<compile_context>
chip_gen: v5e
topology: v5e:2x2
jax: 0.10.0
libtpu: 0.0.40
codegen_flags: <defaults>
</compile_context>

<pallas_src>
import functools

import jax
import jax.numpy as jnp
from jax import lax
from jax.experimental import pallas as pl
from jax.experimental.pallas import tpu as pltpu

EPS = 1e-5                              # PyTorch BatchNorm2d default eps
VMEM_LIMIT_BYTES = 28 * 1024 * 1024     # explicit headroom, < 32 MiB defaults
FUSED_BYTES_LIMIT = 6 * 1024 * 1024     # budget for the single fused kernel

# (kernel_size, stride, final_layer) per generator block (reference only).
LAYER_CFGS = ((3, 2, False), (4, 1, False), (3, 2, False), (4, 2, True))


def _round_up(x, m):
    return (x + m - 1) // m * m


def _pick_row_tile(m, kp, *, align, target_bytes=2 << 20, t_min=256, t_max=2048):
    """K-aware row tile: ~2 MiB of bf16 patch data per block, and >=2 grid
    tiles when the problem is big enough (keeps both v7x TensorCores busy)."""
    if m <= t_min:
        return _round_up(m, align)
    t = (target_bytes // (kp * 2)) // align * align
    t = max(t_min, min(t, t_max))
    t = min(t, _round_up(m, align))
    if _round_up(m, t) // t < 2:
        t = _round_up(-(-m // 2), align)
    return max(t, align)


def _patch_spec(block_shape, index_map, ntiles):
    """Patch-stream BlockSpec; request 3-deep buffering on long memory-bound
    grids (hides DMA jitter on v6e/v7x).  Falls back if unsupported."""
    if ntiles >= 3:
        try:
            return pl.BlockSpec(block_shape, index_map,
                                pipeline_mode=pl.Buffered(3))
        except (TypeError, AttributeError):
            pass
    return pl.BlockSpec(block_shape, index_map)


# --------------------------------------------------------------------------
# Kernels
# --------------------------------------------------------------------------
def _fused_convt_bn_relu_kernel(mask_ref, p_ref, w_ref, gamma_ref, beta_ref,
                                o_ref, *, groups, cout, count):
    """Single-tile fused ConvT-GEMM + training-mode BatchNorm + ReLU."""
    y = jnp.dot(p_ref[...], w_ref[...], preferred_element_type=jnp.float32)
    mask = mask_ref[...]                                    # (M, G) validity
    s1 = jnp.zeros((1, cout), jnp.float32)
    s2 = jnp.zeros((1, cout), jnp.float32)
    for g in range(groups):                                 # static unroll
        yg = y[:, g * cout:(g + 1) * cout]
        mg = mask[:, g:g + 1]
        s1 = s1 + jnp.sum(yg * mg, axis=0, keepdims=True)
        s2 = s2 + jnp.sum(yg * yg * mg, axis=0, keepdims=True)
    mean = s1 / count
    var = jnp.maximum(s2 / count - mean * mean, 0.0)        # biased (training BN)
    inv = lax.rsqrt(var + EPS)
    scale = gamma_ref[...] * inv                            # (1, Cout)
    shift = beta_ref[...] - mean * scale
    scale_c = jnp.concatenate([scale] * groups, axis=-1)    # (1, G*Cout)
    shift_c = jnp.concatenate([shift] * groups, axis=-1)
    o_ref[...] = jnp.maximum(y * scale_c + shift_c, 0.0).astype(o_ref.dtype)


def _gemm_stats_kernel(mask_ref, p_ref, w_ref, y_ref, stats_ref, *, groups, cout):
    """Pass 1: tiled GEMM; per-tile per-channel sum / sum-of-squares are taken
    from the f32 MXU accumulator, the pre-activation is written back bf16."""
    y = jnp.dot(p_ref[...], w_ref[...], preferred_element_type=jnp.float32)
    mask = mask_ref[...]
    s1 = jnp.zeros((1, cout), jnp.float32)
    s2 = jnp.zeros((1, cout), jnp.float32)
    for g in range(groups):
        yg = y[:, g * cout:(g + 1) * cout]
        mg = mask[:, g:g + 1]
        s1 = s1 + jnp.sum(yg * mg, axis=0, keepdims=True)
        s2 = s2 + jnp.sum(yg * yg * mg, axis=0, keepdims=True)
    y_ref[...] = y.astype(y_ref.dtype)                      # bf16 writeback
    stats_ref[...] = jnp.stack([s1, s2], axis=1)            # (1, 2, Cout)


def _scale_shift_relu_kernel(y_ref, scale_ref, shift_ref, o_ref):
    """Pass 2: y*scale + shift, ReLU (VPU-bound), bf16 in / bf16 out."""
    y = y_ref[...].astype(jnp.float32)
    o_ref[...] = jnp.maximum(y * scale_ref[...] + shift_ref[...],
                             0.0).astype(o_ref.dtype)


def _matmul_bias_tanh_kernel(p_ref, w_ref, b_ref, o_ref):
    """Final layer (lane-dense, transposed): tanh(W^T @ patches^T + b)."""
    y = jnp.dot(w_ref[...], p_ref[...], preferred_element_type=jnp.float32)
    o_ref[...] = jnp.tanh(y + b_ref[...]).astype(o_ref.dtype)


# --------------------------------------------------------------------------
# Layer drivers
# --------------------------------------------------------------------------
def _convt_bn_relu(patches, mask, w_mat, gamma, beta, *, cout, count):
    """patches (M, Kp) bf16, mask (M, G) f32, w_mat (Kp, G*cout) bf16.
    Returns ReLU(BN(patches @ w_mat)) as (M, G*cout) bf16."""
    m, kp = patches.shape
    cols = w_mat.shape[1]
    groups = cols // cout
    gamma = gamma.reshape(1, cout).astype(jnp.float32)
    beta = beta.reshape(1, cout).astype(jnp.float32)

    m8 = _round_up(m, 8)
    fused_bytes = m8 * kp * 2 + 2 * kp * cols + m8 * cols * 6 + m8 * groups * 4
    if fused_bytes <= FUSED_BYTES_LIMIT:
        # ---- single fused kernel: GEMM + exact batch-stats + BN + ReLU ----
        mp = m8
        patches = jnp.pad(patches, ((0, mp - m), (0, 0)))
        mask = jnp.pad(mask, ((0, mp - m), (0, 0)))
        kern = functools.partial(_fused_convt_bn_relu_kernel, groups=groups,
                                 cout=cout, count=float(count))
        act = pl.pallas_call(
            kern,
            out_shape=jax.ShapeDtypeStruct((mp, cols), jnp.bfloat16),
            grid=(1,),
            in_specs=[
                pl.BlockSpec((mp, groups), lambda i: (0, 0)),
                pl.BlockSpec((mp, kp), lambda i: (0, 0)),
                pl.BlockSpec((kp, cols), lambda i: (0, 0)),
                pl.BlockSpec((1, cout), lambda i: (0, 0)),
                pl.BlockSpec((1, cout), lambda i: (0, 0)),
            ],
            out_specs=pl.BlockSpec((mp, cols), lambda i: (0, 0)),
            compiler_params=pltpu.CompilerParams(
                dimension_semantics=("arbitrary",),
                vmem_limit_bytes=VMEM_LIMIT_BYTES),
        )(mask, patches, w_mat, gamma, beta)
        return act[:m]

    # ---- two-pass, tiled over rows (exact BN via per-tile partial stats) ----
    tm = _pick_row_tile(m, kp, align=8)
    mp = _round_up(m, tm)
    ntiles = mp // tm
    patches = jnp.pad(patches, ((0, mp - m), (0, 0)))
    mask = jnp.pad(mask, ((0, mp - m), (0, 0)))

    kern = functools.partial(_gemm_stats_kernel, groups=groups, cout=cout)
    y, stats = pl.pallas_call(
        kern,
        out_shape=(jax.ShapeDtypeStruct((mp, cols), jnp.bfloat16),
                   jax.ShapeDtypeStruct((ntiles, 2, cout), jnp.float32)),
        grid=(ntiles,),
        in_specs=[
            pl.BlockSpec((tm, groups), lambda i: (i, 0)),
            _patch_spec((tm, kp), lambda i: (i, 0), ntiles),
            pl.BlockSpec((kp, cols), lambda i: (0, 0)),        # W resident
        ],
        out_specs=(pl.BlockSpec((tm, cols), lambda i: (i, 0)),
                   pl.BlockSpec((1, 2, cout), lambda i: (i, 0, 0))),
        compiler_params=pltpu.CompilerParams(
            dimension_semantics=("parallel",),
            vmem_limit_bytes=VMEM_LIMIT_BYTES),
    )(mask, patches, w_mat)

    # Tiny XLA reduce -> exact batch statistics over the real output positions.
    s1 = jnp.sum(stats[:, 0, :], axis=0)
    s2 = jnp.sum(stats[:, 1, :], axis=0)
    mean = s1 / count
    var = jnp.maximum(s2 / count - mean * mean, 0.0)
    inv = lax.rsqrt(var + EPS)
    scale = gamma[0] * inv
    shift = beta[0] - mean * scale
    scale_c = jnp.tile(scale, groups).reshape(1, cols)
    shift_c = jnp.tile(shift, groups).reshape(1, cols)

    act = pl.pallas_call(
        _scale_shift_relu_kernel,
        out_shape=jax.ShapeDtypeStruct((mp, cols), jnp.bfloat16),
        grid=(ntiles,),
        in_specs=[
            pl.BlockSpec((tm, cols), lambda i: (i, 0)),
            pl.BlockSpec((1, cols), lambda i: (0, 0)),
            pl.BlockSpec((1, cols), lambda i: (0, 0)),
        ],
        out_specs=pl.BlockSpec((tm, cols), lambda i: (i, 0)),
        compiler_params=pltpu.CompilerParams(
            dimension_semantics=("parallel",),
            vmem_limit_bytes=VMEM_LIMIT_BYTES),
    )(y, scale_c, shift_c)
    return act[:m]


# --------------------------------------------------------------------------
# XLA-side patch / weight construction (phase decomposition, no dilation zeros)
# --------------------------------------------------------------------------
def _phase_weight(w, ksize):
    """PyTorch ConvTranspose2d weight (Cin, Cout, k, k) -> (4*Cin, 4*Cout),
    rows ordered (dy, dx, ci), cols ordered (py, px, co); taps with
    2*d + p >= k are zero."""
    cin, cout = w.shape[:2]
    wp = jnp.pad(w, ((0, 0), (0, 0), (0, 4 - ksize), (0, 4 - ksize)))
    wp = wp.reshape(cin, cout, 2, 2, 2, 2)          # (ci, co, dy, py, dx, px)
    wp = wp.transpose(2, 4, 0, 3, 5, 1)             # (dy, dx, ci, py, px, co)
    return wp.reshape(4 * cin, 4 * cout)


def _phase_patches(x):
    """x (N,H,W,C) NHWC -> patches (N*Q*Q, 4*C), Q=H+1, cols ordered (dy,dx,ci).
    Each stride-2 ConvT output pixel only needs this 2x2 input neighbourhood."""
    n, h, w, c = x.shape
    q = h + 1
    xp = jnp.pad(x, ((0, 0), (1, 1), (1, 1), (0, 0)))
    cols = [xp[:, 1 - dy:1 - dy + q, 1 - dx:1 - dx + q, :]
            for dy in (0, 1) for dx in (0, 1)]
    p = jnp.concatenate(cols, axis=-1)              # (N, Q, Q, 4C)
    return p.reshape(n * q * q, 4 * c), q


def _phase_patches_t(x):
    """Transposed patches (4*C, N*Q*Q) built from the channel-major view of the
    small input (no transpose of the big patch matrix)."""
    n, h, w, c = x.shape
    q = h + 1
    xp = jnp.pad(x, ((0, 0), (1, 1), (1, 1), (0, 0)))
    xcm = xp.transpose(3, 0, 1, 2)                  # (C, N, H+2, W+2), small
    rows = [xcm[:, :, 1 - dy:1 - dy + q, 1 - dx:1 - dx + q]
            for dy in (0, 1) for dx in (0, 1)]
    p = jnp.concatenate(rows, axis=0)               # (4C, N, Q, Q)
    return p.reshape(4 * c, n * q * q), q


def _phase_mask(n, q, oh):
    """(N*Q*Q, 4) validity mask: phase (py,px) at grid (qy,qx) is a real output
    pixel iff 2*qy+py < oh and 2*qx+px < oh."""
    nv = jnp.array([(oh + 1) // 2, oh // 2], jnp.float32)
    idx = jnp.arange(q, dtype=jnp.float32)
    my = (idx[:, None] < nv[None, :]).astype(jnp.float32)        # (Q, 2)
    m2 = my[:, None, :, None] * my[None, :, None, :]             # (Q,Q,2,2)
    m = jnp.broadcast_to(m2.reshape(1, q * q, 4), (n, q * q, 4))
    return m.reshape(n * q * q, 4)


def _s1_patches(x, ksize):
    """Stride-1 ConvT im2col: pad by k-1 and gather k*k shifted views."""
    n, h, w, c = x.shape
    pad = ksize - 1
    xp = jnp.pad(x, ((0, 0), (pad, pad), (pad, pad), (0, 0)))
    oh = h + ksize - 1
    cols = [xp[:, a:a + oh, b:b + oh, :] for a in range(ksize) for b in range(ksize)]
    p = jnp.concatenate(cols, axis=-1)
    return p.reshape(n * oh * oh, ksize * ksize * c), oh


def _s1_weight(w):
    """ConvT(s=1) == conv with spatially flipped kernel on the padded input."""
    cin, cout, k, _ = w.shape
    wf = w[:, :, ::-1, ::-1].transpose(2, 3, 0, 1)   # (kh, kw, ci, co)
    return wf.reshape(k * k * cin, cout)


# --------------------------------------------------------------------------
# Generator blocks
# --------------------------------------------------------------------------
def _stride2_bn_block(x, layer, ksize):
    """ConvT(k, s=2) + BN + ReLU via phase decomposition.  NHWC in/out."""
    n, h, _, cin = x.shape
    cout = layer["w"].shape[1]
    oh = 2 * (h - 1) + ksize

    patches, q = _phase_patches(x)                       # (N*Q*Q, 4*Cin)
    k = patches.shape[1]
    kp = _round_up(k, 128)
    patches = jnp.pad(patches, ((0, 0), (0, kp - k))).astype(jnp.bfloat16)
    w_mat = jnp.pad(_phase_weight(layer["w"], ksize),
                    ((0, kp - k), (0, 0))).astype(jnp.bfloat16)   # (Kp, 4*Cout)
    mask = _phase_mask(n, q, oh)
    count = n * oh * oh
    # ConvT bias is skipped: training-mode BatchNorm cancels it exactly.
    act = _convt_bn_relu(patches, mask, w_mat, layer["gamma"], layer["beta"],
                         cout=cout, count=count)         # (N*Q*Q, 4*Cout)

    # De-interleave the 4 phases back into NHWC and crop to (oh, oh).
    act = act.reshape(n, q, q, 2, 2, cout).transpose(0, 1, 3, 2, 4, 5)
    return act.reshape(n, 2 * q, 2 * q, cout)[:, :oh, :oh, :]


def _stride1_bn_block(x, layer, ksize):
    """ConvT(k, s=1) + BN + ReLU via dense im2col GEMM.  NHWC in/out."""
    n = x.shape[0]
    cout = layer["w"].shape[1]
    patches, oh = _s1_patches(x, ksize)
    k = patches.shape[1]
    kp = _round_up(k, 128)
    patches = jnp.pad(patches, ((0, 0), (0, kp - k))).astype(jnp.bfloat16)
    w_mat = jnp.pad(_s1_weight(layer["w"]),
                    ((0, kp - k), (0, 0))).astype(jnp.bfloat16)
    mask = jnp.ones((patches.shape[0], 1), jnp.float32)
    count = n * oh * oh
    act = _convt_bn_relu(patches, mask, w_mat, layer["gamma"], layer["beta"],
                         cout=cout, count=count)
    return act.reshape(n, oh, oh, cout)


def _final_tanh_block(x, layer):
    """ConvT(64->1, k=4, s=2) + tanh, computed lane-dense & phase-decomposed:
    out(8, M_tile) = tanh(W^T(8, 4*Cin) @ patches^T(4*Cin, M_tile) + b)."""
    n, h, _, cin = x.shape
    patches_t, q = _phase_patches_t(x)                   # (4*Cin, N*Q*Q)
    k, m = patches_t.shape
    kp = _round_up(k, 128)
    coutp = 8
    patches_t = jnp.pad(patches_t, ((0, kp - k), (0, 0))).astype(jnp.bfloat16)
    w_t = _phase_weight(layer["w"], 4).T                  # (4, 4*Cin)
    w_t = jnp.pad(w_t, ((0, coutp - w_t.shape[0]), (0, kp - k))).astype(jnp.bfloat16)
    b_col = jnp.pad(jnp.broadcast_to(layer["b"].astype(jnp.float32), (4,)),
                    (0, coutp - 4)).reshape(coutp, 1)

    tl = _pick_row_tile(m, kp, align=128)
    mp = _round_up(m, tl)
    ntiles = mp // tl
    patches_t = jnp.pad(patches_t, ((0, 0), (0, mp - m)))

    out_t = pl.pallas_call(
        _matmul_bias_tanh_kernel,
        out_shape=jax.ShapeDtypeStruct((coutp, mp), jnp.float32),
        grid=(ntiles,),
        in_specs=[
            _patch_spec((kp, tl), lambda i: (0, i), ntiles),
            pl.BlockSpec((coutp, kp), lambda i: (0, 0)),      # W^T resident
            pl.BlockSpec((coutp, 1), lambda i: (0, 0)),       # bias resident
        ],
        out_specs=pl.BlockSpec((coutp, tl), lambda i: (0, i)),
        compiler_params=pltpu.CompilerParams(
            dimension_semantics=("parallel",),
            vmem_limit_bytes=VMEM_LIMIT_BYTES),
    )(patches_t, w_t, b_col)

    # Rows 0..3 are phases (py*2+px); columns are (n, qy, qx).  Interleave.
    ph = out_t[:4, :m].reshape(2, 2, n, q, q)            # (py, px, n, qy, qx)
    img = ph.transpose(2, 3, 0, 4, 1).reshape(n, 2 * q, 2 * q)
    return img[:, None, :, :]                            # (N, 1, 28, 28) f32


def generator_forward(noise, params):
    n = noise.shape[0]
    x = noise.reshape(n, 1, 1, noise.shape[1]).astype(jnp.bfloat16)  # NHWC
    x = _stride2_bn_block(x, params[0], ksize=3)    # (N,  3,  3, 256)
    x = _stride1_bn_block(x, params[1], ksize=4)    # (N,  6,  6, 128)
    x = _stride2_bn_block(x, params[2], ksize=3)    # (N, 13, 13,  64)
    return _final_tanh_block(x, params[3])          # (N,  1, 28,  28)


# --------------------------------------------------------------------------
# Parameters + pure-JAX reference (for numerical sanity checking)
# --------------------------------------------------------------------------
def init_generator_params(key, z_dim=10, im_chan=1, hidden_dim=64):
    specs = [
        (z_dim,          hidden_dim * 4, 3),
        (hidden_dim * 4, hidden_dim * 2, 4),
        (hidden_dim * 2, hidden_dim,     3),
        (hidden_dim,     im_chan,        4),
    ]
    params = []
    for cin, cout, ksize in specs:
        key, kw_key, kb_key = jax.random.split(key, 3)
        bound = 1.0 / float(cout * ksize * ksize) ** 0.5
        w = jax.random.uniform(kw_key, (cin, cout, ksize, ksize),
                               jnp.float32, -bound, bound)
        b = jax.random.uniform(kb_key, (cout,), jnp.float32, -bound, bound)
        params.append(dict(
            w=w, b=b,
            gamma=jnp.ones((cout,), jnp.float32),
            beta=jnp.zeros((cout,), jnp.float32),
        ))
    return params


def _reference_conv_transpose(x, w, b, stride):
    n, cin, h, wd = x.shape
    k = w.shape[2]
    oh, ow = (h - 1) * stride + k, (wd - 1) * stride + k
    out = jnp.zeros((n, w.shape[1], oh, ow), jnp.float32)
    for iy in range(h):
        for ix in range(wd):
            contrib = jnp.einsum("nc,cokl->nokl", x[:, :, iy, ix], w)
            out = out.at[:, :, iy * stride:iy * stride + k,
                         ix * stride:ix * stride + k].add(contrib)
    return out + b[None, :, None, None]


def reference_forward(noise, params):
    x = noise.reshape(noise.shape[0], -1, 1, 1).astype(jnp.float32)
    for layer, (ksize, stride, final) in zip(params, LAYER_CFGS):
        x = _reference_conv_transpose(x, layer["w"], layer["b"], stride)
        if final:
            x = jnp.tanh(x)
        else:
            mean = x.mean(axis=(0, 2, 3), keepdims=True)
            var = x.var(axis=(0, 2, 3), keepdims=True)      # biased (training BN)
            x = (x - mean) * lax.rsqrt(var + EPS)
            x = x * layer["gamma"][None, :, None, None] \
                + layer["beta"][None, :, None, None]
            x = jnp.maximum(x, 0.0)
    return x


if __name__ == "__main__":
    key = jax.random.PRNGKey(0)
    pkey, nkey = jax.random.split(key)
    z_dim, batch = 10, 2
    params = init_generator_params(pkey, z_dim=z_dim, im_chan=1, hidden_dim=64)
    noise = jax.random.normal(nkey, (batch, z_dim), jnp.float32)

    fwd = jax.jit(generator_forward)
    out = jax.block_until_ready(fwd(noise, params))

    assert out.shape == (batch, 1, 28, 28), out.shape
    assert out.dtype == jnp.float32
    assert bool(jnp.all(jnp.isfinite(out)))
    assert bool(jnp.all(jnp.abs(out) <= 1.0 + 1e-6))        # tanh range

    ref = jax.block_until_ready(jax.jit(reference_forward)(noise, params))
    max_err = float(jnp.max(jnp.abs(out - ref)))
    # bf16 MXU inputs + bf16 inter-layer activations => small deviation only.
    assert max_err < 0.3, f"max |pallas - reference| = {max_err}"
    print("KERNEL_OK")
</pallas_src>

<mosaic_0001>
module attributes {stable_mosaic.version = 11 : i64} {
  func.func @_fused_convt_bn_relu_kernel(%arg0: i32, %arg1: memref<8x4xf32, #tpu.memory_space<vmem>>, %arg2: memref<8x128xbf16, #tpu.memory_space<vmem>>, %arg3: memref<128x1024xbf16, #tpu.memory_space<vmem>>, %arg4: memref<1x256xf32, #tpu.memory_space<vmem>>, %arg5: memref<1x256xf32, #tpu.memory_space<vmem>>, %arg6: memref<8x1024xbf16, #tpu.memory_space<vmem>>) attributes {dimension_semantics = [#tpu.dimension_semantics<arbitrary>], iteration_bounds = array<i64: 1>, scalar_prefetch = 0 : i64, scratch_operands = 0 : i64, tpu.core_type = #tpu.core_type<tc>, window_params = [{pipeline_mode = #tpu.pipeline_mode<synchronous>, transform_indices = @transform_0, window_bounds = array<i64: 8, 4>}, {pipeline_mode = #tpu.pipeline_mode<synchronous>, transform_indices = @transform_1, window_bounds = array<i64: 8, 128>}, {pipeline_mode = #tpu.pipeline_mode<synchronous>, transform_indices = @transform_2, window_bounds = array<i64: 128, 1024>}, {pipeline_mode = #tpu.pipeline_mode<synchronous>, transform_indices = @transform_3, window_bounds = array<i64: 1, 256>}, {pipeline_mode = #tpu.pipeline_mode<synchronous>, transform_indices = @transform_4, window_bounds = array<i64: 1, 256>}, {pipeline_mode = #tpu.pipeline_mode<synchronous>, transform_indices = @transform_5, window_bounds = array<i64: 8, 1024>}]} {
    %c0 = arith.constant 0 : index
    %c0_0 = arith.constant 0 : index
    %0 = vector.load %arg2[%c0, %c0_0] : memref<8x128xbf16, #tpu.memory_space<vmem>>, vector<8x128xbf16>
    %c0_1 = arith.constant 0 : index
    %c0_2 = arith.constant 0 : index
    %1 = vector.load %arg3[%c0_1, %c0_2] : memref<128x1024xbf16, #tpu.memory_space<vmem>>, vector<128x1024xbf16>
    %cst = arith.constant dense<0.000000e+00> : vector<8x1024xf32>
    %2 = tpu.matmul %0, %1, %cst {dimension_numbers = #tpu.dot_dimension_numbers<[1], [0], [0], [1], [0, 0, 1, 1], [], []>} : vector<8x128xbf16>, vector<128x1024xbf16>, vector<8x1024xf32> -> vector<8x1024xf32>
    %c0_3 = arith.constant 0 : index
    %c0_4 = arith.constant 0 : index
    %3 = vector.load %arg1[%c0_3, %c0_4] : memref<8x4xf32, #tpu.memory_space<vmem>>, vector<8x4xf32>
    %cst_5 = arith.constant 0.000000e+00 : f32
    %4 = vector.broadcast %cst_5 : f32 to vector<1x256xf32>
    %cst_6 = arith.constant 0.000000e+00 : f32
    %5 = vector.broadcast %cst_6 : f32 to vector<1x256xf32>
    %6 = vector.extract_strided_slice %2 {offsets = [0, 0], sizes = [8, 256], strides = [1, 1]} : vector<8x1024xf32> to vector<8x256xf32>
    %7 = vector.extract_strided_slice %3 {offsets = [0, 0], sizes = [8, 1], strides = [1, 1]} : vector<8x4xf32> to vector<8x1xf32>
    %8 = vector.broadcast %7 : vector<8x1xf32> to vector<8x256xf32>
    %9 = arith.mulf %6, %8 : vector<8x256xf32>
    %cst_7 = arith.constant dense<0.000000e+00> : vector<256xf32>
    %10 = vector.multi_reduction <add>, %9, %cst_7 [0] : vector<8x256xf32> to vector<256xf32>
    %11 = vector.shape_cast %10 : vector<256xf32> to vector<1x256xf32>
    %12 = arith.addf %4, %11 : vector<1x256xf32>
    %13 = arith.mulf %6, %6 : vector<8x256xf32>
    %14 = vector.broadcast %7 : vector<8x1xf32> to vector<8x256xf32>
    %15 = arith.mulf %13, %14 : vector<8x256xf32>
    %cst_8 = arith.constant dense<0.000000e+00> : vector<256xf32>
    %16 = vector.multi_reduction <add>, %15, %cst_8 [0] : vector<8x256xf32> to vector<256xf32>
    %17 = vector.shape_cast %16 : vector<256xf32> to vector<1x256xf32>
    %18 = arith.addf %5, %17 : vector<1x256xf32>
    %19 = vector.extract_strided_slice %2 {offsets = [0, 256], sizes = [8, 256], strides = [1, 1]} : vector<8x1024xf32> to vector<8x256xf32>
    %20 = vector.extract_strided_slice %3 {offsets = [0, 1], sizes = [8, 1], strides = [1, 1]} : vector<8x4xf32> to vector<8x1xf32>
    %21 = vector.broadcast %20 : vector<8x1xf32> to vector<8x256xf32>
    %22 = arith.mulf %19, %21 : vector<8x256xf32>
    %cst_9 = arith.constant dense<0.000000e+00> : vector<256xf32>
    %23 = vector.multi_reduction <add>, %22, %cst_9 [0] : vector<8x256xf32> to vector<256xf32>
    %24 = vector.shape_cast %23 : vector<256xf32> to vector<1x256xf32>
    %25 = arith.addf %12, %24 : vector<1x256xf32>
    %26 = arith.mulf %19, %19 : vector<8x256xf32>
    %27 = vector.broadcast %20 : vector<8x1xf32> to vector<8x256xf32>
    %28 = arith.mulf %26, %27 : vector<8x256xf32>
    %cst_10 = arith.constant dense<0.000000e+00> : vector<256xf32>
    %29 = vector.multi_reduction <add>, %28, %cst_10 [0] : vector<8x256xf32> to vector<256xf32>
    %30 = vector.shape_cast %29 : vector<256xf32> to vector<1x256xf32>
    %31 = arith.addf %18, %30 : vector<1x256xf32>
    %32 = vector.extract_strided_slice %2 {offsets = [0, 512], sizes = [8, 256], strides = [1, 1]} : vector<8x1024xf32> to vector<8x256xf32>
    %33 = vector.extract_strided_slice %3 {offsets = [0, 2], sizes = [8, 1], strides = [1, 1]} : vector<8x4xf32> to vector<8x1xf32>
    %34 = vector.broadcast %33 : vector<8x1xf32> to vector<8x256xf32>
    %35 = arith.mulf %32, %34 : vector<8x256xf32>
    %cst_11 = arith.constant dense<0.000000e+00> : vector<256xf32>
    %36 = vector.multi_reduction <add>, %35, %cst_11 [0] : vector<8x256xf32> to vector<256xf32>
    %37 = vector.shape_cast %36 : vector<256xf32> to vector<1x256xf32>
    %38 = arith.addf %25, %37 : vector<1x256xf32>
    %39 = arith.mulf %32, %32 : vector<8x256xf32>
    %40 = vector.broadcast %33 : vector<8x1xf32> to vector<8x256xf32>
    %41 = arith.mulf %39, %40 : vector<8x256xf32>
    %cst_12 = arith.constant dense<0.000000e+00> : vector<256xf32>
    %42 = vector.multi_reduction <add>, %41, %cst_12 [0] : vector<8x256xf32> to vector<256xf32>
    %43 = vector.shape_cast %42 : vector<256xf32> to vector<1x256xf32>
    %44 = arith.addf %31, %43 : vector<1x256xf32>
    %45 = vector.extract_strided_slice %2 {offsets = [0, 768], sizes = [8, 256], strides = [1, 1]} : vector<8x1024xf32> to vector<8x256xf32>
    %46 = vector.extract_strided_slice %3 {offsets = [0, 3], sizes = [8, 1], strides = [1, 1]} : vector<8x4xf32> to vector<8x1xf32>
    %47 = vector.broadcast %46 : vector<8x1xf32> to vector<8x256xf32>
    %48 = arith.mulf %45, %47 : vector<8x256xf32>
    %cst_13 = arith.constant dense<0.000000e+00> : vector<256xf32>
    %49 = vector.multi_reduction <add>, %48, %cst_13 [0] : vector<8x256xf32> to vector<256xf32>
    %50 = vector.shape_cast %49 : vector<256xf32> to vector<1x256xf32>
    %51 = arith.addf %38, %50 : vector<1x256xf32>
    %52 = arith.mulf %45, %45 : vector<8x256xf32>
    %53 = vector.broadcast %46 : vector<8x1xf32> to vector<8x256xf32>
    %54 = arith.mulf %52, %53 : vector<8x256xf32>
    %cst_14 = arith.constant dense<0.000000e+00> : vector<256xf32>
    %55 = vector.multi_reduction <add>, %54, %cst_14 [0] : vector<8x256xf32> to vector<256xf32>
    %56 = vector.shape_cast %55 : vector<256xf32> to vector<1x256xf32>
    %57 = arith.addf %44, %56 : vector<1x256xf32>
    %cst_15 = arith.constant 1.800000e+01 : f32
    %58 = vector.broadcast %cst_15 : f32 to vector<1x256xf32>
    %59 = arith.divf %51, %58 : vector<1x256xf32>
    %cst_16 = arith.constant 1.800000e+01 : f32
    %60 = vector.broadcast %cst_16 : f32 to vector<1x256xf32>
    %61 = arith.divf %57, %60 : vector<1x256xf32>
    %62 = arith.mulf %59, %59 : vector<1x256xf32>
    %63 = arith.subf %61, %62 : vector<1x256xf32>
    %cst_17 = arith.constant 0.000000e+00 : f32
    %64 = vector.broadcast %cst_17 : f32 to vector<1x256xf32>
    %65 = arith.maximumf %63, %64 : vector<1x256xf32>
    %cst_18 = arith.constant 9.99999974E-6 : f32
    %66 = vector.broadcast %cst_18 : f32 to vector<1x256xf32>
    %67 = arith.addf %65, %66 : vector<1x256xf32>
    %68 = math.rsqrt %67 : vector<1x256xf32>
    %c0_19 = arith.constant 0 : index
    %c0_20 = arith.constant 0 : index
    %69 = vector.load %arg4[%c0_19, %c0_20] : memref<1x256xf32, #tpu.memory_space<vmem>>, vector<1x256xf32>
    %70 = arith.mulf %69, %68 : vector<1x256xf32>
    %c0_21 = arith.constant 0 : index
    %c0_22 = arith.constant 0 : index
    %71 = vector.load %arg5[%c0_21, %c0_22] : memref<1x256xf32, #tpu.memory_space<vmem>>, vector<1x256xf32>
    %72 = arith.mulf %59, %70 : vector<1x256xf32>
    %73 = arith.subf %71, %72 : vector<1x256xf32>
    %74 = tpu.concatenate %70, %70, %70, %70 in 1 : vector<1x256xf32>, vector<1x256xf32>, vector<1x256xf32>, vector<1x256xf32> -> vector<1x1024xf32>
    %75 = tpu.concatenate %73, %73, %73, %73 in 1 : vector<1x256xf32>, vector<1x256xf32>, vector<1x256xf32>, vector<1x256xf32> -> vector<1x1024xf32>
    %76 = vector.broadcast %74 : vector<1x1024xf32> to vector<8x1024xf32>
    %77 = arith.mulf %2, %76 : vector<8x1024xf32>
    %78 = vector.broadcast %75 : vector<1x1024xf32> to vector<8x1024xf32>
    %79 = arith.addf %77, %78 : vector<8x1024xf32>
    %cst_23 = arith.constant 0.000000e+00 : f32
    %80 = vector.broadcast %cst_23 : f32 to vector<8x1024xf32>
    %81 = arith.maximumf %79, %80 : vector<8x1024xf32>
    %82 = arith.truncf %81 : vector<8x1024xf32> to vector<8x1024xbf16>
    %c0_24 = arith.constant 0 : index
    %c0_25 = arith.constant 0 : index
    %83 = vector.load %arg6[%c0_24, %c0_25] : memref<8x1024xbf16, #tpu.memory_space<vmem>>, vector<8x1024xbf16>
    tpu.vector_store %arg6[%c0_24, %c0_25], %82 {strides = array<i32>} : memref<8x1024xbf16, #tpu.memory_space<vmem>>, vector<8x1024xbf16>,
    return
  }
  func.func @transform_0(%arg0: i32) -> (i32, i32) {
    %c0_i32 = arith.constant 0 : i32
    %c0_i32_0 = arith.constant 0 : i32
    %c0_i32_1 = arith.constant 0 : i32
    return %c0_i32, %c0_i32_0 : i32, i32
  }
  func.func @transform_1(%arg0: i32) -> (i32, i32) {
    %c0_i32 = arith.constant 0 : i32
    %c0_i32_0 = arith.constant 0 : i32
    %c0_i32_1 = arith.constant 0 : i32
    return %c0_i32, %c0_i32_0 : i32, i32
  }
  func.func @transform_2(%arg0: i32) -> (i32, i32) {
    %c0_i32 = arith.constant 0 : i32
    %c0_i32_0 = arith.constant 0 : i32
    %c0_i32_1 = arith.constant 0 : i32
    return %c0_i32, %c0_i32_0 : i32, i32
  }
  func.func @transform_3(%arg0: i32) -> (i32, i32) {
    %c0_i32 = arith.constant 0 : i32
    %c0_i32_0 = arith.constant 0 : i32
    %c0_i32_1 = arith.constant 0 : i32
    return %c0_i32, %c0_i32_0 : i32, i32
  }
  func.func @transform_4(%arg0: i32) -> (i32, i32) {
    %c0_i32 = arith.constant 0 : i32
    %c0_i32_0 = arith.constant 0 : i32
    %c0_i32_1 = arith.constant 0 : i32
    return %c0_i32, %c0_i32_0 : i32, i32
  }
  func.func @transform_5(%arg0: i32) -> (i32, i32) {
    %c0_i32 = arith.constant 0 : i32
    %c0_i32_0 = arith.constant 0 : i32
    %c0_i32_1 = arith.constant 0 : i32
    return %c0_i32, %c0_i32_0 : i32, i32
  }
}

module attributes {stable_mosaic.version = 11 : i64} {
  func.func @_fused_convt_bn_relu_kernel(%arg0: i32, %arg1: memref<72x1xf32, #tpu.memory_space<vmem>>, %arg2: memref<72x4096xbf16, #tpu.memory_space<vmem>>, %arg3: memref<4096x128xbf16, #tpu.memory_space<vmem>>, %arg4: memref<1x128xf32, #tpu.memory_space<vmem>>, %arg5: memref<1x128xf32, #tpu.memory_space<vmem>>, %arg6: memref<72x128xbf16, #tpu.memory_space<vmem>>) attributes {dimension_semantics = [#tpu.dimension_semantics<arbitrary>], iteration_bounds = array<i64: 1>, scalar_prefetch = 0 : i64, scratch_operands = 0 : i64, tpu.core_type = #tpu.core_type<tc>, window_params = [{pipeline_mode = #tpu.pipeline_mode<synchronous>, transform_indices = @transform_0, window_bounds = array<i64: 72, 1>}, {pipeline_mode = #tpu.pipeline_mode<synchronous>, transform_indices = @transform_1, window_bounds = array<i64: 72, 4096>}, {pipeline_mode = #tpu.pipeline_mode<synchronous>, transform_indices = @transform_2, window_bounds = array<i64: 4096, 128>}, {pipeline_mode = #tpu.pipeline_mode<synchronous>, transform_indices = @transform_3, window_bounds = array<i64: 1, 128>}, {pipeline_mode = #tpu.pipeline_mode<synchronous>, transform_indices = @transform_4, window_bounds = array<i64: 1, 128>}, {pipeline_mode = #tpu.pipeline_mode<synchronous>, transform_indices = @transform_5, window_bounds = array<i64: 72, 128>}]} {
    %c0 = arith.constant 0 : index
    %c0_0 = arith.constant 0 : index
    %0 = vector.load %arg2[%c0, %c0_0] : memref<72x4096xbf16, #tpu.memory_space<vmem>>, vector<72x4096xbf16>
    %c0_1 = arith.constant 0 : index
    %c0_2 = arith.constant 0 : index
    %1 = vector.load %arg3[%c0_1, %c0_2] : memref<4096x128xbf16, #tpu.memory_space<vmem>>, vector<4096x128xbf16>
    %cst = arith.constant dense<0.000000e+00> : vector<72x128xf32>
    %2 = tpu.matmul %0, %1, %cst {dimension_numbers = #tpu.dot_dimension_numbers<[1], [0], [0], [1], [0, 0, 1, 1], [], []>} : vector<72x4096xbf16>, vector<4096x128xbf16>, vector<72x128xf32> -> vector<72x128xf32>
    %c0_3 = arith.constant 0 : index
    %c0_4 = arith.constant 0 : index
    %3 = vector.load %arg1[%c0_3, %c0_4] : memref<72x1xf32, #tpu.memory_space<vmem>>, vector<72x1xf32>
    %cst_5 = arith.constant 0.000000e+00 : f32
    %4 = vector.broadcast %cst_5 : f32 to vector<1x128xf32>
    %cst_6 = arith.constant 0.000000e+00 : f32
    %5 = vector.broadcast %cst_6 : f32 to vector<1x128xf32>
    %6 = vector.broadcast %3 : vector<72x1xf32> to vector<72x128xf32>
    %7 = arith.mulf %2, %6 : vector<72x128xf32>
    %cst_7 = arith.constant dense<0.000000e+00> : vector<128xf32>
    %8 = vector.multi_reduction <add>, %7, %cst_7 [0] : vector<72x128xf32> to vector<128xf32>
    %9 = vector.shape_cast %8 : vector<128xf32> to vector<1x128xf32>
    %10 = arith.addf %4, %9 : vector<1x128xf32>
    %11 = arith.mulf %2, %2 : vector<72x128xf32>
    %12 = vector.broadcast %3 : vector<72x1xf32> to vector<72x128xf32>
    %13 = arith.mulf %11, %12 : vector<72x128xf32>
    %cst_8 = arith.constant dense<0.000000e+00> : vector<128xf32>
    %14 = vector.multi_reduction <add>, %13, %cst_8 [0] : vector<72x128xf32> to vector<128xf32>
    %15 = vector.shape_cast %14 : vector<128xf32> to vector<1x128xf32>
    %16 = arith.addf %5, %15 : vector<1x128xf32>
    %cst_9 = arith.constant 7.200000e+01 : f32
    %17 = vector.broadcast %cst_9 : f32 to vector<1x128xf32>
    %18 = arith.divf %10, %17 : vector<1x128xf32>
    %cst_10 = arith.constant 7.200000e+01 : f32
    %19 = vector.broadcast %cst_10 : f32 to vector<1x128xf32>
    %20 = arith.divf %16, %19 : vector<1x128xf32>
    %21 = arith.mulf %18, %18 : vector<1x128xf32>
    %22 = arith.subf %20, %21 : vector<1x128xf32>
    %cst_11 = arith.constant 0.000000e+00 : f32
    %23 = vector.broadcast %cst_11 : f32 to vector<1x128xf32>
    %24 = arith.maximumf %22, %23 : vector<1x128xf32>
    %cst_12 = arith.constant 9.99999974E-6 : f32
    %25 = vector.broadcast %cst_12 : f32 to vector<1x128xf32>
    %26 = arith.addf %24, %25 : vector<1x128xf32>
    %27 = math.rsqrt %26 : vector<1x128xf32>
    %c0_13 = arith.constant 0 : index
    %c0_14 = arith.constant 0 : index
    %28 = vector.load %arg4[%c0_13, %c0_14] : memref<1x128xf32, #tpu.memory_space<vmem>>, vector<1x128xf32>
    %29 = arith.mulf %28, %27 : vector<1x128xf32>
    %c0_15 = arith.constant 0 : index
    %c0_16 = arith.constant 0 : index
    %30 = vector.load %arg5[%c0_15, %c0_16] : memref<1x128xf32, #tpu.memory_space<vmem>>, vector<1x128xf32>
    %31 = arith.mulf %18, %29 : vector<1x128xf32>
    %32 = arith.subf %30, %31 : vector<1x128xf32>
    %33 = vector.broadcast %29 : vector<1x128xf32> to vector<72x128xf32>
    %34 = arith.mulf %2, %33 : vector<72x128xf32>
    %35 = vector.broadcast %32 : vector<1x128xf32> to vector<72x128xf32>
    %36 = arith.addf %34, %35 : vector<72x128xf32>
    %cst_17 = arith.constant 0.000000e+00 : f32
    %37 = vector.broadcast %cst_17 : f32 to vector<72x128xf32>
    %38 = arith.maximumf %36, %37 : vector<72x128xf32>
    %39 = arith.truncf %38 : vector<72x128xf32> to vector<72x128xbf16>
    %c0_18 = arith.constant 0 : index
    %c0_19 = arith.constant 0 : index
    %40 = vector.load %arg6[%c0_18, %c0_19] : memref<72x128xbf16, #tpu.memory_space<vmem>>, vector<72x128xbf16>
    tpu.vector_store %arg6[%c0_18, %c0_19], %39 {strides = array<i32>} : memref<72x128xbf16, #tpu.memory_space<vmem>>, vector<72x128xbf16>,
    return
  }
  func.func @transform_0(%arg0: i32) -> (i32, i32) {
    %c0_i32 = arith.constant 0 : i32
    %c0_i32_0 = arith.constant 0 : i32
    %c0_i32_1 = arith.constant 0 : i32
    return %c0_i32, %c0_i32_0 : i32, i32
  }
  func.func @transform_1(%arg0: i32) -> (i32, i32) {
    %c0_i32 = arith.constant 0 : i32
    %c0_i32_0 = arith.constant 0 : i32
    %c0_i32_1 = arith.constant 0 : i32
    return %c0_i32, %c0_i32_0 : i32, i32
  }
  func.func @transform_2(%arg0: i32) -> (i32, i32) {
    %c0_i32 = arith.constant 0 : i32
    %c0_i32_0 = arith.constant 0 : i32
    %c0_i32_1 = arith.constant 0 : i32
    return %c0_i32, %c0_i32_0 : i32, i32
  }
  func.func @transform_3(%arg0: i32) -> (i32, i32) {
    %c0_i32 = arith.constant 0 : i32
    %c0_i32_0 = arith.constant 0 : i32
    %c0_i32_1 = arith.constant 0 : i32
    return %c0_i32, %c0_i32_0 : i32, i32
  }
  func.func @transform_4(%arg0: i32) -> (i32, i32) {
    %c0_i32 = arith.constant 0 : i32
    %c0_i32_0 = arith.constant 0 : i32
    %c0_i32_1 = arith.constant 0 : i32
    return %c0_i32, %c0_i32_0 : i32, i32
  }
  func.func @transform_5(%arg0: i32) -> (i32, i32) {
    %c0_i32 = arith.constant 0 : i32
    %c0_i32_0 = arith.constant 0 : i32
    %c0_i32_1 = arith.constant 0 : i32
    return %c0_i32, %c0_i32_0 : i32, i32
  }
}

module attributes {stable_mosaic.version = 11 : i64} {
  func.func @_fused_convt_bn_relu_kernel(%arg0: i32, %arg1: memref<104x4xf32, #tpu.memory_space<vmem>>, %arg2: memref<104x512xbf16, #tpu.memory_space<vmem>>, %arg3: memref<512x256xbf16, #tpu.memory_space<vmem>>, %arg4: memref<1x64xf32, #tpu.memory_space<vmem>>, %arg5: memref<1x64xf32, #tpu.memory_space<vmem>>, %arg6: memref<104x256xbf16, #tpu.memory_space<vmem>>) attributes {dimension_semantics = [#tpu.dimension_semantics<arbitrary>], iteration_bounds = array<i64: 1>, scalar_prefetch = 0 : i64, scratch_operands = 0 : i64, tpu.core_type = #tpu.core_type<tc>, window_params = [{pipeline_mode = #tpu.pipeline_mode<synchronous>, transform_indices = @transform_0, window_bounds = array<i64: 104, 4>}, {pipeline_mode = #tpu.pipeline_mode<synchronous>, transform_indices = @transform_1, window_bounds = array<i64: 104, 512>}, {pipeline_mode = #tpu.pipeline_mode<synchronous>, transform_indices = @transform_2, window_bounds = array<i64: 512, 256>}, {pipeline_mode = #tpu.pipeline_mode<synchronous>, transform_indices = @transform_3, window_bounds = array<i64: 1, 64>}, {pipeline_mode = #tpu.pipeline_mode<synchronous>, transform_indices = @transform_4, window_bounds = array<i64: 1, 64>}, {pipeline_mode = #tpu.pipeline_mode<synchronous>, transform_indices = @transform_5, window_bounds = array<i64: 104, 256>}]} {
    %c0 = arith.constant 0 : index
    %c0_0 = arith.constant 0 : index
    %0 = vector.load %arg2[%c0, %c0_0] : memref<104x512xbf16, #tpu.memory_space<vmem>>, vector<104x512xbf16>
    %c0_1 = arith.constant 0 : index
    %c0_2 = arith.constant 0 : index
    %1 = vector.load %arg3[%c0_1, %c0_2] : memref<512x256xbf16, #tpu.memory_space<vmem>>, vector<512x256xbf16>
    %cst = arith.constant dense<0.000000e+00> : vector<104x256xf32>
    %2 = tpu.matmul %0, %1, %cst {dimension_numbers = #tpu.dot_dimension_numbers<[1], [0], [0], [1], [0, 0, 1, 1], [], []>} : vector<104x512xbf16>, vector<512x256xbf16>, vector<104x256xf32> -> vector<104x256xf32>
    %c0_3 = arith.constant 0 : index
    %c0_4 = arith.constant 0 : index
    %3 = vector.load %arg1[%c0_3, %c0_4] : memref<104x4xf32, #tpu.memory_space<vmem>>, vector<104x4xf32>
    %cst_5 = arith.constant 0.000000e+00 : f32
    %4 = vector.broadcast %cst_5 : f32 to vector<1x64xf32>
    %cst_6 = arith.constant 0.000000e+00 : f32
    %5 = vector.broadcast %cst_6 : f32 to vector<1x64xf32>
    %6 = vector.extract_strided_slice %2 {offsets = [0, 0], sizes = [104, 64], strides = [1, 1]} : vector<104x256xf32> to vector<104x64xf32>
    %7 = vector.extract_strided_slice %3 {offsets = [0, 0], sizes = [104, 1], strides = [1, 1]} : vector<104x4xf32> to vector<104x1xf32>
    %8 = vector.broadcast %7 : vector<104x1xf32> to vector<104x64xf32>
    %9 = arith.mulf %6, %8 : vector<104x64xf32>
    %cst_7 = arith.constant dense<0.000000e+00> : vector<64xf32>
    %10 = vector.multi_reduction <add>, %9, %cst_7 [0] : vector<104x64xf32> to vector<64xf32>
    %11 = vector.shape_cast %10 : vector<64xf32> to vector<1x64xf32>
    %12 = arith.addf %4, %11 : vector<1x64xf32>
    %13 = arith.mulf %6, %6 : vector<104x64xf32>
    %14 = vector.broadcast %7 : vector<104x1xf32> to vector<104x64xf32>
    %15 = arith.mulf %13, %14 : vector<104x64xf32>
    %cst_8 = arith.constant dense<0.000000e+00> : vector<64xf32>
    %16 = vector.multi_reduction <add>, %15, %cst_8 [0] : vector<104x64xf32> to vector<64xf32>
    %17 = vector.shape_cast %16 : vector<64xf32> to vector<1x64xf32>
    %18 = arith.addf %5, %17 : vector<1x64xf32>
    %19 = vector.extract_strided_slice %2 {offsets = [0, 64], sizes = [104, 64], strides = [1, 1]} : vector<104x256xf32> to vector<104x64xf32>
    %20 = vector.extract_strided_slice %3 {offsets = [0, 1], sizes = [104, 1], strides = [1, 1]} : vector<104x4xf32> to vector<104x1xf32>
    %21 = vector.broadcast %20 : vector<104x1xf32> to vector<104x64xf32>
    %22 = arith.mulf %19, %21 : vector<104x64xf32>
    %cst_9 = arith.constant dense<0.000000e+00> : vector<64xf32>
    %23 = vector.multi_reduction <add>, %22, %cst_9 [0] : vector<104x64xf32> to vector<64xf32>
    %24 = vector.shape_cast %23 : vector<64xf32> to vector<1x64xf32>
    %25 = arith.addf %12, %24 : vector<1x64xf32>
    %26 = arith.mulf %19, %19 : vector<104x64xf32>
    %27 = vector.broadcast %20 : vector<104x1xf32> to vector<104x64xf32>
    %28 = arith.mulf %26, %27 : vector<104x64xf32>
    %cst_10 = arith.constant dense<0.000000e+00> : vector<64xf32>
    %29 = vector.multi_reduction <add>, %28, %cst_10 [0] : vector<104x64xf32> to vector<64xf32>
    %30 = vector.shape_cast %29 : vector<64xf32> to vector<1x64xf32>
    %31 = arith.addf %18, %30 : vector<1x64xf32>
    %32 = vector.extract_strided_slice %2 {offsets = [0, 128], sizes = [104, 64], strides = [1, 1]} : vector<104x256xf32> to vector<104x64xf32>
    %33 = vector.extract_strided_slice %3 {offsets = [0, 2], sizes = [104, 1], strides = [1, 1]} : vector<104x4xf32> to vector<104x1xf32>
    %34 = vector.broadcast %33 : vector<104x1xf32> to vector<104x64xf32>
    %35 = arith.mulf %32, %34 : vector<104x64xf32>
    %cst_11 = arith.constant dense<0.000000e+00> : vector<64xf32>
    %36 = vector.multi_reduction <add>, %35, %cst_11 [0] : vector<104x64xf32> to vector<64xf32>
    %37 = vector.shape_cast %36 : vector<64xf32> to vector<1x64xf32>
    %38 = arith.addf %25, %37 : vector<1x64xf32>
    %39 = arith.mulf %32, %32 : vector<104x64xf32>
    %40 = vector.broadcast %33 : vector<104x1xf32> to vector<104x64xf32>
    %41 = arith.mulf %39, %40 : vector<104x64xf32>
    %cst_12 = arith.constant dense<0.000000e+00> : vector<64xf32>
    %42 = vector.multi_reduction <add>, %41, %cst_12 [0] : vector<104x64xf32> to vector<64xf32>
    %43 = vector.shape_cast %42 : vector<64xf32> to vector<1x64xf32>
    %44 = arith.addf %31, %43 : vector<1x64xf32>
    %45 = vector.extract_strided_slice %2 {offsets = [0, 192], sizes = [104, 64], strides = [1, 1]} : vector<104x256xf32> to vector<104x64xf32>
    %46 = vector.extract_strided_slice %3 {offsets = [0, 3], sizes = [104, 1], strides = [1, 1]} : vector<104x4xf32> to vector<104x1xf32>
    %47 = vector.broadcast %46 : vector<104x1xf32> to vector<104x64xf32>
    %48 = arith.mulf %45, %47 : vector<104x64xf32>
    %cst_13 = arith.constant dense<0.000000e+00> : vector<64xf32>
    %49 = vector.multi_reduction <add>, %48, %cst_13 [0] : vector<104x64xf32> to vector<64xf32>
    %50 = vector.shape_cast %49 : vector<64xf32> to vector<1x64xf32>
    %51 = arith.addf %38, %50 : vector<1x64xf32>
    %52 = arith.mulf %45, %45 : vector<104x64xf32>
    %53 = vector.broadcast %46 : vector<104x1xf32> to vector<104x64xf32>
    %54 = arith.mulf %52, %53 : vector<104x64xf32>
    %cst_14 = arith.constant dense<0.000000e+00> : vector<64xf32>
    %55 = vector.multi_reduction <add>, %54, %cst_14 [0] : vector<104x64xf32> to vector<64xf32>
    %56 = vector.shape_cast %55 : vector<64xf32> to vector<1x64xf32>
    %57 = arith.addf %44, %56 : vector<1x64xf32>
    %cst_15 = arith.constant 3.380000e+02 : f32
    %58 = vector.broadcast %cst_15 : f32 to vector<1x64xf32>
    %59 = arith.divf %51, %58 : vector<1x64xf32>
    %cst_16 = arith.constant 3.380000e+02 : f32
    %60 = vector.broadcast %cst_16 : f32 to vector<1x64xf32>
    %61 = arith.divf %57, %60 : vector<1x64xf32>
    %62 = arith.mulf %59, %59 : vector<1x64xf32>
    %63 = arith.subf %61, %62 : vector<1x64xf32>
    %cst_17 = arith.constant 0.000000e+00 : f32
    %64 = vector.broadcast %cst_17 : f32 to vector<1x64xf32>
    %65 = arith.maximumf %63, %64 : vector<1x64xf32>
    %cst_18 = arith.constant 9.99999974E-6 : f32
    %66 = vector.broadcast %cst_18 : f32 to vector<1x64xf32>
    %67 = arith.addf %65, %66 : vector<1x64xf32>
    %68 = math.rsqrt %67 : vector<1x64xf32>
    %c0_19 = arith.constant 0 : index
    %c0_20 = arith.constant 0 : index
    %69 = vector.load %arg4[%c0_19, %c0_20] : memref<1x64xf32, #tpu.memory_space<vmem>>, vector<1x64xf32>
    %70 = arith.mulf %69, %68 : vector<1x64xf32>
    %c0_21 = arith.constant 0 : index
    %c0_22 = arith.constant 0 : index
    %71 = vector.load %arg5[%c0_21, %c0_22] : memref<1x64xf32, #tpu.memory_space<vmem>>, vector<1x64xf32>
    %72 = arith.mulf %59, %70 : vector<1x64xf32>
    %73 = arith.subf %71, %72 : vector<1x64xf32>
    %74 = tpu.concatenate %70, %70, %70, %70 in 1 : vector<1x64xf32>, vector<1x64xf32>, vector<1x64xf32>, vector<1x64xf32> -> vector<1x256xf32>
    %75 = tpu.concatenate %73, %73, %73, %73 in 1 : vector<1x64xf32>, vector<1x64xf32>, vector<1x64xf32>, vector<1x64xf32> -> vector<1x256xf32>
    %76 = vector.broadcast %74 : vector<1x256xf32> to vector<104x256xf32>
    %77 = arith.mulf %2, %76 : vector<104x256xf32>
    %78 = vector.broadcast %75 : vector<1x256xf32> to vector<104x256xf32>
    %79 = arith.addf %77, %78 : vector<104x256xf32>
    %cst_23 = arith.constant 0.000000e+00 : f32
    %80 = vector.broadcast %cst_23 : f32 to vector<104x256xf32>
    %81 = arith.maximumf %79, %80 : vector<104x256xf32>
    %82 = arith.truncf %81 : vector<104x256xf32> to vector<104x256xbf16>
    %c0_24 = arith.constant 0 : index
    %c0_25 = arith.constant 0 : index
    %83 = vector.load %arg6[%c0_24, %c0_25] : memref<104x256xbf16, #tpu.memory_space<vmem>>, vector<104x256xbf16>
    tpu.vector_store %arg6[%c0_24, %c0_25], %82 {strides = array<i32>} : memref<104x256xbf16, #tpu.memory_space<vmem>>, vector<104x256xbf16>,
    return
  }
  func.func @transform_0(%arg0: i32) -> (i32, i32) {
    %c0_i32 = arith.constant 0 : i32
    %c0_i32_0 = arith.constant 0 : i32
    %c0_i32_1 = arith.constant 0 : i32
    return %c0_i32, %c0_i32_0 : i32, i32
  }
  func.func @transform_1(%arg0: i32) -> (i32, i32) {
    %c0_i32 = arith.constant 0 : i32
    %c0_i32_0 = arith.constant 0 : i32
    %c0_i32_1 = arith.constant 0 : i32
    return %c0_i32, %c0_i32_0 : i32, i32
  }
  func.func @transform_2(%arg0: i32) -> (i32, i32) {
    %c0_i32 = arith.constant 0 : i32
    %c0_i32_0 = arith.constant 0 : i32
    %c0_i32_1 = arith.constant 0 : i32
    return %c0_i32, %c0_i32_0 : i32, i32
  }
  func.func @transform_3(%arg0: i32) -> (i32, i32) {
    %c0_i32 = arith.constant 0 : i32
    %c0_i32_0 = arith.constant 0 : i32
    %c0_i32_1 = arith.constant 0 : i32
    return %c0_i32, %c0_i32_0 : i32, i32
  }
  func.func @transform_4(%arg0: i32) -> (i32, i32) {
    %c0_i32 = arith.constant 0 : i32
    %c0_i32_0 = arith.constant 0 : i32
    %c0_i32_1 = arith.constant 0 : i32
    return %c0_i32, %c0_i32_0 : i32, i32
  }
  func.func @transform_5(%arg0: i32) -> (i32, i32) {
    %c0_i32 = arith.constant 0 : i32
    %c0_i32_0 = arith.constant 0 : i32
    %c0_i32_1 = arith.constant 0 : i32
    return %c0_i32, %c0_i32_0 : i32, i32
  }
}

module attributes {stable_mosaic.version = 11 : i64} {
  func.func @_matmul_bias_tanh_kernel(%arg0: i32, %arg1: memref<256x256xbf16, #tpu.memory_space<vmem>>, %arg2: memref<8x256xbf16, #tpu.memory_space<vmem>>, %arg3: memref<8x1xf32, #tpu.memory_space<vmem>>, %arg4: memref<8x256xf32, #tpu.memory_space<vmem>>) attributes {dimension_semantics = [#tpu.dimension_semantics<parallel>], iteration_bounds = array<i64: 2>, scalar_prefetch = 0 : i64, scratch_operands = 0 : i64, tpu.core_type = #tpu.core_type<tc>, window_params = [{transform_indices = @transform_0, window_bounds = array<i64: 256, 256>}, {pipeline_mode = #tpu.pipeline_mode<synchronous>, transform_indices = @transform_1, window_bounds = array<i64: 8, 256>}, {pipeline_mode = #tpu.pipeline_mode<synchronous>, transform_indices = @transform_2, window_bounds = array<i64: 8, 1>}, {transform_indices = @transform_3, window_bounds = array<i64: 8, 256>}]} {
    %c0 = arith.constant 0 : index
    %c0_0 = arith.constant 0 : index
    %0 = vector.load %arg2[%c0, %c0_0] : memref<8x256xbf16, #tpu.memory_space<vmem>>, vector<8x256xbf16>
    %c0_1 = arith.constant 0 : index
    %c0_2 = arith.constant 0 : index
    %1 = vector.load %arg1[%c0_1, %c0_2] : memref<256x256xbf16, #tpu.memory_space<vmem>>, vector<256x256xbf16>
    %cst = arith.constant dense<0.000000e+00> : vector<8x256xf32>
    %2 = tpu.matmul %0, %1, %cst {dimension_numbers = #tpu.dot_dimension_numbers<[1], [0], [0], [1], [0, 0, 1, 1], [], []>} : vector<8x256xbf16>, vector<256x256xbf16>, vector<8x256xf32> -> vector<8x256xf32>
    %c0_3 = arith.constant 0 : index
    %c0_4 = arith.constant 0 : index
    %3 = vector.load %arg3[%c0_3, %c0_4] : memref<8x1xf32, #tpu.memory_space<vmem>>, vector<8x1xf32>
    %4 = vector.broadcast %3 : vector<8x1xf32> to vector<8x256xf32>
    %5 = arith.addf %2, %4 : vector<8x256xf32>
    %6 = math.tanh %5 : vector<8x256xf32>
    %c0_5 = arith.constant 0 : index
    %c0_6 = arith.constant 0 : index
    %7 = vector.load %arg4[%c0_5, %c0_6] : memref<8x256xf32, #tpu.memory_space<vmem>>, vector<8x256xf32>
    tpu.vector_store %arg4[%c0_5, %c0_6], %6 {strides = array<i32>} : memref<8x256xf32, #tpu.memory_space<vmem>>, vector<8x256xf32>,
    return
  }
  func.func @transform_0(%arg0: i32) -> (i32, i32) {
    %c0_i32 = arith.constant 0 : i32
    %c0_i32_0 = arith.constant 0 : i32
    return %c0_i32, %arg0 : i32, i32
  }
  func.func @transform_1(%arg0: i32) -> (i32, i32) {
    %c0_i32 = arith.constant 0 : i32
    %c0_i32_0 = arith.constant 0 : i32
    %c0_i32_1 = arith.constant 0 : i32
    return %c0_i32, %c0_i32_0 : i32, i32
  }
  func.func @transform_2(%arg0: i32) -> (i32, i32) {
    %c0_i32 = arith.constant 0 : i32
    %c0_i32_0 = arith.constant 0 : i32
    %c0_i32_1 = arith.constant 0 : i32
    return %c0_i32, %c0_i32_0 : i32, i32
  }
  func.func @transform_3(%arg0: i32) -> (i32, i32) {
    %c0_i32 = arith.constant 0 : i32
    %c0_i32_0 = arith.constant 0 : i32
    return %c0_i32, %arg0 : i32, i32
  }
}

</mosaic_0001>

<llo_original>
// kernel: generator_forward.4
$region0: #{generator_forward.4}
  #allocation0 [shape = 'u32[]', space=smem, size = 0x4, offset = 0x4, fixed_abs, tag = 'smem constant byte address 0x4 - core index']
  #allocation1 [shape = 'u32[72,128]{1,0:T(1,128)}', space=vmem, size = 0x9000, scoped, tag = 'internal scratch']
  %s0 = inlined_call_operand.vmem [shape: f32[8,4], index: 0, kind: input, shape index: {}]
  %s1 = inlined_call_operand.vmem [shape: bf16[8,128], index: 1, kind: input, shape index: {}]
  %s2 = inlined_call_operand.vmem [shape: bf16[128,1024], index: 2, kind: input, shape index: {}]
  %s3 = inlined_call_operand.hbm [shape: f32[1,256], index: 3, kind: input, shape index: {}]
  %s4 = inlined_call_operand.hbm [shape: f32[1,256], index: 4, kind: input, shape index: {}]
  %s5 = inlined_call_operand.vmem [shape: bf16[8,1024], index: 5, kind: output, shape index: {}]
  %s6 = sld [smem:[#allocation0]]
  $region38: #{generator_forward.4} parent=0
    _
  %s8 = ssub.s32 1, %s6
  %s9 = scalar_select 0, %s8, %s6
  $region1: #{generator_forward.4} parent=0
    #allocation2 [shape = 'u8[1024]{0}', space=vmem, size = 0x400, scoped, tag = 'input window, operand 3, single buffered']
    #allocation3 [shape = 's32[1]{0}', space=sflag, size = 0x4, scoped, tag = 'scoped memory for generator_forward.4']
    #allocation4 [shape = 'u8[1024]{0}', space=vmem, size = 0x400, scoped, tag = 'input window, operand 4, single buffered']
    #allocation5 [shape = 's32[1]{0}', space=sflag, size = 0x4, scoped, tag = 'scoped memory for generator_forward.4']
    %10 = vsyncpa [#allocation3], 0
    %11 = vsyncpa [#allocation5], 0
    // Predicated region
    $region2: #{generator_forward.4} parent=1 // pred_check
      _
    $region3: #{generator_forward.4} parent=1 // pred_check_branch
      %13 = sbr.rel (0) target = $region5
    $region4: #{generator_forward.4} parent=1 // pred_region
      _
    $region5: #{generator_forward.4} parent=1 // pred_fallthru
      _
    // Predicated region
    $region6: #{generator_forward.4} parent=1 // pred_check
      _
    $region7: #{generator_forward.4} parent=1 // pred_check_branch
      %15 = sbr.rel (0) target = $region9
    $region8: #{generator_forward.4} parent=1 // pred_region
      _
    $region9: #{generator_forward.4} parent=1 // pred_fallthru
      _
    // Predicated region
    $region10: #{generator_forward.4} parent=1 // pred_check
      _
    $region11: #{generator_forward.4} parent=1 // pred_check_branch
      %17 = sbr.rel (0) target = $region13
    $region12: #{generator_forward.4} parent=1 // pred_region
      _
    $region13: #{generator_forward.4} parent=1 // pred_fallthru
      _
    // Predicated region
    $region14: #{generator_forward.4} parent=1 // pred_check
      _
    $region15: #{generator_forward.4} parent=1 // pred_check_branch
      %19 = sbr.rel (0) target = $region17
    $region16: #{generator_forward.4} parent=1 // pred_region
      %21 = vsyncadd [#allocation3], 0
      %s23 = sshll.u32 %s3, 4
      %s24 = int_to_ptr.hbm [resolvable:$true] %s23
      %s25 = sshll.u32 [#allocation2], 4
      %s26 = int_to_ptr.vmem [resolvable:$true] %s25
      %28 = dma.hbm_to_vmem [thread:$0]  %s24, 32, %s26, [#allocation3]
    $region17: #{generator_forward.4} parent=1 // pred_fallthru
      _
    // Predicated region
    $region18: #{generator_forward.4} parent=1 // pred_check
      _
    $region19: #{generator_forward.4} parent=1 // pred_check_branch
      %30 = sbr.rel (0) target = $region21
    $region20: #{generator_forward.4} parent=1 // pred_region
      %32 = vsyncadd [#allocation5], 0
      %s34 = sshll.u32 %s4, 4
      %s35 = int_to_ptr.hbm [resolvable:$true] %s34
      %s36 = sshll.u32 [#allocation4], 4
      %s37 = int_to_ptr.vmem [resolvable:$true] %s36
      %39 = dma.hbm_to_vmem [thread:$0]  %s35, 32, %s37, [#allocation5]
    $region21: #{generator_forward.4} parent=1 // pred_fallthru
      _
    // Predicated region
    $region22: #{generator_forward.4} parent=1 // pred_check
      _
    $region23: #{generator_forward.4} parent=1 // pred_check_branch
      %41 = sbr.rel (0) target = $region25
    $region24: #{generator_forward.4} parent=1 // pred_region
      %43 = dma.done [#allocation3], 32
    $region25: #{generator_forward.4} parent=1 // pred_fallthru
      _
    // Predicated region
    $region26: #{generator_forward.4} parent=1 // pred_check
      _
    $region27: #{generator_forward.4} parent=1 // pred_check_branch
      %45 = sbr.rel (0) target = $region29
    $region28: #{generator_forward.4} parent=1 // pred_region
      %47 = dma.done [#allocation5], 32
    $region29: #{generator_forward.4} parent=1 // pred_fallthru
      _
    %v48 = vld [vmem:[%s1] sm:$0xf]
    %v49 = vld [vmem:[%s2] sm:$0xff]
    %v50 = vld [vmem:[%s2 + $0x8] sm:$0xff]
    %v51 = vld [vmem:[%s2 + $0x10] sm:$0xff]
    %v52 = vld [vmem:[%s2 + $0x18] sm:$0xff]
    %v53 = vld [vmem:[%s2 + $0x20] sm:$0xff]
    %v54 = vld [vmem:[%s2 + $0x28] sm:$0xff]
    %v55 = vld [vmem:[%s2 + $0x30] sm:$0xff]
    %v56 = vld [vmem:[%s2 + $0x38] sm:$0xff]
    %v57 = vld [vmem:[%s2 + $0x40] sm:$0xff]
    %v58 = vld [vmem:[%s2 + $0x48] sm:$0xff]
    %v59 = vld [vmem:[%s2 + $0x50] sm:$0xff]
    %v60 = vld [vmem:[%s2 + $0x58] sm:$0xff]
    %v61 = vld [vmem:[%s2 + $0x60] sm:$0xff]
    %v62 = vld [vmem:[%s2 + $0x68] sm:$0xff]
    %v63 = vld [vmem:[%s2 + $0x70] sm:$0xff]
    %v64 = vld [vmem:[%s2 + $0x78] sm:$0xff]
    %v65 = vld [vmem:[%s2 + $0x80] sm:$0xff]
    %v66 = vld [vmem:[%s2 + $0x88] sm:$0xff]
    %v67 = vld [vmem:[%s2 + $0x90] sm:$0xff]
    %v68 = vld [vmem:[%s2 + $0x98] sm:$0xff]
    %v69 = vld [vmem:[%s2 + $0xa0] sm:$0xff]
    %v70 = vld [vmem:[%s2 + $0xa8] sm:$0xff]
    %v71 = vld [vmem:[%s2 + $0xb0] sm:$0xff]
    %v72 = vld [vmem:[%s2 + $0xb8] sm:$0xff]
    %v73 = vld [vmem:[%s2 + $0xc0] sm:$0xff]
    %v74 = vld [vmem:[%s2 + $0xc8] sm:$0xff]
    %v75 = vld [vmem:[%s2 + $0xd0] sm:$0xff]
    %v76 = vld [vmem:[%s2 + $0xd8] sm:$0xff]
    %v77 = vld [vmem:[%s2 + $0xe0] sm:$0xff]
    %v78 = vld [vmem:[%s2 + $0xe8] sm:$0xff]
    %v79 = vld [vmem:[%s2 + $0xf0] sm:$0xff]
    %v80 = vld [vmem:[%s2 + $0xf8] sm:$0xff]
    %v81 = vld [vmem:[%s2 + $0x100] sm:$0xff]
    %v82 = vld [vmem:[%s2 + $0x108] sm:$0xff]
    %v83 = vld [vmem:[%s2 + $0x110] sm:$0xff]
    %v84 = vld [vmem:[%s2 + $0x118] sm:$0xff]
    %v85 = vld [vmem:[%s2 + $0x120] sm:$0xff]
    %v86 = vld [vmem:[%s2 + $0x128] sm:$0xff]
    %v87 = vld [vmem:[%s2 + $0x130] sm:$0xff]
    %v88 = vld [vmem:[%s2 + $0x138] sm:$0xff]
    %v89 = vld [vmem:[%s2 + $0x140] sm:$0xff]
    %v90 = vld [vmem:[%s2 + $0x148] sm:$0xff]
    %v91 = vld [vmem:[%s2 + $0x150] sm:$0xff]
    %v92 = vld [vmem:[%s2 + $0x158] sm:$0xff]
    %v93 = vld [vmem:[%s2 + $0x160] sm:$0xff]
    %v94 = vld [vmem:[%s2 + $0x168] sm:$0xff]
    %v95 = vld [vmem:[%s2 + $0x170] sm:$0xff]
    %v96 = vld [vmem:[%s2 + $0x178] sm:$0xff]
    %v97 = vld [vmem:[%s2 + $0x180] sm:$0xff]
    %v98 = vld [vmem:[%s2 + $0x188] sm:$0xff]
    %v99 = vld [vmem:[%s2 + $0x190] sm:$0xff]
    %v100 = vld [vmem:[%s2 + $0x198] sm:$0xff]
    %v101 = vld [vmem:[%s2 + $0x1a0] sm:$0xff]
    %v102 = vld [vmem:[%s2 + $0x1a8] sm:$0xff]
    %v103 = vld [vmem:[%s2 + $0x1b0] sm:$0xff]
    %v104 = vld [vmem:[%s2 + $0x1b8] sm:$0xff]
    %v105 = vld [vmem:[%s2 + $0x1c0] sm:$0xff]
    %v106 = vld [vmem:[%s2 + $0x1c8] sm:$0xff]
    %v107 = vld [vmem:[%s2 + $0x1d0] sm:$0xff]
    %v108 = vld [vmem:[%s2 + $0x1d8] sm:$0xff]
    %v109 = vld [vmem:[%s2 + $0x1e0] sm:$0xff]
    %v110 = vld [vmem:[%s2 + $0x1e8] sm:$0xff]
    %v111 = vld [vmem:[%s2 + $0x1f0] sm:$0xff]
    %v112 = vld [vmem:[%s2 + $0x1f8] sm:$0xff]
    %v177 = vunpack.c.l.b16 %v49
    %v178 = vunpack.c.h.b16 %v49
    %v179 = vunpack.c.l.b16 %v50
    %v180 = vunpack.c.h.b16 %v50
    %v181 = vunpack.c.l.b16 %v51
    %v182 = vunpack.c.h.b16 %v51
    %v183 = vunpack.c.l.b16 %v52
    %v184 = vunpack.c.h.b16 %v52
    %v185 = vunpack.c.l.b16 %v53
    %v186 = vunpack.c.h.b16 %v53
    %v187 = vunpack.c.l.b16 %v54
    %v188 = vunpack.c.h.b16 %v54
    %v189 = vunpack.c.l.b16 %v55
    %v190 = vunpack.c.h.b16 %v55
    %v191 = vunpack.c.l.b16 %v56
    %v192 = vunpack.c.h.b16 %v56
    %v193 = vunpack.c.l.b16 %v57
    %v194 = vunpack.c.h.b16 %v57
    %v195 = vunpack.c.l.b16 %v58
    %v196 = vunpack.c.h.b16 %v58
    %v197 = vunpack.c.l.b16 %v59
    %v198 = vunpack.c.h.b16 %v59
    %v199 = vunpack.c.l.b16 %v60
    %v200 = vunpack.c.h.b16 %v60
    %v201 = vunpack.c.l.b16 %v61
    %v202 = vunpack.c.h.b16 %v61
    %v203 = vunpack.c.l.b16 %v62
    %v204 = vunpack.c.h.b16 %v62
    %v205 = vunpack.c.l.b16 %v63
    %v206 = vunpack.c.h.b16 %v63
    %v207 = vunpack.c.l.b16 %v64
    %v208 = vunpack.c.h.b16 %v64
    %v209 = vunpack.c.l.b16 %v65
    %v210 = vunpack.c.h.b16 %v65
    %v211 = vunpack.c.l.b16 %v66
    %v212 = vunpack.c.h.b16 %v66
    %v213 = vunpack.c.l.b16 %v67
    %v214 = vunpack.c.h.b16 %v67
    %v215 = vunpack.c.l.b16 %v68
    %v216 = vunpack.c.h.b16 %v68
    %v217 = vunpack.c.l.b16 %v69
    %v218 = vunpack.c.h.b16 %v69
    %v219 = vunpack.c.l.b16 %v70
    %v220 = vunpack.c.h.b16 %v70
    %v221 = vunpack.c.l.b16 %v71
    %v222 = vunpack.c.h.b16 %v71
    %v223 = vunpack.c.l.b16 %v72
    %v224 = vunpack.c.h.b16 %v72
    %v225 = vunpack.c.l.b16 %v73
    %v226 = vunpack.c.h.b16 %v73
    %v227 = vunpack.c.l.b16 %v74
    %v228 = vunpack.c.h.b16 %v74
    %v229 = vunpack.c.l.b16 %v75
    %v230 = vunpack.c.h.b16 %v75
    %v231 = vunpack.c.l.b16 %v76
    %v232 = vunpack.c.h.b16 %v76
    %v233 = vunpack.c.l.b16 %v77
    %v234 = vunpack.c.h.b16 %v77
    %v235 = vunpack.c.l.b16 %v78
    %v236 = vunpack.c.h.b16 %v78
    %v237 = vunpack.c.l.b16 %v79
    %v238 = vunpack.c.h.b16 %v79
    %v239 = vunpack.c.l.b16 %v80
    %v240 = vunpack.c.h.b16 %v80
    %v241 = vunpack.c.l.b16 %v81
    %v242 = vunpack.c.h.b16 %v81
    %v243 = vunpack.c.l.b16 %v82
    %v244 = vunpack.c.h.b16 %v82
    %v245 = vunpack.c.l.b16 %v83
    %v246 = vunpack.c.h.b16 %v83
    %v247 = vunpack.c.l.b16 %v84
    %v248 = vunpack.c.h.b16 %v84
    %v249 = vunpack.c.l.b16 %v85
    %v250 = vunpack.c.h.b16 %v85
    %v251 = vunpack.c.l.b16 %v86
    %v252 = vunpack.c.h.b16 %v86
    %v253 = vunpack.c.l.b16 %v87
    %v254 = vunpack.c.h.b16 %v87
    %v255 = vunpack.c.l.b16 %v88
    %v256 = vunpack.c.h.b16 %v88
    %v257 = vunpack.c.l.b16 %v89
    %v258 = vunpack.c.h.b16 %v89
    %v259 = vunpack.c.l.b16 %v90
    %v260 = vunpack.c.h.b16 %v90
    %v261 = vunpack.c.l.b16 %v91
    %v262 = vunpack.c.h.b16 %v91
    %v263 = vunpack.c.l.b16 %v92
    %v264 = vunpack.c.h.b16 %v92
    %v265 = vunpack.c.l.b16 %v93
    %v266 = vunpack.c.h.b16 %v93
    %v267 = vunpack.c.l.b16 %v94
    %v268 = vunpack.c.h.b16 %v94
    %v269 = vunpack.c.l.b16 %v95
    %v270 = vunpack.c.h.b16 %v95
    %v271 = vunpack.c.l.b16 %v96
    %v272 = vunpack.c.h.b16 %v96
    %v273 = vunpack.c.l.b16 %v97
    %v274 = vunpack.c.h.b16 %v97
    %v275 = vunpack.c.l.b16 %v98
    %v276 = vunpack.c.h.b16 %v98
    %v277 = vunpack.c.l.b16 %v99
    %v278 = vunpack.c.h.b16 %v99
    %v279 = vunpack.c.l.b16 %v100
    %v280 = vunpack.c.h.b16 %v100
    %v281 = vunpack.c.l.b16 %v101
    %v282 = vunpack.c.h.b16 %v101
    %v283 = vunpack.c.l.b16 %v102
    %v284 = vunpack.c.h.b16 %v102
    %v285 = vunpack.c.l.b16 %v103
    %v286 = vunpack.c.h.b16 %v103
    %v287 = vunpack.c.l.b16 %v104
    %v288 = vunpack.c.h.b16 %v104
    %v289 = vunpack.c.l.b16 %v105
    %v290 = vunpack.c.h.b16 %v105
    %v291 = vunpack.c.l.b16 %v106
    %v292 = vunpack.c.h.b16 %v106
    %v293 = vunpack.c.l.b16 %v107
    %v294 = vunpack.c.h.b16 %v107
    %v295 = vunpack.c.l.b16 %v108
    %v296 = vunpack.c.h.b16 %v108
    %v297 = vunpack.c.l.b16 %v109
    %v298 = vunpack.c.h.b16 %v109
    %v299 = vunpack.c.l.b16 %v110
    %v300 = vunpack.c.h.b16 %v110
    %v301 = vunpack.c.l.b16 %v111
    %v302 = vunpack.c.h.b16 %v111
    %v303 = vunpack.c.l.b16 %v112
    %v304 = vunpack.c.h.b16 %v112
    %v305 = vpack.c.b16 %v185, %v177
    %v306 = vpack.c.b16 %v186, %v178
    %v307 = vpack.c.b16 %v187, %v179
    %v308 = vpack.c.b16 %v188, %v180
    %v309 = vpack.c.b16 %v189, %v181
    %v310 = vpack.c.b16 %v190, %v182
    %v311 = vpack.c.b16 %v191, %v183
    %v312 = vpack.c.b16 %v192, %v184
    %v313 = vpack.c.b16 %v201, %v193
    %v314 = vpack.c.b16 %v202, %v194
    %v315 = vpack.c.b16 %v203, %v195
    %v316 = vpack.c.b16 %v204, %v196
    %v317 = vpack.c.b16 %v205, %v197
    %v318 = vpack.c.b16 %v206, %v198
    %v319 = vpack.c.b16 %v207, %v199
    %v320 = vpack.c.b16 %v208, %v200
    %v321 = vpack.c.b16 %v217, %v209
    %v322 = vpack.c.b16 %v218, %v210
    %v323 = vpack.c.b16 %v219, %v211
    %v324 = vpack.c.b16 %v220, %v212
    %v325 = vpack.c.b16 %v221, %v213
    %v326 = vpack.c.b16 %v222, %v214
    %v327 = vpack.c.b16 %v223, %v215
    %v328 = vpack.c.b16 %v224, %v216
    %v329 = vpack.c.b16 %v233, %v225
    %v330 = vpack.c.b16 %v234, %v226
    %v331 = vpack.c.b16 %v235, %v227
    %v332 = vpack.c.b16 %v236, %v228
    %v333 = vpack.c.b16 %v237, %v229
    %v334 = vpack.c.b16 %v238, %v230
    %v335 = vpack.c.b16 %v239, %v231
    %v336 = vpack.c.b16 %v240, %v232
    %v337 = vpack.c.b16 %v249, %v241
    %v338 = vpack.c.b16 %v250, %v242
    %v339 = vpack.c.b16 %v251, %v243
    %v340 = vpack.c.b16 %v252, %v244
    %v341 = vpack.c.b16 %v253, %v245
    %v342 = vpack.c.b16 %v254, %v246
    %v343 = vpack.c.b16 %v255, %v247
    %v344 = vpack.c.b16 %v256, %v248
    %v345 = vpack.c.b16 %v265, %v257
    %v346 = vpack.c.b16 %v266, %v258
    %v347 = vpack.c.b16 %v267, %v259
    %v348 = vpack.c.b16 %v268, %v260
    %v349 = vpack.c.b16 %v269, %v261
    %v350 = vpack.c.b16 %v270, %v262
    %v351 = vpack.c.b16 %v271, %v263
    %v352 = vpack.c.b16 %v272, %v264
    %v353 = vpack.c.b16 %v281, %v273
    %v354 = vpack.c.b16 %v282, %v274
    %v355 = vpack.c.b16 %v283, %v275
    %v356 = vpack.c.b16 %v284, %v276
    %v357 = vpack.c.b16 %v285, %v277
    %v358 = vpack.c.b16 %v286, %v278
    %v359 = vpack.c.b16 %v287, %v279
    %v360 = vpack.c.b16 %v288, %v280
    %v361 = vpack.c.b16 %v297, %v289
    %v362 = vpack.c.b16 %v298, %v290
    %v363 = vpack.c.b16 %v299, %v291
    %v364 = vpack.c.b16 %v300, %v292
    %v365 = vpack.c.b16 %v301, %v293
    %v366 = vpack.c.b16 %v302, %v294
    %v367 = vpack.c.b16 %v303, %v295
    %v368 = vpack.c.b16 %v304, %v296
    %433 = vmatpush.bf16.msra.mxu0 %v361
    %434 = vmatpush.bf16.msra.mxu0 %v353
    %435 = vmatpush.bf16.msra.mxu0 %v345
    %436 = vmatpush.bf16.msra.mxu0 %v337
    %437 = vmatpush.bf16.msra.mxu0 %v329
    %438 = vmatpush.bf16.msra.mxu0 %v321
    %439 = vmatpush.bf16.msra.mxu0 %v313
    %440 = vmatpush.bf16.msra.mxu0 %v305
    %441 = vmatmul.bf16.gmra.mxu0 %v48
    %v442 = vpop.f32.mrf.mxu0
    %v443 = vadd.f32 0.0, %v442
    %v444 = vpop.f32.mrf.mxu0
    %445 = vdwg.mxu0
    %446 = vmatpush.bf16.msra.mxu0 %v362
    %447 = vmatpush.bf16.msra.mxu0 %v354
    %448 = vmatpush.bf16.msra.mxu0 %v346
    %449 = vmatpush.bf16.msra.mxu0 %v338
    %450 = vmatpush.bf16.msra.mxu0 %v330
    %451 = vmatpush.bf16.msra.mxu0 %v322
    %452 = vmatpush.bf16.msra.mxu0 %v314
    %453 = vmatpush.bf16.msra.mxu0 %v306
    %454 = vmatmul.bf16.gmra.mxu0 %v48
    %v455 = vpop.f32.mrf.mxu0
    %v456 = vadd.f32 0.0, %v455
    %v457 = vpop.f32.mrf.mxu0
    %458 = vdwg.mxu0
    %459 = vmatpush.bf16.msra.mxu0 %v363
    %460 = vmatpush.bf16.msra.mxu0 %v355
    %461 = vmatpush.bf16.msra.mxu0 %v347
    %462 = vmatpush.bf16.msra.mxu0 %v339
    %463 = vmatpush.bf16.msra.mxu0 %v331
    %464 = vmatpush.bf16.msra.mxu0 %v323
    %465 = vmatpush.bf16.msra.mxu0 %v315
    %466 = vmatpush.bf16.msra.mxu0 %v307
    %467 = vmatmul.bf16.gmra.mxu0 %v48
    %v468 = vpop.f32.mrf.mxu0
    %v469 = vadd.f32 0.0, %v468
    %v470 = vpop.f32.mrf.mxu0
    %471 = vdwg.mxu0
    %472 = vmatpush.bf16.msra.mxu0 %v364
    %473 = vmatpush.bf16.msra.mxu0 %v356
    %474 = vmatpush.bf16.msra.mxu0 %v348
    %475 = vmatpush.bf16.msra.mxu0 %v340
    %476 = vmatpush.bf16.msra.mxu0 %v332
    %477 = vmatpush.bf16.msra.mxu0 %v324
    %478 = vmatpush.bf16.msra.mxu0 %v316
    %479 = vmatpush.bf16.msra.mxu0 %v308
    %480 = vmatmul.bf16.gmra.mxu0 %v48
    %v481 = vpop.f32.mrf.mxu0
    %v482 = vadd.f32 0.0, %v481
    %v483 = vpop.f32.mrf.mxu0
    %484 = vdwg.mxu0
    %485 = vmatpush.bf16.msra.mxu0 %v365
    %486 = vmatpush.bf16.msra.mxu0 %v357
    %487 = vmatpush.bf16.msra.mxu0 %v349
    %488 = vmatpush.bf16.msra.mxu0 %v341
    %489 = vmatpush.bf16.msra.mxu0 %v333
    %490 = vmatpush.bf16.msra.mxu0 %v325
    %491 = vmatpush.bf16.msra.mxu0 %v317
    %492 = vmatpush.bf16.msra.mxu0 %v309
    %493 = vmatmul.bf16.gmra.mxu0 %v48
    %v494 = vpop.f32.mrf.mxu0
    %v495 = vadd.f32 0.0, %v494
    %v496 = vpop.f32.mrf.mxu0
    %497 = vdwg.mxu0
    %498 = vmatpush.bf16.msra.mxu0 %v366
    %499 = vmatpush.bf16.msra.mxu0 %v358
    %500 = vmatpush.bf16.msra.mxu0 %v350
    %501 = vmatpush.bf16.msra.mxu0 %v342
    %502 = vmatpush.bf16.msra.mxu0 %v334
    %503 = vmatpush.bf16.msra.mxu0 %v326
    %504 = vmatpush.bf16.msra.mxu0 %v318
    %505 = vmatpush.bf16.msra.mxu0 %v310
    %506 = vmatmul.bf16.gmra.mxu0 %v48
    %v507 = vpop.f32.mrf.mxu0
    %v508 = vadd.f32 0.0, %v507
    %v509 = vpop.f32.mrf.mxu0
    %510 = vdwg.mxu0
    %511 = vmatpush.bf16.msra.mxu0 %v367
    %512 = vmatpush.bf16.msra.mxu0 %v359
    %513 = vmatpush.bf16.msra.mxu0 %v351
    %514 = vmatpush.bf16.msra.mxu0 %v343
    %515 = vmatpush.bf16.msra.mxu0 %v335
    %516 = vmatpush.bf16.msra.mxu0 %v327
    %517 = vmatpush.bf16.msra.mxu0 %v319
    %518 = vmatpush.bf16.msra.mxu0 %v311
    %519 = vmatmul.bf16.gmra.mxu0 %v48
    %v520 = vpop.f32.mrf.mxu0
    %v521 = vadd.f32 0.0, %v520
    %v522 = vpop.f32.mrf.mxu0
    %523 = vdwg.mxu0
    %524 = vmatpush.bf16.msra.mxu0 %v368
    %525 = vmatpush.bf16.msra.mxu0 %v360
    %526 = vmatpush.bf16.msra.mxu0 %v352
    %527 = vmatpush.bf16.msra.mxu0 %v344
    %528 = vmatpush.bf16.msra.mxu0 %v336
    %529 = vmatpush.bf16.msra.mxu0 %v328
    %530 = vmatpush.bf16.msra.mxu0 %v320
    %531 = vmatpush.bf16.msra.mxu0 %v312
    %532 = vmatmul.bf16.gmra.mxu0 %v48
    %v533 = vpop.f32.mrf.mxu0
    %v534 = vadd.f32 0.0, %v533
    %v535 = vpop.f32.mrf.mxu0
    %536 = vdwg.mxu0
    %v537 = vld [vmem:[%s0] sm:$0xff]
    %539 = vset.pattern.permute.xlu0 0
    %540 = vperm.xlu0 %539, %v537
    %v541 = vpop.permute.xlu0 %540
    %v543 = vmul.f32 %v443, %v541
    %v544 = vmul.f32 %v456, %v541
    %v545 = vrot.slane %v543, 4
    %v546 = vadd.f32 %v543, %v545
    %v547 = vrot.slane %v546, 2
    %v548 = vadd.f32 %v546, %v547
    %v549 = vrot.slane %v548, 1
    %v550 = vadd.f32 %v548, %v549
    %v551 = vrot.slane %v544, 4
    %v552 = vadd.f32 %v544, %v551
    %v553 = vrot.slane %v552, 2
    %v554 = vadd.f32 %v552, %v553
    %v555 = vrot.slane %v554, 1
    %v556 = vadd.f32 %v554, %v555
    %v557 = vadd.f32 %v550, 0.0
    %v558 = vadd.f32 %v556, 0.0
    %v559 = vmul.f32 %v443, %v443
    %v560 = vmul.f32 %v456, %v456
    %v561 = vmul.f32 %v559, %v541
    %v562 = vmul.f32 %v560, %v541
    %v563 = vrot.slane %v561, 4
    %v564 = vadd.f32 %v561, %v563
    %v565 = vrot.slane %v564, 2
    %v566 = vadd.f32 %v564, %v565
    %v567 = vrot.slane %v566, 1
    %v568 = vadd.f32 %v566, %v567
    %v569 = vrot.slane %v562, 4
    %v570 = vadd.f32 %v562, %v569
    %v571 = vrot.slane %v570, 2
    %v572 = vadd.f32 %v570, %v571
    %v573 = vrot.slane %v572, 1
    %v574 = vadd.f32 %v572, %v573
    %v575 = vadd.f32 %v568, 0.0
    %v576 = vadd.f32 %v574, 0.0
    %577 = vset.pattern.permute.xlu0 1
    %578 = vperm.xlu0 %577, %v537
    %v579 = vpop.permute.xlu0 %578
    %v581 = vmul.f32 %v469, %v579
    %v582 = vmul.f32 %v482, %v579
    %v583 = vrot.slane %v581, 4
    %v584 = vadd.f32 %v581, %v583
    %v585 = vrot.slane %v584, 2
    %v586 = vadd.f32 %v584, %v585
    %v587 = vrot.slane %v586, 1
    %v588 = vadd.f32 %v586, %v587
    %v589 = vrot.slane %v582, 4
    %v590 = vadd.f32 %v582, %v589
    %v591 = vrot.slane %v590, 2
    %v592 = vadd.f32 %v590, %v591
    %v593 = vrot.slane %v592, 1
    %v594 = vadd.f32 %v592, %v593
    %v595 = vadd.f32 %v557, %v588
    %v596 = vadd.f32 %v558, %v594
    %v597 = vmul.f32 %v469, %v469
    %v598 = vmul.f32 %v482, %v482
    %v599 = vmul.f32 %v597, %v579
    %v600 = vmul.f32 %v598, %v579
    %v601 = vrot.slane %v599, 4
    %v602 = vadd.f32 %v599, %v601
    %v603 = vrot.slane %v602, 2
    %v604 = vadd.f32 %v602, %v603
    %v605 = vrot.slane %v604, 1
    %v606 = vadd.f32 %v604, %v605
    %v607 = vrot.slane %v600, 4
    %v608 = vadd.f32 %v600, %v607
    %v609 = vrot.slane %v608, 2
    %v610 = vadd.f32 %v608, %v609
    %v611 = vrot.slane %v610, 1
    %v612 = vadd.f32 %v610, %v611
    %v613 = vadd.f32 %v575, %v606
    %v614 = vadd.f32 %v576, %v612
    %615 = vset.pattern.permute.xlu0 2
    %616 = vperm.xlu0 %615, %v537
    %v617 = vpop.permute.xlu0 %616
    %v619 = vmul.f32 %v495, %v617
    %v620 = vmul.f32 %v508, %v617
    %v621 = vrot.slane %v619, 4
    %v622 = vadd.f32 %v619, %v621
    %v623 = vrot.slane %v622, 2
    %v624 = vadd.f32 %v622, %v623
    %v625 = vrot.slane %v624, 1
    %v626 = vadd.f32 %v624, %v625
    %v627 = vrot.slane %v620, 4
    %v628 = vadd.f32 %v620, %v627
    %v629 = vrot.slane %v628, 2
    %v630 = vadd.f32 %v628, %v629
    %v631 = vrot.slane %v630, 1
    %v632 = vadd.f32 %v630, %v631
    %v633 = vadd.f32 %v595, %v626
    %v634 = vadd.f32 %v596, %v632
    %v635 = vmul.f32 %v495, %v495
    %v636 = vmul.f32 %v508, %v508
    %v637 = vmul.f32 %v635, %v617
    %v638 = vmul.f32 %v636, %v617
    %v639 = vrot.slane %v637, 4
    %v640 = vadd.f32 %v637, %v639
    %v641 = vrot.slane %v640, 2
    %v642 = vadd.f32 %v640, %v641
    %v643 = vrot.slane %v642, 1
    %v644 = vadd.f32 %v642, %v643
    %v645 = vrot.slane %v638, 4
    %v646 = vadd.f32 %v638, %v645
    %v647 = vrot.slane %v646, 2
    %v648 = vadd.f32 %v646, %v647
    %v649 = vrot.slane %v648, 1
    %v650 = vadd.f32 %v648, %v649
    %v651 = vadd.f32 %v613, %v644
    %v652 = vadd.f32 %v614, %v650
    %653 = vset.pattern.permute.xlu0 3
    %654 = vperm.xlu0 %653, %v537
    %v655 = vpop.permute.xlu0 %654
    %v657 = vmul.f32 %v521, %v655
    %v658 = vmul.f32 %v534, %v655
    %v659 = vrot.slane %v657, 4
    %v660 = vadd.f32 %v657, %v659
    %v661 = vrot.slane %v660, 2
    %v662 = vadd.f32 %v660, %v661
    %v663 = vrot.slane %v662, 1
    %v664 = vadd.f32 %v662, %v663
    %v665 = vrot.slane %v658, 4
    %v666 = vadd.f32 %v658, %v665
    %v667 = vrot.slane %v666, 2
    %v668 = vadd.f32 %v666, %v667
    %v669 = vrot.slane %v668, 1
    %v670 = vadd.f32 %v668, %v669
    %v671 = vadd.f32 %v633, %v664
    %v672 = vadd.f32 %v634, %v670
    %v673 = vmul.f32 %v521, %v521
    %v674 = vmul.f32 %v534, %v534
    %v675 = vmul.f32 %v673, %v655
    %v676 = vmul.f32 %v674, %v655
    %v677 = vrot.slane %v675, 4
    %v678 = vadd.f32 %v675, %v677
    %v679 = vrot.slane %v678, 2
    %v680 = vadd.f32 %v678, %v679
    %v681 = vrot.slane %v680, 1
    %v682 = vadd.f32 %v680, %v681
    %v683 = vrot.slane %v676, 4
    %v684 = vadd.f32 %v676, %v683
    %v685 = vrot.slane %v684, 2
    %v686 = vadd.f32 %v684, %v685
    %v687 = vrot.slane %v686, 1
    %v688 = vadd.f32 %v686, %v687
    %v689 = vadd.f32 %v651, %v682
    %v690 = vadd.f32 %v652, %v688
    %v691 = vrcp.pop 18.0
    %v692 = vmul.f32 18.0, %v691
    %v693 = vsub.f32 1.0, %v692
    %v694 = vmul.f32 %v691, %v693
    %v695 = vadd.f32 %v691, %v694
    %vm696 = vweird.f32 %v691
    %v697 = vsel %vm696, %v691, %v695
    %v698 = vmul.f32 %v671, %v697
    %v699 = vmul.f32 %v672, %v697
    %v700 = vmul.f32 %v689, %v697
    %v701 = vmul.f32 %v690, %v697
    %v702 = vmul.f32 %v698, %v698
    %v703 = vmul.f32 %v699, %v699
    %v704 = vsub.f32 %v700, %v702
    %v705 = vsub.f32 %v701, %v703
    %v706 = vmax.f32 %v704, 0.0
    %v707 = vmax.f32 %v705, 0.0
    %v708 = vadd.f32 %v706, 1e-05
    %v709 = vadd.f32 %v707, 1e-05
    %v710 = vrsqrt.pop %v708
    %v711 = vmul.f32 %v710, %v708
    %v712 = vmul.f32 %v711, %v710
    %v713 = vmul.f32 0.5, %v712
    %v714 = vsub.f32 1.5, %v713
    %v715 = vmul.f32 %v710, %v714
    %vm716 = vweird.f32 %v708
    %vm717 = vweird.f32 %v710
    %vm718 = vmor %vm716, %vm717
    %v719 = vsel %vm718, %v710, %v715
    %v720 = vrsqrt.pop %v709
    %v721 = vmul.f32 %v720, %v709
    %v722 = vmul.f32 %v721, %v720
    %v723 = vmul.f32 0.5, %v722
    %v724 = vsub.f32 1.5, %v723
    %v725 = vmul.f32 %v720, %v724
    %vm726 = vweird.f32 %v709
    %vm727 = vweird.f32 %v720
    %vm728 = vmor %vm726, %vm727
    %v729 = vsel %vm728, %v720, %v725
    %v730 = vld [vmem:[#allocation2] sm:$0x3]
    %v733 = vrot.slane %v729, 7
    %vm734 = vcmask 1040384
    %v735 = vsel %vm734, %v719, %v733
    %v737 = vmul.f32 %v730, %v735
    %v738 = vld [vmem:[#allocation4] sm:$0x3]
    %v740 = vperm.slane %v737, 0
    %v741 = vperm.slane %v737, 1
    %v744 = vmul.f32 %v698, %v740
    %v745 = vmul.f32 %v699, %v741
    %v748 = vrot.slane %v745, 7
    %v749 = vsel %vm734, %v744, %v748
    %v751 = vsub.f32 %v738, %v749
    %v753 = vperm.slane %v751, 0
    %v754 = vperm.slane %v751, 1
    %v757 = vperm.slane %v740, 0
    %v758 = vperm.slane %v741, 0
    %v759 = vmul.f32 %v443, %v757
    %v760 = vmul.f32 %v456, %v758
    %v761 = vmul.f32 %v469, %v757
    %v762 = vmul.f32 %v482, %v758
    %v763 = vmul.f32 %v495, %v757
    %v764 = vmul.f32 %v508, %v758
    %v765 = vmul.f32 %v521, %v757
    %v766 = vmul.f32 %v534, %v758
    %v767 = vperm.slane %v753, 0
    %v768 = vperm.slane %v754, 0
    %v769 = vadd.f32 %v759, %v767
    %v770 = vadd.f32 %v760, %v768
    %v771 = vadd.f32 %v761, %v767
    %v772 = vadd.f32 %v762, %v768
    %v773 = vadd.f32 %v763, %v767
    %v774 = vadd.f32 %v764, %v768
    %v775 = vadd.f32 %v765, %v767
    %v776 = vadd.f32 %v766, %v768
    %v777 = vmax.f32 %v769, 0.0
    %v778 = vmax.f32 %v770, 0.0
    %v779 = vmax.f32 %v771, 0.0
    %v780 = vmax.f32 %v772, 0.0
    %v781 = vmax.f32 %v773, 0.0
    %v782 = vmax.f32 %v774, 0.0
    %v783 = vmax.f32 %v775, 0.0
    %v784 = vmax.f32 %v776, 0.0
    %v785 = vpack.c.bf16 %v778, %v777
    %v786 = vpack.c.bf16 %v780, %v779
    %v787 = vpack.c.bf16 %v782, %v781
    %v788 = vpack.c.bf16 %v784, %v783
    %789 = vst [vmem:[%s5] sm:$0xff] %v785
    %790 = vst [vmem:[%s5 + $0x8] sm:$0xff] %v786
    %791 = vst [vmem:[%s5 + $0x10] sm:$0xff] %v787
    %792 = vst [vmem:[%s5 + $0x18] sm:$0xff] %v788
    // Predicated region
    $region30: #{generator_forward.4} parent=1 // pred_check
      _
    $region31: #{generator_forward.4} parent=1 // pred_check_branch
      %794 = sbr.rel (0) target = $region33
    $region32: #{generator_forward.4} parent=1 // pred_region
      _
    $region33: #{generator_forward.4} parent=1 // pred_fallthru
      _
    // Predicated region
    $region34: #{generator_forward.4} parent=1 // pred_check
      _
    $region35: #{generator_forward.4} parent=1 // pred_check_branch
      %796 = sbr.rel (0) target = $region37
    $region36: #{generator_forward.4} parent=1 // pred_region
      _
    $region37: #{generator_forward.4} parent=1 // pred_fallthru
      _
    %797 = vsyncpa [#allocation3], 1
    %798 = vsyncpa [#allocation5], 1

// kernel: generator_forward.5
$region0: #{generator_forward.5}
  #allocation0 [shape = 'u32[]', space=smem, size = 0x4, offset = 0x4, fixed_abs, tag = 'smem constant byte address 0x4 - core index']
  #allocation1 [shape = 'u32[72,128]{1,0:T(1,128)}', space=vmem, size = 0x9000, scoped, tag = 'internal scratch']
  %s0 = inlined_call_operand.vmem [shape: f32[72,1], index: 0, kind: input, shape index: {}]
  %s1 = inlined_call_operand.vmem [shape: bf16[72,4096], index: 1, kind: input, shape index: {}]
  %s2 = inlined_call_operand.vmem [shape: bf16[4096,128], index: 2, kind: input, shape index: {}]
  %s3 = inlined_call_operand.vmem [shape: f32[1,128], index: 3, kind: input, shape index: {}]
  %s4 = inlined_call_operand.vmem [shape: f32[1,128], index: 4, kind: input, shape index: {}]
  %s5 = inlined_call_operand.vmem [shape: bf16[72,128], index: 5, kind: output, shape index: {}]
  %s6 = sld [smem:[#allocation0]]
  $region30: #{generator_forward.5} parent=0
    _
  %s8 = ssub.s32 1, %s6
  %s9 = scalar_select 0, %s8, %s6
  // Predicated region
  $region2: #{generator_forward.5} parent=0 // pred_check
    _
  $region3: #{generator_forward.5} parent=0 // pred_check_branch
    %11 = sbr.rel (0) target = $region5
  $region4: #{generator_forward.5} parent=0 // pred_region
    _
  $region5: #{generator_forward.5} parent=0 // pred_fallthru
    _
  // Predicated region
  $region6: #{generator_forward.5} parent=0 // pred_check
    _
  $region7: #{generator_forward.5} parent=0 // pred_check_branch
    %13 = sbr.rel (0) target = $region9
  $region8: #{generator_forward.5} parent=0 // pred_region
    _
  $region9: #{generator_forward.5} parent=0 // pred_fallthru
    _
  // Predicated region
  $region10: #{generator_forward.5} parent=0 // pred_check
    _
  $region11: #{generator_forward.5} parent=0 // pred_check_branch
    %15 = sbr.rel (0) target = $region13
  $region12: #{generator_forward.5} parent=0 // pred_region
    _
  $region13: #{generator_forward.5} parent=0 // pred_fallthru
    _
  // Predicated region
  $region14: #{generator_forward.5} parent=0 // pred_check
    _
  $region15: #{generator_forward.5} parent=0 // pred_check_branch
    %17 = sbr.rel (0) target = $region17
  $region16: #{generator_forward.5} parent=0 // pred_region
    _
  $region17: #{generator_forward.5} parent=0 // pred_fallthru
    _
  // Predicated region
  $region18: #{generator_forward.5} parent=0 // pred_check
    _
  $region19: #{generator_forward.5} parent=0 // pred_check_branch
    %19 = sbr.rel (0) target = $region21
  $region20: #{generator_forward.5} parent=0 // pred_region
    _
  $region21: #{generator_forward.5} parent=0 // pred_fallthru
    _
  %v20 = vld [vmem:[%s1] sm:$0xff]
  %v21 = vld [vmem:[%s1 + $0x8] sm:$0xff]
  %v22 = vld [vmem:[%s1 + $0x10] sm:$0xff]
  %v23 = vld [vmem:[%s1 + $0x18] sm:$0xff]
  %v24 = vld [vmem:[%s1 + $0x20] sm:$0xff]
  %v25 = vld [vmem:[%s1 + $0x28] sm:$0xff]
  %v26 = vld [vmem:[%s1 + $0x30] sm:$0xff]
  %v27 = vld [vmem:[%s1 + $0x38] sm:$0xff]
  %v28 = vld [vmem:[%s1 + $0x40] sm:$0xff]
  %v29 = vld [vmem:[%s1 + $0x48] sm:$0xff]
  %v30 = vld [vmem:[%s1 + $0x50] sm:$0xff]
  %v31 = vld [vmem:[%s1 + $0x58] sm:$0xff]
  %v32 = vld [vmem:[%s1 + $0x60] sm:$0xff]
  %v33 = vld [vmem:[%s1 + $0x68] sm:$0xff]
  %v34 = vld [vmem:[%s1 + $0x70] sm:$0xff]
  %v35 = vld [vmem:[%s1 + $0x78] sm:$0xff]
  %v36 = vld [vmem:[%s1 + $0x80] sm:$0xff]
  %v37 = vld [vmem:[%s1 + $0x88] sm:$0xff]
  %v38 = vld [vmem:[%s1 + $0x90] sm:$0xff]
  %v39 = vld [vmem:[%s1 + $0x98] sm:$0xff]
  %v40 = vld [vmem:[%s1 + $0xa0] sm:$0xff]
  %v41 = vld [vmem:[%s1 + $0xa8] sm:$0xff]
  %v42 = vld [vmem:[%s1 + $0xb0] sm:$0xff]
  %v43 = vld [vmem:[%s1 + $0xb8] sm:$0xff]
  %v44 = vld [vmem:[%s1 + $0xc0] sm:$0xff]
  %v45 = vld [vmem:[%s1 + $0xc8] sm:$0xff]
  %v46 = vld [vmem:[%s1 + $0xd0] sm:$0xff]
  %v47 = vld [vmem:[%s1 + $0xd8] sm:$0xff]
  %v48 = vld [vmem:[%s1 + $0xe0] sm:$0xff]
  %v49 = vld [vmem:[%s1 + $0xe8] sm:$0xff]
  %v50 = vld [vmem:[%s1 + $0xf0] sm:$0xff]
  %v51 = vld [vmem:[%s1 + $0xf8] sm:$0xff]
  %v52 = vld [vmem:[%s1 + $0x100] sm:$0xff]
  %v53 = vld [vmem:[%s1 + $0x108] sm:$0xff]
  %v54 = vld [vmem:[%s1 + $0x110] sm:$0xff]
  %v55 = vld [vmem:[%s1 + $0x118] sm:$0xff]
  %v56 = vld [vmem:[%s1 + $0x120] sm:$0xff]
  %v57 = vld [vmem:[%s1 + $0x128] sm:$0xff]
  %v58 = vld [vmem:[%s1 + $0x130] sm:$0xff]
  %v59 = vld [vmem:[%s1 + $0x138] sm:$0xff]
  %v60 = vld [vmem:[%s1 + $0x140] sm:$0xff]
  %v61 = vld [vmem:[%s1 + $0x148] sm:$0xff]
  %v62 = vld [vmem:[%s1 + $0x150] sm:$0xff]
  %v63 = vld [vmem:[%s1 + $0x158] sm:$0xff]
  %v64 = vld [vmem:[%s1 + $0x160] sm:$0xff]
  %v65 = vld [vmem:[%s1 + $0x168] sm:$0xff]
  %v66 = vld [vmem:[%s1 + $0x170] sm:$0xff]
  %v67 = vld [vmem:[%s1 + $0x178] sm:$0xff]
  %v68 = vld [vmem:[%s1 + $0x180] sm:$0xff]
  %v69 = vld [vmem:[%s1 + $0x188] sm:$0xff]
  %v70 = vld [vmem:[%s1 + $0x190] sm:$0xff]
  %v71 = vld [vmem:[%s1 + $0x198] sm:$0xff]
  %v72 = vld [vmem:[%s1 + $0x1a0] sm:$0xff]
  %v73 = vld [vmem:[%s1 + $0x1a8] sm:$0xff]
  %v74 = vld [vmem:[%s1 + $0x1b0] sm:$0xff]
  %v75 = vld [vmem:[%s1 + $0x1b8] sm:$0xff]
  %v76 = vld [vmem:[%s1 + $0x1c0] sm:$0xff]
  %v77 = vld [vmem:[%s1 + $0x1c8] sm:$0xff]
  %v78 = vld [vmem:[%s1 + $0x1d0] sm:$0xff]
  %v79 = vld [vmem:[%s1 + $0x1d8] sm:$0xff]
  %v80 = vld [vmem:[%s1 + $0x1e0] sm:$0xff]
  %v81 = vld [vmem:[%s1 + $0x1e8] sm:$0xff]
  %v82 = vld [vmem:[%s1 + $0x1f0] sm:$0xff]
  %v83 = vld [vmem:[%s1 + $0x1f8] sm:$0xff]
  %v84 = vld [vmem:[%s1 + $0x200] sm:$0xff]
  %v85 = vld [vmem:[%s1 + $0x208] sm:$0xff]
  %v86 = vld [vmem:[%s1 + $0x210] sm:$0xff]
  %v87 = vld [vmem:[%s1 + $0x218] sm:$0xff]
  %v88 = vld [vmem:[%s1 + $0x220] sm:$0xff]
  %v89 = vld [vmem:[%s1 + $0x228] sm:$0xff]
  %v90 = vld [vmem:[%s1 + $0x230] sm:$0xff]
  %v91 = vld [vmem:[%s1 + $0x238] sm:$0xff]
  %v92 = vld [vmem:[%s1 + $0x240] sm:$0xff]
  %v93 = vld [vmem:[%s1 + $0x248] sm:$0xff]
  %v94 = vld [vmem:[%s1 + $0x250] sm:$0xff]
  %v95 = vld [vmem:[%s1 + $0x258] sm:$0xff]
  %v96 = vld [vmem:[%s1 + $0x260] sm:$0xff]
  %v97 = vld [vmem:[%s1 + $0x268] sm:$0xff]
  %v98 = vld [vmem:[%s1 + $0x270] sm:$0xff]
  %v99 = vld [vmem:[%s1 + $0x278] sm:$0xff]
  %v100 = vld [vmem:[%s1 + $0x280] sm:$0xff]
  %v101 = vld [vmem:[%s1 + $0x288] sm:$0xff]
  %v102 = vld [vmem:[%s1 + $0x290] sm:$0xff]
  %v103 = vld [vmem:[%s1 + $0x298] sm:$0xff]
  %v104 = vld [vmem:[%s1 + $0x2a0] sm:$0xff]
  %v105 = vld [vmem:[%s1 + $0x2a8] sm:$0xff]
  %v106 = vld [vmem:[%s1 + $0x2b0] sm:$0xff]
  %v107 = vld [vmem:[%s1 + $0x2b8] sm:$0xff]
  %v108 = vld [vmem:[%s1 + $0x2c0] sm:$0xff]
  %v109 = vld [vmem:[%s1 + $0x2c8] sm:$0xff]
  %v110 = vld [vmem:[%s1 + $0x2d0] sm:$0xff]
  %v111 = vld [vmem:[%s1 + $0x2d8] sm:$0xff]
  %v112 = vld [vmem:[%s1 + $0x2e0] sm:$0xff]
  %v113 = vld [vmem:[%s1 + $0x2e8] sm:$0xff]
  %v114 = vld [vmem:[%s1 + $0x2f0] sm:$0xff]
  %v115 = vld [vmem:[%s1 + $0x2f8] sm:$0xff]
  %v116 = vld [vmem:[%s1 + $0x300] sm:$0xff]
  %v117 = vld [vmem:[%s1 + $0x308] sm:$0xff]
  %v118 = vld [vmem:[%s1 + $0x310] sm:$0xff]
  %v119 = vld [vmem:[%s1 + $0x318] sm:$0xff]
  %v120 = vld [vmem:[%s1 + $0x320] sm:$0xff]
  %v121 = vld [vmem:[%s1 + $0x328] sm:$0xff]
  %v122 = vld [vmem:[%s1 + $0x330] sm:$0xff]
  %v123 = vld [vmem:[%s1 + $0x338] sm:$0xff]
  %v124 = vld [vmem:[%s1 + $0x340] sm:$0xff]
  %v125 = vld [vmem:[%s1 + $0x348] sm:$0xff]
  %v126 = vld [vmem:[%s1 + $0x350] sm:$0xff]
  %v127 = vld [vmem:[%s1 + $0x358] sm:$0xff]
  %v128 = vld [vmem:[%s1 + $0x360] sm:$0xff]
  %v129 = vld [vmem:[%s1 + $0x368] sm:$0xff]
  %v130 = vld [vmem:[%s1 + $0x370] sm:$0xff]
  %v131 = vld [vmem:[%s1 + $0x378] sm:$0xff]
  %v132 = vld [vmem:[%s1 + $0x380] sm:$0xff]
  %v133 = vld [vmem:[%s1 + $0x388] sm:$0xff]
  %v134 = vld [vmem:[%s1 + $0x390] sm:$0xff]
  %v135 = vld [vmem:[%s1 + $0x398] sm:$0xff]
  %v136 = vld [vmem:[%s1 + $0x3a0] sm:$0xff]
  %v137 = vld [vmem:[%s1 + $0x3a8] sm:$0xff]
  %v138 = vld [vmem:[%s1 + $0x3b0] sm:$0xff]
  %v139 = vld [vmem:[%s1 + $0x3b8] sm:$0xff]
  %v140 = vld [vmem:[%s1 + $0x3c0] sm:$0xff]
  %v141 = vld [vmem:[%s1 + $0x3c8] sm:$0xff]
  %v142 = vld [vmem:[%s1 + $0x3d0] sm:$0xff]
  %v143 = vld [vmem:[%s1 + $0x3d8] sm:$0xff]
  %v144 = vld [vmem:[%s1 + $0x3e0] sm:$0xff]
  %v145 = vld [vmem:[%s1 + $0x3e8] sm:$0xff]
  %v146 = vld [vmem:[%s1 + $0x3f0] sm:$0xff]
  %v147 = vld [vmem:[%s1 + $0x3f8] sm:$0xff]
  %v148 = vld [vmem:[%s1 + $0x400] sm:$0xff]
  %v149 = vld [vmem:[%s1 + $0x408] sm:$0xff]
  %v150 = vld [vmem:[%s1 + $0x410] sm:$0xff]
  %v151 = vld [vmem:[%s1 + $0x418] sm:$0xff]
  %v152 = vld [vmem:[%s1 + $0x420] sm:$0xff]
  %v153 = vld [vmem:[%s1 + $0x428] sm:$0xff]
  %v154 = vld [vmem:[%s1 + $0x430] sm:$0xff]
  %v155 = vld [vmem:[%s1 + $0x438] sm:$0xff]
  %v156 = vld [vmem:[%s1 + $0x440] sm:$0xff]
  %v157 = vld [vmem:[%s1 + $0x448] sm:$0xff]
  %v158 = vld [vmem:[%s1 + $0x450] sm:$0xff]
  %v159 = vld [vmem:[%s1 + $0x458] sm:$0xff]
  %v160 = vld [vmem:[%s1 + $0x460] sm:$0xff]
  %v161 = vld [vmem:[%s1 + $0x468] sm:$0xff]
  %v162 = vld [vmem:[%s1 + $0x470] sm:$0xff]
  %v163 = vld [vmem:[%s1 + $0x478] sm:$0xff]
  %v164 = vld [vmem:[%s2] sm:$0xf]
  %v165 = vld [vmem:[%s2 + $0x4] sm:$0xf]
  %v166 = vld [vmem:[%s2 + $0x8] sm:$0xf]
  %v167 = vld [vmem:[%s2 + $0xc] sm:$0xf]
  %v168 = vld [vmem:[%s2 + $0x10] sm:$0xf]
  %v169 = vld [vmem:[%s2 + $0x14] sm:$0xf]
  %v170 = vld [vmem:[%s2 + $0x18] sm:$0xf]
  %v171 = vld [vmem:[%s2 + $0x1c] sm:$0xf]
  %v172 = vld [vmem:[%s2 + $0x20] sm:$0xf]
  %v173 = vld [vmem:[%s2 + $0x24] sm:$0xf]
  %v174 = vld [vmem:[%s2 + $0x28] sm:$0xf]
  %v175 = vld [vmem:[%s2 + $0x2c] sm:$0xf]
  %v176 = vld [vmem:[%s2 + $0x30] sm:$0xf]
  %v177 = vld [vmem:[%s2 + $0x34] sm:$0xf]
  %v178 = vld [vmem:[%s2 + $0x38] sm:$0xf]
  %v179 = vld [vmem:[%s2 + $0x3c] sm:$0xf]
  %v180 = vld [vmem:[%s2 + $0x40] sm:$0xf]
  %v181 = vld [vmem:[%s2 + $0x44] sm:$0xf]
  %v182 = vld [vmem:[%s2 + $0x48] sm:$0xf]
  %v183 = vld [vmem:[%s2 + $0x4c] sm:$0xf]
  %v184 = vld [vmem:[%s2 + $0x50] sm:$0xf]
  %v185 = vld [vmem:[%s2 + $0x54] sm:$0xf]
  %v186 = vld [vmem:[%s2 + $0x58] sm:$0xf]
  %v187 = vld [vmem:[%s2 + $0x5c] sm:$0xf]
  %v188 = vld [vmem:[%s2 + $0x60] sm:$0xf]
  %v189 = vld [vmem:[%s2 + $0x64] sm:$0xf]
  %v190 = vld [vmem:[%s2 + $0x68] sm:$0xf]
  %v191 = vld [vmem:[%s2 + $0x6c] sm:$0xf]
  %v192 = vld [vmem:[%s2 + $0x70] sm:$0xf]
  %v193 = vld [vmem:[%s2 + $0x74] sm:$0xf]
  %v194 = vld [vmem:[%s2 + $0x78] sm:$0xf]
  %v195 = vld [vmem:[%s2 + $0x7c] sm:$0xf]
  %v196 = vld [vmem:[%s2 + $0x80] sm:$0xf]
  %v197 = vld [vmem:[%s2 + $0x84] sm:$0xf]
  %v198 = vld [vmem:[%s2 + $0x88] sm:$0xf]
  %v199 = vld [vmem:[%s2 + $0x8c] sm:$0xf]
  %v200 = vld [vmem:[%s2 + $0x90] sm:$0xf]
  %v201 = vld [vmem:[%s2 + $0x94] sm:$0xf]
  %v202 = vld [vmem:[%s2 + $0x98] sm:$0xf]
  %v203 = vld [vmem:[%s2 + $0x9c] sm:$0xf]
  %v204 = vld [vmem:[%s2 + $0xa0] sm:$0xf]
  %v205 = vld [vmem:[%s2 + $0xa4] sm:$0xf]
  %v206 = vld [vmem:[%s2 + $0xa8] sm:$0xf]
  %v207 = vld [vmem:[%s2 + $0xac] sm:$0xf]
  %v208 = vld [vmem:[%s2 + $0xb0] sm:$0xf]
  %v209 = vld [vmem:[%s2 + $0xb4] sm:$0xf]
  %v210 = vld [vmem:[%s2 + $0xb8] sm:$0xf]
  %v211 = vld [vmem:[%s2 + $0xbc] sm:$0xf]
  %v212 = vld [vmem:[%s2 + $0xc0] sm:$0xf]
  %v213 = vld [vmem:[%s2 + $0xc4] sm:$0xf]
  %v214 = vld [vmem:[%s2 + $0xc8] sm:$0xf]
  %v215 = vld [vmem:[%s2 + $0xcc] sm:$0xf]
  %v216 = vld [vmem:[%s2 + $0xd0] sm:$0xf]
  %v217 = vld [vmem:[%s2 + $0xd4] sm:$0xf]
  %v218 = vld [vmem:[%s2 + $0xd8] sm:$0xf]
  %v219 = vld [vmem:[%s2 + $0xdc] sm:$0xf]
  %v220 = vld [vmem:[%s2 + $0xe0] sm:$0xf]
  %v221 = vld [vmem:[%s2 + $0xe4] sm:$0xf]
  %v222 = vld [vmem:[%s2 + $0xe8] sm:$0xf]
  %v223 = vld [vmem:[%s2 + $0xec] sm:$0xf]
  %v224 = vld [vmem:[%s2 + $0xf0] sm:$0xf]
  %v225 = vld [vmem:[%s2 + $0xf4] sm:$0xf]
  %v226 = vld [vmem:[%s2 + $0xf8] sm:$0xf]
  %v227 = vld [vmem:[%s2 + $0xfc] sm:$0xf]
  %v228 = vld [vmem:[%s2 + $0x100] sm:$0xf]
  %v229 = vld [vmem:[%s2 + $0x104] sm:$0xf]
  %v230 = vld [vmem:[%s2 + $0x108] sm:$0xf]
  %v231 = vld [vmem:[%s2 + $0x10c] sm:$0xf]
  %v232 = vld [vmem:[%s2 + $0x110] sm:$0xf]
  %v233 = vld [vmem:[%s2 + $0x114] sm:$0xf]
  %v234 = vld [vmem:[%s2 + $0x118] sm:$0xf]
  %v235 = vld [vmem:[%s2 + $0x11c] sm:$0xf]
  %v236 = vld [vmem:[%s2 + $0x120] sm:$0xf]
  %v237 = vld [vmem:[%s2 + $0x124] sm:$0xf]
  %v238 = vld [vmem:[%s2 + $0x128] sm:$0xf]
  %v239 = vld [vmem:[%s2 + $0x12c] sm:$0xf]
  %v240 = vld [vmem:[%s2 + $0x130] sm:$0xf]
  %v241 = vld [vmem:[%s2 + $0x134] sm:$0xf]
  %v242 = vld [vmem:[%s2 + $0x138] sm:$0xf]
  %v243 = vld [vmem:[%s2 + $0x13c] sm:$0xf]
  %v244 = vld [vmem:[%s2 + $0x140] sm:$0xf]
  %v245 = vld [vmem:[%s2 + $0x144] sm:$0xf]
  %v246 = vld [vmem:[%s2 + $0x148] sm:$0xf]
  %v247 = vld [vmem:[%s2 + $0x14c] sm:$0xf]
  %v248 = vld [vmem:[%s2 + $0x150] sm:$0xf]
  %v249 = vld [vmem:[%s2 + $0x154] sm:$0xf]
  %v250 = vld [vmem:[%s2 + $0x158] sm:$0xf]
  %v251 = vld [vmem:[%s2 + $0x15c] sm:$0xf]
  %v252 = vld [vmem:[%s2 + $0x160] sm:$0xf]
  %v253 = vld [vmem:[%s2 + $0x164] sm:$0xf]
  %v254 = vld [vmem:[%s2 + $0x168] sm:$0xf]
  %v255 = vld [vmem:[%s2 + $0x16c] sm:$0xf]
  %v256 = vld [vmem:[%s2 + $0x170] sm:$0xf]
  %v257 = vld [vmem:[%s2 + $0x174] sm:$0xf]
  %v258 = vld [vmem:[%s2 + $0x178] sm:$0xf]
  %v259 = vld [vmem:[%s2 + $0x17c] sm:$0xf]
  %v260 = vld [vmem:[%s2 + $0x180] sm:$0xf]
  %v261 = vld [vmem:[%s2 + $0x184] sm:$0xf]
  %v262 = vld [vmem:[%s2 + $0x188] sm:$0xf]
  %v263 = vld [vmem:[%s2 + $0x18c] sm:$0xf]
  %v264 = vld [vmem:[%s2 + $0x190] sm:$0xf]
  %v265 = vld [vmem:[%s2 + $0x194] sm:$0xf]
  %v266 = vld [vmem:[%s2 + $0x198] sm:$0xf]
  %v267 = vld [vmem:[%s2 + $0x19c] sm:$0xf]
  %v268 = vld [vmem:[%s2 + $0x1a0] sm:$0xf]
  %v269 = vld [vmem:[%s2 + $0x1a4] sm:$0xf]
  %v270 = vld [vmem:[%s2 + $0x1a8] sm:$0xf]
  %v271 = vld [vmem:[%s2 + $0x1ac] sm:$0xf]
  %v272 = vld [vmem:[%s2 + $0x1b0] sm:$0xf]
  %v273 = vld [vmem:[%s2 + $0x1b4] sm:$0xf]
  %v274 = vld [vmem:[%s2 + $0x1b8] sm:$0xf]
  %v275 = vld [vmem:[%s2 + $0x1bc] sm:$0xf]
  %v276 = vld [vmem:[%s2 + $0x1c0] sm:$0xf]
  %v277 = vld [vmem:[%s2 + $0x1c4] sm:$0xf]
  %v278 = vld [vmem:[%s2 + $0x1c8] sm:$0xf]
  %v279 = vld [vmem:[%s2 + $0x1cc] sm:$0xf]
  %v280 = vld [vmem:[%s2 + $0x1d0] sm:$0xf]
  %v281 = vld [vmem:[%s2 + $0x1d4] sm:$0xf]
  %v282 = vld [vmem:[%s2 + $0x1d8] sm:$0xf]
  %v283 = vld [vmem:[%s2 + $0x1dc] sm:$0xf]
  %v284 = vld [vmem:[%s2 + $0x1e0] sm:$0xf]
  %v285 = vld [vmem:[%s2 + $0x1e4] sm:$0xf]
  %v286 = vld [vmem:[%s2 + $0x1e8] sm:$0xf]
  %v287 = vld [vmem:[%s2 + $0x1ec] sm:$0xf]
  %v288 = vld [vmem:[%s2 + $0x1f0] sm:$0xf]
  %v289 = vld [vmem:[%s2 + $0x1f4] sm:$0xf]
  %v290 = vld [vmem:[%s2 + $0x1f8] sm:$0xf]
  %v291 = vld [vmem:[%s2 + $0x1fc] sm:$0xf]
  %v292 = vld [vmem:[%s2 + $0x200] sm:$0xf]
  %v293 = vld [vmem:[%s2 + $0x204] sm:$0xf]
  %v294 = vld [vmem:[%s2 + $0x208] sm:$0xf]
  %v295 = vld [vmem:[%s2 + $0x20c] sm:$0xf]
  %v296 = vld [vmem:[%s2 + $0x210] sm:$0xf]
  %v297 = vld [vmem:[%s2 + $0x214] sm:$0xf]
  %v298 = vld [vmem:[%s2 + $0x218] sm:$0xf]
  %v299 = vld [vmem:[%s2 + $0x21c] sm:$0xf]
  %v300 = vld [vmem:[%s2 + $0x220] sm:$0xf]
  %v301 = vld [vmem:[%s2 + $0x224] sm:$0xf]
  %v302 = vld [vmem:[%s2 + $0x228] sm:$0xf]
  %v303 = vld [vmem:[%s2 + $0x22c] sm:$0xf]
  %v304 = vld [vmem:[%s2 + $0x230] sm:$0xf]
  %v305 = vld [vmem:[%s2 + $0x234] sm:$0xf]
  %v306 = vld [vmem:[%s2 + $0x238] sm:$0xf]
  %v307 = vld [vmem:[%s2 + $0x23c] sm:$0xf]
  %v308 = vld [vmem:[%s2 + $0x240] sm:$0xf]
  %v309 = vld [vmem:[%s2 + $0x244] sm:$0xf]
  %v310 = vld [vmem:[%s2 + $0x248] sm:$0xf]
  %v311 = vld [vmem:[%s2 + $0x24c] sm:$0xf]
  %v312 = vld [vmem:[%s2 + $0x250] sm:$0xf]
  %v313 = vld [vmem:[%s2 + $0x254] sm:$0xf]
  %v314 = vld [vmem:[%s2 + $0x258] sm:$0xf]
  %v315 = vld [vmem:[%s2 + $0x25c] sm:$0xf]
  %v316 = vld [vmem:[%s2 + $0x260] sm:$0xf]
  %v317 = vld [vmem:[%s2 + $0x264] sm:$0xf]
  %v318 = vld [vmem:[%s2 + $0x268] sm:$0xf]
  %v319 = vld [vmem:[%s2 + $0x26c] sm:$0xf]
  %v320 = vld [vmem:[%s2 + $0x270] sm:$0xf]
  %v321 = vld [vmem:[%s2 + $0x274] sm:$0xf]
  %v322 = vld [vmem:[%s2 + $0x278] sm:$0xf]
  %v323 = vld [vmem:[%s2 + $0x27c] sm:$0xf]
  %v324 = vld [vmem:[%s2 + $0x280] sm:$0xf]
  %v325 = vld [vmem:[%s2 + $0x284] sm:$0xf]
  %v326 = vld [vmem:[%s2 + $0x288] sm:$0xf]
  %v327 = vld [vmem:[%s2 + $0x28c] sm:$0xf]
  %v328 = vld [vmem:[%s2 + $0x290] sm:$0xf]
  %v329 = vld [vmem:[%s2 + $0x294] sm:$0xf]
  %v330 = vld [vmem:[%s2 + $0x298] sm:$0xf]
  %v331 = vld [vmem:[%s2 + $0x29c] sm:$0xf]
  %v332 = vld [vmem:[%s2 + $0x2a0] sm:$0xf]
  %v333 = vld [vmem:[%s2 + $0x2a4] sm:$0xf]
  %v334 = vld [vmem:[%s2 + $0x2a8] sm:$0xf]
  %v335 = vld [vmem:[%s2 + $0x2ac] sm:$0xf]
  %v336 = vld [vmem:[%s2 + $0x2b0] sm:$0xf]
  %v337 = vld [vmem:[%s2 + $0x2b4] sm:$0xf]
  %v338 = vld [vmem:[%s2 + $0x2b8] sm:$0xf]
  %v339 = vld [vmem:[%s2 + $0x2bc] sm:$0xf]
  %v340 = vld [vmem:[%s2 + $0x2c0] sm:$0xf]
  %v341 = vld [vmem:[%s2 + $0x2c4] sm:$0xf]
  %v342 = vld [vmem:[%s2 + $0x2c8] sm:$0xf]
  %v343 = vld [vmem:[%s2 + $0x2cc] sm:$0xf]
  %v344 = vld [vmem:[%s2 + $0x2d0] sm:$0xf]
  %v345 = vld [vmem:[%s2 + $0x2d4] sm:$0xf]
  %v346 = vld [vmem:[%s2 + $0x2d8] sm:$0xf]
  %v347 = vld [vmem:[%s2 + $0x2dc] sm:$0xf]
  %v348 = vld [vmem:[%s2 + $0x2e0] sm:$0xf]
  %v349 = vld [vmem:[%s2 + $0x2e4] sm:$0xf]
  %v350 = vld [vmem:[%s2 + $0x2e8] sm:$0xf]
  %v351 = vld [vmem:[%s2 + $0x2ec] sm:$0xf]
  %v352 = vld [vmem:[%s2 + $0x2f0] sm:$0xf]
  %v353 = vld [vmem:[%s2 + $0x2f4] sm:$0xf]
  %v354 = vld [vmem:[%s2 + $0x2f8] sm:$0xf]
  %v355 = vld [vmem:[%s2 + $0x2fc] sm:$0xf]
  %v356 = vld [vmem:[%s2 + $0x300] sm:$0xf]
  %v357 = vld [vmem:[%s2 + $0x304] sm:$0xf]
  %v358 = vld [vmem:[%s2 + $0x308] sm:$0xf]
  %v359 = vld [vmem:[%s2 + $0x30c] sm:$0xf]
  %v360 = vld [vmem:[%s2 + $0x310] sm:$0xf]
  %v361 = vld [vmem:[%s2 + $0x314] sm:$0xf]
  %v362 = vld [vmem:[%s2 + $0x318] sm:$0xf]
  %v363 = vld [vmem:[%s2 + $0x31c] sm:$0xf]
  %v364 = vld [vmem:[%s2 + $0x320] sm:$0xf]
  %v365 = vld [vmem:[%s2 + $0x324] sm:$0xf]
  %v366 = vld [vmem:[%s2 + $0x328] sm:$0xf]
  %v367 = vld [vmem:[%s2 + $0x32c] sm:$0xf]
  %v368 = vld [vmem:[%s2 + $0x330] sm:$0xf]
  %v369 = vld [vmem:[%s2 + $0x334] sm:$0xf]
  %v370 = vld [vmem:[%s2 + $0x338] sm:$0xf]
  %v371 = vld [vmem:[%s2 + $0x33c] sm:$0xf]
  %v372 = vld [vmem:[%s2 + $0x340] sm:$0xf]
  %v373 = vld [vmem:[%s2 + $0x344] sm:$0xf]
  %v374 = vld [vmem:[%s2 + $0x348] sm:$0xf]
  %v375 = vld [vmem:[%s2 + $0x34c] sm:$0xf]
  %v376 = vld [vmem:[%s2 + $0x350] sm:$0xf]
  %v377 = vld [vmem:[%s2 + $0x354] sm:$0xf]
  %v378 = vld [vmem:[%s2 + $0x358] sm:$0xf]
  %v379 = vld [vmem:[%s2 + $0x35c] sm:$0xf]
  %v380 = vld [vmem:[%s2 + $0x360] sm:$0xf]
  %v381 = vld [vmem:[%s2 + $0x364] sm:$0xf]
  %v382 = vld [vmem:[%s2 + $0x368] sm:$0xf]
  %v383 = vld [vmem:[%s2 + $0x36c] sm:$0xf]
  %v384 = vld [vmem:[%s2 + $0x370] sm:$0xf]
  %v385 = vld [vmem:[%s2 + $0x374] sm:$0xf]
  %v386 = vld [vmem:[%s2 + $0x378] sm:$0xf]
  %v387 = vld [vmem:[%s2 + $0x37c] sm:$0xf]
  %v388 = vld [vmem:[%s2 + $0x380] sm:$0xf]
  %v389 = vld [vmem:[%s2 + $0x384] sm:$0xf]
  %v390 = vld [vmem:[%s2 + $0x388] sm:$0xf]
  %v391 = vld [vmem:[%s2 + $0x38c] sm:$0xf]
  %v392 = vld [vmem:[%s2 + $0x390] sm:$0xf]
  %v393 = vld [vmem:[%s2 + $0x394] sm:$0xf]
  %v394 = vld [vmem:[%s2 + $0x398] sm:$0xf]
  %v395 = vld [vmem:[%s2 + $0x39c] sm:$0xf]
  %v396 = vld [vmem:[%s2 + $0x3a0] sm:$0xf]
  %v397 = vld [vmem:[%s2 + $0x3a4] sm:$0xf]
  %v398 = vld [vmem:[%s2 + $0x3a8] sm:$0xf]
  %v399 = vld [vmem:[%s2 + $0x3ac] sm:$0xf]
  %v400 = vld [vmem:[%s2 + $0x3b0] sm:$0xf]
  %v401 = vld [vmem:[%s2 + $0x3b4] sm:$0xf]
  %v402 = vld [vmem:[%s2 + $0x3b8] sm:$0xf]
  %v403 = vld [vmem:[%s2 + $0x3bc] sm:$0xf]
  %v404 = vld [vmem:[%s2 + $0x3c0] sm:$0xf]
  %v405 = vld [vmem:[%s2 + $0x3c4] sm:$0xf]
  %v406 = vld [vmem:[%s2 + $0x3c8] sm:$0xf]
  %v407 = vld [vmem:[%s2 + $0x3cc] sm:$0xf]
  %v408 = vld [vmem:[%s2 + $0x3d0] sm:$0xf]
  %v409 = vld [vmem:[%s2 + $0x3d4] sm:$0xf]
  %v410 = vld [vmem:[%s2 + $0x3d8] sm:$0xf]
  %v411 = vld [vmem:[%s2 + $0x3dc] sm:$0xf]
  %v412 = vld [vmem:[%s2 + $0x3e0] sm:$0xf]
  %v413 = vld [vmem:[%s2 + $0x3e4] sm:$0xf]
  %v414 = vld [vmem:[%s2 + $0x3e8] sm:$0xf]
  %v415 = vld [vmem:[%s2 + $0x3ec] sm:$0xf]
  %v416 = vld [vmem:[%s2 + $0x3f0] sm:$0xf]
  %v417 = vld [vmem:[%s2 + $0x3f4] sm:$0xf]
  %v418 = vld [vmem:[%s2 + $0x3f8] sm:$0xf]
  %v419 = vld [vmem:[%s2 + $0x3fc] sm:$0xf]
  %v420 = vld [vmem:[%s2 + $0x400] sm:$0xf]
  %v421 = vld [vmem:[%s2 + $0x404] sm:$0xf]
  %v422 = vld [vmem:[%s2 + $0x408] sm:$0xf]
  %v423 = vld [vmem:[%s2 + $0x40c] sm:$0xf]
  %v424 = vld [vmem:[%s2 + $0x410] sm:$0xf]
  %v425 = vld [vmem:[%s2 + $0x414] sm:$0xf]
  %v426 = vld [vmem:[%s2 + $0x418] sm:$0xf]
  %v427 = vld [vmem:[%s2 + $0x41c] sm:$0xf]
  %v428 = vld [vmem:[%s2 + $0x420] sm:$0xf]
  %v429 = vld [vmem:[%s2 + $0x424] sm:$0xf]
  %v430 = vld [vmem:[%s2 + $0x428] sm:$0xf]
  %v431 = vld [vmem:[%s2 + $0x42c] sm:$0xf]
  %v432 = vld [vmem:[%s2 + $0x430] sm:$0xf]
  %v433 = vld [vmem:[%s2 + $0x434] sm:$0xf]
  %v434 = vld [vmem:[%s2 + $0x438] sm:$0xf]
  %v435 = vld [vmem:[%s2 + $0x43c] sm:$0xf]
  %v436 = vld [vmem:[%s2 + $0x440] sm:$0xf]
  %v437 = vld [vmem:[%s2 + $0x444] sm:$0xf]
  %v438 = vld [vmem:[%s2 + $0x448] sm:$0xf]
  %v439 = vld [vmem:[%s2 + $0x44c] sm:$0xf]
  %v440 = vld [vmem:[%s2 + $0x450] sm:$0xf]
  %v441 = vld [vmem:[%s2 + $0x454] sm:$0xf]
  %v442 = vld [vmem:[%s2 + $0x458] sm:$0xf]
  %v443 = vld [vmem:[%s2 + $0x45c] sm:$0xf]
  %v444 = vld [vmem:[%s2 + $0x460] sm:$0xf]
  %v445 = vld [vmem:[%s2 + $0x464] sm:$0xf]
  %v446 = vld [vmem:[%s2 + $0x468] sm:$0xf]
  %v447 = vld [vmem:[%s2 + $0x46c] sm:$0xf]
  %v448 = vld [vmem:[%s2 + $0x470] sm:$0xf]
  %v449 = vld [vmem:[%s2 + $0x474] sm:$0xf]
  %v450 = vld [vmem:[%s2 + $0x478] sm:$0xf]
  %v451 = vld [vmem:[%s2 + $0x47c] sm:$0xf]
  %v452 = vld [vmem:[%s2 + $0x480] sm:$0xf]
  %v453 = vld [vmem:[%s2 + $0x484] sm:$0xf]
  %v454 = vld [vmem:[%s2 + $0x488] sm:$0xf]
  %v455 = vld [vmem:[%s2 + $0x48c] sm:$0xf]
  %v456 = vld [vmem:[%s2 + $0x490] sm:$0xf]
  %v457 = vld [vmem:[%s2 + $0x494] sm:$0xf]
  %v458 = vld [vmem:[%s2 + $0x498] sm:$0xf]
  %v459 = vld [vmem:[%s2 + $0x49c] sm:$0xf]
  %v460 = vld [vmem:[%s2 + $0x4a0] sm:$0xf]
  %v461 = vld [vmem:[%s2 + $0x4a4] sm:$0xf]
  %v462 = vld [vmem:[%s2 + $0x4a8] sm:$0xf]
  %v463 = vld [vmem:[%s2 + $0x4ac] sm:$0xf]
  %v464 = vld [vmem:[%s2 + $0x4b0] sm:$0xf]
  %v465 = vld [vmem:[%s2 + $0x4b4] sm:$0xf]
  %v466 = vld [vmem:[%s2 + $0x4b8] sm:$0xf]
  %v467 = vld [vmem:[%s2 + $0x4bc] sm:$0xf]
  %v468 = vld [vmem:[%s2 + $0x4c0] sm:$0xf]
  %v469 = vld [vmem:[%s2 + $0x4c4] sm:$0xf]
  %v470 = vld [vmem:[%s2 + $0x4c8] sm:$0xf]
  %v471 = vld [vmem:[%s2 + $0x4cc] sm:$0xf]
  %v472 = vld [vmem:[%s2 + $0x4d0] sm:$0xf]
  %v473 = vld [vmem:[%s2 + $0x4d4] sm:$0xf]
  %v474 = vld [vmem:[%s2 + $0x4d8] sm:$0xf]
  %v475 = vld [vmem:[%s2 + $0x4dc] sm:$0xf]
  %v476 = vld [vmem:[%s2 + $0x4e0] sm:$0xf]
  %v477 = vld [vmem:[%s2 + $0x4e4] sm:$0xf]
  %v478 = vld [vmem:[%s2 + $0x4e8] sm:$0xf]
  %v479 = vld [vmem:[%s2 + $0x4ec] sm:$0xf]
  %v480 = vld [vmem:[%s2 + $0x4f0] sm:$0xf]
  %v481 = vld [vmem:[%s2 + $0x4f4] sm:$0xf]
  %v482 = vld [vmem:[%s2 + $0x4f8] sm:$0xf]
  %v483 = vld [vmem:[%s2 + $0x4fc] sm:$0xf]
  %v484 = vld [vmem:[%s2 + $0x500] sm:$0xf]
  %v485 = vld [vmem:[%s2 + $0x504] sm:$0xf]
  %v486 = vld [vmem:[%s2 + $0x508] sm:$0xf]
  %v487 = vld [vmem:[%s2 + $0x50c] sm:$0xf]
  %v488 = vld [vmem:[%s2 + $0x510] sm:$0xf]
  %v489 = vld [vmem:[%s2 + $0x514] sm:$0xf]
  %v490 = vld [vmem:[%s2 + $0x518] sm:$0xf]
  %v491 = vld [vmem:[%s2 + $0x51c] sm:$0xf]
  %v492 = vld [vmem:[%s2 + $0x520] sm:$0xf]
  %v493 = vld [vmem:[%s2 + $0x524] sm:$0xf]
  %v494 = vld [vmem:[%s2 + $0x528] sm:$0xf]
  %v495 = vld [vmem:[%s2 + $0x52c] sm:$0xf]
  %v496 = vld [vmem:[%s2 + $0x530] sm:$0xf]
  %v497 = vld [vmem:[%s2 + $0x534] sm:$0xf]
  %v498 = vld [vmem:[%s2 + $0x538] sm:$0xf]
  %v499 = vld [vmem:[%s2 + $0x53c] sm:$0xf]
  %v500 = vld [vmem:[%s2 + $0x540] sm:$0xf]
  %v501 = vld [vmem:[%s2 + $0x544] sm:$0xf]
  %v502 = vld [vmem:[%s2 + $0x548] sm:$0xf]
  %v503 = vld [vmem:[%s2 + $0x54c] sm:$0xf]
  %v504 = vld [vmem:[%s2 + $0x550] sm:$0xf]
  %v505 = vld [vmem:[%s2 + $0x554] sm:$0xf]
  %v506 = vld [vmem:[%s2 + $0x558] sm:$0xf]
  %v507 = vld [vmem:[%s2 + $0x55c] sm:$0xf]
  %v508 = vld [vmem:[%s2 + $0x560] sm:$0xf]
  %v509 = vld [vmem:[%s2 + $0x564] sm:$0xf]
  %v510 = vld [vmem:[%s2 + $0x568] sm:$0xf]
  %v511 = vld [vmem:[%s2 + $0x56c] sm:$0xf]
  %v512 = vld [vmem:[%s2 + $0x570] sm:$0xf]
  %v513 = vld [vmem:[%s2 + $0x574] sm:$0xf]
  %v514 = vld [vmem:[%s2 + $0x578] sm:$0xf]
  %v515 = vld [vmem:[%s2 + $0x57c] sm:$0xf]
  %v516 = vld [vmem:[%s2 + $0x580] sm:$0xf]
  %v517 = vld [vmem:[%s2 + $0x584] sm:$0xf]
  %v518 = vld [vmem:[%s2 + $0x588] sm:$0xf]
  %v519 = vld [vmem:[%s2 + $0x58c] sm:$0xf]
  %v520 = vld [vmem:[%s2 + $0x590] sm:$0xf]
  %v521 = vld [vmem:[%s2 + $0x594] sm:$0xf]
  %v522 = vld [vmem:[%s2 + $0x598] sm:$0xf]
  %v523 = vld [vmem:[%s2 + $0x59c] sm:$0xf]
  %v524 = vld [vmem:[%s2 + $0x5a0] sm:$0xf]
  %v525 = vld [vmem:[%s2 + $0x5a4] sm:$0xf]
  %v526 = vld [vmem:[%s2 + $0x5a8] sm:$0xf]
  %v527 = vld [vmem:[%s2 + $0x5ac] sm:$0xf]
  %v528 = vld [vmem:[%s2 + $0x5b0] sm:$0xf]
  %v529 = vld [vmem:[%s2 + $0x5b4] sm:$0xf]
  %v530 = vld [vmem:[%s2 + $0x5b8] sm:$0xf]
  %v531 = vld [vmem:[%s2 + $0x5bc] sm:$0xf]
  %v532 = vld [vmem:[%s2 + $0x5c0] sm:$0xf]
  %v533 = vld [vmem:[%s2 + $0x5c4] sm:$0xf]
  %v534 = vld [vmem:[%s2 + $0x5c8] sm:$0xf]
  %v535 = vld [vmem:[%s2 + $0x5cc] sm:$0xf]
  %v536 = vld [vmem:[%s2 + $0x5d0] sm:$0xf]
  %v537 = vld [vmem:[%s2 + $0x5d4] sm:$0xf]
  %v538 = vld [vmem:[%s2 + $0x5d8] sm:$0xf]
  %v539 = vld [vmem:[%s2 + $0x5dc] sm:$0xf]
  %v540 = vld [vmem:[%s2 + $0x5e0] sm:$0xf]
  %v541 = vld [vmem:[%s2 + $0x5e4] sm:$0xf]
  %v542 = vld [vmem:[%s2 + $0x5e8] sm:$0xf]
  %v543 = vld [vmem:[%s2 + $0x5ec] sm:$0xf]
  %v544 = vld [vmem:[%s2 + $0x5f0] sm:$0xf]
  %v545 = vld [vmem:[%s2 + $0x5f4] sm:$0xf]
  %v546 = vld [vmem:[%s2 + $0x5f8] sm:$0xf]
  %v547 = vld [vmem:[%s2 + $0x5fc] sm:$0xf]
  %v548 = vld [vmem:[%s2 + $0x600] sm:$0xf]
  %v549 = vld [vmem:[%s2 + $0x604] sm:$0xf]
  %v550 = vld [vmem:[%s2 + $0x608] sm:$0xf]
  %v551 = vld [vmem:[%s2 + $0x60c] sm:$0xf]
  %v552 = vld [vmem:[%s2 + $0x610] sm:$0xf]
  %v553 = vld [vmem:[%s2 + $0x614] sm:$0xf]
  %v554 = vld [vmem:[%s2 + $0x618] sm:$0xf]
  %v555 = vld [vmem:[%s2 + $0x61c] sm:$0xf]
  %v556 = vld [vmem:[%s2 + $0x620] sm:$0xf]
  %v557 = vld [vmem:[%s2 + $0x624] sm:$0xf]
  %v558 = vld [vmem:[%s2 + $0x628] sm:$0xf]
  %v559 = vld [vmem:[%s2 + $0x62c] sm:$0xf]
  %v560 = vld [vmem:[%s2 + $0x630] sm:$0xf]
  %v561 = vld [vmem:[%s2 + $0x634] sm:$0xf]
  %v562 = vld [vmem:[%s2 + $0x638] sm:$0xf]
  %v563 = vld [vmem:[%s2 + $0x63c] sm:$0xf]
  %v564 = vld [vmem:[%s2 + $0x640] sm:$0xf]
  %v565 = vld [vmem:[%s2 + $0x644] sm:$0xf]
  %v566 = vld [vmem:[%s2 + $0x648] sm:$0xf]
  %v567 = vld [vmem:[%s2 + $0x64c] sm:$0xf]
  %v568 = vld [vmem:[%s2 + $0x650] sm:$0xf]
  %v569 = vld [vmem:[%s2 + $0x654] sm:$0xf]
  %v570 = vld [vmem:[%s2 + $0x658] sm:$0xf]
  %v571 = vld [vmem:[%s2 + $0x65c] sm:$0xf]
  %v572 = vld [vmem:[%s2 + $0x660] sm:$0xf]
  %v573 = vld [vmem:[%s2 + $0x664] sm:$0xf]
  %v574 = vld [vmem:[%s2 + $0x668] sm:$0xf]
  %v575 = vld [vmem:[%s2 + $0x66c] sm:$0xf]
  %v576 = vld [vmem:[%s2 + $0x670] sm:$0xf]
  %v577 = vld [vmem:[%s2 + $0x674] sm:$0xf]
  %v578 = vld [vmem:[%s2 + $0x678] sm:$0xf]
  %v579 = vld [vmem:[%s2 + $0x67c] sm:$0xf]
  %v580 = vld [vmem:[%s2 + $0x680] sm:$0xf]
  %v581 = vld [vmem:[%s2 + $0x684] sm:$0xf]
  %v582 = vld [vmem:[%s2 + $0x688] sm:$0xf]
  %v583 = vld [vmem:[%s2 + $0x68c] sm:$0xf]
  %v584 = vld [vmem:[%s2 + $0x690] sm:$0xf]
  %v585 = vld [vmem:[%s2 + $0x694] sm:$0xf]
  %v586 = vld [vmem:[%s2 + $0x698] sm:$0xf]
  %v587 = vld [vmem:[%s2 + $0x69c] sm:$0xf]
  %v588 = vld [vmem:[%s2 + $0x6a0] sm:$0xf]
  %v589 = vld [vmem:[%s2 + $0x6a4] sm:$0xf]
  %v590 = vld [vmem:[%s2 + $0x6a8] sm:$0xf]
  %v591 = vld [vmem:[%s2 + $0x6ac] sm:$0xf]
  %v592 = vld [vmem:[%s2 + $0x6b0] sm:$0xf]
  %v593 = vld [vmem:[%s2 + $0x6b4] sm:$0xf]
  %v594 = vld [vmem:[%s2 + $0x6b8] sm:$0xf]
  %v595 = vld [vmem:[%s2 + $0x6bc] sm:$0xf]
  %v596 = vld [vmem:[%s2 + $0x6c0] sm:$0xf]
  %v597 = vld [vmem:[%s2 + $0x6c4] sm:$0xf]
  %v598 = vld [vmem:[%s2 + $0x6c8] sm:$0xf]
  %v599 = vld [vmem:[%s2 + $0x6cc] sm:$0xf]
  %v600 = vld [vmem:[%s2 + $0x6d0] sm:$0xf]
  %v601 = vld [vmem:[%s2 + $0x6d4] sm:$0xf]
  %v602 = vld [vmem:[%s2 + $0x6d8] sm:$0xf]
  %v603 = vld [vmem:[%s2 + $0x6dc] sm:$0xf]
  %v604 = vld [vmem:[%s2 + $0x6e0] sm:$0xf]
  %v605 = vld [vmem:[%s2 + $0x6e4] sm:$0xf]
  %v606 = vld [vmem:[%s2 + $0x6e8] sm:$0xf]
  %v607 = vld [vmem:[%s2 + $0x6ec] sm:$0xf]
  %v608 = vld [vmem:[%s2 + $0x6f0] sm:$0xf]
  %v609 = vld [vmem:[%s2 + $0x6f4] sm:$0xf]
  %v610 = vld [vmem:[%s2 + $0x6f8] sm:$0xf]
  %v611 = vld [vmem:[%s2 + $0x6fc] sm:$0xf]
  %v612 = vld [vmem:[%s2 + $0x700] sm:$0xf]
  %v613 = vld [vmem:[%s2 + $0x704] sm:$0xf]
  %v614 = vld [vmem:[%s2 + $0x708] sm:$0xf]
  %v615 = vld [vmem:[%s2 + $0x70c] sm:$0xf]
  %v616 = vld [vmem:[%s2 + $0x710] sm:$0xf]
  %v617 = vld [vmem:[%s2 + $0x714] sm:$0xf]
  %v618 = vld [vmem:[%s2 + $0x718] sm:$0xf]
  %v619 = vld [vmem:[%s2 + $0x71c] sm:$0xf]
  %v620 = vld [vmem:[%s2 + $0x720] sm:$0xf]
  %v621 = vld [vmem:[%s2 + $0x724] sm:$0xf]
  %v622 = vld [vmem:[%s2 + $0x728] sm:$0xf]
  %v623 = vld [vmem:[%s2 + $0x72c] sm:$0xf]
  %v624 = vld [vmem:[%s2 + $0x730] sm:$0xf]
  %v625 = vld [vmem:[%s2 + $0x734] sm:$0xf]
  %v626 = vld [vmem:[%s2 + $0x738] sm:$0xf]
  %v627 = vld [vmem:[%s2 + $0x73c] sm:$0xf]
  %v628 = vld [vmem:[%s2 + $0x740] sm:$0xf]
  %v629 = vld [vmem:[%s2 + $0x744] sm:$0xf]
  %v630 = vld [vmem:[%s2 + $0x748] sm:$0xf]
  %v631 = vld [vmem:[%s2 + $0x74c] sm:$0xf]
  %v632 = vld [vmem:[%s2 + $0x750] sm:$0xf]
  %v633 = vld [vmem:[%s2 + $0x754] sm:$0xf]
  %v634 = vld [vmem:[%s2 + $0x758] sm:$0xf]
  %v635 = vld [vmem:[%s2 + $0x75c] sm:$0xf]
  %v636 = vld [vmem:[%s2 + $0x760] sm:$0xf]
  %v637 = vld [vmem:[%s2 + $0x764] sm:$0xf]
  %v638 = vld [vmem:[%s2 + $0x768] sm:$0xf]
  %v639 = vld [vmem:[%s2 + $0x76c] sm:$0xf]
  %v640 = vld [vmem:[%s2 + $0x770] sm:$0xf]
  %v641 = vld [vmem:[%s2 + $0x774] sm:$0xf]
  %v642 = vld [vmem:[%s2 + $0x778] sm:$0xf]
  %v643 = vld [vmem:[%s2 + $0x77c] sm:$0xf]
  %v644 = vld [vmem:[%s2 + $0x780] sm:$0xf]
  %v645 = vld [vmem:[%s2 + $0x784] sm:$0xf]
  %v646 = vld [vmem:[%s2 + $0x788] sm:$0xf]
  %v647 = vld [vmem:[%s2 + $0x78c] sm:$0xf]
  %v648 = vld [vmem:[%s2 + $0x790] sm:$0xf]
  %v649 = vld [vmem:[%s2 + $0x794] sm:$0xf]
  %v650 = vld [vmem:[%s2 + $0x798] sm:$0xf]
  %v651 = vld [vmem:[%s2 + $0x79c] sm:$0xf]
  %v652 = vld [vmem:[%s2 + $0x7a0] sm:$0xf]
  %v653 = vld [vmem:[%s2 + $0x7a4] sm:$0xf]
  %v654 = vld [vmem:[%s2 + $0x7a8] sm:$0xf]
  %v655 = vld [vmem:[%s2 + $0x7ac] sm:$0xf]
  %v656 = vld [vmem:[%s2 + $0x7b0] sm:$0xf]
  %v657 = vld [vmem:[%s2 + $0x7b4] sm:$0xf]
  %v658 = vld [vmem:[%s2 + $0x7b8] sm:$0xf]
  %v659 = vld [vmem:[%s2 + $0x7bc] sm:$0xf]
  %v660 = vld [vmem:[%s2 + $0x7c0] sm:$0xf]
  %v661 = vld [vmem:[%s2 + $0x7c4] sm:$0xf]
  %v662 = vld [vmem:[%s2 + $0x7c8] sm:$0xf]
  %v663 = vld [vmem:[%s2 + $0x7cc] sm:$0xf]
  %v664 = vld [vmem:[%s2 + $0x7d0] sm:$0xf]
  %v665 = vld [vmem:[%s2 + $0x7d4] sm:$0xf]
  %v666 = vld [vmem:[%s2 + $0x7d8] sm:$0xf]
  %v667 = vld [vmem:[%s2 + $0x7dc] sm:$0xf]
  %v668 = vld [vmem:[%s2 + $0x7e0] sm:$0xf]
  %v669 = vld [vmem:[%s2 + $0x7e4] sm:$0xf]
  %v670 = vld [vmem:[%s2 + $0x7e8] sm:$0xf]
  %v671 = vld [vmem:[%s2 + $0x7ec] sm:$0xf]
  %v672 = vld [vmem:[%s2 + $0x7f0] sm:$0xf]
  %v673 = vld [vmem:[%s2 + $0x7f4] sm:$0xf]
  %v674 = vld [vmem:[%s2 + $0x7f8] sm:$0xf]
  %v675 = vld [vmem:[%s2 + $0x7fc] sm:$0xf]
  %v820 = vunpack.c.l.b16 %v20
  %v821 = vunpack.c.h.b16 %v20
  %v822 = vunpack.c.l.b16 %v21
  %v823 = vunpack.c.h.b16 %v21
  %v824 = vunpack.c.l.b16 %v22
  %v825 = vunpack.c.h.b16 %v22
  %v826 = vunpack.c.l.b16 %v23
  %v827 = vunpack.c.h.b16 %v23
  %v828 = vunpack.c.l.b16 %v24
  %v829 = vunpack.c.h.b16 %v24
  %v830 = vunpack.c.l.b16 %v25
  %v831 = vunpack.c.h.b16 %v25
  %v832 = vunpack.c.l.b16 %v26
  %v833 = vunpack.c.h.b16 %v26
  %v834 = vunpack.c.l.b16 %v27
  %v835 = vunpack.c.h.b16 %v27
  %v836 = vunpack.c.l.b16 %v28
  %v837 = vunpack.c.h.b16 %v28
  %v838 = vunpack.c.l.b16 %v29
  %v839 = vunpack.c.h.b16 %v29
  %v840 = vunpack.c.l.b16 %v30
  %v841 = vunpack.c.h.b16 %v30
  %v842 = vunpack.c.l.b16 %v31
  %v843 = vunpack.c.h.b16 %v31
  %v844 = vunpack.c.l.b16 %v32
  %v845 = vunpack.c.h.b16 %v32
  %v846 = vunpack.c.l.b16 %v33
  %v847 = vunpack.c.h.b16 %v33
  %v848 = vunpack.c.l.b16 %v34
  %v849 = vunpack.c.h.b16 %v34
  %v850 = vunpack.c.l.b16 %v35
  %v851 = vunpack.c.h.b16 %v35
  %v852 = vunpack.c.l.b16 %v36
  %v853 = vunpack.c.h.b16 %v36
  %v854 = vunpack.c.l.b16 %v37
  %v855 = vunpack.c.h.b16 %v37
  %v856 = vunpack.c.l.b16 %v38
  %v857 = vunpack.c.h.b16 %v38
  %v858 = vunpack.c.l.b16 %v39
  %v859 = vunpack.c.h.b16 %v39
  %v860 = vunpack.c.l.b16 %v40
  %v861 = vunpack.c.h.b16 %v40
  %v862 = vunpack.c.l.b16 %v41
  %v863 = vunpack.c.h.b16 %v41
  %v864 = vunpack.c.l.b16 %v42
  %v865 = vunpack.c.h.b16 %v42
  %v866 = vunpack.c.l.b16 %v43
  %v867 = vunpack.c.h.b16 %v43
  %v868 = vunpack.c.l.b16 %v44
  %v869 = vunpack.c.h.b16 %v44
  %v870 = vunpack.c.l.b16 %v45
  %v871 = vunpack.c.h.b16 %v45
  %v872 = vunpack.c.l.b16 %v46
  %v873 = vunpack.c.h.b16 %v46
  %v874 = vunpack.c.l.b16 %v47
  %v875 = vunpack.c.h.b16 %v47
  %v876 = vunpack.c.l.b16 %v48
  %v877 = vunpack.c.h.b16 %v48
  %v878 = vunpack.c.l.b16 %v49
  %v879 = vunpack.c.h.b16 %v49
  %v880 = vunpack.c.l.b16 %v50
  %v881 = vunpack.c.h.b16 %v50
  %v882 = vunpack.c.l.b16 %v51
  %v883 = vunpack.c.h.b16 %v51
  %v884 = vunpack.c.l.b16 %v52
  %v885 = vunpack.c.h.b16 %v52
  %v886 = vunpack.c.l.b16 %v53
  %v887 = vunpack.c.h.b16 %v53
  %v888 = vunpack.c.l.b16 %v54
  %v889 = vunpack.c.h.b16 %v54
  %v890 = vunpack.c.l.b16 %v55
  %v891 = vunpack.c.h.b16 %v55
  %v892 = vunpack.c.l.b16 %v56
  %v893 = vunpack.c.h.b16 %v56
  %v894 = vunpack.c.l.b16 %v57
  %v895 = vunpack.c.h.b16 %v57
  %v896 = vunpack.c.l.b16 %v58
  %v897 = vunpack.c.h.b16 %v58
  %v898 = vunpack.c.l.b16 %v59
  %v899 = vunpack.c.h.b16 %v59
  %v900 = vunpack.c.l.b16 %v60
  %v901 = vunpack.c.h.b16 %v60
  %v902 = vunpack.c.l.b16 %v61
  %v903 = vunpack.c.h.b16 %v61
  %v904 = vunpack.c.l.b16 %v62
  %v905 = vunpack.c.h.b16 %v62
  %v906 = vunpack.c.l.b16 %v63
  %v907 = vunpack.c.h.b16 %v63
  %v908 = vunpack.c.l.b16 %v64
  %v909 = vunpack.c.h.b16 %v64
  %v910 = vunpack.c.l.b16 %v65
  %v911 = vunpack.c.h.b16 %v65
  %v912 = vunpack.c.l.b16 %v66
  %v913 = vunpack.c.h.b16 %v66
  %v914 = vunpack.c.l.b16 %v67
  %v915 = vunpack.c.h.b16 %v67
  %v916 = vunpack.c.l.b16 %v68
  %v917 = vunpack.c.h.b16 %v68
  %v918 = vunpack.c.l.b16 %v69
  %v919 = vunpack.c.h.b16 %v69
  %v920 = vunpack.c.l.b16 %v70
  %v921 = vunpack.c.h.b16 %v70
  %v922 = vunpack.c.l.b16 %v71
  %v923 = vunpack.c.h.b16 %v71
  %v924 = vunpack.c.l.b16 %v72
  %v925 = vunpack.c.h.b16 %v72
  %v926 = vunpack.c.l.b16 %v73
  %v927 = vunpack.c.h.b16 %v73
  %v928 = vunpack.c.l.b16 %v74
  %v929 = vunpack.c.h.b16 %v74
  %v930 = vunpack.c.l.b16 %v75
  %v931 = vunpack.c.h.b16 %v75
  %v932 = vunpack.c.l.b16 %v76
  %v933 = vunpack.c.h.b16 %v76
  %v934 = vunpack.c.l.b16 %v77
  %v935 = vunpack.c.h.b16 %v77
  %v936 = vunpack.c.l.b16 %v78
  %v937 = vunpack.c.h.b16 %v78
  %v938 = vunpack.c.l.b16 %v79
  %v939 = vunpack.c.h.b16 %v79
  %v940 = vunpack.c.l.b16 %v80
  %v941 = vunpack.c.h.b16 %v80
  %v942 = vunpack.c.l.b16 %v81
  %v943 = vunpack.c.h.b16 %v81
  %v944 = vunpack.c.l.b16 %v82
  %v945 = vunpack.c.h.b16 %v82
  %v946 = vunpack.c.l.b16 %v83
  %v947 = vunpack.c.h.b16 %v83
  %v948 = vunpack.c.l.b16 %v84
  %v949 = vunpack.c.h.b16 %v84
  %v950 = vunpack.c.l.b16 %v85
  %v951 = vunpack.c.h.b16 %v85
  %v952 = vunpack.c.l.b16 %v86
  %v953 = vunpack.c.h.b16 %v86
  %v954 = vunpack.c.l.b16 %v87
  %v955 = vunpack.c.h.b16 %v87
  %v956 = vunpack.c.l.b16 %v88
  %v957 = vunpack.c.h.b16 %v88
  %v958 = vunpack.c.l.b16 %v89
  %v959 = vunpack.c.h.b16 %v89
  %v960 = vunpack.c.l.b16 %v90
  %v961 = vunpack.c.h.b16 %v90
  %v962 = vunpack.c.l.b16 %v91
  %v963 = vunpack.c.h.b16 %v91
  %v964 = vunpack.c.l.b16 %v92
  %v965 = vunpack.c.h.b16 %v92
  %v966 = vunpack.c.l.b16 %v93
  %v967 = vunpack.c.h.b16 %v93
  %v968 = vunpack.c.l.b16 %v94
  %v969 = vunpack.c.h.b16 %v94
  %v970 = vunpack.c.l.b16 %v95
  %v971 = vunpack.c.h.b16 %v95
  %v972 = vunpack.c.l.b16 %v96
  %v973 = vunpack.c.h.b16 %v96
  %v974 = vunpack.c.l.b16 %v97
  %v975 = vunpack.c.h.b16 %v97
  %v976 = vunpack.c.l.b16 %v98
  %v977 = vunpack.c.h.b16 %v98
  %v978 = vunpack.c.l.b16 %v99
  %v979 = vunpack.c.h.b16 %v99
  %v980 = vunpack.c.l.b16 %v100
  %v981 = vunpack.c.h.b16 %v100
  %v982 = vunpack.c.l.b16 %v101
  %v983 = vunpack.c.h.b16 %v101
  %v984 = vunpack.c.l.b16 %v102
  %v985 = vunpack.c.h.b16 %v102
  %v986 = vunpack.c.l.b16 %v103
  %v987 = vunpack.c.h.b16 %v103
  %v988 = vunpack.c.l.b16 %v104
  %v989 = vunpack.c.h.b16 %v104
  %v990 = vunpack.c.l.b16 %v105
  %v991 = vunpack.c.h.b16 %v105
  %v992 = vunpack.c.l.b16 %v106
  %v993 = vunpack.c.h.b16 %v106
  %v994 = vunpack.c.l.b16 %v107
  %v995 = vunpack.c.h.b16 %v107
  %v996 = vunpack.c.l.b16 %v108
  %v997 = vunpack.c.h.b16 %v108
  %v998 = vunpack.c.l.b16 %v109
  %v999 = vunpack.c.h.b16 %v109
  %v1000 = vunpack.c.l.b16 %v110
  %v1001 = vunpack.c.h.b16 %v110
  %v1002 = vunpack.c.l.b16 %v111
  %v1003 = vunpack.c.h.b16 %v111
  %v1004 = vunpack.c.l.b16 %v112
  %v1005 = vunpack.c.h.b16 %v112
  %v1006 = vunpack.c.l.b16 %v113
  %v1007 = vunpack.c.h.b16 %v113
  %v1008 = vunpack.c.l.b16 %v114
  %v1009 = vunpack.c.h.b16 %v114
  %v1010 = vunpack.c.l.b16 %v115
  %v1011 = vunpack.c.h.b16 %v115
  %v1012 = vunpack.c.l.b16 %v116
  %v1013 = vunpack.c.h.b16 %v116
  %v1014 = vunpack.c.l.b16 %v117
  %v1015 = vunpack.c.h.b16 %v117
  %v1016 = vunpack.c.l.b16 %v118
  %v1017 = vunpack.c.h.b16 %v118
  %v1018 = vunpack.c.l.b16 %v119
  %v1019 = vunpack.c.h.b16 %v119
  %v1020 = vunpack.c.l.b16 %v120
  %v1021 = vunpack.c.h.b16 %v120
  %v1022 = vunpack.c.l.b16 %v121
  %v1023 = vunpack.c.h.b16 %v121
  %v1024 = vunpack.c.l.b16 %v122
  %v1025 = vunpack.c.h.b16 %v122
  %v1026 = vunpack.c.l.b16 %v123
  %v1027 = vunpack.c.h.b16 %v123
  %v1028 = vunpack.c.l.b16 %v124
  %v1029 = vunpack.c.h.b16 %v124
  %v1030 = vunpack.c.l.b16 %v125
  %v1031 = vunpack.c.h.b16 %v125
  %v1032 = vunpack.c.l.b16 %v126
  %v1033 = vunpack.c.h.b16 %v126
  %v1034 = vunpack.c.l.b16 %v127
  %v1035 = vunpack.c.h.b16 %v127
  %v1036 = vunpack.c.l.b16 %v128
  %v1037 = vunpack.c.h.b16 %v128
  %v1038 = vunpack.c.l.b16 %v129
  %v1039 = vunpack.c.h.b16 %v129
  %v1040 = vunpack.c.l.b16 %v130
  %v1041 = vunpack.c.h.b16 %v130
  %v1042 = vunpack.c.l.b16 %v131
  %v1043 = vunpack.c.h.b16 %v131
  %v1044 = vunpack.c.l.b16 %v132
  %v1045 = vunpack.c.h.b16 %v132
  %v1046 = vunpack.c.l.b16 %v133
  %v1047 = vunpack.c.h.b16 %v133
  %v1048 = vunpack.c.l.b16 %v134
  %v1049 = vunpack.c.h.b16 %v134
  %v1050 = vunpack.c.l.b16 %v135
  %v1051 = vunpack.c.h.b16 %v135
  %v1052 = vunpack.c.l.b16 %v136
  %v1053 = vunpack.c.h.b16 %v136
  %v1054 = vunpack.c.l.b16 %v137
  %v1055 = vunpack.c.h.b16 %v137
  %v1056 = vunpack.c.l.b16 %v138
  %v1057 = vunpack.c.h.b16 %v138
  %v1058 = vunpack.c.l.b16 %v139
  %v1059 = vunpack.c.h.b16 %v139
  %v1060 = vunpack.c.l.b16 %v140
  %v1061 = vunpack.c.h.b16 %v140
  %v1062 = vunpack.c.l.b16 %v141
  %v1063 = vunpack.c.h.b16 %v141
  %v1064 = vunpack.c.l.b16 %v142
  %v1065 = vunpack.c.h.b16 %v142
  %v1066 = vunpack.c.l.b16 %v143
  %v1067 = vunpack.c.h.b16 %v143
  %v1068 = vunpack.c.l.b16 %v144
  %v1069 = vunpack.c.h.b16 %v144
  %v1070 = vunpack.c.l.b16 %v145
  %v1071 = vunpack.c.h.b16 %v145
  %v1072 = vunpack.c.l.b16 %v146
  %v1073 = vunpack.c.h.b16 %v146
  %v1074 = vunpack.c.l.b16 %v147
  %v1075 = vunpack.c.h.b16 %v147
  %v1076 = vunpack.c.l.b16 %v148
  %v1077 = vunpack.c.h.b16 %v148
  %v1078 = vunpack.c.l.b16 %v149
  %v1079 = vunpack.c.h.b16 %v149
  %v1080 = vunpack.c.l.b16 %v150
  %v1081 = vunpack.c.h.b16 %v150
  %v1082 = vunpack.c.l.b16 %v151
  %v1083 = vunpack.c.h.b16 %v151
  %v1084 = vunpack.c.l.b16 %v152
  %v1085 = vunpack.c.h.b16 %v152
  %v1086 = vunpack.c.l.b16 %v153
  %v1087 = vunpack.c.h.b16 %v153
  %v1088 = vunpack.c.l.b16 %v154
  %v1089 = vunpack.c.h.b16 %v154
  %v1090 = vunpack.c.l.b16 %v155
  %v1091 = vunpack.c.h.b16 %v155
  %v1092 = vunpack.c.l.b16 %v156
  %v1093 = vunpack.c.h.b16 %v156
  %v1094 = vunpack.c.l.b16 %v157
  %v1095 = vunpack.c.h.b16 %v157
  %v1096 = vunpack.c.l.b16 %v158
  %v1097 = vunpack.c.h.b16 %v158
  %v1098 = vunpack.c.l.b16 %v159
  %v1099 = vunpack.c.h.b16 %v159
  %v1100 = vunpack.c.l.b16 %v160
  %v1101 = vunpack.c.h.b16 %v160
  %v1102 = vunpack.c.l.b16 %v161
  %v1103 = vunpack.c.h.b16 %v161
  %v1104 = vunpack.c.l.b16 %v162
  %v1105 = vunpack.c.h.b16 %v162
  %v1106 = vunpack.c.l.b16 %v163
  %v1107 = vunpack.c.h.b16 %v163
  %v1108 = vpack.c.b16 %v852, %v820
  %v1109 = vpack.c.b16 %v853, %v821
  %v1110 = vpack.c.b16 %v854, %v822
  %v1111 = vpack.c.b16 %v855, %v823
  %v1112 = vpack.c.b16 %v856, %v824
  %v1113 = vpack.c.b16 %v857, %v825
  %v1114 = vpack.c.b16 %v858, %v826
  %v1115 = vpack.c.b16 %v859, %v827
  %v1116 = vpack.c.b16 %v860, %v828
  %v1117 = vpack.c.b16 %v861, %v829
  %v1118 = vpack.c.b16 %v862, %v830
  %v1119 = vpack.c.b16 %v863, %v831
  %v1120 = vpack.c.b16 %v864, %v832
  %v1121 = vpack.c.b16 %v865, %v833
  %v1122 = vpack.c.b16 %v866, %v834
  %v1123 = vpack.c.b16 %v867, %v835
  %v1124 = vpack.c.b16 %v868, %v836
  %v1125 = vpack.c.b16 %v869, %v837
  %v1126 = vpack.c.b16 %v870, %v838
  %v1127 = vpack.c.b16 %v871, %v839
  %v1128 = vpack.c.b16 %v872, %v840
  %v1129 = vpack.c.b16 %v873, %v841
  %v1130 = vpack.c.b16 %v874, %v842
  %v1131 = vpack.c.b16 %v875, %v843
  %v1132 = vpack.c.b16 %v876, %v844
  %v1133 = vpack.c.b16 %v877, %v845
  %v1134 = vpack.c.b16 %v878, %v846
  %v1135 = vpack.c.b16 %v879, %v847
  %v1136 = vpack.c.b16 %v880, %v848
  %v1137 = vpack.c.b16 %v881, %v849
  %v1138 = vpack.c.b16 %v882, %v850
  %v1139 = vpack.c.b16 %v883, %v851
  %v1140 = vpack.c.b16 %v916, %v884
  %v1141 = vpack.c.b16 %v917, %v885
  %v1142 = vpack.c.b16 %v918, %v886
  %v1143 = vpack.c.b16 %v919, %v887
  %v1144 = vpack.c.b16 %v920, %v888
  %v1145 = vpack.c.b16 %v921, %v889
  %v1146 = vpack.c.b16 %v922, %v890
  %v1147 = vpack.c.b16 %v923, %v891
  %v1148 = vpack.c.b16 %v924, %v892
  %v1149 = vpack.c.b16 %v925, %v893
  %v1150 = vpack.c.b16 %v926, %v894
  %v1151 = vpack.c.b16 %v927, %v895
  %v1152 = vpack.c.b16 %v928, %v896
  %v1153 = vpack.c.b16 %v929, %v897
  %v1154 = vpack.c.b16 %v930, %v898
  %v1155 = vpack.c.b16 %v931, %v899
  %v1156 = vpack.c.b16 %v932, %v900
  %v1157 = vpack.c.b16 %v933, %v901
  %v1158 = vpack.c.b16 %v934, %v902
  %v1159 = vpack.c.b16 %v935, %v903
  %v1160 = vpack.c.b16 %v936, %v904
  %v1161 = vpack.c.b16 %v937, %v905
  %v1162 = vpack.c.b16 %v938, %v906
  %v1163 = vpack.c.b16 %v939, %v907
  %v1164 = vpack.c.b16 %v940, %v908
  %v1165 = vpack.c.b16 %v941, %v909
  %v1166 = vpack.c.b16 %v942, %v910
  %v1167 = vpack.c.b16 %v943, %v911
  %v1168 = vpack.c.b16 %v944, %v912
  %v1169 = vpack.c.b16 %v945, %v913
  %v1170 = vpack.c.b16 %v946, %v914
  %v1171 = vpack.c.b16 %v947, %v915
  %v1172 = vpack.c.b16 %v980, %v948
  %v1173 = vpack.c.b16 %v981, %v949
  %v1174 = vpack.c.b16 %v982, %v950
  %v1175 = vpack.c.b16 %v983, %v951
  %v1176 = vpack.c.b16 %v984, %v952
  %v1177 = vpack.c.b16 %v985, %v953
  %v1178 = vpack.c.b16 %v986, %v954
  %v1179 = vpack.c.b16 %v987, %v955
  %v1180 = vpack.c.b16 %v988, %v956
  %v1181 = vpack.c.b16 %v989, %v957
  %v1182 = vpack.c.b16 %v990, %v958
  %v1183 = vpack.c.b16 %v991, %v959
  %v1184 = vpack.c.b16 %v992, %v960
  %v1185 = vpack.c.b16 %v993, %v961
  %v1186 = vpack.c.b16 %v994, %v962
  %v1187 = vpack.c.b16 %v995, %v963
  %v1188 = vpack.c.b16 %v996, %v964
  %v1189 = vpack.c.b16 %v997, %v965
  %v1190 = vpack.c.b16 %v998, %v966
  %v1191 = vpack.c.b16 %v999, %v967
  %v1192 = vpack.c.b16 %v1000, %v968
  %v1193 = vpack.c.b16 %v1001, %v969
  %v1194 = vpack.c.b16 %v1002, %v970
  %v1195 = vpack.c.b16 %v1003, %v971
  %v1196 = vpack.c.b16 %v1004, %v972
  %v1197 = vpack.c.b16 %v1005, %v973
  %v1198 = vpack.c.b16 %v1006, %v974
  %v1199 = vpack.c.b16 %v1007, %v975
  %v1200 = vpack.c.b16 %v1008, %v976
  %v1201 = vpack.c.b16 %v1009, %v977
  %v1202 = vpack.c.b16 %v1010, %v978
  %v1203 = vpack.c.b16 %v1011, %v979
  %v1204 = vpack.c.b16 %v1044, %v1012
  %v1205 = vpack.c.b16 %v1045, %v1013
  %v1206 = vpack.c.b16 %v1046, %v1014
  %v1207 = vpack.c.b16 %v1047, %v1015
  %v1208 = vpack.c.b16 %v1048, %v1016
  %v1209 = vpack.c.b16 %v1049, %v1017
  %v1210 = vpack.c.b16 %v1050, %v1018
  %v1211 = vpack.c.b16 %v1051, %v1019
  %v1212 = vpack.c.b16 %v1052, %v1020
  %v1213 = vpack.c.b16 %v1053, %v1021
  %v1214 = vpack.c.b16 %v1054, %v1022
  %v1215 = vpack.c.b16 %v1055, %v1023
  %v1216 = vpack.c.b16 %v1056, %v1024
  %v1217 = vpack.c.b16 %v1057, %v1025
  %v1218 = vpack.c.b16 %v1058, %v1026
  %v1219 = vpack.c.b16 %v1059, %v1027
  %v1220 = vpack.c.b16 %v1060, %v1028
  %v1221 = vpack.c.b16 %v1061, %v1029
  %v1222 = vpack.c.b16 %v1062, %v1030
  %v1223 = vpack.c.b16 %v1063, %v1031
  %v1224 = vpack.c.b16 %v1064, %v1032
  %v1225 = vpack.c.b16 %v1065, %v1033
  %v1226 = vpack.c.b16 %v1066, %v1034
  %v1227 = vpack.c.b16 %v1067, %v1035
  %v1228 = vpack.c.b16 %v1068, %v1036
  %v1229 = vpack.c.b16 %v1069, %v1037
  %v1230 = vpack.c.b16 %v1070, %v1038
  %v1231 = vpack.c.b16 %v1071, %v1039
  %v1232 = vpack.c.b16 %v1072, %v1040
  %v1233 = vpack.c.b16 %v1073, %v1041
  %v1234 = vpack.c.b16 %v1074, %v1042
  %v1235 = vpack.c.b16 %v1075, %v1043
  %v1236 = vpack.c.b16 %v1076, %v1076
  %v1237 = vpack.c.b16 %v1077, %v1077
  %v1238 = vpack.c.b16 %v1078, %v1078
  %v1239 = vpack.c.b16 %v1079, %v1079
  %v1240 = vpack.c.b16 %v1080, %v1080
  %v1241 = vpack.c.b16 %v1081, %v1081
  %v1242 = vpack.c.b16 %v1082, %v1082
  %v1243 = vpack.c.b16 %v1083, %v1083
  %v1244 = vpack.c.b16 %v1084, %v1084
  %v1245 = vpack.c.b16 %v1085, %v1085
  %v1246 = vpack.c.b16 %v1086, %v1086
  %v1247 = vpack.c.b16 %v1087, %v1087
  %v1248 = vpack.c.b16 %v1088, %v1088
  %v1249 = vpack.c.b16 %v1089, %v1089
  %v1250 = vpack.c.b16 %v1090, %v1090
  %v1251 = vpack.c.b16 %v1091, %v1091
  %v1252 = vpack.c.b16 %v1092, %v1092
  %v1253 = vpack.c.b16 %v1093, %v1093
  %v1254 = vpack.c.b16 %v1094, %v1094
  %v1255 = vpack.c.b16 %v1095, %v1095
  %v1256 = vpack.c.b16 %v1096, %v1096
  %v1257 = vpack.c.b16 %v1097, %v1097
  %v1258 = vpack.c.b16 %v1098, %v1098
  %v1259 = vpack.c.b16 %v1099, %v1099
  %v1260 = vpack.c.b16 %v1100, %v1100
  %v1261 = vpack.c.b16 %v1101, %v1101
  %v1262 = vpack.c.b16 %v1102, %v1102
  %v1263 = vpack.c.b16 %v1103, %v1103
  %v1264 = vpack.c.b16 %v1104, %v1104
  %v1265 = vpack.c.b16 %v1105, %v1105
  %v1266 = vpack.c.b16 %v1106, %v1106
  %v1267 = vpack.c.b16 %v1107, %v1107
  %v1940 = vunpack.c.l.b16 %v164
  %v1941 = vunpack.c.l.b16 %v165
  %v1942 = vunpack.c.l.b16 %v166
  %v1943 = vunpack.c.l.b16 %v167
  %v1944 = vunpack.c.l.b16 %v168
  %v1945 = vunpack.c.l.b16 %v169
  %v1946 = vunpack.c.l.b16 %v170
  %v1947 = vunpack.c.l.b16 %v171
  %v1948 = vunpack.c.l.b16 %v172
  %v1949 = vunpack.c.l.b16 %v173
  %v1950 = vunpack.c.l.b16 %v174
  %v1951 = vunpack.c.l.b16 %v175
  %v1952 = vunpack.c.l.b16 %v176
  %v1953 = vunpack.c.l.b16 %v177
  %v1954 = vunpack.c.l.b16 %v178
  %v1955 = vunpack.c.l.b16 %v179
  %v1956 = vunpack.c.l.b16 %v180
  %v1957 = vunpack.c.l.b16 %v181
  %v1958 = vunpack.c.l.b16 %v182
  %v1959 = vunpack.c.l.b16 %v183
  %v1960 = vunpack.c.l.b16 %v184
  %v1961 = vunpack.c.l.b16 %v185
  %v1962 = vunpack.c.l.b16 %v186
  %v1963 = vunpack.c.l.b16 %v187
  %v1964 = vunpack.c.l.b16 %v188
  %v1965 = vunpack.c.l.b16 %v189
  %v1966 = vunpack.c.l.b16 %v190
  %v1967 = vunpack.c.l.b16 %v191
  %v1968 = vunpack.c.l.b16 %v192
  %v1969 = vunpack.c.l.b16 %v193
  %v1970 = vunpack.c.l.b16 %v194
  %v1971 = vunpack.c.l.b16 %v195
  %v1972 = vunpack.c.l.b16 %v196
  %v1973 = vunpack.c.l.b16 %v197
  %v1974 = vunpack.c.l.b16 %v198
  %v1975 = vunpack.c.l.b16 %v199
  %v1976 = vunpack.c.l.b16 %v200
  %v1977 = vunpack.c.l.b16 %v201
  %v1978 = vunpack.c.l.b16 %v202
  %v1979 = vunpack.c.l.b16 %v203
  %v1980 = vunpack.c.l.b16 %v204
  %v1981 = vunpack.c.l.b16 %v205
  %v1982 = vunpack.c.l.b16 %v206
  %v1983 = vunpack.c.l.b16 %v207
  %v1984 = vunpack.c.l.b16 %v208
  %v1985 = vunpack.c.l.b16 %v209
  %v1986 = vunpack.c.l.b16 %v210
  %v1987 = vunpack.c.l.b16 %v211
  %v1988 = vunpack.c.l.b16 %v212
  %v1989 = vunpack.c.l.b16 %v213
  %v1990 = vunpack.c.l.b16 %v214
  %v1991 = vunpack.c.l.b16 %v215
  %v1992 = vunpack.c.l.b16 %v216
  %v1993 = vunpack.c.l.b16 %v217
  %v1994 = vunpack.c.l.b16 %v218
  %v1995 = vunpack.c.l.b16 %v219
  %v1996 = vunpack.c.l.b16 %v220
  %v1997 = vunpack.c.l.b16 %v221
  %v1998 = vunpack.c.l.b16 %v222
  %v1999 = vunpack.c.l.b16 %v223
  %v2000 = vunpack.c.l.b16 %v224
  %v2001 = vunpack.c.l.b16 %v225
  %v2002 = vunpack.c.l.b16 %v226
  %v2003 = vunpack.c.l.b16 %v227
  %v2004 = vunpack.c.l.b16 %v228
  %v2005 = vunpack.c.l.b16 %v229
  %v2006 = vunpack.c.l.b16 %v230
  %v2007 = vunpack.c.l.b16 %v231
  %v2008 = vunpack.c.l.b16 %v232
  %v2009 = vunpack.c.l.b16 %v233
  %v2010 = vunpack.c.l.b16 %v234
  %v2011 = vunpack.c.l.b16 %v235
  %v2012 = vunpack.c.l.b16 %v236
  %v2013 = vunpack.c.l.b16 %v237
  %v2014 = vunpack.c.l.b16 %v238
  %v2015 = vunpack.c.l.b16 %v239
  %v2016 = vunpack.c.l.b16 %v240
  %v2017 = vunpack.c.l.b16 %v241
  %v2018 = vunpack.c.l.b16 %v242
  %v2019 = vunpack.c.l.b16 %v243
  %v2020 = vunpack.c.l.b16 %v244
  %v2021 = vunpack.c.l.b16 %v245
  %v2022 = vunpack.c.l.b16 %v246
  %v2023 = vunpack.c.l.b16 %v247
  %v2024 = vunpack.c.l.b16 %v248
  %v2025 = vunpack.c.l.b16 %v249
  %v2026 = vunpack.c.l.b16 %v250
  %v2027 = vunpack.c.l.b16 %v251
  %v2028 = vunpack.c.l.b16 %v252
  %v2029 = vunpack.c.l.b16 %v253
  %v2030 = vunpack.c.l.b16 %v254
  %v2031 = vunpack.c.l.b16 %v255
  %v2032 = vunpack.c.l.b16 %v256
  %v2033 = vunpack.c.l.b16 %v257
  %v2034 = vunpack.c.l.b16 %v258
  %v2035 = vunpack.c.l.b16 %v259
  %v2036 = vunpack.c.l.b16 %v260
  %v2037 = vunpack.c.l.b16 %v261
  %v2038 = vunpack.c.l.b16 %v262
  %v2039 = vunpack.c.l.b16 %v263
  %v2040 = vunpack.c.l.b16 %v264
  %v2041 = vunpack.c.l.b16 %v265
  %v2042 = vunpack.c.l.b16 %v266
  %v2043 = vunpack.c.l.b16 %v267
  %v2044 = vunpack.c.l.b16 %v268
  %v2045 = vunpack.c.l.b16 %v269
  %v2046 = vunpack.c.l.b16 %v270
  %v2047 = vunpack.c.l.b16 %v271
  %v2048 = vunpack.c.l.b16 %v272
  %v2049 = vunpack.c.l.b16 %v273
  %v2050 = vunpack.c.l.b16 %v274
  %v2051 = vunpack.c.l.b16 %v275
  %v2052 = vunpack.c.l.b16 %v276
  %v2053 = vunpack.c.l.b16 %v277
  %v2054 = vunpack.c.l.b16 %v278
  %v2055 = vunpack.c.l.b16 %v279
  %v2056 = vunpack.c.l.b16 %v280
  %v2057 = vunpack.c.l.b16 %v281
  %v2058 = vunpack.c.l.b16 %v282
  %v2059 = vunpack.c.l.b16 %v283
  %v2060 = vunpack.c.l.b16 %v284
  %v2061 = vunpack.c.l.b16 %v285
  %v2062 = vunpack.c.l.b16 %v286
  %v2063 = vunpack.c.l.b16 %v287
  %v2064 = vunpack.c.l.b16 %v288
  %v2065 = vunpack.c.l.b16 %v289
  %v2066 = vunpack.c.l.b16 %v290
  %v2067 = vunpack.c.l.b16 %v291
  %v2068 = vunpack.c.l.b16 %v292
  %v2069 = vunpack.c.l.b16 %v293
  %v2070 = vunpack.c.l.b16 %v294
  %v2071 = vunpack.c.l.b16 %v295
  %v2072 = vunpack.c.l.b16 %v296
  %v2073 = vunpack.c.l.b16 %v297
  %v2074 = vunpack.c.l.b16 %v298
  %v2075 = vunpack.c.l.b16 %v299
  %v2076 = vunpack.c.l.b16 %v300
  %v2077 = vunpack.c.l.b16 %v301
  %v2078 = vunpack.c.l.b16 %v302
  %v2079 = vunpack.c.l.b16 %v303
  %v2080 = vunpack.c.l.b16 %v304
  %v2081 = vunpack.c.l.b16 %v305
  %v2082 = vunpack.c.l.b16 %v306
  %v2083 = vunpack.c.l.b16 %v307
  %v2084 = vunpack.c.l.b16 %v308
  %v2085 = vunpack.c.l.b16 %v309
  %v2086 = vunpack.c.l.b16 %v310
  %v2087 = vunpack.c.l.b16 %v311
  %v2088 = vunpack.c.l.b16 %v312
  %v2089 = vunpack.c.l.b16 %v313
  %v2090 = vunpack.c.l.b16 %v314
  %v2091 = vunpack.c.l.b16 %v315
  %v2092 = vunpack.c.l.b16 %v316
  %v2093 = vunpack.c.l.b16 %v317
  %v2094 = vunpack.c.l.b16 %v318
  %v2095 = vunpack.c.l.b16 %v319
  %v2096 = vunpack.c.l.b16 %v320
  %v2097 = vunpack.c.l.b16 %v321
  %v2098 = vunpack.c.l.b16 %v322
  %v2099 = vunpack.c.l.b16 %v323
  %v2100 = vunpack.c.l.b16 %v324
  %v2101 = vunpack.c.l.b16 %v325
  %v2102 = vunpack.c.l.b16 %v326
  %v2103 = vunpack.c.l.b16 %v327
  %v2104 = vunpack.c.l.b16 %v328
  %v2105 = vunpack.c.l.b16 %v329
  %v2106 = vunpack.c.l.b16 %v330
  %v2107 = vunpack.c.l.b16 %v331
  %v2108 = vunpack.c.l.b16 %v332
  %v2109 = vunpack.c.l.b16 %v333
  %v2110 = vunpack.c.l.b16 %v334
  %v2111 = vunpack.c.l.b16 %v335
  %v2112 = vunpack.c.l.b16 %v336
  %v2113 = vunpack.c.l.b16 %v337
  %v2114 = vunpack.c.l.b16 %v338
  %v2115 = vunpack.c.l.b16 %v339
  %v2116 = vunpack.c.l.b16 %v340
  %v2117 = vunpack.c.l.b16 %v341
  %v2118 = vunpack.c.l.b16 %v342
  %v2119 = vunpack.c.l.b16 %v343
  %v2120 = vunpack.c.l.b16 %v344
  %v2121 = vunpack.c.l.b16 %v345
  %v2122 = vunpack.c.l.b16 %v346
  %v2123 = vunpack.c.l.b16 %v347
  %v2124 = vunpack.c.l.b16 %v348
  %v2125 = vunpack.c.l.b16 %v349
  %v2126 = vunpack.c.l.b16 %v350
  %v2127 = vunpack.c.l.b16 %v351
  %v2128 = vunpack.c.l.b16 %v352
  %v2129 = vunpack.c.l.b16 %v353
  %v2130 = vunpack.c.l.b16 %v354
  %v2131 = vunpack.c.l.b16 %v355
  %v2132 = vunpack.c.l.b16 %v356
  %v2133 = vunpack.c.l.b16 %v357
  %v2134 = vunpack.c.l.b16 %v358
  %v2135 = vunpack.c.l.b16 %v359
  %v2136 = vunpack.c.l.b16 %v360
  %v2137 = vunpack.c.l.b16 %v361
  %v2138 = vunpack.c.l.b16 %v362
  %v2139 = vunpack.c.l.b16 %v363
  %v2140 = vunpack.c.l.b16 %v364
  %v2141 = vunpack.c.l.b16 %v365
  %v2142 = vunpack.c.l.b16 %v366
  %v2143 = vunpack.c.l.b16 %v367
  %v2144 = vunpack.c.l.b16 %v368
  %v2145 = vunpack.c.l.b16 %v369
  %v2146 = vunpack.c.l.b16 %v370
  %v2147 = vunpack.c.l.b16 %v371
  %v2148 = vunpack.c.l.b16 %v372
  %v2149 = vunpack.c.l.b16 %v373
  %v2150 = vunpack.c.l.b16 %v374
  %v2151 = vunpack.c.l.b16 %v375
  %v2152 = vunpack.c.l.b16 %v376
  %v2153 = vunpack.c.l.b16 %v377
  %v2154 = vunpack.c.l.b16 %v378
  %v2155 = vunpack.c.l.b16 %v379
  %v2156 = vunpack.c.l.b16 %v380
  %v2157 = vunpack.c.l.b16 %v381
  %v2158 = vunpack.c.l.b16 %v382
  %v2159 = vunpack.c.l.b16 %v383
  %v2160 = vunpack.c.l.b16 %v384
  %v2161 = vunpack.c.l.b16 %v385
  %v2162 = vunpack.c.l.b16 %v386
  %v2163 = vunpack.c.l.b16 %v387
  %v2164 = vunpack.c.l.b16 %v388
  %v2165 = vunpack.c.l.b16 %v389
  %v2166 = vunpack.c.l.b16 %v390
  %v2167 = vunpack.c.l.b16 %v391
  %v2168 = vunpack.c.l.b16 %v392
  %v2169 = vunpack.c.l.b16 %v393
  %v2170 = vunpack.c.l.b16 %v394
  %v2171 = vunpack.c.l.b16 %v395
  %v2172 = vunpack.c.l.b16 %v396
  %v2173 = vunpack.c.l.b16 %v397
  %v2174 = vunpack.c.l.b16 %v398
  %v2175 = vunpack.c.l.b16 %v399
  %v2176 = vunpack.c.l.b16 %v400
  %v2177 = vunpack.c.l.b16 %v401
  %v2178 = vunpack.c.l.b16 %v402
  %v2179 = vunpack.c.l.b16 %v403
  %v2180 = vunpack.c.l.b16 %v404
  %v2181 = vunpack.c.l.b16 %v405
  %v2182 = vunpack.c.l.b16 %v406
  %v2183 = vunpack.c.l.b16 %v407
  %v2184 = vunpack.c.l.b16 %v408
  %v2185 = vunpack.c.l.b16 %v409
  %v2186 = vunpack.c.l.b16 %v410
  %v2187 = vunpack.c.l.b16 %v411
  %v2188 = vunpack.c.l.b16 %v412
  %v2189 = vunpack.c.l.b16 %v413
  %v2190 = vunpack.c.l.b16 %v414
  %v2191 = vunpack.c.l.b16 %v415
  %v2192 = vunpack.c.l.b16 %v416
  %v2193 = vunpack.c.l.b16 %v417
  %v2194 = vunpack.c.l.b16 %v418
  %v2195 = vunpack.c.l.b16 %v419
  %v2196 = vunpack.c.l.b16 %v420
  %v2197 = vunpack.c.l.b16 %v421
  %v2198 = vunpack.c.l.b16 %v422
  %v2199 = vunpack.c.l.b16 %v423
  %v2200 = vunpack.c.l.b16 %v424
  %v2201 = vunpack.c.l.b16 %v425
  %v2202 = vunpack.c.l.b16 %v426
  %v2203 = vunpack.c.l.b16 %v427
  %v2204 = vunpack.c.l.b16 %v428
  %v2205 = vunpack.c.l.b16 %v429
  %v2206 = vunpack.c.l.b16 %v430
  %v2207 = vunpack.c.l.b16 %v431
  %v2208 = vunpack.c.l.b16 %v432
  %v2209 = vunpack.c.l.b16 %v433
  %v2210 = vunpack.c.l.b16 %v434
  %v2211 = vunpack.c.l.b16 %v435
  %v2212 = vunpack.c.l.b16 %v436
  %v2213 = vunpack.c.l.b16 %v437
  %v2214 = vunpack.c.l.b16 %v438
  %v2215 = vunpack.c.l.b16 %v439
  %v2216 = vunpack.c.l.b16 %v440
  %v2217 = vunpack.c.l.b16 %v441
  %v2218 = vunpack.c.l.b16 %v442
  %v2219 = vunpack.c.l.b16 %v443
  %v2220 = vunpack.c.l.b16 %v444
  %v2221 = vunpack.c.l.b16 %v445
  %v2222 = vunpack.c.l.b16 %v446
  %v2223 = vunpack.c.l.b16 %v447
  %v2224 = vunpack.c.l.b16 %v448
  %v2225 = vunpack.c.l.b16 %v449
  %v2226 = vunpack.c.l.b16 %v450
  %v2227 = vunpack.c.l.b16 %v451
  %v2228 = vunpack.c.l.b16 %v452
  %v2229 = vunpack.c.l.b16 %v453
  %v2230 = vunpack.c.l.b16 %v454
  %v2231 = vunpack.c.l.b16 %v455
  %v2232 = vunpack.c.l.b16 %v456
  %v2233 = vunpack.c.l.b16 %v457
  %v2234 = vunpack.c.l.b16 %v458
  %v2235 = vunpack.c.l.b16 %v459
  %v2236 = vunpack.c.l.b16 %v460
  %v2237 = vunpack.c.l.b16 %v461
  %v2238 = vunpack.c.l.b16 %v462
  %v2239 = vunpack.c.l.b16 %v463
  %v2240 = vunpack.c.l.b16 %v464
  %v2241 = vunpack.c.l.b16 %v465
  %v2242 = vunpack.c.l.b16 %v466
  %v2243 = vunpack.c.l.b16 %v467
  %v2244 = vunpack.c.l.b16 %v468
  %v2245 = vunpack.c.l.b16 %v469
  %v2246 = vunpack.c.l.b16 %v470
  %v2247 = vunpack.c.l.b16 %v471
  %v2248 = vunpack.c.l.b16 %v472
  %v2249 = vunpack.c.l.b16 %v473
  %v2250 = vunpack.c.l.b16 %v474
  %v2251 = vunpack.c.l.b16 %v475
  %v2252 = vunpack.c.l.b16 %v476
  %v2253 = vunpack.c.l.b16 %v477
  %v2254 = vunpack.c.l.b16 %v478
  %v2255 = vunpack.c.l.b16 %v479
  %v2256 = vunpack.c.l.b16 %v480
  %v2257 = vunpack.c.l.b16 %v481
  %v2258 = vunpack.c.l.b16 %v482
  %v2259 = vunpack.c.l.b16 %v483
  %v2260 = vunpack.c.l.b16 %v484
  %v2261 = vunpack.c.l.b16 %v485
  %v2262 = vunpack.c.l.b16 %v486
  %v2263 = vunpack.c.l.b16 %v487
  %v2264 = vunpack.c.l.b16 %v488
  %v2265 = vunpack.c.l.b16 %v489
  %v2266 = vunpack.c.l.b16 %v490
  %v2267 = vunpack.c.l.b16 %v491
  %v2268 = vunpack.c.l.b16 %v492
  %v2269 = vunpack.c.l.b16 %v493
  %v2270 = vunpack.c.l.b16 %v494
  %v2271 = vunpack.c.l.b16 %v495
  %v2272 = vunpack.c.l.b16 %v496
  %v2273 = vunpack.c.l.b16 %v497
  %v2274 = vunpack.c.l.b16 %v498
  %v2275 = vunpack.c.l.b16 %v499
  %v2276 = vunpack.c.l.b16 %v500
  %v2277 = vunpack.c.l.b16 %v501
  %v2278 = vunpack.c.l.b16 %v502
  %v2279 = vunpack.c.l.b16 %v503
  %v2280 = vunpack.c.l.b16 %v504
  %v2281 = vunpack.c.l.b16 %v505
  %v2282 = vunpack.c.l.b16 %v506
  %v2283 = vunpack.c.l.b16 %v507
  %v2284 = vunpack.c.l.b16 %v508
  %v2285 = vunpack.c.l.b16 %v509
  %v2286 = vunpack.c.l.b16 %v510
  %v2287 = vunpack.c.l.b16 %v511
  %v2288 = vunpack.c.l.b16 %v512
  %v2289 = vunpack.c.l.b16 %v513
  %v2290 = vunpack.c.l.b16 %v514
  %v2291 = vunpack.c.l.b16 %v515
  %v2292 = vunpack.c.l.b16 %v516
  %v2293 = vunpack.c.l.b16 %v517
  %v2294 = vunpack.c.l.b16 %v518
  %v2295 = vunpack.c.l.b16 %v519
  %v2296 = vunpack.c.l.b16 %v520
  %v2297 = vunpack.c.l.b16 %v521
  %v2298 = vunpack.c.l.b16 %v522
  %v2299 = vunpack.c.l.b16 %v523
  %v2300 = vunpack.c.l.b16 %v524
  %v2301 = vunpack.c.l.b16 %v525
  %v2302 = vunpack.c.l.b16 %v526
  %v2303 = vunpack.c.l.b16 %v527
  %v2304 = vunpack.c.l.b16 %v528
  %v2305 = vunpack.c.l.b16 %v529
  %v2306 = vunpack.c.l.b16 %v530
  %v2307 = vunpack.c.l.b16 %v531
  %v2308 = vunpack.c.l.b16 %v532
  %v2309 = vunpack.c.l.b16 %v533
  %v2310 = vunpack.c.l.b16 %v534
  %v2311 = vunpack.c.l.b16 %v535
  %v2312 = vunpack.c.l.b16 %v536
  %v2313 = vunpack.c.l.b16 %v537
  %v2314 = vunpack.c.l.b16 %v538
  %v2315 = vunpack.c.l.b16 %v539
  %v2316 = vunpack.c.l.b16 %v540
  %v2317 = vunpack.c.l.b16 %v541
  %v2318 = vunpack.c.l.b16 %v542
  %v2319 = vunpack.c.l.b16 %v543
  %v2320 = vunpack.c.l.b16 %v544
  %v2321 = vunpack.c.l.b16 %v545
  %v2322 = vunpack.c.l.b16 %v546
  %v2323 = vunpack.c.l.b16 %v547
  %v2324 = vunpack.c.l.b16 %v548
  %v2325 = vunpack.c.l.b16 %v549
  %v2326 = vunpack.c.l.b16 %v550
  %v2327 = vunpack.c.l.b16 %v551
  %v2328 = vunpack.c.l.b16 %v552
  %v2329 = vunpack.c.l.b16 %v553
  %v2330 = vunpack.c.l.b16 %v554
  %v2331 = vunpack.c.l.b16 %v555
  %v2332 = vunpack.c.l.b16 %v556
  %v2333 = vunpack.c.l.b16 %v557
  %v2334 = vunpack.c.l.b16 %v558
  %v2335 = vunpack.c.l.b16 %v559
  %v2336 = vunpack.c.l.b16 %v560
  %v2337 = vunpack.c.l.b16 %v561
  %v2338 = vunpack.c.l.b16 %v562
  %v2339 = vunpack.c.l.b16 %v563
  %v2340 = vunpack.c.l.b16 %v564
  %v2341 = vunpack.c.l.b16 %v565
  %v2342 = vunpack.c.l.b16 %v566
  %v2343 = vunpack.c.l.b16 %v567
  %v2344 = vunpack.c.l.b16 %v568
  %v2345 = vunpack.c.l.b16 %v569
  %v2346 = vunpack.c.l.b16 %v570
  %v2347 = vunpack.c.l.b16 %v571
  %v2348 = vunpack.c.l.b16 %v572
  %v2349 = vunpack.c.l.b16 %v573
  %v2350 = vunpack.c.l.b16 %v574
  %v2351 = vunpack.c.l.b16 %v575
  %v2352 = vunpack.c.l.b16 %v576
  %v2353 = vunpack.c.l.b16 %v577
  %v2354 = vunpack.c.l.b16 %v578
  %v2355 = vunpack.c.l.b16 %v579
  %v2356 = vunpack.c.l.b16 %v580
  %v2357 = vunpack.c.l.b16 %v581
  %v2358 = vunpack.c.l.b16 %v582
  %v2359 = vunpack.c.l.b16 %v583
  %v2360 = vunpack.c.l.b16 %v584
  %v2361 = vunpack.c.l.b16 %v585
  %v2362 = vunpack.c.l.b16 %v586
  %v2363 = vunpack.c.l.b16 %v587
  %v2364 = vunpack.c.l.b16 %v588
  %v2365 = vunpack.c.l.b16 %v589
  %v2366 = vunpack.c.l.b16 %v590
  %v2367 = vunpack.c.l.b16 %v591
  %v2368 = vunpack.c.l.b16 %v592
  %v2369 = vunpack.c.l.b16 %v593
  %v2370 = vunpack.c.l.b16 %v594
  %v2371 = vunpack.c.l.b16 %v595
  %v2372 = vunpack.c.l.b16 %v596
  %v2373 = vunpack.c.l.b16 %v597
  %v2374 = vunpack.c.l.b16 %v598
  %v2375 = vunpack.c.l.b16 %v599
  %v2376 = vunpack.c.l.b16 %v600
  %v2377 = vunpack.c.l.b16 %v601
  %v2378 = vunpack.c.l.b16 %v602
  %v2379 = vunpack.c.l.b16 %v603
  %v2380 = vunpack.c.l.b16 %v604
  %v2381 = vunpack.c.l.b16 %v605
  %v2382 = vunpack.c.l.b16 %v606
  %v2383 = vunpack.c.l.b16 %v607
  %v2384 = vunpack.c.l.b16 %v608
  %v2385 = vunpack.c.l.b16 %v609
  %v2386 = vunpack.c.l.b16 %v610
  %v2387 = vunpack.c.l.b16 %v611
  %v2388 = vunpack.c.l.b16 %v612
  %v2389 = vunpack.c.l.b16 %v613
  %v2390 = vunpack.c.l.b16 %v614
  %v2391 = vunpack.c.l.b16 %v615
  %v2392 = vunpack.c.l.b16 %v616
  %v2393 = vunpack.c.l.b16 %v617
  %v2394 = vunpack.c.l.b16 %v618
  %v2395 = vunpack.c.l.b16 %v619
  %v2396 = vunpack.c.l.b16 %v620
  %v2397 = vunpack.c.l.b16 %v621
  %v2398 = vunpack.c.l.b16 %v622
  %v2399 = vunpack.c.l.b16 %v623
  %v2400 = vunpack.c.l.b16 %v624
  %v2401 = vunpack.c.l.b16 %v625
  %v2402 = vunpack.c.l.b16 %v626
  %v2403 = vunpack.c.l.b16 %v627
  %v2404 = vunpack.c.l.b16 %v628
  %v2405 = vunpack.c.l.b16 %v629
  %v2406 = vunpack.c.l.b16 %v630
  %v2407 = vunpack.c.l.b16 %v631
  %v2408 = vunpack.c.l.b16 %v632
  %v2409 = vunpack.c.l.b16 %v633
  %v2410 = vunpack.c.l.b16 %v634
  %v2411 = vunpack.c.l.b16 %v635
  %v2412 = vunpack.c.l.b16 %v636
  %v2413 = vunpack.c.l.b16 %v637
  %v2414 = vunpack.c.l.b16 %v638
  %v2415 = vunpack.c.l.b16 %v639
  %v2416 = vunpack.c.l.b16 %v640
  %v2417 = vunpack.c.l.b16 %v641
  %v2418 = vunpack.c.l.b16 %v642
  %v2419 = vunpack.c.l.b16 %v643
  %v2420 = vunpack.c.l.b16 %v644
  %v2421 = vunpack.c.l.b16 %v645
  %v2422 = vunpack.c.l.b16 %v646
  %v2423 = vunpack.c.l.b16 %v647
  %v2424 = vunpack.c.l.b16 %v648
  %v2425 = vunpack.c.l.b16 %v649
  %v2426 = vunpack.c.l.b16 %v650
  %v2427 = vunpack.c.l.b16 %v651
  %v2428 = vunpack.c.l.b16 %v652
  %v2429 = vunpack.c.l.b16 %v653
  %v2430 = vunpack.c.l.b16 %v654
  %v2431 = vunpack.c.l.b16 %v655
  %v2432 = vunpack.c.l.b16 %v656
  %v2433 = vunpack.c.l.b16 %v657
  %v2434 = vunpack.c.l.b16 %v658
  %v2435 = vunpack.c.l.b16 %v659
  %v2436 = vunpack.c.l.b16 %v660
  %v2437 = vunpack.c.l.b16 %v661
  %v2438 = vunpack.c.l.b16 %v662
  %v2439 = vunpack.c.l.b16 %v663
  %v2440 = vunpack.c.l.b16 %v664
  %v2441 = vunpack.c.l.b16 %v665
  %v2442 = vunpack.c.l.b16 %v666
  %v2443 = vunpack.c.l.b16 %v667
  %v2444 = vunpack.c.l.b16 %v668
  %v2445 = vunpack.c.l.b16 %v669
  %v2446 = vunpack.c.l.b16 %v670
  %v2447 = vunpack.c.l.b16 %v671
  %v2448 = vunpack.c.l.b16 %v672
  %v2449 = vunpack.c.l.b16 %v673
  %v2450 = vunpack.c.l.b16 %v674
  %v2451 = vunpack.c.l.b16 %v675
  %v2452 = vpack.c.b16 %v1941, %v1940
  %v2453 = vpack.c.b16 %v1943, %v1942
  %v2454 = vpack.c.b16 %v1945, %v1944
  %v2455 = vpack.c.b16 %v1947, %v1946
  %v2456 = vpack.c.b16 %v1949, %v1948
  %v2457 = vpack.c.b16 %v1951, %v1950
  %v2458 = vpack.c.b16 %v1953, %v1952
  %v2459 = vpack.c.b16 %v1955, %v1954
  %v2460 = vpack.c.b16 %v1957, %v1956
  %v2461 = vpack.c.b16 %v1959, %v1958
  %v2462 = vpack.c.b16 %v1961, %v1960
  %v2463 = vpack.c.b16 %v1963, %v1962
  %v2464 = vpack.c.b16 %v1965, %v1964
  %v2465 = vpack.c.b16 %v1967, %v1966
  %v2466 = vpack.c.b16 %v1969, %v1968
  %v2467 = vpack.c.b16 %v1971, %v1970
  %v2468 = vpack.c.b16 %v1973, %v1972
  %v2469 = vpack.c.b16 %v1975, %v1974
  %v2470 = vpack.c.b16 %v1977, %v1976
  %v2471 = vpack.c.b16 %v1979, %v1978
  %v2472 = vpack.c.b16 %v1981, %v1980
  %v2473 = vpack.c.b16 %v1983, %v1982
  %v2474 = vpack.c.b16 %v1985, %v1984
  %v2475 = vpack.c.b16 %v1987, %v1986
  %v2476 = vpack.c.b16 %v1989, %v1988
  %v2477 = vpack.c.b16 %v1991, %v1990
  %v2478 = vpack.c.b16 %v1993, %v1992
  %v2479 = vpack.c.b16 %v1995, %v1994
  %v2480 = vpack.c.b16 %v1997, %v1996
  %v2481 = vpack.c.b16 %v1999, %v1998
  %v2482 = vpack.c.b16 %v2001, %v2000
  %v2483 = vpack.c.b16 %v2003, %v2002
  %v2484 = vpack.c.b16 %v2005, %v2004
  %v2485 = vpack.c.b16 %v2007, %v2006
  %v2486 = vpack.c.b16 %v2009, %v2008
  %v2487 = vpack.c.b16 %v2011, %v2010
  %v2488 = vpack.c.b16 %v2013, %v2012
  %v2489 = vpack.c.b16 %v2015, %v2014
  %v2490 = vpack.c.b16 %v2017, %v2016
  %v2491 = vpack.c.b16 %v2019, %v2018
  %v2492 = vpack.c.b16 %v2021, %v2020
  %v2493 = vpack.c.b16 %v2023, %v2022
  %v2494 = vpack.c.b16 %v2025, %v2024
  %v2495 = vpack.c.b16 %v2027, %v2026
  %v2496 = vpack.c.b16 %v2029, %v2028
  %v2497 = vpack.c.b16 %v2031, %v2030
  %v2498 = vpack.c.b16 %v2033, %v2032
  %v2499 = vpack.c.b16 %v2035, %v2034
  %v2500 = vpack.c.b16 %v2037, %v2036
  %v2501 = vpack.c.b16 %v2039, %v2038
  %v2502 = vpack.c.b16 %v2041, %v2040
  %v2503 = vpack.c.b16 %v2043, %v2042
  %v2504 = vpack.c.b16 %v2045, %v2044
  %v2505 = vpack.c.b16 %v2047, %v2046
  %v2506 = vpack.c.b16 %v2049, %v2048
  %v2507 = vpack.c.b16 %v2051, %v2050
  %v2508 = vpack.c.b16 %v2053, %v2052
  %v2509 = vpack.c.b16 %v2055, %v2054
  %v2510 = vpack.c.b16 %v2057, %v2056
  %v2511 = vpack.c.b16 %v2059, %v2058
  %v2512 = vpack.c.b16 %v2061, %v2060
  %v2513 = vpack.c.b16 %v2063, %v2062
  %v2514 = vpack.c.b16 %v2065, %v2064
  %v2515 = vpack.c.b16 %v2067, %v2066
  %v2516 = vpack.c.b16 %v2069, %v2068
  %v2517 = vpack.c.b16 %v2071, %v2070
  %v2518 = vpack.c.b16 %v2073, %v2072
  %v2519 = vpack.c.b16 %v2075, %v2074
  %v2520 = vpack.c.b16 %v2077, %v2076
  %v2521 = vpack.c.b16 %v2079, %v2078
  %v2522 = vpack.c.b16 %v2081, %v2080
  %v2523 = vpack.c.b16 %v2083, %v2082
  %v2524 = vpack.c.b16 %v2085, %v2084
  %v2525 = vpack.c.b16 %v2087, %v2086
  %v2526 = vpack.c.b16 %v2089, %v2088
  %v2527 = vpack.c.b16 %v2091, %v2090
  %v2528 = vpack.c.b16 %v2093, %v2092
  %v2529 = vpack.c.b16 %v2095, %v2094
  %v2530 = vpack.c.b16 %v2097, %v2096
  %v2531 = vpack.c.b16 %v2099, %v2098
  %v2532 = vpack.c.b16 %v2101, %v2100
  %v2533 = vpack.c.b16 %v2103, %v2102
  %v2534 = vpack.c.b16 %v2105, %v2104
  %v2535 = vpack.c.b16 %v2107, %v2106
  %v2536 = vpack.c.b16 %v2109, %v2108
  %v2537 = vpack.c.b16 %v2111, %v2110
  %v2538 = vpack.c.b16 %v2113, %v2112
  %v2539 = vpack.c.b16 %v2115, %v2114
  %v2540 = vpack.c.b16 %v2117, %v2116
  %v2541 = vpack.c.b16 %v2119, %v2118
  %v2542 = vpack.c.b16 %v2121, %v2120
  %v2543 = vpack.c.b16 %v2123, %v2122
  %v2544 = vpack.c.b16 %v2125, %v2124
  %v2545 = vpack.c.b16 %v2127, %v2126
  %v2546 = vpack.c.b16 %v2129, %v2128
  %v2547 = vpack.c.b16 %v2131, %v2130
  %v2548 = vpack.c.b16 %v2133, %v2132
  %v2549 = vpack.c.b16 %v2135, %v2134
  %v2550 = vpack.c.b16 %v2137, %v2136
  %v2551 = vpack.c.b16 %v2139, %v2138
  %v2552 = vpack.c.b16 %v2141, %v2140
  %v2553 = vpack.c.b16 %v2143, %v2142
  %v2554 = vpack.c.b16 %v2145, %v2144
  %v2555 = vpack.c.b16 %v2147, %v2146
  %v2556 = vpack.c.b16 %v2149, %v2148
  %v2557 = vpack.c.b16 %v2151, %v2150
  %v2558 = vpack.c.b16 %v2153, %v2152
  %v2559 = vpack.c.b16 %v2155, %v2154
  %v2560 = vpack.c.b16 %v2157, %v2156
  %v2561 = vpack.c.b16 %v2159, %v2158
  %v2562 = vpack.c.b16 %v2161, %v2160
  %v2563 = vpack.c.b16 %v2163, %v2162
  %v2564 = vpack.c.b16 %v2165, %v2164
  %v2565 = vpack.c.b16 %v2167, %v2166
  %v2566 = vpack.c.b16 %v2169, %v2168
  %v2567 = vpack.c.b16 %v2171, %v2170
  %v2568 = vpack.c.b16 %v2173, %v2172
  %v2569 = vpack.c.b16 %v2175, %v2174
  %v2570 = vpack.c.b16 %v2177, %v2176
  %v2571 = vpack.c.b16 %v2179, %v2178
  %v2572 = vpack.c.b16 %v2181, %v2180
  %v2573 = vpack.c.b16 %v2183, %v2182
  %v2574 = vpack.c.b16 %v2185, %v2184
  %v2575 = vpack.c.b16 %v2187, %v2186
  %v2576 = vpack.c.b16 %v2189, %v2188
  %v2577 = vpack.c.b16 %v2191, %v2190
  %v2578 = vpack.c.b16 %v2193, %v2192
  %v2579 = vpack.c.b16 %v2195, %v2194
  %v2580 = vpack.c.b16 %v2197, %v2196
  %v2581 = vpack.c.b16 %v2199, %v2198
  %v2582 = vpack.c.b16 %v2201, %v2200
  %v2583 = vpack.c.b16 %v2203, %v2202
  %v2584 = vpack.c.b16 %v2205, %v2204
  %v2585 = vpack.c.b16 %v2207, %v2206
  %v2586 = vpack.c.b16 %v2209, %v2208
  %v2587 = vpack.c.b16 %v2211, %v2210
  %v2588 = vpack.c.b16 %v2213, %v2212
  %v2589 = vpack.c.b16 %v2215, %v2214
  %v2590 = vpack.c.b16 %v2217, %v2216
  %v2591 = vpack.c.b16 %v2219, %v2218
  %v2592 = vpack.c.b16 %v2221, %v2220
  %v2593 = vpack.c.b16 %v2223, %v2222
  %v2594 = vpack.c.b16 %v2225, %v2224
  %v2595 = vpack.c.b16 %v2227, %v2226
  %v2596 = vpack.c.b16 %v2229, %v2228
  %v2597 = vpack.c.b16 %v2231, %v2230
  %v2598 = vpack.c.b16 %v2233, %v2232
  %v2599 = vpack.c.b16 %v2235, %v2234
  %v2600 = vpack.c.b16 %v2237, %v2236
  %v2601 = vpack.c.b16 %v2239, %v2238
  %v2602 = vpack.c.b16 %v2241, %v2240
  %v2603 = vpack.c.b16 %v2243, %v2242
  %v2604 = vpack.c.b16 %v2245, %v2244
  %v2605 = vpack.c.b16 %v2247, %v2246
  %v2606 = vpack.c.b16 %v2249, %v2248
  %v2607 = vpack.c.b16 %v2251, %v2250
  %v2608 = vpack.c.b16 %v2253, %v2252
  %v2609 = vpack.c.b16 %v2255, %v2254
  %v2610 = vpack.c.b16 %v2257, %v2256
  %v2611 = vpack.c.b16 %v2259, %v2258
  %v2612 = vpack.c.b16 %v2261, %v2260
  %v2613 = vpack.c.b16 %v2263, %v2262
  %v2614 = vpack.c.b16 %v2265, %v2264
  %v2615 = vpack.c.b16 %v2267, %v2266
  %v2616 = vpack.c.b16 %v2269, %v2268
  %v2617 = vpack.c.b16 %v2271, %v2270
  %v2618 = vpack.c.b16 %v2273, %v2272
  %v2619 = vpack.c.b16 %v2275, %v2274
  %v2620 = vpack.c.b16 %v2277, %v2276
  %v2621 = vpack.c.b16 %v2279, %v2278
  %v2622 = vpack.c.b16 %v2281, %v2280
  %v2623 = vpack.c.b16 %v2283, %v2282
  %v2624 = vpack.c.b16 %v2285, %v2284
  %v2625 = vpack.c.b16 %v2287, %v2286
  %v2626 = vpack.c.b16 %v2289, %v2288
  %v2627 = vpack.c.b16 %v2291, %v2290
  %v2628 = vpack.c.b16 %v2293, %v2292
  %v2629 = vpack.c.b16 %v2295, %v2294
  %v2630 = vpack.c.b16 %v2297, %v2296
  %v2631 = vpack.c.b16 %v2299, %v2298
  %v2632 = vpack.c.b16 %v2301, %v2300
  %v2633 = vpack.c.b16 %v2303, %v2302
  %v2634 = vpack.c.b16 %v2305, %v2304
  %v2635 = vpack.c.b16 %v2307, %v2306
  %v2636 = vpack.c.b16 %v2309, %v2308
  %v2637 = vpack.c.b16 %v2311, %v2310
  %v2638 = vpack.c.b16 %v2313, %v2312
  %v2639 = vpack.c.b16 %v2315, %v2314
  %v2640 = vpack.c.b16 %v2317, %v2316
  %v2641 = vpack.c.b16 %v2319, %v2318
  %v2642 = vpack.c.b16 %v2321, %v2320
  %v2643 = vpack.c.b16 %v2323, %v2322
  %v2644 = vpack.c.b16 %v2325, %v2324
  %v2645 = vpack.c.b16 %v2327, %v2326
  %v2646 = vpack.c.b16 %v2329, %v2328
  %v2647 = vpack.c.b16 %v2331, %v2330
  %v2648 = vpack.c.b16 %v2333, %v2332
  %v2649 = vpack.c.b16 %v2335, %v2334
  %v2650 = vpack.c.b16 %v2337, %v2336
  %v2651 = vpack.c.b16 %v2339, %v2338
  %v2652 = vpack.c.b16 %v2341, %v2340
  %v2653 = vpack.c.b16 %v2343, %v2342
  %v2654 = vpack.c.b16 %v2345, %v2344
  %v2655 = vpack.c.b16 %v2347, %v2346
  %v2656 = vpack.c.b16 %v2349, %v2348
  %v2657 = vpack.c.b16 %v2351, %v2350
  %v2658 = vpack.c.b16 %v2353, %v2352
  %v2659 = vpack.c.b16 %v2355, %v2354
  %v2660 = vpack.c.b16 %v2357, %v2356
  %v2661 = vpack.c.b16 %v2359, %v2358
  %v2662 = vpack.c.b16 %v2361, %v2360
  %v2663 = vpack.c.b16 %v2363, %v2362
  %v2664 = vpack.c.b16 %v2365, %v2364
  %v2665 = vpack.c.b16 %v2367, %v2366
  %v2666 = vpack.c.b16 %v2369, %v2368
  %v2667 = vpack.c.b16 %v2371, %v2370
  %v2668 = vpack.c.b16 %v2373, %v2372
  %v2669 = vpack.c.b16 %v2375, %v2374
  %v2670 = vpack.c.b16 %v2377, %v2376
  %v2671 = vpack.c.b16 %v2379, %v2378
  %v2672 = vpack.c.b16 %v2381, %v2380
  %v2673 = vpack.c.b16 %v2383, %v2382
  %v2674 = vpack.c.b16 %v2385, %v2384
  %v2675 = vpack.c.b16 %v2387, %v2386
  %v2676 = vpack.c.b16 %v2389, %v2388
  %v2677 = vpack.c.b16 %v2391, %v2390
  %v2678 = vpack.c.b16 %v2393, %v2392
  %v2679 = vpack.c.b16 %v2395, %v2394
  %v2680 = vpack.c.b16 %v2397, %v2396
  %v2681 = vpack.c.b16 %v2399, %v2398
  %v2682 = vpack.c.b16 %v2401, %v2400
  %v2683 = vpack.c.b16 %v2403, %v2402
  %v2684 = vpack.c.b16 %v2405, %v2404
  %v2685 = vpack.c.b16 %v2407, %v2406
  %v2686 = vpack.c.b16 %v2409, %v2408
  %v2687 = vpack.c.b16 %v2411, %v2410
  %v2688 = vpack.c.b16 %v2413, %v2412
  %v2689 = vpack.c.b16 %v2415, %v2414
  %v2690 = vpack.c.b16 %v2417, %v2416
  %v2691 = vpack.c.b16 %v2419, %v2418
  %v2692 = vpack.c.b16 %v2421, %v2420
  %v2693 = vpack.c.b16 %v2423, %v2422
  %v2694 = vpack.c.b16 %v2425, %v2424
  %v2695 = vpack.c.b16 %v2427, %v2426
  %v2696 = vpack.c.b16 %v2429, %v2428
  %v2697 = vpack.c.b16 %v2431, %v2430
  %v2698 = vpack.c.b16 %v2433, %v2432
  %v2699 = vpack.c.b16 %v2435, %v2434
  %v2700 = vpack.c.b16 %v2437, %v2436
  %v2701 = vpack.c.b16 %v2439, %v2438
  %v2702 = vpack.c.b16 %v2441, %v2440
  %v2703 = vpack.c.b16 %v2443, %v2442
  %v2704 = vpack.c.b16 %v2445, %v2444
  %v2705 = vpack.c.b16 %v2447, %v2446
  %v2706 = vpack.c.b16 %v2449, %v2448
  %v2707 = vpack.c.b16 %v2451, %v2450
  %2964 = vmatpush.bf16.msra.mxu0 %v2459
  %2965 = vmatpush.bf16.msra.mxu0 %v2458
  %2966 = vmatpush.bf16.msra.mxu0 %v2457
  %2967 = vmatpush.bf16.msra.mxu0 %v2456
  %2968 = vmatpush.bf16.msra.mxu0 %v2455
  %2969 = vmatpush.bf16.msra.mxu0 %v2454
  %2970 = vmatpush.bf16.msra.mxu0 %v2453
  %2971 = vmatpush.bf16.msra.mxu0 %v2452
  %2972 = vmatmul.bf16.gmra.mxu0 %v1108
  %v2973 = vpop.f32.mrf.mxu0
  %v2974 = vadd.f32 0.0, %v2973
  %v2975 = vpop.f32.mrf.mxu0
  %v2976 = vadd.f32 0.0, %v2975
  %2977 = vmatmul.bf16.gmra.mxu0 %v1140
  %v2978 = vpop.f32.mrf.mxu0
  %v2979 = vadd.f32 0.0, %v2978
  %v2980 = vpop.f32.mrf.mxu0
  %v2981 = vadd.f32 0.0, %v2980
  %2982 = vmatmul.bf16.gmra.mxu0 %v1172
  %v2983 = vpop.f32.mrf.mxu0
  %v2984 = vadd.f32 0.0, %v2983
  %v2985 = vpop.f32.mrf.mxu0
  %v2986 = vadd.f32 0.0, %v2985
  %2987 = vmatmul.bf16.gmra.mxu0 %v1204
  %v2988 = vpop.f32.mrf.mxu0
  %v2989 = vadd.f32 0.0, %v2988
  %v2990 = vpop.f32.mrf.mxu0
  %v2991 = vadd.f32 0.0, %v2990
  %2992 = vmatmul.bf16.gmra.mxu0 %v1236
  %v2993 = vpop.f32.mrf.mxu0
  %v2994 = vadd.f32 0.0, %v2993
  %v2995 = vpop.f32.mrf.mxu0
  %2996 = vdwg.mxu0
  %2997 = vmatpush.bf16.msra.mxu0 %v2467
  %2998 = vmatpush.bf16.msra.mxu0 %v2466
  %2999 = vmatpush.bf16.msra.mxu0 %v2465
  %3000 = vmatpush.bf16.msra.mxu0 %v2464
  %3001 = vmatpush.bf16.msra.mxu0 %v2463
  %3002 = vmatpush.bf16.msra.mxu0 %v2462
  %3003 = vmatpush.bf16.msra.mxu0 %v2461
  %3004 = vmatpush.bf16.msra.mxu0 %v2460
  %3005 = vmatmul.bf16.gmra.mxu0 %v1109
  %v3006 = vpop.f32.mrf.mxu0
  %v3007 = vadd.f32 %v2974, %v3006
  %v3008 = vpop.f32.mrf.mxu0
  %v3009 = vadd.f32 %v2976, %v3008
  %3010 = vmatmul.bf16.gmra.mxu0 %v1141
  %v3011 = vpop.f32.mrf.mxu0
  %v3012 = vadd.f32 %v2979, %v3011
  %v3013 = vpop.f32.mrf.mxu0
  %v3014 = vadd.f32 %v2981, %v3013
  %3015 = vmatmul.bf16.gmra.mxu0 %v1173
  %v3016 = vpop.f32.mrf.mxu0
  %v3017 = vadd.f32 %v2984, %v3016
  %v3018 = vpop.f32.mrf.mxu0
  %v3019 = vadd.f32 %v2986, %v3018
  %3020 = vmatmul.bf16.gmra.mxu0 %v1205
  %v3021 = vpop.f32.mrf.mxu0
  %v3022 = vadd.f32 %v2989, %v3021
  %v3023 = vpop.f32.mrf.mxu0
  %v3024 = vadd.f32 %v2991, %v3023
  %3025 = vmatmul.bf16.gmra.mxu0 %v1237
  %v3026 = vpop.f32.mrf.mxu0
  %v3027 = vadd.f32 %v2994, %v3026
  %v3028 = vpop.f32.mrf.mxu0
  %3029 = vdwg.mxu0
  %3030 = vmatpush.bf16.msra.mxu0 %v2475
  %3031 = vmatpush.bf16.msra.mxu0 %v2474
  %3032 = vmatpush.bf16.msra.mxu0 %v2473
  %3033 = vmatpush.bf16.msra.mxu0 %v2472
  %3034 = vmatpush.bf16.msra.mxu0 %v2471
  %3035 = vmatpush.bf16.msra.mxu0 %v2470
  %3036 = vmatpush.bf16.msra.mxu0 %v2469
  %3037 = vmatpush.bf16.msra.mxu0 %v2468
  %3038 = vmatmul.bf16.gmra.mxu0 %v1110
  %v3039 = vpop.f32.mrf.mxu0
  %v3040 = vadd.f32 %v3007, %v3039
  %v3041 = vpop.f32.mrf.mxu0
  %v3042 = vadd.f32 %v3009, %v3041
  %3043 = vmatmul.bf16.gmra.mxu0 %v1142
  %v3044 = vpop.f32.mrf.mxu0
  %v3045 = vadd.f32 %v3012, %v3044
  %v3046 = vpop.f32.mrf.mxu0
  %v3047 = vadd.f32 %v3014, %v3046
  %3048 = vmatmul.bf16.gmra.mxu0 %v1174
  %v3049 = vpop.f32.mrf.mxu0
  %v3050 = vadd.f32 %v3017, %v3049
  %v3051 = vpop.f32.mrf.mxu0
  %v3052 = vadd.f32 %v3019, %v3051
  %3053 = vmatmul.bf16.gmra.mxu0 %v1206
  %v3054 = vpop.f32.mrf.mxu0
  %v3055 = vadd.f32 %v3022, %v3054
  %v3056 = vpop.f32.mrf.mxu0
  %v3057 = vadd.f32 %v3024, %v3056
  %3058 = vmatmul.bf16.gmra.mxu0 %v1238
  %v3059 = vpop.f32.mrf.mxu0
  %v3060 = vadd.f32 %v3027, %v3059
  %v3061 = vpop.f32.mrf.mxu0
  %3062 = vdwg.mxu0
  %3063 = vmatpush.bf16.msra.mxu0 %v2483
  %3064 = vmatpush.bf16.msra.mxu0 %v2482
  %3065 = vmatpush.bf16.msra.mxu0 %v2481
  %3066 = vmatpush.bf16.msra.mxu0 %v2480
  %3067 = vmatpush.bf16.msra.mxu0 %v2479
  %3068 = vmatpush.bf16.msra.mxu0 %v2478
  %3069 = vmatpush.bf16.msra.mxu0 %v2477
  %3070 = vmatpush.bf16.msra.mxu0 %v2476
  %3071 = vmatmul.bf16.gmra.mxu0 %v1111
  %v3072 = vpop.f32.mrf.mxu0
  %v3073 = vadd.f32 %v3040, %v3072
  %v3074 = vpop.f32.mrf.mxu0
  %v3075 = vadd.f32 %v3042, %v3074
  %3076 = vmatmul.bf16.gmra.mxu0 %v1143
  %v3077 = vpop.f32.mrf.mxu0
  %v3078 = vadd.f32 %v3045, %v3077
  %v3079 = vpop.f32.mrf.mxu0
  %v3080 = vadd.f32 %v3047, %v3079
  %3081 = vmatmul.bf16.gmra.mxu0 %v1175
  %v3082 = vpop.f32.mrf.mxu0
  %v3083 = vadd.f32 %v3050, %v3082
  %v3084 = vpop.f32.mrf.mxu0
  %v3085 = vadd.f32 %v3052, %v3084
  %3086 = vmatmul.bf16.gmra.mxu0 %v1207
  %v3087 = vpop.f32.mrf.mxu0
  %v3088 = vadd.f32 %v3055, %v3087
  %v3089 = vpop.f32.mrf.mxu0
  %v3090 = vadd.f32 %v3057, %v3089
  %3091 = vmatmul.bf16.gmra.mxu0 %v1239
  %v3092 = vpop.f32.mrf.mxu0
  %v3093 = vadd.f32 %v3060, %v3092
  %v3094 = vpop.f32.mrf.mxu0
  %3095 = vdwg.mxu0
  %3096 = vmatpush.bf16.msra.mxu0 %v2491
  %3097 = vmatpush.bf16.msra.mxu0 %v2490
  %3098 = vmatpush.bf16.msra.mxu0 %v2489
  %3099 = vmatpush.bf16.msra.mxu0 %v2488
  %3100 = vmatpush.bf16.msra.mxu0 %v2487
  %3101 = vmatpush.bf16.msra.mxu0 %v2486
  %3102 = vmatpush.bf16.msra.mxu0 %v2485
  %3103 = vmatpush.bf16.msra.mxu0 %v2484
  %3104 = vmatmul.bf16.gmra.mxu0 %v1112
  %v3105 = vpop.f32.mrf.mxu0
  %v3106 = vadd.f32 %v3073, %v3105
  %v3107 = vpop.f32.mrf.mxu0
  %v3108 = vadd.f32 %v3075, %v3107
  %3109 = vmatmul.bf16.gmra.mxu0 %v1144
  %v3110 = vpop.f32.mrf.mxu0
  %v3111 = vadd.f32 %v3078, %v3110
  %v3112 = vpop.f32.mrf.mxu0
  %v3113 = vadd.f32 %v3080, %v3112
  %3114 = vmatmul.bf16.gmra.mxu0 %v1176
  %v3115 = vpop.f32.mrf.mxu0
  %v3116 = vadd.f32 %v3083, %v3115
  %v3117 = vpop.f32.mrf.mxu0
  %v3118 = vadd.f32 %v3085, %v3117
  %3119 = vmatmul.bf16.gmra.mxu0 %v1208
  %v3120 = vpop.f32.mrf.mxu0
  %v3121 = vadd.f32 %v3088, %v3120
  %v3122 = vpop.f32.mrf.mxu0
  %v3123 = vadd.f32 %v3090, %v3122
  %3124 = vmatmul.bf16.gmra.mxu0 %v1240
  %v3125 = vpop.f32.mrf.mxu0
  %v3126 = vadd.f32 %v3093, %v3125
  %v3127 = vpop.f32.mrf.mxu0
  %3128 = vdwg.mxu0
  %3129 = vmatpush.bf16.msra.mxu0 %v2499
  %3130 = vmatpush.bf16.msra.mxu0 %v2498
  %3131 = vmatpush.bf16.msra.mxu0 %v2497
  %3132 = vmatpush.bf16.msra.mxu0 %v2496
  %3133 = vmatpush.bf16.msra.mxu0 %v2495
  %3134 = vmatpush.bf16.msra.mxu0 %v2494
  %3135 = vmatpush.bf16.msra.mxu0 %v2493
  %3136 = vmatpush.bf16.msra.mxu0 %v2492
  %3137 = vmatmul.bf16.gmra.mxu0 %v1113
  %v3138 = vpop.f32.mrf.mxu0
  %v3139 = vadd.f32 %v3106, %v3138
  %v3140 = vpop.f32.mrf.mxu0
  %v3141 = vadd.f32 %v3108, %v3140
  %3142 = vmatmul.bf16.gmra.mxu0 %v1145
  %v3143 = vpop.f32.mrf.mxu0
  %v3144 = vadd.f32 %v3111, %v3143
  %v3145 = vpop.f32.mrf.mxu0
  %v3146 = vadd.f32 %v3113, %v3145
  %3147 = vmatmul.bf16.gmra.mxu0 %v1177
  %v3148 = vpop.f32.mrf.mxu0
  %v3149 = vadd.f32 %v3116, %v3148
  %v3150 = vpop.f32.mrf.mxu0
  %v3151 = vadd.f32 %v3118, %v3150
  %3152 = vmatmul.bf16.gmra.mxu0 %v1209
  %v3153 = vpop.f32.mrf.mxu0
  %v3154 = vadd.f32 %v3121, %v3153
  %v3155 = vpop.f32.mrf.mxu0
  %v3156 = vadd.f32 %v3123, %v3155
  %3157 = vmatmul.bf16.gmra.mxu0 %v1241
  %v3158 = vpop.f32.mrf.mxu0
  %v3159 = vadd.f32 %v3126, %v3158
  %v3160 = vpop.f32.mrf.mxu0
  %3161 = vdwg.mxu0
  %3162 = vmatpush.bf16.msra.mxu0 %v2507
  %3163 = vmatpush.bf16.msra.mxu0 %v2506
  %3164 = vmatpush.bf16.msra.mxu0 %v2505
  %3165 = vmatpush.bf16.msra.mxu0 %v2504
  %3166 = vmatpush.bf16.msra.mxu0 %v2503
  %3167 = vmatpush.bf16.msra.mxu0 %v2502
  %3168 = vmatpush.bf16.msra.mxu0 %v2501
  %3169 = vmatpush.bf16.msra.mxu0 %v2500
  %3170 = vmatmul.bf16.gmra.mxu0 %v1114
  %v3171 = vpop.f32.mrf.mxu0
  %v3172 = vadd.f32 %v3139, %v3171
  %v3173 = vpop.f32.mrf.mxu0
  %v3174 = vadd.f32 %v3141, %v3173
  %3175 = vmatmul.bf16.gmra.mxu0 %v1146
  %v3176 = vpop.f32.mrf.mxu0
  %v3177 = vadd.f32 %v3144, %v3176
  %v3178 = vpop.f32.mrf.mxu0
  %v3179 = vadd.f32 %v3146, %v3178
  %3180 = vmatmul.bf16.gmra.mxu0 %v1178
  %v3181 = vpop.f32.mrf.mxu0
  %v3182 = vadd.f32 %v3149, %v3181
  %v3183 = vpop.f32.mrf.mxu0
  %v3184 = vadd.f32 %v3151, %v3183
  %3185 = vmatmul.bf16.gmra.mxu0 %v1210
  %v3186 = vpop.f32.mrf.mxu0
  %v3187 = vadd.f32 %v3154, %v3186
  %v3188 = vpop.f32.mrf.mxu0
  %v3189 = vadd.f32 %v3156, %v3188
  %3190 = vmatmul.bf16.gmra.mxu0 %v1242
  %v3191 = vpop.f32.mrf.mxu0
  %v3192 = vadd.f32 %v3159, %v3191
  %v3193 = vpop.f32.mrf.mxu0
  %3194 = vdwg.mxu0
  %3195 = vmatpush.bf16.msra.mxu0 %v2515
  %3196 = vmatpush.bf16.msra.mxu0 %v2514
  %3197 = vmatpush.bf16.msra.mxu0 %v2513
  %3198 = vmatpush.bf16.msra.mxu0 %v2512
  %3199 = vmatpush.bf16.msra.mxu0 %v2511
  %3200 = vmatpush.bf16.msra.mxu0 %v2510
  %3201 = vmatpush.bf16.msra.mxu0 %v2509
  %3202 = vmatpush.bf16.msra.mxu0 %v2508
  %3203 = vmatmul.bf16.gmra.mxu0 %v1115
  %v3204 = vpop.f32.mrf.mxu0
  %v3205 = vadd.f32 %v3172, %v3204
  %v3206 = vpop.f32.mrf.mxu0
  %v3207 = vadd.f32 %v3174, %v3206
  %3208 = vmatmul.bf16.gmra.mxu0 %v1147
  %v3209 = vpop.f32.mrf.mxu0
  %v3210 = vadd.f32 %v3177, %v3209
  %v3211 = vpop.f32.mrf.mxu0
  %v3212 = vadd.f32 %v3179, %v3211
  %3213 = vmatmul.bf16.gmra.mxu0 %v1179
  %v3214 = vpop.f32.mrf.mxu0
  %v3215 = vadd.f32 %v3182, %v3214
  %v3216 = vpop.f32.mrf.mxu0
  %v3217 = vadd.f32 %v3184, %v3216
  %3218 = vmatmul.bf16.gmra.mxu0 %v1211
  %v3219 = vpop.f32.mrf.mxu0
  %v3220 = vadd.f32 %v3187, %v3219
  %v3221 = vpop.f32.mrf.mxu0
  %v3222 = vadd.f32 %v3189, %v3221
  %3223 = vmatmul.bf16.gmra.mxu0 %v1243
  %v3224 = vpop.f32.mrf.mxu0
  %v3225 = vadd.f32 %v3192, %v3224
  %v3226 = vpop.f32.mrf.mxu0
  %3227 = vdwg.mxu0
  %3228 = vmatpush.bf16.msra.mxu0 %v2523
  %3229 = vmatpush.bf16.msra.mxu0 %v2522
  %3230 = vmatpush.bf16.msra.mxu0 %v2521
  %3231 = vmatpush.bf16.msra.mxu0 %v2520
  %3232 = vmatpush.bf16.msra.mxu0 %v2519
  %3233 = vmatpush.bf16.msra.mxu0 %v2518
  %3234 = vmatpush.bf16.msra.mxu0 %v2517
  %3235 = vmatpush.bf16.msra.mxu0 %v2516
  %3236 = vmatmul.bf16.gmra.mxu0 %v1116
  %v3237 = vpop.f32.mrf.mxu0
  %v3238 = vadd.f32 %v3205, %v3237
  %v3239 = vpop.f32.mrf.mxu0
  %v3240 = vadd.f32 %v3207, %v3239
  %3241 = vmatmul.bf16.gmra.mxu0 %v1148
  %v3242 = vpop.f32.mrf.mxu0
  %v3243 = vadd.f32 %v3210, %v3242
  %v3244 = vpop.f32.mrf.mxu0
  %v3245 = vadd.f32 %v3212, %v3244
  %3246 = vmatmul.bf16.gmra.mxu0 %v1180
  %v3247 = vpop.f32.mrf.mxu0
  %v3248 = vadd.f32 %v3215, %v3247
  %v3249 = vpop.f32.mrf.mxu0
  %v3250 = vadd.f32 %v3217, %v3249
  %3251 = vmatmul.bf16.gmra.mxu0 %v1212
  %v3252 = vpop.f32.mrf.mxu0
  %v3253 = vadd.f32 %v3220, %v3252
  %v3254 = vpop.f32.mrf.mxu0
  %v3255 = vadd.f32 %v3222, %v3254
  %3256 = vmatmul.bf16.gmra.mxu0 %v1244
  %v3257 = vpop.f32.mrf.mxu0
  %v3258 = vadd.f32 %v3225, %v3257
  %v3259 = vpop.f32.mrf.mxu0
  %3260 = vdwg.mxu0
  %3261 = vmatpush.bf16.msra.mxu0 %v2531
  %3262 = vmatpush.bf16.msra.mxu0 %v2530
  %3263 = vmatpush.bf16.msra.mxu0 %v2529
  %3264 = vmatpush.bf16.msra.mxu0 %v2528
  %3265 = vmatpush.bf16.msra.mxu0 %v2527
  %3266 = vmatpush.bf16.msra.mxu0 %v2526
  %3267 = vmatpush.bf16.msra.mxu0 %v2525
  %3268 = vmatpush.bf16.msra.mxu0 %v2524
  %3269 = vmatmul.bf16.gmra.mxu0 %v1117
  %v3270 = vpop.f32.mrf.mxu0
  %v3271 = vadd.f32 %v3238, %v3270
  %v3272 = vpop.f32.mrf.mxu0
  %v3273 = vadd.f32 %v3240, %v3272
  %3274 = vmatmul.bf16.gmra.mxu0 %v1149
  %v3275 = vpop.f32.mrf.mxu0
  %v3276 = vadd.f32 %v3243, %v3275
  %v3277 = vpop.f32.mrf.mxu0
  %v3278 = vadd.f32 %v3245, %v3277
  %3279 = vmatmul.bf16.gmra.mxu0 %v1181
  %v3280 = vpop.f32.mrf.mxu0
  %v3281 = vadd.f32 %v3248, %v3280
  %v3282 = vpop.f32.mrf.mxu0
  %v3283 = vadd.f32 %v3250, %v3282
  %3284 = vmatmul.bf16.gmra.mxu0 %v1213
  %v3285 = vpop.f32.mrf.mxu0
  %v3286 = vadd.f32 %v3253, %v3285
  %v3287 = vpop.f32.mrf.mxu0
  %v3288 = vadd.f32 %v3255, %v3287
  %3289 = vmatmul.bf16.gmra.mxu0 %v1245
  %v3290 = vpop.f32.mrf.mxu0
  %v3291 = vadd.f32 %v3258, %v3290
  %v3292 = vpop.f32.mrf.mxu0
  %3293 = vdwg.mxu0
  %3294 = vmatpush.bf16.msra.mxu0 %v2539
  %3295 = vmatpush.bf16.msra.mxu0 %v2538
  %3296 = vmatpush.bf16.msra.mxu0 %v2537
  %3297 = vmatpush.bf16.msra.mxu0 %v2536
  %3298 = vmatpush.bf16.msra.mxu0 %v2535
  %3299 = vmatpush.bf16.msra.mxu0 %v2534
  %3300 = vmatpush.bf16.msra.mxu0 %v2533
  %3301 = vmatpush.bf16.msra.mxu0 %v2532
  %3302 = vmatmul.bf16.gmra.mxu0 %v1118
  %v3303 = vpop.f32.mrf.mxu0
  %v3304 = vadd.f32 %v3271, %v3303
  %v3305 = vpop.f32.mrf.mxu0
  %v3306 = vadd.f32 %v3273, %v3305
  %3307 = vmatmul.bf16.gmra.mxu0 %v1150
  %v3308 = vpop.f32.mrf.mxu0
  %v3309 = vadd.f32 %v3276, %v3308
  %v3310 = vpop.f32.mrf.mxu0
  %v3311 = vadd.f32 %v3278, %v3310
  %3312 = vmatmul.bf16.gmra.mxu0 %v1182
  %v3313 = vpop.f32.mrf.mxu0
  %v3314 = vadd.f32 %v3281, %v3313
  %v3315 = vpop.f32.mrf.mxu0
  %v3316 = vadd.f32 %v3283, %v3315
  %3317 = vmatmul.bf16.gmra.mxu0 %v1214
  %v3318 = vpop.f32.mrf.mxu0
  %v3319 = vadd.f32 %v3286, %v3318
  %v3320 = vpop.f32.mrf.mxu0
  %v3321 = vadd.f32 %v3288, %v3320
  %3322 = vmatmul.bf16.gmra.mxu0 %v1246
  %v3323 = vpop.f32.mrf.mxu0
  %v3324 = vadd.f32 %v3291, %v3323
  %v3325 = vpop.f32.mrf.mxu0
  %3326 = vdwg.mxu0
  %3327 = vmatpush.bf16.msra.mxu0 %v2547
  %3328 = vmatpush.bf16.msra.mxu0 %v2546
  %3329 = vmatpush.bf16.msra.mxu0 %v2545
  %3330 = vmatpush.bf16.msra.mxu0 %v2544
  %3331 = vmatpush.bf16.msra.mxu0 %v2543
  %3332 = vmatpush.bf16.msra.mxu0 %v2542
  %3333 = vmatpush.bf16.msra.mxu0 %v2541
  %3334 = vmatpush.bf16.msra.mxu0 %v2540
  %3335 = vmatmul.bf16.gmra.mxu0 %v1119
  %v3336 = vpop.f32.mrf.mxu0
  %v3337 = vadd.f32 %v3304, %v3336
  %v3338 = vpop.f32.mrf.mxu0
  %v3339 = vadd.f32 %v3306, %v3338
  %3340 = vmatmul.bf16.gmra.mxu0 %v1151
  %v3341 = vpop.f32.mrf.mxu0
  %v3342 = vadd.f32 %v3309, %v3341
  %v3343 = vpop.f32.mrf.mxu0
  %v3344 = vadd.f32 %v3311, %v3343
  %3345 = vmatmul.bf16.gmra.mxu0 %v1183
  %v3346 = vpop.f32.mrf.mxu0
  %v3347 = vadd.f32 %v3314, %v3346
  %v3348 = vpop.f32.mrf.mxu0
  %v3349 = vadd.f32 %v3316, %v3348
  %3350 = vmatmul.bf16.gmra.mxu0 %v1215
  %v3351 = vpop.f32.mrf.mxu0
  %v3352 = vadd.f32 %v3319, %v3351
  %v3353 = vpop.f32.mrf.mxu0
  %v3354 = vadd.f32 %v3321, %v3353
  %3355 = vmatmul.bf16.gmra.mxu0 %v1247
  %v3356 = vpop.f32.mrf.mxu0
  %v3357 = vadd.f32 %v3324, %v3356
  %v3358 = vpop.f32.mrf.mxu0
  %3359 = vdwg.mxu0
  %3360 = vmatpush.bf16.msra.mxu0 %v2555
  %3361 = vmatpush.bf16.msra.mxu0 %v2554
  %3362 = vmatpush.bf16.msra.mxu0 %v2553
  %3363 = vmatpush.bf16.msra.mxu0 %v2552
  %3364 = vmatpush.bf16.msra.mxu0 %v2551
  %3365 = vmatpush.bf16.msra.mxu0 %v2550
  %3366 = vmatpush.bf16.msra.mxu0 %v2549
  %3367 = vmatpush.bf16.msra.mxu0 %v2548
  %3368 = vmatmul.bf16.gmra.mxu0 %v1120
  %v3369 = vpop.f32.mrf.mxu0
  %v3370 = vadd.f32 %v3337, %v3369
  %v3371 = vpop.f32.mrf.mxu0
  %v3372 = vadd.f32 %v3339, %v3371
  %3373 = vmatmul.bf16.gmra.mxu0 %v1152
  %v3374 = vpop.f32.mrf.mxu0
  %v3375 = vadd.f32 %v3342, %v3374
  %v3376 = vpop.f32.mrf.mxu0
  %v3377 = vadd.f32 %v3344, %v3376
  %3378 = vmatmul.bf16.gmra.mxu0 %v1184
  %v3379 = vpop.f32.mrf.mxu0
  %v3380 = vadd.f32 %v3347, %v3379
  %v3381 = vpop.f32.mrf.mxu0
  %v3382 = vadd.f32 %v3349, %v3381
  %3383 = vmatmul.bf16.gmra.mxu0 %v1216
  %v3384 = vpop.f32.mrf.mxu0
  %v3385 = vadd.f32 %v3352, %v3384
  %v3386 = vpop.f32.mrf.mxu0
  %v3387 = vadd.f32 %v3354, %v3386
  %3388 = vmatmul.bf16.gmra.mxu0 %v1248
  %v3389 = vpop.f32.mrf.mxu0
  %v3390 = vadd.f32 %v3357, %v3389
  %v3391 = vpop.f32.mrf.mxu0
  %3392 = vdwg.mxu0
  %3393 = vmatpush.bf16.msra.mxu0 %v2563
  %3394 = vmatpush.bf16.msra.mxu0 %v2562
  %3395 = vmatpush.bf16.msra.mxu0 %v2561
  %3396 = vmatpush.bf16.msra.mxu0 %v2560
  %3397 = vmatpush.bf16.msra.mxu0 %v2559
  %3398 = vmatpush.bf16.msra.mxu0 %v2558
  %3399 = vmatpush.bf16.msra.mxu0 %v2557
  %3400 = vmatpush.bf16.msra.mxu0 %v2556
  %3401 = vmatmul.bf16.gmra.mxu0 %v1121
  %v3402 = vpop.f32.mrf.mxu0
  %v3403 = vadd.f32 %v3370, %v3402
  %v3404 = vpop.f32.mrf.mxu0
  %v3405 = vadd.f32 %v3372, %v3404
  %3406 = vmatmul.bf16.gmra.mxu0 %v1153
  %v3407 = vpop.f32.mrf.mxu0
  %v3408 = vadd.f32 %v3375, %v3407
  %v3409 = vpop.f32.mrf.mxu0
  %v3410 = vadd.f32 %v3377, %v3409
  %3411 = vmatmul.bf16.gmra.mxu0 %v1185
  %v3412 = vpop.f32.mrf.mxu0
  %v3413 = vadd.f32 %v3380, %v3412
  %v3414 = vpop.f32.mrf.mxu0
  %v3415 = vadd.f32 %v3382, %v3414
  %3416 = vmatmul.bf16.gmra.mxu0 %v1217
  %v3417 = vpop.f32.mrf.mxu0
  %v3418 = vadd.f32 %v3385, %v3417
  %v3419 = vpop.f32.mrf.mxu0
  %v3420 = vadd.f32 %v3387, %v3419
  %3421 = vmatmul.bf16.gmra.mxu0 %v1249
  %v3422 = vpop.f32.mrf.mxu0
  %v3423 = vadd.f32 %v3390, %v3422
  %v3424 = vpop.f32.mrf.mxu0
  %3425 = vdwg.mxu0
  %3426 = vmatpush.bf16.msra.mxu0 %v2571
  %3427 = vmatpush.bf16.msra.mxu0 %v2570
  %3428 = vmatpush.bf16.msra.mxu0 %v2569
  %3429 = vmatpush.bf16.msra.mxu0 %v2568
  %3430 = vmatpush.bf16.msra.mxu0 %v2567
  %3431 = vmatpush.bf16.msra.mxu0 %v2566
  %3432 = vmatpush.bf16.msra.mxu0 %v2565
  %3433 = vmatpush.bf16.msra.mxu0 %v2564
  %3434 = vmatmul.bf16.gmra.mxu0 %v1122
  %v3435 = vpop.f32.mrf.mxu0
  %v3436 = vadd.f32 %v3403, %v3435
  %v3437 = vpop.f32.mrf.mxu0
  %v3438 = vadd.f32 %v3405, %v3437
  %3439 = vmatmul.bf16.gmra.mxu0 %v1154
  %v3440 = vpop.f32.mrf.mxu0
  %v3441 = vadd.f32 %v3408, %v3440
  %v3442 = vpop.f32.mrf.mxu0
  %v3443 = vadd.f32 %v3410, %v3442
  %3444 = vmatmul.bf16.gmra.mxu0 %v1186
  %v3445 = vpop.f32.mrf.mxu0
  %v3446 = vadd.f32 %v3413, %v3445
  %v3447 = vpop.f32.mrf.mxu0
  %v3448 = vadd.f32 %v3415, %v3447
  %3449 = vmatmul.bf16.gmra.mxu0 %v1218
  %v3450 = vpop.f32.mrf.mxu0
  %v3451 = vadd.f32 %v3418, %v3450
  %v3452 = vpop.f32.mrf.mxu0
  %v3453 = vadd.f32 %v3420, %v3452
  %3454 = vmatmul.bf16.gmra.mxu0 %v1250
  %v3455 = vpop.f32.mrf.mxu0
  %v3456 = vadd.f32 %v3423, %v3455
  %v3457 = vpop.f32.mrf.mxu0
  %3458 = vdwg.mxu0
  %3459 = vmatpush.bf16.msra.mxu0 %v2579
  %3460 = vmatpush.bf16.msra.mxu0 %v2578
  %3461 = vmatpush.bf16.msra.mxu0 %v2577
  %3462 = vmatpush.bf16.msra.mxu0 %v2576
  %3463 = vmatpush.bf16.msra.mxu0 %v2575
  %3464 = vmatpush.bf16.msra.mxu0 %v2574
  %3465 = vmatpush.bf16.msra.mxu0 %v2573
  %3466 = vmatpush.bf16.msra.mxu0 %v2572
  %3467 = vmatmul.bf16.gmra.mxu0 %v1123
  %v3468 = vpop.f32.mrf.mxu0
  %v3469 = vadd.f32 %v3436, %v3468
  %v3470 = vpop.f32.mrf.mxu0
  %v3471 = vadd.f32 %v3438, %v3470
  %3472 = vmatmul.bf16.gmra.mxu0 %v1155
  %v3473 = vpop.f32.mrf.mxu0
  %v3474 = vadd.f32 %v3441, %v3473
  %v3475 = vpop.f32.mrf.mxu0
  %v3476 = vadd.f32 %v3443, %v3475
  %3477 = vmatmul.bf16.gmra.mxu0 %v1187
  %v3478 = vpop.f32.mrf.mxu0
  %v3479 = vadd.f32 %v3446, %v3478
  %v3480 = vpop.f32.mrf.mxu0
  %v3481 = vadd.f32 %v3448, %v3480
  %3482 = vmatmul.bf16.gmra.mxu0 %v1219
  %v3483 = vpop.f32.mrf.mxu0
  %v3484 = vadd.f32 %v3451, %v3483
  %v3485 = vpop.f32.mrf.mxu0
  %v3486 = vadd.f32 %v3453, %v3485
  %3487 = vmatmul.bf16.gmra.mxu0 %v1251
  %v3488 = vpop.f32.mrf.mxu0
  %v3489 = vadd.f32 %v3456, %v3488
  %v3490 = vpop.f32.mrf.mxu0
  %3491 = vdwg.mxu0
  %3492 = vmatpush.bf16.msra.mxu0 %v2587
  %3493 = vmatpush.bf16.msra.mxu0 %v2586
  %3494 = vmatpush.bf16.msra.mxu0 %v2585
  %3495 = vmatpush.bf16.msra.mxu0 %v2584
  %3496 = vmatpush.bf16.msra.mxu0 %v2583
  %3497 = vmatpush.bf16.msra.mxu0 %v2582
  %3498 = vmatpush.bf16.msra.mxu0 %v2581
  %3499 = vmatpush.bf16.msra.mxu0 %v2580
  %3500 = vmatmul.bf16.gmra.mxu0 %v1124
  %v3501 = vpop.f32.mrf.mxu0
  %v3502 = vadd.f32 %v3469, %v3501
  %v3503 = vpop.f32.mrf.mxu0
  %v3504 = vadd.f32 %v3471, %v3503
  %3505 = vmatmul.bf16.gmra.mxu0 %v1156
  %v3506 = vpop.f32.mrf.mxu0
  %v3507 = vadd.f32 %v3474, %v3506
  %v3508 = vpop.f32.mrf.mxu0
  %v3509 = vadd.f32 %v3476, %v3508
  %3510 = vmatmul.bf16.gmra.mxu0 %v1188
  %v3511 = vpop.f32.mrf.mxu0
  %v3512 = vadd.f32 %v3479, %v3511
  %v3513 = vpop.f32.mrf.mxu0
  %v3514 = vadd.f32 %v3481, %v3513
  %3515 = vmatmul.bf16.gmra.mxu0 %v1220
  %v3516 = vpop.f32.mrf.mxu0
  %v3517 = vadd.f32 %v3484, %v3516
  %v3518 = vpop.f32.mrf.mxu0
  %v3519 = vadd.f32 %v3486, %v3518
  %3520 = vmatmul.bf16.gmra.mxu0 %v1252
  %v3521 = vpop.f32.mrf.mxu0
  %v3522 = vadd.f32 %v3489, %v3521
  %v3523 = vpop.f32.mrf.mxu0
  %3524 = vdwg.mxu0
  %3525 = vmatpush.bf16.msra.mxu0 %v2595
  %3526 = vmatpush.bf16.msra.mxu0 %v2594
  %3527 = vmatpush.bf16.msra.mxu0 %v2593
  %3528 = vmatpush.bf16.msra.mxu0 %v2592
  %3529 = vmatpush.bf16.msra.mxu0 %v2591
  %3530 = vmatpush.bf16.msra.mxu0 %v2590
  %3531 = vmatpush.bf16.msra.mxu0 %v2589
  %3532 = vmatpush.bf16.msra.mxu0 %v2588
  %3533 = vmatmul.bf16.gmra.mxu0 %v1125
  %v3534 = vpop.f32.mrf.mxu0
  %v3535 = vadd.f32 %v3502, %v3534
  %v3536 = vpop.f32.mrf.mxu0
  %v3537 = vadd.f32 %v3504, %v3536
  %3538 = vmatmul.bf16.gmra.mxu0 %v1157
  %v3539 = vpop.f32.mrf.mxu0
  %v3540 = vadd.f32 %v3507, %v3539
  %v3541 = vpop.f32.mrf.mxu0
  %v3542 = vadd.f32 %v3509, %v3541
  %3543 = vmatmul.bf16.gmra.mxu0 %v1189
  %v3544 = vpop.f32.mrf.mxu0
  %v3545 = vadd.f32 %v3512, %v3544
  %v3546 = vpop.f32.mrf.mxu0
  %v3547 = vadd.f32 %v3514, %v3546
  %3548 = vmatmul.bf16.gmra.mxu0 %v1221
  %v3549 = vpop.f32.mrf.mxu0
  %v3550 = vadd.f32 %v3517, %v3549
  %v3551 = vpop.f32.mrf.mxu0
  %v3552 = vadd.f32 %v3519, %v3551
  %3553 = vmatmul.bf16.gmra.mxu0 %v1253
  %v3554 = vpop.f32.mrf.mxu0
  %v3555 = vadd.f32 %v3522, %v3554
  %v3556 = vpop.f32.mrf.mxu0
  %3557 = vdwg.mxu0
  %3558 = vmatpush.bf16.msra.mxu0 %v2603
  %3559 = vmatpush.bf16.msra.mxu0 %v2602
  %3560 = vmatpush.bf16.msra.mxu0 %v2601
  %3561 = vmatpush.bf16.msra.mxu0 %v2600
  %3562 = vmatpush.bf16.msra.mxu0 %v2599
  %3563 = vmatpush.bf16.msra.mxu0 %v2598
  %3564 = vmatpush.bf16.msra.mxu0 %v2597
  %3565 = vmatpush.bf16.msra.mxu0 %v2596
  %3566 = vmatmul.bf16.gmra.mxu0 %v1126
  %v3567 = vpop.f32.mrf.mxu0
  %v3568 = vadd.f32 %v3535, %v3567
  %v3569 = vpop.f32.mrf.mxu0
  %v3570 = vadd.f32 %v3537, %v3569
  %3571 = vmatmul.bf16.gmra.mxu0 %v1158
  %v3572 = vpop.f32.mrf.mxu0
  %v3573 = vadd.f32 %v3540, %v3572
  %v3574 = vpop.f32.mrf.mxu0
  %v3575 = vadd.f32 %v3542, %v3574
  %3576 = vmatmul.bf16.gmra.mxu0 %v1190
  %v3577 = vpop.f32.mrf.mxu0
  %v3578 = vadd.f32 %v3545, %v3577
  %v3579 = vpop.f32.mrf.mxu0
  %v3580 = vadd.f32 %v3547, %v3579
  %3581 = vmatmul.bf16.gmra.mxu0 %v1222
  %v3582 = vpop.f32.mrf.mxu0
  %v3583 = vadd.f32 %v3550, %v3582
  %v3584 = vpop.f32.mrf.mxu0
  %v3585 = vadd.f32 %v3552, %v3584
  %3586 = vmatmul.bf16.gmra.mxu0 %v1254
  %v3587 = vpop.f32.mrf.mxu0
  %v3588 = vadd.f32 %v3555, %v3587
  %v3589 = vpop.f32.mrf.mxu0
  %3590 = vdwg.mxu0
  %3591 = vmatpush.bf16.msra.mxu0 %v2611
  %3592 = vmatpush.bf16.msra.mxu0 %v2610
  %3593 = vmatpush.bf16.msra.mxu0 %v2609
  %3594 = vmatpush.bf16.msra.mxu0 %v2608
  %3595 = vmatpush.bf16.msra.mxu0 %v2607
  %3596 = vmatpush.bf16.msra.mxu0 %v2606
  %3597 = vmatpush.bf16.msra.mxu0 %v2605
  %3598 = vmatpush.bf16.msra.mxu0 %v2604
  %3599 = vmatmul.bf16.gmra.mxu0 %v1127
  %v3600 = vpop.f32.mrf.mxu0
  %v3601 = vadd.f32 %v3568, %v3600
  %v3602 = vpop.f32.mrf.mxu0
  %v3603 = vadd.f32 %v3570, %v3602
  %3604 = vmatmul.bf16.gmra.mxu0 %v1159
  %v3605 = vpop.f32.mrf.mxu0
  %v3606 = vadd.f32 %v3573, %v3605
  %v3607 = vpop.f32.mrf.mxu0
  %v3608 = vadd.f32 %v3575, %v3607
  %3609 = vmatmul.bf16.gmra.mxu0 %v1191
  %v3610 = vpop.f32.mrf.mxu0
  %v3611 = vadd.f32 %v3578, %v3610
  %v3612 = vpop.f32.mrf.mxu0
  %v3613 = vadd.f32 %v3580, %v3612
  %3614 = vmatmul.bf16.gmra.mxu0 %v1223
  %v3615 = vpop.f32.mrf.mxu0
  %v3616 = vadd.f32 %v3583, %v3615
  %v3617 = vpop.f32.mrf.mxu0
  %v3618 = vadd.f32 %v3585, %v3617
  %3619 = vmatmul.bf16.gmra.mxu0 %v1255
  %v3620 = vpop.f32.mrf.mxu0
  %v3621 = vadd.f32 %v3588, %v3620
  %v3622 = vpop.f32.mrf.mxu0
  %3623 = vdwg.mxu0
  %3624 = vmatpush.bf16.msra.mxu0 %v2619
  %3625 = vmatpush.bf16.msra.mxu0 %v2618
  %3626 = vmatpush.bf16.msra.mxu0 %v2617
  %3627 = vmatpush.bf16.msra.mxu0 %v2616
  %3628 = vmatpush.bf16.msra.mxu0 %v2615
  %3629 = vmatpush.bf16.msra.mxu0 %v2614
  %3630 = vmatpush.bf16.msra.mxu0 %v2613
  %3631 = vmatpush.bf16.msra.mxu0 %v2612
  %3632 = vmatmul.bf16.gmra.mxu0 %v1128
  %v3633 = vpop.f32.mrf.mxu0
  %v3634 = vadd.f32 %v3601, %v3633
  %v3635 = vpop.f32.mrf.mxu0
  %v3636 = vadd.f32 %v3603, %v3635
  %3637 = vmatmul.bf16.gmra.mxu0 %v1160
  %v3638 = vpop.f32.mrf.mxu0
  %v3639 = vadd.f32 %v3606, %v3638
  %v3640 = vpop.f32.mrf.mxu0
  %v3641 = vadd.f32 %v3608, %v3640
  %3642 = vmatmul.bf16.gmra.mxu0 %v1192
  %v3643 = vpop.f32.mrf.mxu0
  %v3644 = vadd.f32 %v3611, %v3643
  %v3645 = vpop.f32.mrf.mxu0
  %v3646 = vadd.f32 %v3613, %v3645
  %3647 = vmatmul.bf16.gmra.mxu0 %v1224
  %v3648 = vpop.f32.mrf.mxu0
  %v3649 = vadd.f32 %v3616, %v3648
  %v3650 = vpop.f32.mrf.mxu0
  %v3651 = vadd.f32 %v3618, %v3650
  %3652 = vmatmul.bf16.gmra.mxu0 %v1256
  %v3653 = vpop.f32.mrf.mxu0
  %v3654 = vadd.f32 %v3621, %v3653
  %v3655 = vpop.f32.mrf.mxu0
  %3656 = vdwg.mxu0
  %3657 = vmatpush.bf16.msra.mxu0 %v2627
  %3658 = vmatpush.bf16.msra.mxu0 %v2626
  %3659 = vmatpush.bf16.msra.mxu0 %v2625
  %3660 = vmatpush.bf16.msra.mxu0 %v2624
  %3661 = vmatpush.bf16.msra.mxu0 %v2623
  %3662 = vmatpush.bf16.msra.mxu0 %v2622
  %3663 = vmatpush.bf16.msra.mxu0 %v2621
  %3664 = vmatpush.bf16.msra.mxu0 %v2620
  %3665 = vmatmul.bf16.gmra.mxu0 %v1129
  %v3666 = vpop.f32.mrf.mxu0
  %v3667 = vadd.f32 %v3634, %v3666
  %v3668 = vpop.f32.mrf.mxu0
  %v3669 = vadd.f32 %v3636, %v3668
  %3670 = vmatmul.bf16.gmra.mxu0 %v1161
  %v3671 = vpop.f32.mrf.mxu0
  %v3672 = vadd.f32 %v3639, %v3671
  %v3673 = vpop.f32.mrf.mxu0
  %v3674 = vadd.f32 %v3641, %v3673
  %3675 = vmatmul.bf16.gmra.mxu0 %v1193
  %v3676 = vpop.f32.mrf.mxu0
  %v3677 = vadd.f32 %v3644, %v3676
  %v3678 = vpop.f32.mrf.mxu0
  %v3679 = vadd.f32 %v3646, %v3678
  %3680 = vmatmul.bf16.gmra.mxu0 %v1225
  %v3681 = vpop.f32.mrf.mxu0
  %v3682 = vadd.f32 %v3649, %v3681
  %v3683 = vpop.f32.mrf.mxu0
  %v3684 = vadd.f32 %v3651, %v3683
  %3685 = vmatmul.bf16.gmra.mxu0 %v1257
  %v3686 = vpop.f32.mrf.mxu0
  %v3687 = vadd.f32 %v3654, %v3686
  %v3688 = vpop.f32.mrf.mxu0
  %3689 = vdwg.mxu0
  %3690 = vmatpush.bf16.msra.mxu0 %v2635
  %3691 = vmatpush.bf16.msra.mxu0 %v2634
  %3692 = vmatpush.bf16.msra.mxu0 %v2633
  %3693 = vmatpush.bf16.msra.mxu0 %v2632
  %3694 = vmatpush.bf16.msra.mxu0 %v2631
  %3695 = vmatpush.bf16.msra.mxu0 %v2630
  %3696 = vmatpush.bf16.msra.mxu0 %v2629
  %3697 = vmatpush.bf16.msra.mxu0 %v2628
  %3698 = vmatmul.bf16.gmra.mxu0 %v1130
  %v3699 = vpop.f32.mrf.mxu0
  %v3700 = vadd.f32 %v3667, %v3699
  %v3701 = vpop.f32.mrf.mxu0
  %v3702 = vadd.f32 %v3669, %v3701
  %3703 = vmatmul.bf16.gmra.mxu0 %v1162
  %v3704 = vpop.f32.mrf.mxu0
  %v3705 = vadd.f32 %v3672, %v3704
  %v3706 = vpop.f32.mrf.mxu0
  %v3707 = vadd.f32 %v3674, %v3706
  %3708 = vmatmul.bf16.gmra.mxu0 %v1194
  %v3709 = vpop.f32.mrf.mxu0
  %v3710 = vadd.f32 %v3677, %v3709
  %v3711 = vpop.f32.mrf.mxu0
  %v3712 = vadd.f32 %v3679, %v3711
  %3713 = vmatmul.bf16.gmra.mxu0 %v1226
  %v3714 = vpop.f32.mrf.mxu0
  %v3715 = vadd.f32 %v3682, %v3714
  %v3716 = vpop.f32.mrf.mxu0
  %v3717 = vadd.f32 %v3684, %v3716
  %3718 = vmatmul.bf16.gmra.mxu0 %v1258
  %v3719 = vpop.f32.mrf.mxu0
  %v3720 = vadd.f32 %v3687, %v3719
  %v3721 = vpop.f32.mrf.mxu0
  %3722 = vdwg.mxu0
  %3723 = vmatpush.bf16.msra.mxu0 %v2643
  %3724 = vmatpush.bf16.msra.mxu0 %v2642
  %3725 = vmatpush.bf16.msra.mxu0 %v2641
  %3726 = vmatpush.bf16.msra.mxu0 %v2640
  %3727 = vmatpush.bf16.msra.mxu0 %v2639
  %3728 = vmatpush.bf16.msra.mxu0 %v2638
  %3729 = vmatpush.bf16.msra.mxu0 %v2637
  %3730 = vmatpush.bf16.msra.mxu0 %v2636
  %3731 = vmatmul.bf16.gmra.mxu0 %v1131
  %v3732 = vpop.f32.mrf.mxu0
  %v3733 = vadd.f32 %v3700, %v3732
  %v3734 = vpop.f32.mrf.mxu0
  %v3735 = vadd.f32 %v3702, %v3734
  %3736 = vmatmul.bf16.gmra.mxu0 %v1163
  %v3737 = vpop.f32.mrf.mxu0
  %v3738 = vadd.f32 %v3705, %v3737
  %v3739 = vpop.f32.mrf.mxu0
  %v3740 = vadd.f32 %v3707, %v3739
  %3741 = vmatmul.bf16.gmra.mxu0 %v1195
  %v3742 = vpop.f32.mrf.mxu0
  %v3743 = vadd.f32 %v3710, %v3742
  %v3744 = vpop.f32.mrf.mxu0
  %v3745 = vadd.f32 %v3712, %v3744
  %3746 = vmatmul.bf16.gmra.mxu0 %v1227
  %v3747 = vpop.f32.mrf.mxu0
  %v3748 = vadd.f32 %v3715, %v3747
  %v3749 = vpop.f32.mrf.mxu0
  %v3750 = vadd.f32 %v3717, %v3749
  %3751 = vmatmul.bf16.gmra.mxu0 %v1259
  %v3752 = vpop.f32.mrf.mxu0
  %v3753 = vadd.f32 %v3720, %v3752
  %v3754 = vpop.f32.mrf.mxu0
  %3755 = vdwg.mxu0
  %3756 = vmatpush.bf16.msra.mxu0 %v2651
  %3757 = vmatpush.bf16.msra.mxu0 %v2650
  %3758 = vmatpush.bf16.msra.mxu0 %v2649
  %3759 = vmatpush.bf16.msra.mxu0 %v2648
  %3760 = vmatpush.bf16.msra.mxu0 %v2647
  %3761 = vmatpush.bf16.msra.mxu0 %v2646
  %3762 = vmatpush.bf16.msra.mxu0 %v2645
  %3763 = vmatpush.bf16.msra.mxu0 %v2644
  %3764 = vmatmul.bf16.gmra.mxu0 %v1132
  %v3765 = vpop.f32.mrf.mxu0
  %v3766 = vadd.f32 %v3733, %v3765
  %v3767 = vpop.f32.mrf.mxu0
  %v3768 = vadd.f32 %v3735, %v3767
  %3769 = vmatmul.bf16.gmra.mxu0 %v1164
  %v3770 = vpop.f32.mrf.mxu0
  %v3771 = vadd.f32 %v3738, %v3770
  %v3772 = vpop.f32.mrf.mxu0
  %v3773 = vadd.f32 %v3740, %v3772
  %3774 = vmatmul.bf16.gmra.mxu0 %v1196
  %v3775 = vpop.f32.mrf.mxu0
  %v3776 = vadd.f32 %v3743, %v3775
  %v3777 = vpop.f32.mrf.mxu0
  %v3778 = vadd.f32 %v3745, %v3777
  %3779 = vmatmul.bf16.gmra.mxu0 %v1228
  %v3780 = vpop.f32.mrf.mxu0
  %v3781 = vadd.f32 %v3748, %v3780
  %v3782 = vpop.f32.mrf.mxu0
  %v3783 = vadd.f32 %v3750, %v3782
  %3784 = vmatmul.bf16.gmra.mxu0 %v1260
  %v3785 = vpop.f32.mrf.mxu0
  %v3786 = vadd.f32 %v3753, %v3785
  %v3787 = vpop.f32.mrf.mxu0
  %3788 = vdwg.mxu0
  %3789 = vmatpush.bf16.msra.mxu0 %v2659
  %3790 = vmatpush.bf16.msra.mxu0 %v2658
  %3791 = vmatpush.bf16.msra.mxu0 %v2657
  %3792 = vmatpush.bf16.msra.mxu0 %v2656
  %3793 = vmatpush.bf16.msra.mxu0 %v2655
  %3794 = vmatpush.bf16.msra.mxu0 %v2654
  %3795 = vmatpush.bf16.msra.mxu0 %v2653
  %3796 = vmatpush.bf16.msra.mxu0 %v2652
  %3797 = vmatmul.bf16.gmra.mxu0 %v1133
  %v3798 = vpop.f32.mrf.mxu0
  %v3799 = vadd.f32 %v3766, %v3798
  %v3800 = vpop.f32.mrf.mxu0
  %v3801 = vadd.f32 %v3768, %v3800
  %3802 = vmatmul.bf16.gmra.mxu0 %v1165
  %v3803 = vpop.f32.mrf.mxu0
  %v3804 = vadd.f32 %v3771, %v3803
  %v3805 = vpop.f32.mrf.mxu0
  %v3806 = vadd.f32 %v3773, %v3805
  %3807 = vmatmul.bf16.gmra.mxu0 %v1197
  %v3808 = vpop.f32.mrf.mxu0
  %v3809 = vadd.f32 %v3776, %v3808
  %v3810 = vpop.f32.mrf.mxu0
  %v3811 = vadd.f32 %v3778, %v3810
  %3812 = vmatmul.bf16.gmra.mxu0 %v1229
  %v3813 = vpop.f32.mrf.mxu0
  %v3814 = vadd.f32 %v3781, %v3813
  %v3815 = vpop.f32.mrf.mxu0
  %v3816 = vadd.f32 %v3783, %v3815
  %3817 = vmatmul.bf16.gmra.mxu0 %v1261
  %v3818 = vpop.f32.mrf.mxu0
  %v3819 = vadd.f32 %v3786, %v3818
  %v3820 = vpop.f32.mrf.mxu0
  %3821 = vdwg.mxu0
  %3822 = vmatpush.bf16.msra.mxu0 %v2667
  %3823 = vmatpush.bf16.msra.mxu0 %v2666
  %3824 = vmatpush.bf16.msra.mxu0 %v2665
  %3825 = vmatpush.bf16.msra.mxu0 %v2664
  %3826 = vmatpush.bf16.msra.mxu0 %v2663
  %3827 = vmatpush.bf16.msra.mxu0 %v2662
  %3828 = vmatpush.bf16.msra.mxu0 %v2661
  %3829 = vmatpush.bf16.msra.mxu0 %v2660
  %3830 = vmatmul.bf16.gmra.mxu0 %v1134
  %v3831 = vpop.f32.mrf.mxu0
  %v3832 = vadd.f32 %v3799, %v3831
  %v3833 = vpop.f32.mrf.mxu0
  %v3834 = vadd.f32 %v3801, %v3833
  %3835 = vmatmul.bf16.gmra.mxu0 %v1166
  %v3836 = vpop.f32.mrf.mxu0
  %v3837 = vadd.f32 %v3804, %v3836
  %v3838 = vpop.f32.mrf.mxu0
  %v3839 = vadd.f32 %v3806, %v3838
  %3840 = vmatmul.bf16.gmra.mxu0 %v1198
  %v3841 = vpop.f32.mrf.mxu0
  %v3842 = vadd.f32 %v3809, %v3841
  %v3843 = vpop.f32.mrf.mxu0
  %v3844 = vadd.f32 %v3811, %v3843
  %3845 = vmatmul.bf16.gmra.mxu0 %v1230
  %v3846 = vpop.f32.mrf.mxu0
  %v3847 = vadd.f32 %v3814, %v3846
  %v3848 = vpop.f32.mrf.mxu0
  %v3849 = vadd.f32 %v3816, %v3848
  %3850 = vmatmul.bf16.gmra.mxu0 %v1262
  %v3851 = vpop.f32.mrf.mxu0
  %v3852 = vadd.f32 %v3819, %v3851
  %v3853 = vpop.f32.mrf.mxu0
  %3854 = vdwg.mxu0
  %3855 = vmatpush.bf16.msra.mxu0 %v2675
  %3856 = vmatpush.bf16.msra.mxu0 %v2674
  %3857 = vmatpush.bf16.msra.mxu0 %v2673
  %3858 = vmatpush.bf16.msra.mxu0 %v2672
  %3859 = vmatpush.bf16.msra.mxu0 %v2671
  %3860 = vmatpush.bf16.msra.mxu0 %v2670
  %3861 = vmatpush.bf16.msra.mxu0 %v2669
  %3862 = vmatpush.bf16.msra.mxu0 %v2668
  %3863 = vmatmul.bf16.gmra.mxu0 %v1135
  %v3864 = vpop.f32.mrf.mxu0
  %v3865 = vadd.f32 %v3832, %v3864
  %v3866 = vpop.f32.mrf.mxu0
  %v3867 = vadd.f32 %v3834, %v3866
  %3868 = vmatmul.bf16.gmra.mxu0 %v1167
  %v3869 = vpop.f32.mrf.mxu0
  %v3870 = vadd.f32 %v3837, %v3869
  %v3871 = vpop.f32.mrf.mxu0
  %v3872 = vadd.f32 %v3839, %v3871
  %3873 = vmatmul.bf16.gmra.mxu0 %v1199
  %v3874 = vpop.f32.mrf.mxu0
  %v3875 = vadd.f32 %v3842, %v3874
  %v3876 = vpop.f32.mrf.mxu0
  %v3877 = vadd.f32 %v3844, %v3876
  %3878 = vmatmul.bf16.gmra.mxu0 %v1231
  %v3879 = vpop.f32.mrf.mxu0
  %v3880 = vadd.f32 %v3847, %v3879
  %v3881 = vpop.f32.mrf.mxu0
  %v3882 = vadd.f32 %v3849, %v3881
  %3883 = vmatmul.bf16.gmra.mxu0 %v1263
  %v3884 = vpop.f32.mrf.mxu0
  %v3885 = vadd.f32 %v3852, %v3884
  %v3886 = vpop.f32.mrf.mxu0
  %3887 = vdwg.mxu0
  %3888 = vmatpush.bf16.msra.mxu0 %v2683
  %3889 = vmatpush.bf16.msra.mxu0 %v2682
  %3890 = vmatpush.bf16.msra.mxu0 %v2681
  %3891 = vmatpush.bf16.msra.mxu0 %v2680
  %3892 = vmatpush.bf16.msra.mxu0 %v2679
  %3893 = vmatpush.bf16.msra.mxu0 %v2678
  %3894 = vmatpush.bf16.msra.mxu0 %v2677
  %3895 = vmatpush.bf16.msra.mxu0 %v2676
  %3896 = vmatmul.bf16.gmra.mxu0 %v1136
  %v3897 = vpop.f32.mrf.mxu0
  %v3898 = vadd.f32 %v3865, %v3897
  %v3899 = vpop.f32.mrf.mxu0
  %v3900 = vadd.f32 %v3867, %v3899
  %3901 = vmatmul.bf16.gmra.mxu0 %v1168
  %v3902 = vpop.f32.mrf.mxu0
  %v3903 = vadd.f32 %v3870, %v3902
  %v3904 = vpop.f32.mrf.mxu0
  %v3905 = vadd.f32 %v3872, %v3904
  %3906 = vmatmul.bf16.gmra.mxu0 %v1200
  %v3907 = vpop.f32.mrf.mxu0
  %v3908 = vadd.f32 %v3875, %v3907
  %v3909 = vpop.f32.mrf.mxu0
  %v3910 = vadd.f32 %v3877, %v3909
  %3911 = vmatmul.bf16.gmra.mxu0 %v1232
  %v3912 = vpop.f32.mrf.mxu0
  %v3913 = vadd.f32 %v3880, %v3912
  %v3914 = vpop.f32.mrf.mxu0
  %v3915 = vadd.f32 %v3882, %v3914
  %3916 = vmatmul.bf16.gmra.mxu0 %v1264
  %v3917 = vpop.f32.mrf.mxu0
  %v3918 = vadd.f32 %v3885, %v3917
  %v3919 = vpop.f32.mrf.mxu0
  %3920 = vdwg.mxu0
  %3921 = vmatpush.bf16.msra.mxu0 %v2691
  %3922 = vmatpush.bf16.msra.mxu0 %v2690
  %3923 = vmatpush.bf16.msra.mxu0 %v2689
  %3924 = vmatpush.bf16.msra.mxu0 %v2688
  %3925 = vmatpush.bf16.msra.mxu0 %v2687
  %3926 = vmatpush.bf16.msra.mxu0 %v2686
  %3927 = vmatpush.bf16.msra.mxu0 %v2685
  %3928 = vmatpush.bf16.msra.mxu0 %v2684
  %3929 = vmatmul.bf16.gmra.mxu0 %v1137
  %v3930 = vpop.f32.mrf.mxu0
  %v3931 = vadd.f32 %v3898, %v3930
  %v3932 = vpop.f32.mrf.mxu0
  %v3933 = vadd.f32 %v3900, %v3932
  %3934 = vmatmul.bf16.gmra.mxu0 %v1169
  %v3935 = vpop.f32.mrf.mxu0
  %v3936 = vadd.f32 %v3903, %v3935
  %v3937 = vpop.f32.mrf.mxu0
  %v3938 = vadd.f32 %v3905, %v3937
  %3939 = vmatmul.bf16.gmra.mxu0 %v1201
  %v3940 = vpop.f32.mrf.mxu0
  %v3941 = vadd.f32 %v3908, %v3940
  %v3942 = vpop.f32.mrf.mxu0
  %v3943 = vadd.f32 %v3910, %v3942
  %3944 = vmatmul.bf16.gmra.mxu0 %v1233
  %v3945 = vpop.f32.mrf.mxu0
  %v3946 = vadd.f32 %v3913, %v3945
  %v3947 = vpop.f32.mrf.mxu0
  %v3948 = vadd.f32 %v3915, %v3947
  %3949 = vmatmul.bf16.gmra.mxu0 %v1265
  %v3950 = vpop.f32.mrf.mxu0
  %v3951 = vadd.f32 %v3918, %v3950
  %v3952 = vpop.f32.mrf.mxu0
  %3953 = vdwg.mxu0
  %3954 = vmatpush.bf16.msra.mxu0 %v2699
  %3955 = vmatpush.bf16.msra.mxu0 %v2698
  %3956 = vmatpush.bf16.msra.mxu0 %v2697
  %3957 = vmatpush.bf16.msra.mxu0 %v2696
  %3958 = vmatpush.bf16.msra.mxu0 %v2695
  %3959 = vmatpush.bf16.msra.mxu0 %v2694
  %3960 = vmatpush.bf16.msra.mxu0 %v2693
  %3961 = vmatpush.bf16.msra.mxu0 %v2692
  %3962 = vmatmul.bf16.gmra.mxu0 %v1138
  %v3963 = vpop.f32.mrf.mxu0
  %v3964 = vadd.f32 %v3931, %v3963
  %v3965 = vpop.f32.mrf.mxu0
  %v3966 = vadd.f32 %v3933, %v3965
  %3967 = vmatmul.bf16.gmra.mxu0 %v1170
  %v3968 = vpop.f32.mrf.mxu0
  %v3969 = vadd.f32 %v3936, %v3968
  %v3970 = vpop.f32.mrf.mxu0
  %v3971 = vadd.f32 %v3938, %v3970
  %3972 = vmatmul.bf16.gmra.mxu0 %v1202
  %v3973 = vpop.f32.mrf.mxu0
  %v3974 = vadd.f32 %v3941, %v3973
  %v3975 = vpop.f32.mrf.mxu0
  %v3976 = vadd.f32 %v3943, %v3975
  %3977 = vmatmul.bf16.gmra.mxu0 %v1234
  %v3978 = vpop.f32.mrf.mxu0
  %v3979 = vadd.f32 %v3946, %v3978
  %v3980 = vpop.f32.mrf.mxu0
  %v3981 = vadd.f32 %v3948, %v3980
  %3982 = vmatmul.bf16.gmra.mxu0 %v1266
  %v3983 = vpop.f32.mrf.mxu0
  %v3984 = vadd.f32 %v3951, %v3983
  %v3985 = vpop.f32.mrf.mxu0
  %3986 = vdwg.mxu0
  %3987 = vmatpush.bf16.msra.mxu0 %v2707
  %3988 = vmatpush.bf16.msra.mxu0 %v2706
  %3989 = vmatpush.bf16.msra.mxu0 %v2705
  %3990 = vmatpush.bf16.msra.mxu0 %v2704
  %3991 = vmatpush.bf16.msra.mxu0 %v2703
  %3992 = vmatpush.bf16.msra.mxu0 %v2702
  %3993 = vmatpush.bf16.msra.mxu0 %v2701
  %3994 = vmatpush.bf16.msra.mxu0 %v2700
  %3995 = vmatmul.bf16.gmra.mxu0 %v1139
  %v3996 = vpop.f32.mrf.mxu0
  %v3997 = vadd.f32 %v3964, %v3996
  %v3998 = vpop.f32.mrf.mxu0
  %v3999 = vadd.f32 %v3966, %v3998
  %4000 = vmatmul.bf16.gmra.mxu0 %v1171
  %v4001 = vpop.f32.mrf.mxu0
  %v4002 = vadd.f32 %v3969, %v4001
  %v4003 = vpop.f32.mrf.mxu0
  %v4004 = vadd.f32 %v3971, %v4003
  %4005 = vmatmul.bf16.gmra.mxu0 %v1203
  %v4006 = vpop.f32.mrf.mxu0
  %v4007 = vadd.f32 %v3974, %v4006
  %v4008 = vpop.f32.mrf.mxu0
  %v4009 = vadd.f32 %v3976, %v4008
  %4010 = vmatmul.bf16.gmra.mxu0 %v1235
  %v4011 = vpop.f32.mrf.mxu0
  %v4012 = vadd.f32 %v3979, %v4011
  %v4013 = vpop.f32.mrf.mxu0
  %v4014 = vadd.f32 %v3981, %v4013
  %4015 = vmatmul.bf16.gmra.mxu0 %v1267
  %v4016 = vpop.f32.mrf.mxu0
  %v4017 = vadd.f32 %v3984, %v4016
  %v4018 = vpop.f32.mrf.mxu0
  %4019 = vdwg.mxu0
  %v4020 = vld [vmem:[%s0] sm:$0xff]
  %v4021 = vld [vmem:[%s0 + $0x8] sm:$0xff]
  %v4022 = vld [vmem:[%s0 + $0x10] sm:$0xff]
  %v4023 = vld [vmem:[%s0 + $0x18] sm:$0xff]
  %v4024 = vld [vmem:[%s0 + $0x20] sm:$0xff]
  %v4025 = vld [vmem:[%s0 + $0x28] sm:$0xff]
  %v4026 = vld [vmem:[%s0 + $0x30] sm:$0xff]
  %v4027 = vld [vmem:[%s0 + $0x38] sm:$0xff]
  %v4028 = vld [vmem:[%s0 + $0x40] sm:$0xff]
  %4030 = vset.pattern.permute.xlu0 0
  %4031 = vperm.xlu0 %4030, %v4020
  %v4032 = vpop.permute.xlu0 %4031
  %4035 = vset.pattern.permute.xlu0 0
  %4036 = vperm.xlu0 %4035, %v4021
  %v4037 = vpop.permute.xlu0 %4036
  %4040 = vset.pattern.permute.xlu0 0
  %4041 = vperm.xlu0 %4040, %v4022
  %v4042 = vpop.permute.xlu0 %4041
  %4045 = vset.pattern.permute.xlu0 0
  %4046 = vperm.xlu0 %4045, %v4023
  %v4047 = vpop.permute.xlu0 %4046
  %4050 = vset.pattern.permute.xlu0 0
  %4051 = vperm.xlu0 %4050, %v4024
  %v4052 = vpop.permute.xlu0 %4051
  %4055 = vset.pattern.permute.xlu0 0
  %4056 = vperm.xlu0 %4055, %v4025
  %v4057 = vpop.permute.xlu0 %4056
  %4060 = vset.pattern.permute.xlu0 0
  %4061 = vperm.xlu0 %4060, %v4026
  %v4062 = vpop.permute.xlu0 %4061
  %4065 = vset.pattern.permute.xlu0 0
  %4066 = vperm.xlu0 %4065, %v4027
  %v4067 = vpop.permute.xlu0 %4066
  %4070 = vset.pattern.permute.xlu0 0
  %4071 = vperm.xlu0 %4070, %v4028
  %v4072 = vpop.permute.xlu0 %4071
  %v4074 = vmul.f32 %v3997, %v4032
  %v4075 = vmul.f32 %v3999, %v4037
  %v4076 = vmul.f32 %v4002, %v4042
  %v4077 = vmul.f32 %v4004, %v4047
  %v4078 = vmul.f32 %v4007, %v4052
  %v4079 = vmul.f32 %v4009, %v4057
  %v4080 = vmul.f32 %v4012, %v4062
  %v4081 = vmul.f32 %v4014, %v4067
  %v4082 = vmul.f32 %v4017, %v4072
  %v4083 = vadd.f32 %v4074, %v4075
  %v4084 = vadd.f32 %v4083, %v4076
  %v4085 = vadd.f32 %v4084, %v4077
  %v4086 = vadd.f32 %v4085, %v4078
  %v4087 = vadd.f32 %v4086, %v4079
  %v4088 = vadd.f32 %v4087, %v4080
  %v4089 = vadd.f32 %v4088, %v4081
  %v4090 = vadd.f32 %v4089, %v4082
  %v4091 = vrot.slane %v4090, 4
  %v4092 = vadd.f32 %v4090, %v4091
  %v4093 = vrot.slane %v4092, 2
  %v4094 = vadd.f32 %v4092, %v4093
  %v4095 = vrot.slane %v4094, 1
  %v4096 = vadd.f32 %v4094, %v4095
  %v4097 = vadd.f32 %v4096, 0.0
  %v4098 = vmul.f32 %v3997, %v3997
  %v4099 = vmul.f32 %v3999, %v3999
  %v4100 = vmul.f32 %v4002, %v4002
  %v4101 = vmul.f32 %v4004, %v4004
  %v4102 = vmul.f32 %v4007, %v4007
  %v4103 = vmul.f32 %v4009, %v4009
  %v4104 = vmul.f32 %v4012, %v4012
  %v4105 = vmul.f32 %v4014, %v4014
  %v4106 = vmul.f32 %v4017, %v4017
  %v4107 = vmul.f32 %v4098, %v4032
  %v4108 = vmul.f32 %v4099, %v4037
  %v4109 = vmul.f32 %v4100, %v4042
  %v4110 = vmul.f32 %v4101, %v4047
  %v4111 = vmul.f32 %v4102, %v4052
  %v4112 = vmul.f32 %v4103, %v4057
  %v4113 = vmul.f32 %v4104, %v4062
  %v4114 = vmul.f32 %v4105, %v4067
  %v4115 = vmul.f32 %v4106, %v4072
  %v4116 = vadd.f32 %v4107, %v4108
  %v4117 = vadd.f32 %v4116, %v4109
  %v4118 = vadd.f32 %v4117, %v4110
  %v4119 = vadd.f32 %v4118, %v4111
  %v4120 = vadd.f32 %v4119, %v4112
  %v4121 = vadd.f32 %v4120, %v4113
  %v4122 = vadd.f32 %v4121, %v4114
  %v4123 = vadd.f32 %v4122, %v4115
  %v4124 = vrot.slane %v4123, 4
  %v4125 = vadd.f32 %v4123, %v4124
  %v4126 = vrot.slane %v4125, 2
  %v4127 = vadd.f32 %v4125, %v4126
  %v4128 = vrot.slane %v4127, 1
  %v4129 = vadd.f32 %v4127, %v4128
  %v4130 = vadd.f32 %v4129, 0.0
  %v4131 = vrcp.pop 72.0
  %v4132 = vmul.f32 72.0, %v4131
  %v4133 = vsub.f32 1.0, %v4132
  %v4134 = vmul.f32 %v4131, %v4133
  %v4135 = vadd.f32 %v4131, %v4134
  %vm4136 = vweird.f32 %v4131
  %v4137 = vsel %vm4136, %v4131, %v4135
  %v4138 = vmul.f32 %v4097, %v4137
  %v4139 = vmul.f32 %v4130, %v4137
  %v4140 = vmul.f32 %v4138, %v4138
  %v4141 = vsub.f32 %v4139, %v4140
  %v4142 = vmax.f32 %v4141, 0.0
  %v4143 = vadd.f32 %v4142, 1e-05
  %v4144 = vrsqrt.pop %v4143
  %v4145 = vmul.f32 %v4144, %v4143
  %v4146 = vmul.f32 %v4145, %v4144
  %v4147 = vmul.f32 0.5, %v4146
  %v4148 = vsub.f32 1.5, %v4147
  %v4149 = vmul.f32 %v4144, %v4148
  %vm4150 = vweird.f32 %v4143
  %vm4151 = vweird.f32 %v4144
  %vm4152 = vmor %vm4150, %vm4151
  %v4153 = vsel %vm4152, %v4144, %v4149
  %v4154 = vld [vmem:[%s3] sm:$0x1]
  %v4155 = vmul.f32 %v4154, %v4153
  %v4156 = vld [vmem:[%s4] sm:$0x1]
  %v4157 = vmul.f32 %v4138, %v4155
  %v4158 = vsub.f32 %v4156, %v4157
  %v4160 = vperm.slane %v4155, 0
  %v4162 = vmul.f32 %v3997, %v4160
  %v4163 = vmul.f32 %v3999, %v4160
  %v4164 = vmul.f32 %v4002, %v4160
  %v4165 = vmul.f32 %v4004, %v4160
  %v4166 = vmul.f32 %v4007, %v4160
  %v4167 = vmul.f32 %v4009, %v4160
  %v4168 = vmul.f32 %v4012, %v4160
  %v4169 = vmul.f32 %v4014, %v4160
  %v4170 = vmul.f32 %v4017, %v4160
  %v4172 = vperm.slane %v4158, 0
  %v4174 = vadd.f32 %v4162, %v4172
  %v4175 = vadd.f32 %v4163, %v4172
  %v4176 = vadd.f32 %v4164, %v4172
  %v4177 = vadd.f32 %v4165, %v4172
  %v4178 = vadd.f32 %v4166, %v4172
  %v4179 = vadd.f32 %v4167, %v4172
  %v4180 = vadd.f32 %v4168, %v4172
  %v4181 = vadd.f32 %v4169, %v4172
  %v4182 = vadd.f32 %v4170, %v4172
  %v4183 = vmax.f32 %v4174, 0.0
  %v4184 = vmax.f32 %v4175, 0.0
  %v4185 = vmax.f32 %v4176, 0.0
  %v4186 = vmax.f32 %v4177, 0.0
  %v4187 = vmax.f32 %v4178, 0.0
  %v4188 = vmax.f32 %v4179, 0.0
  %v4189 = vmax.f32 %v4180, 0.0
  %v4190 = vmax.f32 %v4181, 0.0
  %v4191 = vmax.f32 %v4182, 0.0
  %v4192 = vpack.c.bf16 %v4183, %v4183
  %v4193 = vpack.c.bf16 %v4184, %v4184
  %v4194 = vpack.c.bf16 %v4185, %v4185
  %v4195 = vpack.c.bf16 %v4186, %v4186
  %v4196 = vpack.c.bf16 %v4187, %v4187
  %v4197 = vpack.c.bf16 %v4188, %v4188
  %v4198 = vpack.c.bf16 %v4189, %v4189
  %v4199 = vpack.c.bf16 %v4190, %v4190
  %v4200 = vpack.c.bf16 %v4191, %v4191
  %4201 = vst [vmem:[%s5] sm:$0xf] %v4192
  %4202 = vst [vmem:[%s5 + $0x4] sm:$0xf] %v4193
  %4203 = vst [vmem:[%s5 + $0x8] sm:$0xf] %v4194
  %4204 = vst [vmem:[%s5 + $0xc] sm:$0xf] %v4195
  %4205 = vst [vmem:[%s5 + $0x10] sm:$0xf] %v4196
  %4206 = vst [vmem:[%s5 + $0x14] sm:$0xf] %v4197
  %4207 = vst [vmem:[%s5 + $0x18] sm:$0xf] %v4198
  %4208 = vst [vmem:[%s5 + $0x1c] sm:$0xf] %v4199
  %4209 = vst [vmem:[%s5 + $0x20] sm:$0xf] %v4200
  // Predicated region
  $region22: #{generator_forward.5} parent=0 // pred_check
    _
  $region23: #{generator_forward.5} parent=0 // pred_check_branch
    %4211 = sbr.rel (0) target = $region25
  $region24: #{generator_forward.5} parent=0 // pred_region
    _
  $region25: #{generator_forward.5} parent=0 // pred_fallthru
    _
  // Predicated region
  $region26: #{generator_forward.5} parent=0 // pred_check
    _
  $region27: #{generator_forward.5} parent=0 // pred_check_branch
    %4213 = sbr.rel (0) target = $region29
  $region28: #{generator_forward.5} parent=0 // pred_region
    _
  $region29: #{generator_forward.5} parent=0 // pred_fallthru
    _

// kernel: generator_forward.6
$region0: #{generator_forward.6}
  #allocation0 [shape = 'u32[]', space=smem, size = 0x4, offset = 0x4, fixed_abs, tag = 'smem constant byte address 0x4 - core index']
  #allocation1 [shape = 'u32[72,128]{1,0:T(1,128)}', space=vmem, size = 0x9000, scoped, tag = 'internal scratch']
  %s0 = inlined_call_operand.vmem [shape: f32[104,4], index: 0, kind: input, shape index: {}]
  %s1 = inlined_call_operand.vmem [shape: bf16[104,512], index: 1, kind: input, shape index: {}]
  %s2 = inlined_call_operand.vmem [shape: bf16[512,256], index: 2, kind: input, shape index: {}]
  %s3 = inlined_call_operand.vmem [shape: f32[1,64], index: 3, kind: input, shape index: {}]
  %s4 = inlined_call_operand.vmem [shape: f32[1,64], index: 4, kind: input, shape index: {}]
  %s5 = inlined_call_operand.vmem [shape: bf16[104,256], index: 5, kind: output, shape index: {}]
  %s6 = sld [smem:[#allocation0]]
  $region30: #{generator_forward.6} parent=0
    _
  %s8 = ssub.s32 1, %s6
  %s9 = scalar_select 0, %s8, %s6
  // Predicated region
  $region2: #{generator_forward.6} parent=0 // pred_check
    _
  $region3: #{generator_forward.6} parent=0 // pred_check_branch
    %11 = sbr.rel (0) target = $region5
  $region4: #{generator_forward.6} parent=0 // pred_region
    _
  $region5: #{generator_forward.6} parent=0 // pred_fallthru
    _
  // Predicated region
  $region6: #{generator_forward.6} parent=0 // pred_check
    _
  $region7: #{generator_forward.6} parent=0 // pred_check_branch
    %13 = sbr.rel (0) target = $region9
  $region8: #{generator_forward.6} parent=0 // pred_region
    _
  $region9: #{generator_forward.6} parent=0 // pred_fallthru
    _
  // Predicated region
  $region10: #{generator_forward.6} parent=0 // pred_check
    _
  $region11: #{generator_forward.6} parent=0 // pred_check_branch
    %15 = sbr.rel (0) target = $region13
  $region12: #{generator_forward.6} parent=0 // pred_region
    _
  $region13: #{generator_forward.6} parent=0 // pred_fallthru
    _
  // Predicated region
  $region14: #{generator_forward.6} parent=0 // pred_check
    _
  $region15: #{generator_forward.6} parent=0 // pred_check_branch
    %17 = sbr.rel (0) target = $region17
  $region16: #{generator_forward.6} parent=0 // pred_region
    _
  $region17: #{generator_forward.6} parent=0 // pred_fallthru
    _
  // Predicated region
  $region18: #{generator_forward.6} parent=0 // pred_check
    _
  $region19: #{generator_forward.6} parent=0 // pred_check_branch
    %19 = sbr.rel (0) target = $region21
  $region20: #{generator_forward.6} parent=0 // pred_region
    _
  $region21: #{generator_forward.6} parent=0 // pred_fallthru
    _
  %v20 = vld [vmem:[%s1] sm:$0xff]
  %v21 = vld [vmem:[%s1 + $0x8] sm:$0xff]
  %v22 = vld [vmem:[%s1 + $0x10] sm:$0xff]
  %v23 = vld [vmem:[%s1 + $0x18] sm:$0xff]
  %v24 = vld [vmem:[%s1 + $0x20] sm:$0xff]
  %v25 = vld [vmem:[%s1 + $0x28] sm:$0xff]
  %v26 = vld [vmem:[%s1 + $0x30] sm:$0xff]
  %v27 = vld [vmem:[%s1 + $0x38] sm:$0xff]
  %v28 = vld [vmem:[%s1 + $0x40] sm:$0xff]
  %v29 = vld [vmem:[%s1 + $0x48] sm:$0xff]
  %v30 = vld [vmem:[%s1 + $0x50] sm:$0xff]
  %v31 = vld [vmem:[%s1 + $0x58] sm:$0xff]
  %v32 = vld [vmem:[%s1 + $0x60] sm:$0xff]
  %v33 = vld [vmem:[%s1 + $0x68] sm:$0xff]
  %v34 = vld [vmem:[%s1 + $0x70] sm:$0xff]
  %v35 = vld [vmem:[%s1 + $0x78] sm:$0xff]
  %v36 = vld [vmem:[%s1 + $0x80] sm:$0xff]
  %v37 = vld [vmem:[%s1 + $0x88] sm:$0xff]
  %v38 = vld [vmem:[%s1 + $0x90] sm:$0xff]
  %v39 = vld [vmem:[%s1 + $0x98] sm:$0xff]
  %v40 = vld [vmem:[%s1 + $0xa0] sm:$0xff]
  %v41 = vld [vmem:[%s1 + $0xa8] sm:$0xff]
  %v42 = vld [vmem:[%s1 + $0xb0] sm:$0xff]
  %v43 = vld [vmem:[%s1 + $0xb8] sm:$0xff]
  %v44 = vld [vmem:[%s1 + $0xc0] sm:$0xff]
  %v45 = vld [vmem:[%s1 + $0xc8] sm:$0xff]
  %v46 = vld [vmem:[%s2] sm:$0xff]
  %v47 = vld [vmem:[%s2 + $0x8] sm:$0xff]
  %v48 = vld [vmem:[%s2 + $0x10] sm:$0xff]
  %v49 = vld [vmem:[%s2 + $0x18] sm:$0xff]
  %v50 = vld [vmem:[%s2 + $0x20] sm:$0xff]
  %v51 = vld [vmem:[%s2 + $0x28] sm:$0xff]
  %v52 = vld [vmem:[%s2 + $0x30] sm:$0xff]
  %v53 = vld [vmem:[%s2 + $0x38] sm:$0xff]
  %v54 = vld [vmem:[%s2 + $0x40] sm:$0xff]
  %v55 = vld [vmem:[%s2 + $0x48] sm:$0xff]
  %v56 = vld [vmem:[%s2 + $0x50] sm:$0xff]
  %v57 = vld [vmem:[%s2 + $0x58] sm:$0xff]
  %v58 = vld [vmem:[%s2 + $0x60] sm:$0xff]
  %v59 = vld [vmem:[%s2 + $0x68] sm:$0xff]
  %v60 = vld [vmem:[%s2 + $0x70] sm:$0xff]
  %v61 = vld [vmem:[%s2 + $0x78] sm:$0xff]
  %v62 = vld [vmem:[%s2 + $0x80] sm:$0xff]
  %v63 = vld [vmem:[%s2 + $0x88] sm:$0xff]
  %v64 = vld [vmem:[%s2 + $0x90] sm:$0xff]
  %v65 = vld [vmem:[%s2 + $0x98] sm:$0xff]
  %v66 = vld [vmem:[%s2 + $0xa0] sm:$0xff]
  %v67 = vld [vmem:[%s2 + $0xa8] sm:$0xff]
  %v68 = vld [vmem:[%s2 + $0xb0] sm:$0xff]
  %v69 = vld [vmem:[%s2 + $0xb8] sm:$0xff]
  %v70 = vld [vmem:[%s2 + $0xc0] sm:$0xff]
  %v71 = vld [vmem:[%s2 + $0xc8] sm:$0xff]
  %v72 = vld [vmem:[%s2 + $0xd0] sm:$0xff]
  %v73 = vld [vmem:[%s2 + $0xd8] sm:$0xff]
  %v74 = vld [vmem:[%s2 + $0xe0] sm:$0xff]
  %v75 = vld [vmem:[%s2 + $0xe8] sm:$0xff]
  %v76 = vld [vmem:[%s2 + $0xf0] sm:$0xff]
  %v77 = vld [vmem:[%s2 + $0xf8] sm:$0xff]
  %v78 = vld [vmem:[%s2 + $0x100] sm:$0xff]
  %v79 = vld [vmem:[%s2 + $0x108] sm:$0xff]
  %v80 = vld [vmem:[%s2 + $0x110] sm:$0xff]
  %v81 = vld [vmem:[%s2 + $0x118] sm:$0xff]
  %v82 = vld [vmem:[%s2 + $0x120] sm:$0xff]
  %v83 = vld [vmem:[%s2 + $0x128] sm:$0xff]
  %v84 = vld [vmem:[%s2 + $0x130] sm:$0xff]
  %v85 = vld [vmem:[%s2 + $0x138] sm:$0xff]
  %v86 = vld [vmem:[%s2 + $0x140] sm:$0xff]
  %v87 = vld [vmem:[%s2 + $0x148] sm:$0xff]
  %v88 = vld [vmem:[%s2 + $0x150] sm:$0xff]
  %v89 = vld [vmem:[%s2 + $0x158] sm:$0xff]
  %v90 = vld [vmem:[%s2 + $0x160] sm:$0xff]
  %v91 = vld [vmem:[%s2 + $0x168] sm:$0xff]
  %v92 = vld [vmem:[%s2 + $0x170] sm:$0xff]
  %v93 = vld [vmem:[%s2 + $0x178] sm:$0xff]
  %v94 = vld [vmem:[%s2 + $0x180] sm:$0xff]
  %v95 = vld [vmem:[%s2 + $0x188] sm:$0xff]
  %v96 = vld [vmem:[%s2 + $0x190] sm:$0xff]
  %v97 = vld [vmem:[%s2 + $0x198] sm:$0xff]
  %v98 = vld [vmem:[%s2 + $0x1a0] sm:$0xff]
  %v99 = vld [vmem:[%s2 + $0x1a8] sm:$0xff]
  %v100 = vld [vmem:[%s2 + $0x1b0] sm:$0xff]
  %v101 = vld [vmem:[%s2 + $0x1b8] sm:$0xff]
  %v102 = vld [vmem:[%s2 + $0x1c0] sm:$0xff]
  %v103 = vld [vmem:[%s2 + $0x1c8] sm:$0xff]
  %v104 = vld [vmem:[%s2 + $0x1d0] sm:$0xff]
  %v105 = vld [vmem:[%s2 + $0x1d8] sm:$0xff]
  %v106 = vld [vmem:[%s2 + $0x1e0] sm:$0xff]
  %v107 = vld [vmem:[%s2 + $0x1e8] sm:$0xff]
  %v108 = vld [vmem:[%s2 + $0x1f0] sm:$0xff]
  %v109 = vld [vmem:[%s2 + $0x1f8] sm:$0xff]
  %v136 = vunpack.c.l.b16 %v20
  %v137 = vunpack.c.h.b16 %v20
  %v138 = vunpack.c.l.b16 %v21
  %v139 = vunpack.c.h.b16 %v21
  %v140 = vunpack.c.l.b16 %v22
  %v141 = vunpack.c.h.b16 %v22
  %v142 = vunpack.c.l.b16 %v23
  %v143 = vunpack.c.h.b16 %v23
  %v144 = vunpack.c.l.b16 %v24
  %v145 = vunpack.c.h.b16 %v24
  %v146 = vunpack.c.l.b16 %v25
  %v147 = vunpack.c.h.b16 %v25
  %v148 = vunpack.c.l.b16 %v26
  %v149 = vunpack.c.h.b16 %v26
  %v150 = vunpack.c.l.b16 %v27
  %v151 = vunpack.c.h.b16 %v27
  %v152 = vunpack.c.l.b16 %v28
  %v153 = vunpack.c.h.b16 %v28
  %v154 = vunpack.c.l.b16 %v29
  %v155 = vunpack.c.h.b16 %v29
  %v156 = vunpack.c.l.b16 %v30
  %v157 = vunpack.c.h.b16 %v30
  %v158 = vunpack.c.l.b16 %v31
  %v159 = vunpack.c.h.b16 %v31
  %v160 = vunpack.c.l.b16 %v32
  %v161 = vunpack.c.h.b16 %v32
  %v162 = vunpack.c.l.b16 %v33
  %v163 = vunpack.c.h.b16 %v33
  %v164 = vunpack.c.l.b16 %v34
  %v165 = vunpack.c.h.b16 %v34
  %v166 = vunpack.c.l.b16 %v35
  %v167 = vunpack.c.h.b16 %v35
  %v168 = vunpack.c.l.b16 %v36
  %v169 = vunpack.c.h.b16 %v36
  %v170 = vunpack.c.l.b16 %v37
  %v171 = vunpack.c.h.b16 %v37
  %v172 = vunpack.c.l.b16 %v38
  %v173 = vunpack.c.h.b16 %v38
  %v174 = vunpack.c.l.b16 %v39
  %v175 = vunpack.c.h.b16 %v39
  %v176 = vunpack.c.l.b16 %v40
  %v177 = vunpack.c.h.b16 %v40
  %v178 = vunpack.c.l.b16 %v41
  %v179 = vunpack.c.h.b16 %v41
  %v180 = vunpack.c.l.b16 %v42
  %v181 = vunpack.c.h.b16 %v42
  %v182 = vunpack.c.l.b16 %v43
  %v183 = vunpack.c.h.b16 %v43
  %v184 = vunpack.c.l.b16 %v44
  %v185 = vunpack.c.h.b16 %v44
  %v186 = vunpack.c.l.b16 %v45
  %v187 = vunpack.c.h.b16 %v45
  %v188 = vpack.c.b16 %v140, %v136
  %v189 = vpack.c.b16 %v141, %v137
  %v190 = vpack.c.b16 %v142, %v138
  %v191 = vpack.c.b16 %v143, %v139
  %v192 = vpack.c.b16 %v148, %v144
  %v193 = vpack.c.b16 %v149, %v145
  %v194 = vpack.c.b16 %v150, %v146
  %v195 = vpack.c.b16 %v151, %v147
  %v196 = vpack.c.b16 %v156, %v152
  %v197 = vpack.c.b16 %v157, %v153
  %v198 = vpack.c.b16 %v158, %v154
  %v199 = vpack.c.b16 %v159, %v155
  %v200 = vpack.c.b16 %v164, %v160
  %v201 = vpack.c.b16 %v165, %v161
  %v202 = vpack.c.b16 %v166, %v162
  %v203 = vpack.c.b16 %v167, %v163
  %v204 = vpack.c.b16 %v172, %v168
  %v205 = vpack.c.b16 %v173, %v169
  %v206 = vpack.c.b16 %v174, %v170
  %v207 = vpack.c.b16 %v175, %v171
  %v208 = vpack.c.b16 %v180, %v176
  %v209 = vpack.c.b16 %v181, %v177
  %v210 = vpack.c.b16 %v182, %v178
  %v211 = vpack.c.b16 %v183, %v179
  %v212 = vpack.c.b16 %v184, %v184
  %v213 = vpack.c.b16 %v185, %v185
  %v214 = vpack.c.b16 %v186, %v186
  %v215 = vpack.c.b16 %v187, %v187
  %v308 = vunpack.c.l.b16 %v46
  %v309 = vunpack.c.h.b16 %v46
  %v310 = vunpack.c.l.b16 %v47
  %v311 = vunpack.c.h.b16 %v47
  %v312 = vunpack.c.l.b16 %v48
  %v313 = vunpack.c.h.b16 %v48
  %v314 = vunpack.c.l.b16 %v49
  %v315 = vunpack.c.h.b16 %v49
  %v316 = vunpack.c.l.b16 %v50
  %v317 = vunpack.c.h.b16 %v50
  %v318 = vunpack.c.l.b16 %v51
  %v319 = vunpack.c.h.b16 %v51
  %v320 = vunpack.c.l.b16 %v52
  %v321 = vunpack.c.h.b16 %v52
  %v322 = vunpack.c.l.b16 %v53
  %v323 = vunpack.c.h.b16 %v53
  %v324 = vunpack.c.l.b16 %v54
  %v325 = vunpack.c.h.b16 %v54
  %v326 = vunpack.c.l.b16 %v55
  %v327 = vunpack.c.h.b16 %v55
  %v328 = vunpack.c.l.b16 %v56
  %v329 = vunpack.c.h.b16 %v56
  %v330 = vunpack.c.l.b16 %v57
  %v331 = vunpack.c.h.b16 %v57
  %v332 = vunpack.c.l.b16 %v58
  %v333 = vunpack.c.h.b16 %v58
  %v334 = vunpack.c.l.b16 %v59
  %v335 = vunpack.c.h.b16 %v59
  %v336 = vunpack.c.l.b16 %v60
  %v337 = vunpack.c.h.b16 %v60
  %v338 = vunpack.c.l.b16 %v61
  %v339 = vunpack.c.h.b16 %v61
  %v340 = vunpack.c.l.b16 %v62
  %v341 = vunpack.c.h.b16 %v62
  %v342 = vunpack.c.l.b16 %v63
  %v343 = vunpack.c.h.b16 %v63
  %v344 = vunpack.c.l.b16 %v64
  %v345 = vunpack.c.h.b16 %v64
  %v346 = vunpack.c.l.b16 %v65
  %v347 = vunpack.c.h.b16 %v65
  %v348 = vunpack.c.l.b16 %v66
  %v349 = vunpack.c.h.b16 %v66
  %v350 = vunpack.c.l.b16 %v67
  %v351 = vunpack.c.h.b16 %v67
  %v352 = vunpack.c.l.b16 %v68
  %v353 = vunpack.c.h.b16 %v68
  %v354 = vunpack.c.l.b16 %v69
  %v355 = vunpack.c.h.b16 %v69
  %v356 = vunpack.c.l.b16 %v70
  %v357 = vunpack.c.h.b16 %v70
  %v358 = vunpack.c.l.b16 %v71
  %v359 = vunpack.c.h.b16 %v71
  %v360 = vunpack.c.l.b16 %v72
  %v361 = vunpack.c.h.b16 %v72
  %v362 = vunpack.c.l.b16 %v73
  %v363 = vunpack.c.h.b16 %v73
  %v364 = vunpack.c.l.b16 %v74
  %v365 = vunpack.c.h.b16 %v74
  %v366 = vunpack.c.l.b16 %v75
  %v367 = vunpack.c.h.b16 %v75
  %v368 = vunpack.c.l.b16 %v76
  %v369 = vunpack.c.h.b16 %v76
  %v370 = vunpack.c.l.b16 %v77
  %v371 = vunpack.c.h.b16 %v77
  %v372 = vunpack.c.l.b16 %v78
  %v373 = vunpack.c.h.b16 %v78
  %v374 = vunpack.c.l.b16 %v79
  %v375 = vunpack.c.h.b16 %v79
  %v376 = vunpack.c.l.b16 %v80
  %v377 = vunpack.c.h.b16 %v80
  %v378 = vunpack.c.l.b16 %v81
  %v379 = vunpack.c.h.b16 %v81
  %v380 = vunpack.c.l.b16 %v82
  %v381 = vunpack.c.h.b16 %v82
  %v382 = vunpack.c.l.b16 %v83
  %v383 = vunpack.c.h.b16 %v83
  %v384 = vunpack.c.l.b16 %v84
  %v385 = vunpack.c.h.b16 %v84
  %v386 = vunpack.c.l.b16 %v85
  %v387 = vunpack.c.h.b16 %v85
  %v388 = vunpack.c.l.b16 %v86
  %v389 = vunpack.c.h.b16 %v86
  %v390 = vunpack.c.l.b16 %v87
  %v391 = vunpack.c.h.b16 %v87
  %v392 = vunpack.c.l.b16 %v88
  %v393 = vunpack.c.h.b16 %v88
  %v394 = vunpack.c.l.b16 %v89
  %v395 = vunpack.c.h.b16 %v89
  %v396 = vunpack.c.l.b16 %v90
  %v397 = vunpack.c.h.b16 %v90
  %v398 = vunpack.c.l.b16 %v91
  %v399 = vunpack.c.h.b16 %v91
  %v400 = vunpack.c.l.b16 %v92
  %v401 = vunpack.c.h.b16 %v92
  %v402 = vunpack.c.l.b16 %v93
  %v403 = vunpack.c.h.b16 %v93
  %v404 = vunpack.c.l.b16 %v94
  %v405 = vunpack.c.h.b16 %v94
  %v406 = vunpack.c.l.b16 %v95
  %v407 = vunpack.c.h.b16 %v95
  %v408 = vunpack.c.l.b16 %v96
  %v409 = vunpack.c.h.b16 %v96
  %v410 = vunpack.c.l.b16 %v97
  %v411 = vunpack.c.h.b16 %v97
  %v412 = vunpack.c.l.b16 %v98
  %v413 = vunpack.c.h.b16 %v98
  %v414 = vunpack.c.l.b16 %v99
  %v415 = vunpack.c.h.b16 %v99
  %v416 = vunpack.c.l.b16 %v100
  %v417 = vunpack.c.h.b16 %v100
  %v418 = vunpack.c.l.b16 %v101
  %v419 = vunpack.c.h.b16 %v101
  %v420 = vunpack.c.l.b16 %v102
  %v421 = vunpack.c.h.b16 %v102
  %v422 = vunpack.c.l.b16 %v103
  %v423 = vunpack.c.h.b16 %v103
  %v424 = vunpack.c.l.b16 %v104
  %v425 = vunpack.c.h.b16 %v104
  %v426 = vunpack.c.l.b16 %v105
  %v427 = vunpack.c.h.b16 %v105
  %v428 = vunpack.c.l.b16 %v106
  %v429 = vunpack.c.h.b16 %v106
  %v430 = vunpack.c.l.b16 %v107
  %v431 = vunpack.c.h.b16 %v107
  %v432 = vunpack.c.l.b16 %v108
  %v433 = vunpack.c.h.b16 %v108
  %v434 = vunpack.c.l.b16 %v109
  %v435 = vunpack.c.h.b16 %v109
  %v436 = vpack.c.b16 %v310, %v308
  %v437 = vpack.c.b16 %v311, %v309
  %v438 = vpack.c.b16 %v314, %v312
  %v439 = vpack.c.b16 %v315, %v313
  %v440 = vpack.c.b16 %v318, %v316
  %v441 = vpack.c.b16 %v319, %v317
  %v442 = vpack.c.b16 %v322, %v320
  %v443 = vpack.c.b16 %v323, %v321
  %v444 = vpack.c.b16 %v326, %v324
  %v445 = vpack.c.b16 %v327, %v325
  %v446 = vpack.c.b16 %v330, %v328
  %v447 = vpack.c.b16 %v331, %v329
  %v448 = vpack.c.b16 %v334, %v332
  %v449 = vpack.c.b16 %v335, %v333
  %v450 = vpack.c.b16 %v338, %v336
  %v451 = vpack.c.b16 %v339, %v337
  %v452 = vpack.c.b16 %v342, %v340
  %v453 = vpack.c.b16 %v343, %v341
  %v454 = vpack.c.b16 %v346, %v344
  %v455 = vpack.c.b16 %v347, %v345
  %v456 = vpack.c.b16 %v350, %v348
  %v457 = vpack.c.b16 %v351, %v349
  %v458 = vpack.c.b16 %v354, %v352
  %v459 = vpack.c.b16 %v355, %v353
  %v460 = vpack.c.b16 %v358, %v356
  %v461 = vpack.c.b16 %v359, %v357
  %v462 = vpack.c.b16 %v362, %v360
  %v463 = vpack.c.b16 %v363, %v361
  %v464 = vpack.c.b16 %v366, %v364
  %v465 = vpack.c.b16 %v367, %v365
  %v466 = vpack.c.b16 %v370, %v368
  %v467 = vpack.c.b16 %v371, %v369
  %v468 = vpack.c.b16 %v374, %v372
  %v469 = vpack.c.b16 %v375, %v373
  %v470 = vpack.c.b16 %v378, %v376
  %v471 = vpack.c.b16 %v379, %v377
  %v472 = vpack.c.b16 %v382, %v380
  %v473 = vpack.c.b16 %v383, %v381
  %v474 = vpack.c.b16 %v386, %v384
  %v475 = vpack.c.b16 %v387, %v385
  %v476 = vpack.c.b16 %v390, %v388
  %v477 = vpack.c.b16 %v391, %v389
  %v478 = vpack.c.b16 %v394, %v392
  %v479 = vpack.c.b16 %v395, %v393
  %v480 = vpack.c.b16 %v398, %v396
  %v481 = vpack.c.b16 %v399, %v397
  %v482 = vpack.c.b16 %v402, %v400
  %v483 = vpack.c.b16 %v403, %v401
  %v484 = vpack.c.b16 %v406, %v404
  %v485 = vpack.c.b16 %v407, %v405
  %v486 = vpack.c.b16 %v410, %v408
  %v487 = vpack.c.b16 %v411, %v409
  %v488 = vpack.c.b16 %v414, %v412
  %v489 = vpack.c.b16 %v415, %v413
  %v490 = vpack.c.b16 %v418, %v416
  %v491 = vpack.c.b16 %v419, %v417
  %v492 = vpack.c.b16 %v422, %v420
  %v493 = vpack.c.b16 %v423, %v421
  %v494 = vpack.c.b16 %v426, %v424
  %v495 = vpack.c.b16 %v427, %v425
  %v496 = vpack.c.b16 %v430, %v428
  %v497 = vpack.c.b16 %v431, %v429
  %v498 = vpack.c.b16 %v434, %v432
  %v499 = vpack.c.b16 %v435, %v433
  %564 = vmatpush.bf16.msra.mxu0 %v450
  %565 = vmatpush.bf16.msra.mxu0 %v448
  %566 = vmatpush.bf16.msra.mxu0 %v446
  %567 = vmatpush.bf16.msra.mxu0 %v444
  %568 = vmatpush.bf16.msra.mxu0 %v442
  %569 = vmatpush.bf16.msra.mxu0 %v440
  %570 = vmatpush.bf16.msra.mxu0 %v438
  %571 = vmatpush.bf16.msra.mxu0 %v436
  %572 = vmatmul.bf16.gmra.mxu0 %v188
  %v573 = vpop.f32.mrf.mxu0
  %v574 = vadd.f32 0.0, %v573
  %v575 = vpop.f32.mrf.mxu0
  %v576 = vadd.f32 0.0, %v575
  %577 = vmatmul.bf16.gmra.mxu0 %v192
  %v578 = vpop.f32.mrf.mxu0
  %v579 = vadd.f32 0.0, %v578
  %v580 = vpop.f32.mrf.mxu0
  %v581 = vadd.f32 0.0, %v580
  %582 = vmatmul.bf16.gmra.mxu0 %v196
  %v583 = vpop.f32.mrf.mxu0
  %v584 = vadd.f32 0.0, %v583
  %v585 = vpop.f32.mrf.mxu0
  %v586 = vadd.f32 0.0, %v585
  %587 = vmatmul.bf16.gmra.mxu0 %v200
  %v588 = vpop.f32.mrf.mxu0
  %v589 = vadd.f32 0.0, %v588
  %v590 = vpop.f32.mrf.mxu0
  %v591 = vadd.f32 0.0, %v590
  %592 = vmatmul.bf16.gmra.mxu0 %v204
  %v593 = vpop.f32.mrf.mxu0
  %v594 = vadd.f32 0.0, %v593
  %v595 = vpop.f32.mrf.mxu0
  %v596 = vadd.f32 0.0, %v595
  %597 = vmatmul.bf16.gmra.mxu0 %v208
  %v598 = vpop.f32.mrf.mxu0
  %v599 = vadd.f32 0.0, %v598
  %v600 = vpop.f32.mrf.mxu0
  %v601 = vadd.f32 0.0, %v600
  %602 = vmatmul.bf16.gmra.mxu0 %v212
  %v603 = vpop.f32.mrf.mxu0
  %v604 = vadd.f32 0.0, %v603
  %v605 = vpop.f32.mrf.mxu0
  %606 = vdwg.mxu0
  %607 = vmatpush.bf16.msra.mxu0 %v466
  %608 = vmatpush.bf16.msra.mxu0 %v464
  %609 = vmatpush.bf16.msra.mxu0 %v462
  %610 = vmatpush.bf16.msra.mxu0 %v460
  %611 = vmatpush.bf16.msra.mxu0 %v458
  %612 = vmatpush.bf16.msra.mxu0 %v456
  %613 = vmatpush.bf16.msra.mxu0 %v454
  %614 = vmatpush.bf16.msra.mxu0 %v452
  %615 = vmatmul.bf16.gmra.mxu0 %v189
  %v616 = vpop.f32.mrf.mxu0
  %v617 = vadd.f32 %v574, %v616
  %v618 = vpop.f32.mrf.mxu0
  %v619 = vadd.f32 %v576, %v618
  %620 = vmatmul.bf16.gmra.mxu0 %v193
  %v621 = vpop.f32.mrf.mxu0
  %v622 = vadd.f32 %v579, %v621
  %v623 = vpop.f32.mrf.mxu0
  %v624 = vadd.f32 %v581, %v623
  %625 = vmatmul.bf16.gmra.mxu0 %v197
  %v626 = vpop.f32.mrf.mxu0
  %v627 = vadd.f32 %v584, %v626
  %v628 = vpop.f32.mrf.mxu0
  %v629 = vadd.f32 %v586, %v628
  %630 = vmatmul.bf16.gmra.mxu0 %v201
  %v631 = vpop.f32.mrf.mxu0
  %v632 = vadd.f32 %v589, %v631
  %v633 = vpop.f32.mrf.mxu0
  %v634 = vadd.f32 %v591, %v633
  %635 = vmatmul.bf16.gmra.mxu0 %v205
  %v636 = vpop.f32.mrf.mxu0
  %v637 = vadd.f32 %v594, %v636
  %v638 = vpop.f32.mrf.mxu0
  %v639 = vadd.f32 %v596, %v638
  %640 = vmatmul.bf16.gmra.mxu0 %v209
  %v641 = vpop.f32.mrf.mxu0
  %v642 = vadd.f32 %v599, %v641
  %v643 = vpop.f32.mrf.mxu0
  %v644 = vadd.f32 %v601, %v643
  %645 = vmatmul.bf16.gmra.mxu0 %v213
  %v646 = vpop.f32.mrf.mxu0
  %v647 = vadd.f32 %v604, %v646
  %v648 = vpop.f32.mrf.mxu0
  %649 = vdwg.mxu0
  %650 = vmatpush.bf16.msra.mxu0 %v482
  %651 = vmatpush.bf16.msra.mxu0 %v480
  %652 = vmatpush.bf16.msra.mxu0 %v478
  %653 = vmatpush.bf16.msra.mxu0 %v476
  %654 = vmatpush.bf16.msra.mxu0 %v474
  %655 = vmatpush.bf16.msra.mxu0 %v472
  %656 = vmatpush.bf16.msra.mxu0 %v470
  %657 = vmatpush.bf16.msra.mxu0 %v468
  %658 = vmatmul.bf16.gmra.mxu0 %v190
  %v659 = vpop.f32.mrf.mxu0
  %v660 = vadd.f32 %v617, %v659
  %v661 = vpop.f32.mrf.mxu0
  %v662 = vadd.f32 %v619, %v661
  %663 = vmatmul.bf16.gmra.mxu0 %v194
  %v664 = vpop.f32.mrf.mxu0
  %v665 = vadd.f32 %v622, %v664
  %v666 = vpop.f32.mrf.mxu0
  %v667 = vadd.f32 %v624, %v666
  %668 = vmatmul.bf16.gmra.mxu0 %v198
  %v669 = vpop.f32.mrf.mxu0
  %v670 = vadd.f32 %v627, %v669
  %v671 = vpop.f32.mrf.mxu0
  %v672 = vadd.f32 %v629, %v671
  %673 = vmatmul.bf16.gmra.mxu0 %v202
  %v674 = vpop.f32.mrf.mxu0
  %v675 = vadd.f32 %v632, %v674
  %v676 = vpop.f32.mrf.mxu0
  %v677 = vadd.f32 %v634, %v676
  %678 = vmatmul.bf16.gmra.mxu0 %v206
  %v679 = vpop.f32.mrf.mxu0
  %v680 = vadd.f32 %v637, %v679
  %v681 = vpop.f32.mrf.mxu0
  %v682 = vadd.f32 %v639, %v681
  %683 = vmatmul.bf16.gmra.mxu0 %v210
  %v684 = vpop.f32.mrf.mxu0
  %v685 = vadd.f32 %v642, %v684
  %v686 = vpop.f32.mrf.mxu0
  %v687 = vadd.f32 %v644, %v686
  %688 = vmatmul.bf16.gmra.mxu0 %v214
  %v689 = vpop.f32.mrf.mxu0
  %v690 = vadd.f32 %v647, %v689
  %v691 = vpop.f32.mrf.mxu0
  %692 = vdwg.mxu0
  %693 = vmatpush.bf16.msra.mxu0 %v498
  %694 = vmatpush.bf16.msra.mxu0 %v496
  %695 = vmatpush.bf16.msra.mxu0 %v494
  %696 = vmatpush.bf16.msra.mxu0 %v492
  %697 = vmatpush.bf16.msra.mxu0 %v490
  %698 = vmatpush.bf16.msra.mxu0 %v488
  %699 = vmatpush.bf16.msra.mxu0 %v486
  %700 = vmatpush.bf16.msra.mxu0 %v484
  %701 = vmatmul.bf16.gmra.mxu0 %v191
  %v702 = vpop.f32.mrf.mxu0
  %v703 = vadd.f32 %v660, %v702
  %v704 = vpop.f32.mrf.mxu0
  %v705 = vadd.f32 %v662, %v704
  %706 = vmatmul.bf16.gmra.mxu0 %v195
  %v707 = vpop.f32.mrf.mxu0
  %v708 = vadd.f32 %v665, %v707
  %v709 = vpop.f32.mrf.mxu0
  %v710 = vadd.f32 %v667, %v709
  %711 = vmatmul.bf16.gmra.mxu0 %v199
  %v712 = vpop.f32.mrf.mxu0
  %v713 = vadd.f32 %v670, %v712
  %v714 = vpop.f32.mrf.mxu0
  %v715 = vadd.f32 %v672, %v714
  %716 = vmatmul.bf16.gmra.mxu0 %v203
  %v717 = vpop.f32.mrf.mxu0
  %v718 = vadd.f32 %v675, %v717
  %v719 = vpop.f32.mrf.mxu0
  %v720 = vadd.f32 %v677, %v719
  %721 = vmatmul.bf16.gmra.mxu0 %v207
  %v722 = vpop.f32.mrf.mxu0
  %v723 = vadd.f32 %v680, %v722
  %v724 = vpop.f32.mrf.mxu0
  %v725 = vadd.f32 %v682, %v724
  %726 = vmatmul.bf16.gmra.mxu0 %v211
  %v727 = vpop.f32.mrf.mxu0
  %v728 = vadd.f32 %v685, %v727
  %v729 = vpop.f32.mrf.mxu0
  %v730 = vadd.f32 %v687, %v729
  %731 = vmatmul.bf16.gmra.mxu0 %v215
  %v732 = vpop.f32.mrf.mxu0
  %v733 = vadd.f32 %v690, %v732
  %v734 = vpop.f32.mrf.mxu0
  %735 = vdwg.mxu0
  %736 = vmatpush.bf16.msra.mxu0 %v451
  %737 = vmatpush.bf16.msra.mxu0 %v449
  %738 = vmatpush.bf16.msra.mxu0 %v447
  %739 = vmatpush.bf16.msra.mxu0 %v445
  %740 = vmatpush.bf16.msra.mxu0 %v443
  %741 = vmatpush.bf16.msra.mxu0 %v441
  %742 = vmatpush.bf16.msra.mxu0 %v439
  %743 = vmatpush.bf16.msra.mxu0 %v437
  %744 = vmatmul.bf16.gmra.mxu0 %v188
  %v745 = vpop.f32.mrf.mxu0
  %v746 = vadd.f32 0.0, %v745
  %v747 = vpop.f32.mrf.mxu0
  %v748 = vadd.f32 0.0, %v747
  %749 = vmatmul.bf16.gmra.mxu0 %v192
  %v750 = vpop.f32.mrf.mxu0
  %v751 = vadd.f32 0.0, %v750
  %v752 = vpop.f32.mrf.mxu0
  %v753 = vadd.f32 0.0, %v752
  %754 = vmatmul.bf16.gmra.mxu0 %v196
  %v755 = vpop.f32.mrf.mxu0
  %v756 = vadd.f32 0.0, %v755
  %v757 = vpop.f32.mrf.mxu0
  %v758 = vadd.f32 0.0, %v757
  %759 = vmatmul.bf16.gmra.mxu0 %v200
  %v760 = vpop.f32.mrf.mxu0
  %v761 = vadd.f32 0.0, %v760
  %v762 = vpop.f32.mrf.mxu0
  %v763 = vadd.f32 0.0, %v762
  %764 = vmatmul.bf16.gmra.mxu0 %v204
  %v765 = vpop.f32.mrf.mxu0
  %v766 = vadd.f32 0.0, %v765
  %v767 = vpop.f32.mrf.mxu0
  %v768 = vadd.f32 0.0, %v767
  %769 = vmatmul.bf16.gmra.mxu0 %v208
  %v770 = vpop.f32.mrf.mxu0
  %v771 = vadd.f32 0.0, %v770
  %v772 = vpop.f32.mrf.mxu0
  %v773 = vadd.f32 0.0, %v772
  %774 = vmatmul.bf16.gmra.mxu0 %v212
  %v775 = vpop.f32.mrf.mxu0
  %v776 = vadd.f32 0.0, %v775
  %v777 = vpop.f32.mrf.mxu0
  %778 = vdwg.mxu0
  %779 = vmatpush.bf16.msra.mxu0 %v467
  %780 = vmatpush.bf16.msra.mxu0 %v465
  %781 = vmatpush.bf16.msra.mxu0 %v463
  %782 = vmatpush.bf16.msra.mxu0 %v461
  %783 = vmatpush.bf16.msra.mxu0 %v459
  %784 = vmatpush.bf16.msra.mxu0 %v457
  %785 = vmatpush.bf16.msra.mxu0 %v455
  %786 = vmatpush.bf16.msra.mxu0 %v453
  %787 = vmatmul.bf16.gmra.mxu0 %v189
  %v788 = vpop.f32.mrf.mxu0
  %v789 = vadd.f32 %v746, %v788
  %v790 = vpop.f32.mrf.mxu0
  %v791 = vadd.f32 %v748, %v790
  %792 = vmatmul.bf16.gmra.mxu0 %v193
  %v793 = vpop.f32.mrf.mxu0
  %v794 = vadd.f32 %v751, %v793
  %v795 = vpop.f32.mrf.mxu0
  %v796 = vadd.f32 %v753, %v795
  %797 = vmatmul.bf16.gmra.mxu0 %v197
  %v798 = vpop.f32.mrf.mxu0
  %v799 = vadd.f32 %v756, %v798
  %v800 = vpop.f32.mrf.mxu0
  %v801 = vadd.f32 %v758, %v800
  %802 = vmatmul.bf16.gmra.mxu0 %v201
  %v803 = vpop.f32.mrf.mxu0
  %v804 = vadd.f32 %v761, %v803
  %v805 = vpop.f32.mrf.mxu0
  %v806 = vadd.f32 %v763, %v805
  %807 = vmatmul.bf16.gmra.mxu0 %v205
  %v808 = vpop.f32.mrf.mxu0
  %v809 = vadd.f32 %v766, %v808
  %v810 = vpop.f32.mrf.mxu0
  %v811 = vadd.f32 %v768, %v810
  %812 = vmatmul.bf16.gmra.mxu0 %v209
  %v813 = vpop.f32.mrf.mxu0
  %v814 = vadd.f32 %v771, %v813
  %v815 = vpop.f32.mrf.mxu0
  %v816 = vadd.f32 %v773, %v815
  %817 = vmatmul.bf16.gmra.mxu0 %v213
  %v818 = vpop.f32.mrf.mxu0
  %v819 = vadd.f32 %v776, %v818
  %v820 = vpop.f32.mrf.mxu0
  %821 = vdwg.mxu0
  %822 = vmatpush.bf16.msra.mxu0 %v483
  %823 = vmatpush.bf16.msra.mxu0 %v481
  %824 = vmatpush.bf16.msra.mxu0 %v479
  %825 = vmatpush.bf16.msra.mxu0 %v477
  %826 = vmatpush.bf16.msra.mxu0 %v475
  %827 = vmatpush.bf16.msra.mxu0 %v473
  %828 = vmatpush.bf16.msra.mxu0 %v471
  %829 = vmatpush.bf16.msra.mxu0 %v469
  %830 = vmatmul.bf16.gmra.mxu0 %v190
  %v831 = vpop.f32.mrf.mxu0
  %v832 = vadd.f32 %v789, %v831
  %v833 = vpop.f32.mrf.mxu0
  %v834 = vadd.f32 %v791, %v833
  %835 = vmatmul.bf16.gmra.mxu0 %v194
  %v836 = vpop.f32.mrf.mxu0
  %v837 = vadd.f32 %v794, %v836
  %v838 = vpop.f32.mrf.mxu0
  %v839 = vadd.f32 %v796, %v838
  %840 = vmatmul.bf16.gmra.mxu0 %v198
  %v841 = vpop.f32.mrf.mxu0
  %v842 = vadd.f32 %v799, %v841
  %v843 = vpop.f32.mrf.mxu0
  %v844 = vadd.f32 %v801, %v843
  %845 = vmatmul.bf16.gmra.mxu0 %v202
  %v846 = vpop.f32.mrf.mxu0
  %v847 = vadd.f32 %v804, %v846
  %v848 = vpop.f32.mrf.mxu0
  %v849 = vadd.f32 %v806, %v848
  %850 = vmatmul.bf16.gmra.mxu0 %v206
  %v851 = vpop.f32.mrf.mxu0
  %v852 = vadd.f32 %v809, %v851
  %v853 = vpop.f32.mrf.mxu0
  %v854 = vadd.f32 %v811, %v853
  %855 = vmatmul.bf16.gmra.mxu0 %v210
  %v856 = vpop.f32.mrf.mxu0
  %v857 = vadd.f32 %v814, %v856
  %v858 = vpop.f32.mrf.mxu0
  %v859 = vadd.f32 %v816, %v858
  %860 = vmatmul.bf16.gmra.mxu0 %v214
  %v861 = vpop.f32.mrf.mxu0
  %v862 = vadd.f32 %v819, %v861
  %v863 = vpop.f32.mrf.mxu0
  %864 = vdwg.mxu0
  %865 = vmatpush.bf16.msra.mxu0 %v499
  %866 = vmatpush.bf16.msra.mxu0 %v497
  %867 = vmatpush.bf16.msra.mxu0 %v495
  %868 = vmatpush.bf16.msra.mxu0 %v493
  %869 = vmatpush.bf16.msra.mxu0 %v491
  %870 = vmatpush.bf16.msra.mxu0 %v489
  %871 = vmatpush.bf16.msra.mxu0 %v487
  %872 = vmatpush.bf16.msra.mxu0 %v485
  %873 = vmatmul.bf16.gmra.mxu0 %v191
  %v874 = vpop.f32.mrf.mxu0
  %v875 = vadd.f32 %v832, %v874
  %v876 = vpop.f32.mrf.mxu0
  %v877 = vadd.f32 %v834, %v876
  %878 = vmatmul.bf16.gmra.mxu0 %v195
  %v879 = vpop.f32.mrf.mxu0
  %v880 = vadd.f32 %v837, %v879
  %v881 = vpop.f32.mrf.mxu0
  %v882 = vadd.f32 %v839, %v881
  %883 = vmatmul.bf16.gmra.mxu0 %v199
  %v884 = vpop.f32.mrf.mxu0
  %v885 = vadd.f32 %v842, %v884
  %v886 = vpop.f32.mrf.mxu0
  %v887 = vadd.f32 %v844, %v886
  %888 = vmatmul.bf16.gmra.mxu0 %v203
  %v889 = vpop.f32.mrf.mxu0
  %v890 = vadd.f32 %v847, %v889
  %v891 = vpop.f32.mrf.mxu0
  %v892 = vadd.f32 %v849, %v891
  %893 = vmatmul.bf16.gmra.mxu0 %v207
  %v894 = vpop.f32.mrf.mxu0
  %v895 = vadd.f32 %v852, %v894
  %v896 = vpop.f32.mrf.mxu0
  %v897 = vadd.f32 %v854, %v896
  %898 = vmatmul.bf16.gmra.mxu0 %v211
  %v899 = vpop.f32.mrf.mxu0
  %v900 = vadd.f32 %v857, %v899
  %v901 = vpop.f32.mrf.mxu0
  %v902 = vadd.f32 %v859, %v901
  %903 = vmatmul.bf16.gmra.mxu0 %v215
  %v904 = vpop.f32.mrf.mxu0
  %v905 = vadd.f32 %v862, %v904
  %v906 = vpop.f32.mrf.mxu0
  %907 = vdwg.mxu0
  %v908 = vld [vmem:[%s0] sm:$0xff]
  %v909 = vld [vmem:[%s0 + $0x8] sm:$0xff]
  %v910 = vld [vmem:[%s0 + $0x10] sm:$0xff]
  %v911 = vld [vmem:[%s0 + $0x18] sm:$0xff]
  %v912 = vld [vmem:[%s0 + $0x20] sm:$0xff]
  %v913 = vld [vmem:[%s0 + $0x28] sm:$0xff]
  %v914 = vld [vmem:[%s0 + $0x30] sm:$0xff]
  %v915 = vld [vmem:[%s0 + $0x38] sm:$0xff]
  %v916 = vld [vmem:[%s0 + $0x40] sm:$0xff]
  %v917 = vld [vmem:[%s0 + $0x48] sm:$0xff]
  %v918 = vld [vmem:[%s0 + $0x50] sm:$0xff]
  %v919 = vld [vmem:[%s0 + $0x58] sm:$0xff]
  %v920 = vld [vmem:[%s0 + $0x60] sm:$0xff]
  %922 = vset.pattern.permute.xlu0 0
  %923 = vperm.xlu0 %922, %v908
  %v924 = vpop.permute.xlu0 %923
  %927 = vset.pattern.permute.xlu0 0
  %928 = vperm.xlu0 %927, %v909
  %v929 = vpop.permute.xlu0 %928
  %932 = vset.pattern.permute.xlu0 0
  %933 = vperm.xlu0 %932, %v910
  %v934 = vpop.permute.xlu0 %933
  %937 = vset.pattern.permute.xlu0 0
  %938 = vperm.xlu0 %937, %v911
  %v939 = vpop.permute.xlu0 %938
  %942 = vset.pattern.permute.xlu0 0
  %943 = vperm.xlu0 %942, %v912
  %v944 = vpop.permute.xlu0 %943
  %947 = vset.pattern.permute.xlu0 0
  %948 = vperm.xlu0 %947, %v913
  %v949 = vpop.permute.xlu0 %948
  %952 = vset.pattern.permute.xlu0 0
  %953 = vperm.xlu0 %952, %v914
  %v954 = vpop.permute.xlu0 %953
  %957 = vset.pattern.permute.xlu0 0
  %958 = vperm.xlu0 %957, %v915
  %v959 = vpop.permute.xlu0 %958
  %962 = vset.pattern.permute.xlu0 0
  %963 = vperm.xlu0 %962, %v916
  %v964 = vpop.permute.xlu0 %963
  %967 = vset.pattern.permute.xlu0 0
  %968 = vperm.xlu0 %967, %v917
  %v969 = vpop.permute.xlu0 %968
  %972 = vset.pattern.permute.xlu0 0
  %973 = vperm.xlu0 %972, %v918
  %v974 = vpop.permute.xlu0 %973
  %977 = vset.pattern.permute.xlu0 0
  %978 = vperm.xlu0 %977, %v919
  %v979 = vpop.permute.xlu0 %978
  %982 = vset.pattern.permute.xlu0 0
  %983 = vperm.xlu0 %982, %v920
  %v984 = vpop.permute.xlu0 %983
  %v986 = vmul.f32 %v703, %v924
  %v987 = vmul.f32 %v705, %v929
  %v988 = vmul.f32 %v708, %v934
  %v989 = vmul.f32 %v710, %v939
  %v990 = vmul.f32 %v713, %v944
  %v991 = vmul.f32 %v715, %v949
  %v992 = vmul.f32 %v718, %v954
  %v993 = vmul.f32 %v720, %v959
  %v994 = vmul.f32 %v723, %v964
  %v995 = vmul.f32 %v725, %v969
  %v996 = vmul.f32 %v728, %v974
  %v997 = vmul.f32 %v730, %v979
  %v998 = vmul.f32 %v733, %v984
  %vm999 = vcmask 523264
  %v1000 = vsel %vm999, %v986, 0.0
  %v1001 = vsel %vm999, %v987, 0.0
  %v1002 = vadd.f32 %v1000, %v1001
  %v1003 = vsel %vm999, %v988, 0.0
  %v1004 = vadd.f32 %v1002, %v1003
  %v1005 = vsel %vm999, %v989, 0.0
  %v1006 = vadd.f32 %v1004, %v1005
  %v1007 = vsel %vm999, %v990, 0.0
  %v1008 = vadd.f32 %v1006, %v1007
  %v1009 = vsel %vm999, %v991, 0.0
  %v1010 = vadd.f32 %v1008, %v1009
  %v1011 = vsel %vm999, %v992, 0.0
  %v1012 = vadd.f32 %v1010, %v1011
  %v1013 = vsel %vm999, %v993, 0.0
  %v1014 = vadd.f32 %v1012, %v1013
  %v1015 = vsel %vm999, %v994, 0.0
  %v1016 = vadd.f32 %v1014, %v1015
  %v1017 = vsel %vm999, %v995, 0.0
  %v1018 = vadd.f32 %v1016, %v1017
  %v1019 = vsel %vm999, %v996, 0.0
  %v1020 = vadd.f32 %v1018, %v1019
  %v1021 = vsel %vm999, %v997, 0.0
  %v1022 = vadd.f32 %v1020, %v1021
  %v1023 = vsel %vm999, %v998, 0.0
  %v1024 = vadd.f32 %v1022, %v1023
  %v1025 = vrot.slane %v1024, 4
  %v1026 = vadd.f32 %v1024, %v1025
  %v1027 = vrot.slane %v1026, 2
  %v1028 = vadd.f32 %v1026, %v1027
  %v1029 = vrot.slane %v1028, 1
  %v1030 = vadd.f32 %v1028, %v1029
  %v1031 = vadd.f32 %v1030, 0.0
  %v1032 = vmul.f32 %v703, %v703
  %v1033 = vmul.f32 %v705, %v705
  %v1034 = vmul.f32 %v708, %v708
  %v1035 = vmul.f32 %v710, %v710
  %v1036 = vmul.f32 %v713, %v713
  %v1037 = vmul.f32 %v715, %v715
  %v1038 = vmul.f32 %v718, %v718
  %v1039 = vmul.f32 %v720, %v720
  %v1040 = vmul.f32 %v723, %v723
  %v1041 = vmul.f32 %v725, %v725
  %v1042 = vmul.f32 %v728, %v728
  %v1043 = vmul.f32 %v730, %v730
  %v1044 = vmul.f32 %v733, %v733
  %v1045 = vmul.f32 %v1032, %v924
  %v1046 = vmul.f32 %v1033, %v929
  %v1047 = vmul.f32 %v1034, %v934
  %v1048 = vmul.f32 %v1035, %v939
  %v1049 = vmul.f32 %v1036, %v944
  %v1050 = vmul.f32 %v1037, %v949
  %v1051 = vmul.f32 %v1038, %v954
  %v1052 = vmul.f32 %v1039, %v959
  %v1053 = vmul.f32 %v1040, %v964
  %v1054 = vmul.f32 %v1041, %v969
  %v1055 = vmul.f32 %v1042, %v974
  %v1056 = vmul.f32 %v1043, %v979
  %v1057 = vmul.f32 %v1044, %v984
  %v1058 = vsel %vm999, %v1045, 0.0
  %v1059 = vsel %vm999, %v1046, 0.0
  %v1060 = vadd.f32 %v1058, %v1059
  %v1061 = vsel %vm999, %v1047, 0.0
  %v1062 = vadd.f32 %v1060, %v1061
  %v1063 = vsel %vm999, %v1048, 0.0
  %v1064 = vadd.f32 %v1062, %v1063
  %v1065 = vsel %vm999, %v1049, 0.0
  %v1066 = vadd.f32 %v1064, %v1065
  %v1067 = vsel %vm999, %v1050, 0.0
  %v1068 = vadd.f32 %v1066, %v1067
  %v1069 = vsel %vm999, %v1051, 0.0
  %v1070 = vadd.f32 %v1068, %v1069
  %v1071 = vsel %vm999, %v1052, 0.0
  %v1072 = vadd.f32 %v1070, %v1071
  %v1073 = vsel %vm999, %v1053, 0.0
  %v1074 = vadd.f32 %v1072, %v1073
  %v1075 = vsel %vm999, %v1054, 0.0
  %v1076 = vadd.f32 %v1074, %v1075
  %v1077 = vsel %vm999, %v1055, 0.0
  %v1078 = vadd.f32 %v1076, %v1077
  %v1079 = vsel %vm999, %v1056, 0.0
  %v1080 = vadd.f32 %v1078, %v1079
  %v1081 = vsel %vm999, %v1057, 0.0
  %v1082 = vadd.f32 %v1080, %v1081
  %v1083 = vrot.slane %v1082, 4
  %v1084 = vadd.f32 %v1082, %v1083
  %v1085 = vrot.slane %v1084, 2
  %v1086 = vadd.f32 %v1084, %v1085
  %v1087 = vrot.slane %v1086, 1
  %v1088 = vadd.f32 %v1086, %v1087
  %v1089 = vadd.f32 %v1088, 0.0
  %1090 = vset.pattern.permute.xlu0 1
  %1091 = vperm.xlu0 %1090, %v908
  %v1092 = vpop.permute.xlu0 %1091
  %1094 = vset.pattern.permute.xlu0 1
  %1095 = vperm.xlu0 %1094, %v909
  %v1096 = vpop.permute.xlu0 %1095
  %1098 = vset.pattern.permute.xlu0 1
  %1099 = vperm.xlu0 %1098, %v910
  %v1100 = vpop.permute.xlu0 %1099
  %1102 = vset.pattern.permute.xlu0 1
  %1103 = vperm.xlu0 %1102, %v911
  %v1104 = vpop.permute.xlu0 %1103
  %1106 = vset.pattern.permute.xlu0 1
  %1107 = vperm.xlu0 %1106, %v912
  %v1108 = vpop.permute.xlu0 %1107
  %1110 = vset.pattern.permute.xlu0 1
  %1111 = vperm.xlu0 %1110, %v913
  %v1112 = vpop.permute.xlu0 %1111
  %1114 = vset.pattern.permute.xlu0 1
  %1115 = vperm.xlu0 %1114, %v914
  %v1116 = vpop.permute.xlu0 %1115
  %1118 = vset.pattern.permute.xlu0 1
  %1119 = vperm.xlu0 %1118, %v915
  %v1120 = vpop.permute.xlu0 %1119
  %1122 = vset.pattern.permute.xlu0 1
  %1123 = vperm.xlu0 %1122, %v916
  %v1124 = vpop.permute.xlu0 %1123
  %1126 = vset.pattern.permute.xlu0 1
  %1127 = vperm.xlu0 %1126, %v917
  %v1128 = vpop.permute.xlu0 %1127
  %1130 = vset.pattern.permute.xlu0 1
  %1131 = vperm.xlu0 %1130, %v918
  %v1132 = vpop.permute.xlu0 %1131
  %1134 = vset.pattern.permute.xlu0 1
  %1135 = vperm.xlu0 %1134, %v919
  %v1136 = vpop.permute.xlu0 %1135
  %1138 = vset.pattern.permute.xlu0 1
  %1139 = vperm.xlu0 %1138, %v920
  %v1140 = vpop.permute.xlu0 %1139
  %v1142 = vmul.f32 %v703, %v1092
  %v1143 = vmul.f32 %v705, %v1096
  %v1144 = vmul.f32 %v708, %v1100
  %v1145 = vmul.f32 %v710, %v1104
  %v1146 = vmul.f32 %v713, %v1108
  %v1147 = vmul.f32 %v715, %v1112
  %v1148 = vmul.f32 %v718, %v1116
  %v1149 = vmul.f32 %v720, %v1120
  %v1150 = vmul.f32 %v723, %v1124
  %v1151 = vmul.f32 %v725, %v1128
  %v1152 = vmul.f32 %v728, %v1132
  %v1153 = vmul.f32 %v730, %v1136
  %v1154 = vmul.f32 %v733, %v1140
  %vm1155 = vcmask 1048064
  %v1156 = vsel %vm1155, %v1142, 0.0
  %v1157 = vsel %vm1155, %v1143, 0.0
  %v1158 = vadd.f32 %v1156, %v1157
  %v1159 = vsel %vm1155, %v1144, 0.0
  %v1160 = vadd.f32 %v1158, %v1159
  %v1161 = vsel %vm1155, %v1145, 0.0
  %v1162 = vadd.f32 %v1160, %v1161
  %v1163 = vsel %vm1155, %v1146, 0.0
  %v1164 = vadd.f32 %v1162, %v1163
  %v1165 = vsel %vm1155, %v1147, 0.0
  %v1166 = vadd.f32 %v1164, %v1165
  %v1167 = vsel %vm1155, %v1148, 0.0
  %v1168 = vadd.f32 %v1166, %v1167
  %v1169 = vsel %vm1155, %v1149, 0.0
  %v1170 = vadd.f32 %v1168, %v1169
  %v1171 = vsel %vm1155, %v1150, 0.0
  %v1172 = vadd.f32 %v1170, %v1171
  %v1173 = vsel %vm1155, %v1151, 0.0
  %v1174 = vadd.f32 %v1172, %v1173
  %v1175 = vsel %vm1155, %v1152, 0.0
  %v1176 = vadd.f32 %v1174, %v1175
  %v1177 = vsel %vm1155, %v1153, 0.0
  %v1178 = vadd.f32 %v1176, %v1177
  %v1179 = vsel %vm1155, %v1154, 0.0
  %v1180 = vadd.f32 %v1178, %v1179
  %v1181 = vrot.slane %v1180, 4
  %v1182 = vadd.f32 %v1180, %v1181
  %v1183 = vrot.slane %v1182, 2
  %v1184 = vadd.f32 %v1182, %v1183
  %v1185 = vrot.slane %v1184, 1
  %v1186 = vadd.f32 %v1184, %v1185
  %1188 = vrot.lane.b32.xlu0 %v1186, 64
  %v1189 = vpop.permute.xlu0 %1188
  %v1191 = vadd.f32 %v1031, %v1189
  %v1192 = vmul.f32 %v1032, %v1092
  %v1193 = vmul.f32 %v1033, %v1096
  %v1194 = vmul.f32 %v1034, %v1100
  %v1195 = vmul.f32 %v1035, %v1104
  %v1196 = vmul.f32 %v1036, %v1108
  %v1197 = vmul.f32 %v1037, %v1112
  %v1198 = vmul.f32 %v1038, %v1116
  %v1199 = vmul.f32 %v1039, %v1120
  %v1200 = vmul.f32 %v1040, %v1124
  %v1201 = vmul.f32 %v1041, %v1128
  %v1202 = vmul.f32 %v1042, %v1132
  %v1203 = vmul.f32 %v1043, %v1136
  %v1204 = vmul.f32 %v1044, %v1140
  %v1205 = vsel %vm1155, %v1192, 0.0
  %v1206 = vsel %vm1155, %v1193, 0.0
  %v1207 = vadd.f32 %v1205, %v1206
  %v1208 = vsel %vm1155, %v1194, 0.0
  %v1209 = vadd.f32 %v1207, %v1208
  %v1210 = vsel %vm1155, %v1195, 0.0
  %v1211 = vadd.f32 %v1209, %v1210
  %v1212 = vsel %vm1155, %v1196, 0.0
  %v1213 = vadd.f32 %v1211, %v1212
  %v1214 = vsel %vm1155, %v1197, 0.0
  %v1215 = vadd.f32 %v1213, %v1214
  %v1216 = vsel %vm1155, %v1198, 0.0
  %v1217 = vadd.f32 %v1215, %v1216
  %v1218 = vsel %vm1155, %v1199, 0.0
  %v1219 = vadd.f32 %v1217, %v1218
  %v1220 = vsel %vm1155, %v1200, 0.0
  %v1221 = vadd.f32 %v1219, %v1220
  %v1222 = vsel %vm1155, %v1201, 0.0
  %v1223 = vadd.f32 %v1221, %v1222
  %v1224 = vsel %vm1155, %v1202, 0.0
  %v1225 = vadd.f32 %v1223, %v1224
  %v1226 = vsel %vm1155, %v1203, 0.0
  %v1227 = vadd.f32 %v1225, %v1226
  %v1228 = vsel %vm1155, %v1204, 0.0
  %v1229 = vadd.f32 %v1227, %v1228
  %v1230 = vrot.slane %v1229, 4
  %v1231 = vadd.f32 %v1229, %v1230
  %v1232 = vrot.slane %v1231, 2
  %v1233 = vadd.f32 %v1231, %v1232
  %v1234 = vrot.slane %v1233, 1
  %v1235 = vadd.f32 %v1233, %v1234
  %1237 = vrot.lane.b32.xlu0 %v1235, 64
  %v1238 = vpop.permute.xlu0 %1237
  %v1240 = vadd.f32 %v1089, %v1238
  %1241 = vset.pattern.permute.xlu0 2
  %1242 = vperm.xlu0 %1241, %v908
  %v1243 = vpop.permute.xlu0 %1242
  %1245 = vset.pattern.permute.xlu0 2
  %1246 = vperm.xlu0 %1245, %v909
  %v1247 = vpop.permute.xlu0 %1246
  %1249 = vset.pattern.permute.xlu0 2
  %1250 = vperm.xlu0 %1249, %v910
  %v1251 = vpop.permute.xlu0 %1250
  %1253 = vset.pattern.permute.xlu0 2
  %1254 = vperm.xlu0 %1253, %v911
  %v1255 = vpop.permute.xlu0 %1254
  %1257 = vset.pattern.permute.xlu0 2
  %1258 = vperm.xlu0 %1257, %v912
  %v1259 = vpop.permute.xlu0 %1258
  %1261 = vset.pattern.permute.xlu0 2
  %1262 = vperm.xlu0 %1261, %v913
  %v1263 = vpop.permute.xlu0 %1262
  %1265 = vset.pattern.permute.xlu0 2
  %1266 = vperm.xlu0 %1265, %v914
  %v1267 = vpop.permute.xlu0 %1266
  %1269 = vset.pattern.permute.xlu0 2
  %1270 = vperm.xlu0 %1269, %v915
  %v1271 = vpop.permute.xlu0 %1270
  %1273 = vset.pattern.permute.xlu0 2
  %1274 = vperm.xlu0 %1273, %v916
  %v1275 = vpop.permute.xlu0 %1274
  %1277 = vset.pattern.permute.xlu0 2
  %1278 = vperm.xlu0 %1277, %v917
  %v1279 = vpop.permute.xlu0 %1278
  %1281 = vset.pattern.permute.xlu0 2
  %1282 = vperm.xlu0 %1281, %v918
  %v1283 = vpop.permute.xlu0 %1282
  %1285 = vset.pattern.permute.xlu0 2
  %1286 = vperm.xlu0 %1285, %v919
  %v1287 = vpop.permute.xlu0 %1286
  %1289 = vset.pattern.permute.xlu0 2
  %1290 = vperm.xlu0 %1289, %v920
  %v1291 = vpop.permute.xlu0 %1290
  %v1293 = vmul.f32 %v875, %v1243
  %v1294 = vmul.f32 %v877, %v1247
  %v1295 = vmul.f32 %v880, %v1251
  %v1296 = vmul.f32 %v882, %v1255
  %v1297 = vmul.f32 %v885, %v1259
  %v1298 = vmul.f32 %v887, %v1263
  %v1299 = vmul.f32 %v890, %v1267
  %v1300 = vmul.f32 %v892, %v1271
  %v1301 = vmul.f32 %v895, %v1275
  %v1302 = vmul.f32 %v897, %v1279
  %v1303 = vmul.f32 %v900, %v1283
  %v1304 = vmul.f32 %v902, %v1287
  %v1305 = vmul.f32 %v905, %v1291
  %v1306 = vsel %vm999, %v1293, 0.0
  %v1307 = vsel %vm999, %v1294, 0.0
  %v1308 = vadd.f32 %v1306, %v1307
  %v1309 = vsel %vm999, %v1295, 0.0
  %v1310 = vadd.f32 %v1308, %v1309
  %v1311 = vsel %vm999, %v1296, 0.0
  %v1312 = vadd.f32 %v1310, %v1311
  %v1313 = vsel %vm999, %v1297, 0.0
  %v1314 = vadd.f32 %v1312, %v1313
  %v1315 = vsel %vm999, %v1298, 0.0
  %v1316 = vadd.f32 %v1314, %v1315
  %v1317 = vsel %vm999, %v1299, 0.0
  %v1318 = vadd.f32 %v1316, %v1317
  %v1319 = vsel %vm999, %v1300, 0.0
  %v1320 = vadd.f32 %v1318, %v1319
  %v1321 = vsel %vm999, %v1301, 0.0
  %v1322 = vadd.f32 %v1320, %v1321
  %v1323 = vsel %vm999, %v1302, 0.0
  %v1324 = vadd.f32 %v1322, %v1323
  %v1325 = vsel %vm999, %v1303, 0.0
  %v1326 = vadd.f32 %v1324, %v1325
  %v1327 = vsel %vm999, %v1304, 0.0
  %v1328 = vadd.f32 %v1326, %v1327
  %v1329 = vsel %vm999, %v1305, 0.0
  %v1330 = vadd.f32 %v1328, %v1329
  %v1331 = vrot.slane %v1330, 4
  %v1332 = vadd.f32 %v1330, %v1331
  %v1333 = vrot.slane %v1332, 2
  %v1334 = vadd.f32 %v1332, %v1333
  %v1335 = vrot.slane %v1334, 1
  %v1336 = vadd.f32 %v1334, %v1335
  %v1337 = vadd.f32 %v1191, %v1336
  %v1338 = vmul.f32 %v875, %v875
  %v1339 = vmul.f32 %v877, %v877
  %v1340 = vmul.f32 %v880, %v880
  %v1341 = vmul.f32 %v882, %v882
  %v1342 = vmul.f32 %v885, %v885
  %v1343 = vmul.f32 %v887, %v887
  %v1344 = vmul.f32 %v890, %v890
  %v1345 = vmul.f32 %v892, %v892
  %v1346 = vmul.f32 %v895, %v895
  %v1347 = vmul.f32 %v897, %v897
  %v1348 = vmul.f32 %v900, %v900
  %v1349 = vmul.f32 %v902, %v902
  %v1350 = vmul.f32 %v905, %v905
  %v1351 = vmul.f32 %v1338, %v1243
  %v1352 = vmul.f32 %v1339, %v1247
  %v1353 = vmul.f32 %v1340, %v1251
  %v1354 = vmul.f32 %v1341, %v1255
  %v1355 = vmul.f32 %v1342, %v1259
  %v1356 = vmul.f32 %v1343, %v1263
  %v1357 = vmul.f32 %v1344, %v1267
  %v1358 = vmul.f32 %v1345, %v1271
  %v1359 = vmul.f32 %v1346, %v1275
  %v1360 = vmul.f32 %v1347, %v1279
  %v1361 = vmul.f32 %v1348, %v1283
  %v1362 = vmul.f32 %v1349, %v1287
  %v1363 = vmul.f32 %v1350, %v1291
  %v1364 = vsel %vm999, %v1351, 0.0
  %v1365 = vsel %vm999, %v1352, 0.0
  %v1366 = vadd.f32 %v1364, %v1365
  %v1367 = vsel %vm999, %v1353, 0.0
  %v1368 = vadd.f32 %v1366, %v1367
  %v1369 = vsel %vm999, %v1354, 0.0
  %v1370 = vadd.f32 %v1368, %v1369
  %v1371 = vsel %vm999, %v1355, 0.0
  %v1372 = vadd.f32 %v1370, %v1371
  %v1373 = vsel %vm999, %v1356, 0.0
  %v1374 = vadd.f32 %v1372, %v1373
  %v1375 = vsel %vm999, %v1357, 0.0
  %v1376 = vadd.f32 %v1374, %v1375
  %v1377 = vsel %vm999, %v1358, 0.0
  %v1378 = vadd.f32 %v1376, %v1377
  %v1379 = vsel %vm999, %v1359, 0.0
  %v1380 = vadd.f32 %v1378, %v1379
  %v1381 = vsel %vm999, %v1360, 0.0
  %v1382 = vadd.f32 %v1380, %v1381
  %v1383 = vsel %vm999, %v1361, 0.0
  %v1384 = vadd.f32 %v1382, %v1383
  %v1385 = vsel %vm999, %v1362, 0.0
  %v1386 = vadd.f32 %v1384, %v1385
  %v1387 = vsel %vm999, %v1363, 0.0
  %v1388 = vadd.f32 %v1386, %v1387
  %v1389 = vrot.slane %v1388, 4
  %v1390 = vadd.f32 %v1388, %v1389
  %v1391 = vrot.slane %v1390, 2
  %v1392 = vadd.f32 %v1390, %v1391
  %v1393 = vrot.slane %v1392, 1
  %v1394 = vadd.f32 %v1392, %v1393
  %v1395 = vadd.f32 %v1240, %v1394
  %1396 = vset.pattern.permute.xlu0 3
  %1397 = vperm.xlu0 %1396, %v908
  %v1398 = vpop.permute.xlu0 %1397
  %1400 = vset.pattern.permute.xlu0 3
  %1401 = vperm.xlu0 %1400, %v909
  %v1402 = vpop.permute.xlu0 %1401
  %1404 = vset.pattern.permute.xlu0 3
  %1405 = vperm.xlu0 %1404, %v910
  %v1406 = vpop.permute.xlu0 %1405
  %1408 = vset.pattern.permute.xlu0 3
  %1409 = vperm.xlu0 %1408, %v911
  %v1410 = vpop.permute.xlu0 %1409
  %1412 = vset.pattern.permute.xlu0 3
  %1413 = vperm.xlu0 %1412, %v912
  %v1414 = vpop.permute.xlu0 %1413
  %1416 = vset.pattern.permute.xlu0 3
  %1417 = vperm.xlu0 %1416, %v913
  %v1418 = vpop.permute.xlu0 %1417
  %1420 = vset.pattern.permute.xlu0 3
  %1421 = vperm.xlu0 %1420, %v914
  %v1422 = vpop.permute.xlu0 %1421
  %1424 = vset.pattern.permute.xlu0 3
  %1425 = vperm.xlu0 %1424, %v915
  %v1426 = vpop.permute.xlu0 %1425
  %1428 = vset.pattern.permute.xlu0 3
  %1429 = vperm.xlu0 %1428, %v916
  %v1430 = vpop.permute.xlu0 %1429
  %1432 = vset.pattern.permute.xlu0 3
  %1433 = vperm.xlu0 %1432, %v917
  %v1434 = vpop.permute.xlu0 %1433
  %1436 = vset.pattern.permute.xlu0 3
  %1437 = vperm.xlu0 %1436, %v918
  %v1438 = vpop.permute.xlu0 %1437
  %1440 = vset.pattern.permute.xlu0 3
  %1441 = vperm.xlu0 %1440, %v919
  %v1442 = vpop.permute.xlu0 %1441
  %1444 = vset.pattern.permute.xlu0 3
  %1445 = vperm.xlu0 %1444, %v920
  %v1446 = vpop.permute.xlu0 %1445
  %v1448 = vmul.f32 %v875, %v1398
  %v1449 = vmul.f32 %v877, %v1402
  %v1450 = vmul.f32 %v880, %v1406
  %v1451 = vmul.f32 %v882, %v1410
  %v1452 = vmul.f32 %v885, %v1414
  %v1453 = vmul.f32 %v887, %v1418
  %v1454 = vmul.f32 %v890, %v1422
  %v1455 = vmul.f32 %v892, %v1426
  %v1456 = vmul.f32 %v895, %v1430
  %v1457 = vmul.f32 %v897, %v1434
  %v1458 = vmul.f32 %v900, %v1438
  %v1459 = vmul.f32 %v902, %v1442
  %v1460 = vmul.f32 %v905, %v1446
  %v1461 = vsel %vm1155, %v1448, 0.0
  %v1462 = vsel %vm1155, %v1449, 0.0
  %v1463 = vadd.f32 %v1461, %v1462
  %v1464 = vsel %vm1155, %v1450, 0.0
  %v1465 = vadd.f32 %v1463, %v1464
  %v1466 = vsel %vm1155, %v1451, 0.0
  %v1467 = vadd.f32 %v1465, %v1466
  %v1468 = vsel %vm1155, %v1452, 0.0
  %v1469 = vadd.f32 %v1467, %v1468
  %v1470 = vsel %vm1155, %v1453, 0.0
  %v1471 = vadd.f32 %v1469, %v1470
  %v1472 = vsel %vm1155, %v1454, 0.0
  %v1473 = vadd.f32 %v1471, %v1472
  %v1474 = vsel %vm1155, %v1455, 0.0
  %v1475 = vadd.f32 %v1473, %v1474
  %v1476 = vsel %vm1155, %v1456, 0.0
  %v1477 = vadd.f32 %v1475, %v1476
  %v1478 = vsel %vm1155, %v1457, 0.0
  %v1479 = vadd.f32 %v1477, %v1478
  %v1480 = vsel %vm1155, %v1458, 0.0
  %v1481 = vadd.f32 %v1479, %v1480
  %v1482 = vsel %vm1155, %v1459, 0.0
  %v1483 = vadd.f32 %v1481, %v1482
  %v1484 = vsel %vm1155, %v1460, 0.0
  %v1485 = vadd.f32 %v1483, %v1484
  %v1486 = vrot.slane %v1485, 4
  %v1487 = vadd.f32 %v1485, %v1486
  %v1488 = vrot.slane %v1487, 2
  %v1489 = vadd.f32 %v1487, %v1488
  %v1490 = vrot.slane %v1489, 1
  %v1491 = vadd.f32 %v1489, %v1490
  %1493 = vrot.lane.b32.xlu0 %v1491, 64
  %v1494 = vpop.permute.xlu0 %1493
  %v1496 = vadd.f32 %v1337, %v1494
  %v1497 = vmul.f32 %v1338, %v1398
  %v1498 = vmul.f32 %v1339, %v1402
  %v1499 = vmul.f32 %v1340, %v1406
  %v1500 = vmul.f32 %v1341, %v1410
  %v1501 = vmul.f32 %v1342, %v1414
  %v1502 = vmul.f32 %v1343, %v1418
  %v1503 = vmul.f32 %v1344, %v1422
  %v1504 = vmul.f32 %v1345, %v1426
  %v1505 = vmul.f32 %v1346, %v1430
  %v1506 = vmul.f32 %v1347, %v1434
  %v1507 = vmul.f32 %v1348, %v1438
  %v1508 = vmul.f32 %v1349, %v1442
  %v1509 = vmul.f32 %v1350, %v1446
  %v1510 = vsel %vm1155, %v1497, 0.0
  %v1511 = vsel %vm1155, %v1498, 0.0
  %v1512 = vadd.f32 %v1510, %v1511
  %v1513 = vsel %vm1155, %v1499, 0.0
  %v1514 = vadd.f32 %v1512, %v1513
  %v1515 = vsel %vm1155, %v1500, 0.0
  %v1516 = vadd.f32 %v1514, %v1515
  %v1517 = vsel %vm1155, %v1501, 0.0
  %v1518 = vadd.f32 %v1516, %v1517
  %v1519 = vsel %vm1155, %v1502, 0.0
  %v1520 = vadd.f32 %v1518, %v1519
  %v1521 = vsel %vm1155, %v1503, 0.0
  %v1522 = vadd.f32 %v1520, %v1521
  %v1523 = vsel %vm1155, %v1504, 0.0
  %v1524 = vadd.f32 %v1522, %v1523
  %v1525 = vsel %vm1155, %v1505, 0.0
  %v1526 = vadd.f32 %v1524, %v1525
  %v1527 = vsel %vm1155, %v1506, 0.0
  %v1528 = vadd.f32 %v1526, %v1527
  %v1529 = vsel %vm1155, %v1507, 0.0
  %v1530 = vadd.f32 %v1528, %v1529
  %v1531 = vsel %vm1155, %v1508, 0.0
  %v1532 = vadd.f32 %v1530, %v1531
  %v1533 = vsel %vm1155, %v1509, 0.0
  %v1534 = vadd.f32 %v1532, %v1533
  %v1535 = vrot.slane %v1534, 4
  %v1536 = vadd.f32 %v1534, %v1535
  %v1537 = vrot.slane %v1536, 2
  %v1538 = vadd.f32 %v1536, %v1537
  %v1539 = vrot.slane %v1538, 1
  %v1540 = vadd.f32 %v1538, %v1539
  %1542 = vrot.lane.b32.xlu0 %v1540, 64
  %v1543 = vpop.permute.xlu0 %1542
  %v1545 = vadd.f32 %v1395, %v1543
  %v1546 = vrcp.pop 338.0
  %v1547 = vmul.f32 338.0, %v1546
  %v1548 = vsub.f32 1.0, %v1547
  %v1549 = vmul.f32 %v1546, %v1548
  %v1550 = vadd.f32 %v1546, %v1549
  %vm1551 = vweird.f32 %v1546
  %v1552 = vsel %vm1551, %v1546, %v1550
  %v1553 = vmul.f32 %v1496, %v1552
  %v1554 = vmul.f32 %v1545, %v1552
  %v1555 = vmul.f32 %v1553, %v1553
  %v1556 = vsub.f32 %v1554, %v1555
  %v1557 = vmax.f32 %v1556, 0.0
  %v1558 = vadd.f32 %v1557, 1e-05
  %v1559 = vrsqrt.pop %v1558
  %v1560 = vmul.f32 %v1559, %v1558
  %v1561 = vmul.f32 %v1560, %v1559
  %v1562 = vmul.f32 0.5, %v1561
  %v1563 = vsub.f32 1.5, %v1562
  %v1564 = vmul.f32 %v1559, %v1563
  %vm1565 = vweird.f32 %v1558
  %vm1566 = vweird.f32 %v1559
  %vm1567 = vmor %vm1565, %vm1566
  %v1568 = vsel %vm1567, %v1559, %v1564
  %v1569 = vld [vmem:[%s3] sm:$0x1]
  %v1570 = vmul.f32 %v1569, %v1568
  %v1571 = vld [vmem:[%s4] sm:$0x1]
  %v1572 = vmul.f32 %v1553, %v1570
  %v1573 = vsub.f32 %v1571, %v1572
  %v1575 = vperm.slane %v1570, 0
  %1576 = vrot.lane.b32.xlu0 %v1575, 64
  %v1577 = vpop.permute.xlu0 %1576
  %v1579 = vsel %vm999, %v1570, %v1577
  %v1581 = vperm.slane %v1573, 0
  %1582 = vrot.lane.b32.xlu0 %v1581, 64
  %v1583 = vpop.permute.xlu0 %1582
  %v1585 = vsel %vm999, %v1573, %v1583
  %v1586 = vperm.slane %v1579, 0
  %v1587 = vmul.f32 %v703, %v1586
  %v1588 = vmul.f32 %v875, %v1586
  %v1589 = vmul.f32 %v705, %v1586
  %v1590 = vmul.f32 %v877, %v1586
  %v1591 = vmul.f32 %v708, %v1586
  %v1592 = vmul.f32 %v880, %v1586
  %v1593 = vmul.f32 %v710, %v1586
  %v1594 = vmul.f32 %v882, %v1586
  %v1595 = vmul.f32 %v713, %v1586
  %v1596 = vmul.f32 %v885, %v1586
  %v1597 = vmul.f32 %v715, %v1586
  %v1598 = vmul.f32 %v887, %v1586
  %v1599 = vmul.f32 %v718, %v1586
  %v1600 = vmul.f32 %v890, %v1586
  %v1601 = vmul.f32 %v720, %v1586
  %v1602 = vmul.f32 %v892, %v1586
  %v1603 = vmul.f32 %v723, %v1586
  %v1604 = vmul.f32 %v895, %v1586
  %v1605 = vmul.f32 %v725, %v1586
  %v1606 = vmul.f32 %v897, %v1586
  %v1607 = vmul.f32 %v728, %v1586
  %v1608 = vmul.f32 %v900, %v1586
  %v1609 = vmul.f32 %v730, %v1586
  %v1610 = vmul.f32 %v902, %v1586
  %v1611 = vmul.f32 %v733, %v1586
  %v1612 = vmul.f32 %v905, %v1586
  %v1613 = vperm.slane %v1585, 0
  %v1614 = vadd.f32 %v1587, %v1613
  %v1615 = vadd.f32 %v1588, %v1613
  %v1616 = vadd.f32 %v1589, %v1613
  %v1617 = vadd.f32 %v1590, %v1613
  %v1618 = vadd.f32 %v1591, %v1613
  %v1619 = vadd.f32 %v1592, %v1613
  %v1620 = vadd.f32 %v1593, %v1613
  %v1621 = vadd.f32 %v1594, %v1613
  %v1622 = vadd.f32 %v1595, %v1613
  %v1623 = vadd.f32 %v1596, %v1613
  %v1624 = vadd.f32 %v1597, %v1613
  %v1625 = vadd.f32 %v1598, %v1613
  %v1626 = vadd.f32 %v1599, %v1613
  %v1627 = vadd.f32 %v1600, %v1613
  %v1628 = vadd.f32 %v1601, %v1613
  %v1629 = vadd.f32 %v1602, %v1613
  %v1630 = vadd.f32 %v1603, %v1613
  %v1631 = vadd.f32 %v1604, %v1613
  %v1632 = vadd.f32 %v1605, %v1613
  %v1633 = vadd.f32 %v1606, %v1613
  %v1634 = vadd.f32 %v1607, %v1613
  %v1635 = vadd.f32 %v1608, %v1613
  %v1636 = vadd.f32 %v1609, %v1613
  %v1637 = vadd.f32 %v1610, %v1613
  %v1638 = vadd.f32 %v1611, %v1613
  %v1639 = vadd.f32 %v1612, %v1613
  %v1640 = vmax.f32 %v1614, 0.0
  %v1641 = vmax.f32 %v1615, 0.0
  %v1642 = vmax.f32 %v1616, 0.0
  %v1643 = vmax.f32 %v1617, 0.0
  %v1644 = vmax.f32 %v1618, 0.0
  %v1645 = vmax.f32 %v1619, 0.0
  %v1646 = vmax.f32 %v1620, 0.0
  %v1647 = vmax.f32 %v1621, 0.0
  %v1648 = vmax.f32 %v1622, 0.0
  %v1649 = vmax.f32 %v1623, 0.0
  %v1650 = vmax.f32 %v1624, 0.0
  %v1651 = vmax.f32 %v1625, 0.0
  %v1652 = vmax.f32 %v1626, 0.0
  %v1653 = vmax.f32 %v1627, 0.0
  %v1654 = vmax.f32 %v1628, 0.0
  %v1655 = vmax.f32 %v1629, 0.0
  %v1656 = vmax.f32 %v1630, 0.0
  %v1657 = vmax.f32 %v1631, 0.0
  %v1658 = vmax.f32 %v1632, 0.0
  %v1659 = vmax.f32 %v1633, 0.0
  %v1660 = vmax.f32 %v1634, 0.0
  %v1661 = vmax.f32 %v1635, 0.0
  %v1662 = vmax.f32 %v1636, 0.0
  %v1663 = vmax.f32 %v1637, 0.0
  %v1664 = vmax.f32 %v1638, 0.0
  %v1665 = vmax.f32 %v1639, 0.0
  %v1666 = vpack.c.bf16 %v1641, %v1640
  %v1667 = vpack.c.bf16 %v1643, %v1642
  %v1668 = vpack.c.bf16 %v1645, %v1644
  %v1669 = vpack.c.bf16 %v1647, %v1646
  %v1670 = vpack.c.bf16 %v1649, %v1648
  %v1671 = vpack.c.bf16 %v1651, %v1650
  %v1672 = vpack.c.bf16 %v1653, %v1652
  %v1673 = vpack.c.bf16 %v1655, %v1654
  %v1674 = vpack.c.bf16 %v1657, %v1656
  %v1675 = vpack.c.bf16 %v1659, %v1658
  %v1676 = vpack.c.bf16 %v1661, %v1660
  %v1677 = vpack.c.bf16 %v1663, %v1662
  %v1678 = vpack.c.bf16 %v1665, %v1664
  %1679 = vst [vmem:[%s5] sm:$0xff] %v1666
  %1680 = vst [vmem:[%s5 + $0x8] sm:$0xff] %v1667
  %1681 = vst [vmem:[%s5 + $0x10] sm:$0xff] %v1668
  %1682 = vst [vmem:[%s5 + $0x18] sm:$0xff] %v1669
  %1683 = vst [vmem:[%s5 + $0x20] sm:$0xff] %v1670
  %1684 = vst [vmem:[%s5 + $0x28] sm:$0xff] %v1671
  %1685 = vst [vmem:[%s5 + $0x30] sm:$0xff] %v1672
  %1686 = vst [vmem:[%s5 + $0x38] sm:$0xff] %v1673
  %1687 = vst [vmem:[%s5 + $0x40] sm:$0xff] %v1674
  %1688 = vst [vmem:[%s5 + $0x48] sm:$0xff] %v1675
  %1689 = vst [vmem:[%s5 + $0x50] sm:$0xff] %v1676
  %1690 = vst [vmem:[%s5 + $0x58] sm:$0xff] %v1677
  %1691 = vst [vmem:[%s5 + $0x60] sm:$0xff] %v1678
  // Predicated region
  $region22: #{generator_forward.6} parent=0 // pred_check
    _
  $region23: #{generator_forward.6} parent=0 // pred_check_branch
    %1693 = sbr.rel (0) target = $region25
  $region24: #{generator_forward.6} parent=0 // pred_region
    _
  $region25: #{generator_forward.6} parent=0 // pred_fallthru
    _
  // Predicated region
  $region26: #{generator_forward.6} parent=0 // pred_check
    _
  $region27: #{generator_forward.6} parent=0 // pred_check_branch
    %1695 = sbr.rel (0) target = $region29
  $region28: #{generator_forward.6} parent=0 // pred_region
    _
  $region29: #{generator_forward.6} parent=0 // pred_fallthru
    _

// kernel: generator_forward.7
$region0: #{generator_forward.7}
  #allocation0 [shape = 'u32[]', space=smem, size = 0x4, offset = 0x4, fixed_abs, tag = 'smem constant byte address 0x4 - core index']
  #allocation1 [shape = 'u32[72,128]{1,0:T(1,128)}', space=vmem, size = 0x9000, scoped, tag = 'internal scratch']
  %s0 = inlined_call_operand.vmem [shape: bf16[256,512], index: 0, kind: input, shape index: {}]
  %s1 = inlined_call_operand.vmem [shape: bf16[8,256], index: 1, kind: input, shape index: {}]
  %s2 = inlined_call_operand.vmem [shape: f32[8,1], index: 2, kind: input, shape index: {}]
  %s3 = inlined_call_operand.vmem [shape: f32[8,512], index: 3, kind: output, shape index: {}]
  %s4 = sld [smem:[#allocation0]]
  $region83: #{generator_forward.7} parent=0
    _
  %s6 = ssub.s32 1, %s4
  %s7 = scalar_select 0, %s6, %s4
  $region1: #{generator_forward.7} parent=0
    #allocation2 [shape = 'u8[262144]{0}', space=vmem, size = 0x40000, scoped, tag = 'input window, operand 0']
    loop: start=0, step=1, limit=4
    $region2: #{generator_forward.7} parent=1 // loop_pre_header
      _
    $region3: #{generator_forward.7} parent=1 // loop_header
      %s9 = sphi 0, %s13
      %p10 = scmp.ge.s32.totalorder %s9, 4
      %s19 = sphi 0, %s21
      %s22 = sphi 0, %s19
      %s23 = sphi 0, %s22
      %s39 = sphi 0, %s23
      %s43 = sphi 0, %s43
      %s45 = sphi 0, %s43
      %s46 = sphi 0, %s45
      %s60 = sphi 0, %s46
      %s64 = sphi 0, %s64
      %s66 = sphi 0, %s64
      %s67 = sphi 0, %s66
      %s81 = sphi 0, %s67
      %s87 = sphi 0, %s89
      %s90 = sphi 0, %s87
      %s91 = sphi 0, %s90
      %s107 = sphi 0, %s91
    $region4: #{generator_forward.7} parent=1 // loop_header_branch
      %12 = sbr.rel (%p10) target = $region8
    $region5: #{generator_forward.7} parent=1 // loop_body
      %s14 = ssub.s32 %s9, 1
      %s15 = ssub.s32 %s9, 2
      %s16 = sadd.s32 %s9, 1
      %s17 = ssub.s32 %s9, %s16
      %p18 = scmp.eq.s32.totalorder %s17, 0
      %s20 = sadd.s32 %s19, 1
      %s21 = scalar_select %p18, %s19, %s20
      %p24 = pneg %p18
      %p25 = scmp.eq.s32.totalorder %s9, 1
      %p26 = por %p24, %p25
      %p27 = scmp.ne.s32.totalorder %s19, %s22
      %p28 = scmp.eq.s32.totalorder %s9, 0
      %p29 = por %p27, %p28
      %p30 = scmp.ne.s32.totalorder %s19, %s22
      %p31 = scmp.eq.s32.totalorder %s14, 1
      %p32 = por %p30, %p31
      %p33 = scmp.ne.s32.totalorder %s22, %s23
      %p34 = scmp.eq.s32.totalorder %s14, 0
      %p35 = por %p33, %p34
      %p36 = scmp.ne.s32.totalorder %s22, %s23
      %p37 = scmp.eq.s32.totalorder %s15, 1
      %p38 = por %p36, %p37
      %p40 = scmp.ne.s32.totalorder %s23, %s39
      %p41 = scmp.eq.s32.totalorder %s15, 0
      %p42 = por %p40, %p41
      %s44 = sadd.s32 %s43, 1
      %p47 = scmp.eq.s32.totalorder %s9, 1
      %p48 = scmp.ne.s32.totalorder %s43, %s45
      %p49 = scmp.eq.s32.totalorder %s9, 0
      %p50 = por %p48, %p49
      %p51 = scmp.ne.s32.totalorder %s43, %s45
      %p52 = scmp.eq.s32.totalorder %s14, 1
      %p53 = por %p51, %p52
      %p54 = scmp.ne.s32.totalorder %s45, %s46
      %p55 = scmp.eq.s32.totalorder %s14, 0
      %p56 = por %p54, %p55
      %p57 = scmp.ne.s32.totalorder %s45, %s46
      %p58 = scmp.eq.s32.totalorder %s15, 1
      %p59 = por %p57, %p58
      %p61 = scmp.ne.s32.totalorder %s46, %s60
      %p62 = scmp.eq.s32.totalorder %s15, 0
      %p63 = por %p61, %p62
      %s65 = sadd.s32 %s64, 1
      %p68 = scmp.eq.s32.totalorder %s9, 1
      %p69 = scmp.ne.s32.totalorder %s64, %s66
      %p70 = scmp.eq.s32.totalorder %s9, 0
      %p71 = por %p69, %p70
      %p72 = scmp.ne.s32.totalorder %s64, %s66
      %p73 = scmp.eq.s32.totalorder %s14, 1
      %p74 = por %p72, %p73
      %p75 = scmp.ne.s32.totalorder %s66, %s67
      %p76 = scmp.eq.s32.totalorder %s14, 0
      %p77 = por %p75, %p76
      %p78 = scmp.ne.s32.totalorder %s66, %s67
      %p79 = scmp.eq.s32.totalorder %s15, 1
      %p80 = por %p78, %p79
      %p82 = scmp.ne.s32.totalorder %s67, %s81
      %p83 = scmp.eq.s32.totalorder %s15, 0
      %p84 = por %p82, %p83
      %s85 = ssub.s32 %s9, %s16
      %p86 = scmp.eq.s32.totalorder %s85, 0
      %s88 = sadd.s32 %s87, 1
      %s89 = scalar_select %p86, %s87, %s88
      %p92 = pneg %p86
      %p93 = scmp.eq.s32.totalorder %s9, 1
      %p94 = por %p92, %p93
      %p95 = scmp.ne.s32.totalorder %s87, %s90
      %p96 = scmp.eq.s32.totalorder %s9, 0
      %p97 = por %p95, %p96
      %p98 = scmp.ne.s32.totalorder %s87, %s90
      %p99 = scmp.eq.s32.totalorder %s14, 1
      %p100 = por %p98, %p99
      %p101 = scmp.ne.s32.totalorder %s90, %s91
      %p102 = scmp.eq.s32.totalorder %s14, 0
      %p103 = por %p101, %p102
      %p104 = scmp.ne.s32.totalorder %s90, %s91
      %p105 = scmp.eq.s32.totalorder %s15, 1
      %p106 = por %p104, %p105
      %p108 = scmp.ne.s32.totalorder %s91, %s107
      %p109 = scmp.eq.s32.totalorder %s15, 0
      %p110 = por %p108, %p109
      %p111 = scmp.le.s32.totalorder 1, %s9
      %p112 = scmp.lt.s32.totalorder %s9, 3
      %p113 = pnand %p111, %p112
      %p114 = pneg %p113
      // Predicated region
      $region9: #{generator_forward.7} parent=5 // pred_check
        _
      $region10: #{generator_forward.7} parent=5 // pred_check_branch
        %116 = sbr.rel (%p113) target = $region12
      $region11: #{generator_forward.7} parent=5 // pred_region
        %s117 = ssub.s32 %s9, 1
        // Predicated region
        $region13: #{generator_forward.7} parent=11 // pred_check
          %p118 = pneg %p56
        $region14: #{generator_forward.7} parent=11 // pred_check_branch
          %120 = sbr.rel (%p118) target = $region16
        $region15: #{generator_forward.7} parent=11 // pred_region
          _
        $region16: #{generator_forward.7} parent=11 // pred_fallthru
          _
        // Predicated region
        $region17: #{generator_forward.7} parent=11 // pred_check
          %p121 = pneg %p77
        $region18: #{generator_forward.7} parent=11 // pred_check_branch
          %123 = sbr.rel (%p121) target = $region20
        $region19: #{generator_forward.7} parent=11 // pred_region
          _
        $region20: #{generator_forward.7} parent=11 // pred_fallthru
          _
      $region12: #{generator_forward.7} parent=5 // pred_fallthru
        _
      %p124 = scmp.lt.s32.totalorder %s9, 2
      // Predicated region
      $region21: #{generator_forward.7} parent=5 // pred_check
        %p125 = pneg %p124
      $region22: #{generator_forward.7} parent=5 // pred_check_branch
        %127 = sbr.rel (%p125) target = $region24
      $region23: #{generator_forward.7} parent=5 // pred_region
        // Predicated region
        $region25: #{generator_forward.7} parent=23 // pred_check
          %p128 = pneg %p29
        $region26: #{generator_forward.7} parent=23 // pred_check_branch
          %130 = sbr.rel (%p128) target = $region28
        $region27: #{generator_forward.7} parent=23 // pred_region
          %s131 = sand.u32 %s19, 1
          %s132 = sand.u32 %s19, 1
          %s133 = smul.addr %s132, 256
          %s134 = scalar_lea.vmem [#allocation2], %s133
          %s135 = smul.u32 2, %s9
          %s136 = smul.addr %s135, 4
          %s137 = scalar_lea.vmem %s0, %s136
          // Predicated region
          $region29: #{generator_forward.7} parent=27 // pred_check
            _
          $region30: #{generator_forward.7} parent=27 // pred_check_branch
            %139 = sbr.rel (0) target = $region32
          $region31: #{generator_forward.7} parent=27 // pred_region
            // Predicated region
            $region33: #{generator_forward.7} parent=31 // pred_check
              _
            $region34: #{generator_forward.7} parent=31 // pred_check_branch
              %141 = sbr.rel (0) target = $region36
            $region35: #{generator_forward.7} parent=31 // pred_region
              // Predicated region
              $region48: #{generator_forward.7} parent=35 // pred_check
                _
              $region49: #{generator_forward.7} parent=35 // pred_check_branch
                %219 = sbr.rel (0) target = $region51
              $region50: #{generator_forward.7} parent=35 // pred_region
                loop: start=0, step=1, limit=1
                $region52: #{generator_forward.7} parent=50 // loop_pre_header
                  _
                $region53: #{generator_forward.7} parent=50 // loop_header
                  %s221 = sphi 0, %s225
                  %p222 = scmp.ge.s32.totalorder %s221, 1
                  %s226 = sphi %s137, %s137
                  %s227 = sphi %s134, %s134
                $region54: #{generator_forward.7} parent=50 // loop_header_branch
                  %224 = sbr.rel (%p222) target = $region58
                $region55: #{generator_forward.7} parent=50 // loop_body
                  %v228 = vld [vmem:[%s226] sm:$0xff]
                  %229 = vst [vmem:[%s227] sm:$0xff] %v228
                  %v230 = vld [vmem:[%s226 + $0x10] sm:$0xff]
                  %231 = vst [vmem:[%s227 + $0x8] sm:$0xff] %v230
                  %v232 = vld [vmem:[%s226 + $0x20] sm:$0xff]
                  %233 = vst [vmem:[%s227 + $0x10] sm:$0xff] %v232
                  %v234 = vld [vmem:[%s226 + $0x30] sm:$0xff]
                  %235 = vst [vmem:[%s227 + $0x18] sm:$0xff] %v234
                  %v236 = vld [vmem:[%s226 + $0x40] sm:$0xff]
                  %237 = vst [vmem:[%s227 + $0x20] sm:$0xff] %v236
                  %v238 = vld [vmem:[%s226 + $0x50] sm:$0xff]
                  %239 = vst [vmem:[%s227 + $0x28] sm:$0xff] %v238
                  %v240 = vld [vmem:[%s226 + $0x60] sm:$0xff]
                  %241 = vst [vmem:[%s227 + $0x30] sm:$0xff] %v240
                  %v242 = vld [vmem:[%s226 + $0x70] sm:$0xff]
                  %243 = vst [vmem:[%s227 + $0x38] sm:$0xff] %v242
                  %v244 = vld [vmem:[%s226 + $0x80] sm:$0xff]
                  %245 = vst [vmem:[%s227 + $0x40] sm:$0xff] %v244
                  %v246 = vld [vmem:[%s226 + $0x90] sm:$0xff]
                  %247 = vst [vmem:[%s227 + $0x48] sm:$0xff] %v246
                  %v248 = vld [vmem:[%s226 + $0xa0] sm:$0xff]
                  %249 = vst [vmem:[%s227 + $0x50] sm:$0xff] %v248
                  %v250 = vld [vmem:[%s226 + $0xb0] sm:$0xff]
                  %251 = vst [vmem:[%s227 + $0x58] sm:$0xff] %v250
                  %v252 = vld [vmem:[%s226 + $0xc0] sm:$0xff]
                  %253 = vst [vmem:[%s227 + $0x60] sm:$0xff] %v252
                  %v254 = vld [vmem:[%s226 + $0xd0] sm:$0xff]
                  %255 = vst [vmem:[%s227 + $0x68] sm:$0xff] %v254
                  %v256 = vld [vmem:[%s226 + $0xe0] sm:$0xff]
                  %257 = vst [vmem:[%s227 + $0x70] sm:$0xff] %v256
                  %v258 = vld [vmem:[%s226 + $0xf0] sm:$0xff]
                  %259 = vst [vmem:[%s227 + $0x78] sm:$0xff] %v258
                  %v260 = vld [vmem:[%s226 + $0x100] sm:$0xff]
                  %261 = vst [vmem:[%s227 + $0x80] sm:$0xff] %v260
                  %v262 = vld [vmem:[%s226 + $0x110] sm:$0xff]
                  %263 = vst [vmem:[%s227 + $0x88] sm:$0xff] %v262
                  %v264 = vld [vmem:[%s226 + $0x120] sm:$0xff]
                  %265 = vst [vmem:[%s227 + $0x90] sm:$0xff] %v264
                  %v266 = vld [vmem:[%s226 + $0x130] sm:$0xff]
                  %267 = vst [vmem:[%s227 + $0x98] sm:$0xff] %v266
                  %v268 = vld [vmem:[%s226 + $0x140] sm:$0xff]
                  %269 = vst [vmem:[%s227 + $0xa0] sm:$0xff] %v268
                  %v270 = vld [vmem:[%s226 + $0x150] sm:$0xff]
                  %271 = vst [vmem:[%s227 + $0xa8] sm:$0xff] %v270
                  %v272 = vld [vmem:[%s226 + $0x160] sm:$0xff]
                  %273 = vst [vmem:[%s227 + $0xb0] sm:$0xff] %v272
                  %v274 = vld [vmem:[%s226 + $0x170] sm:$0xff]
                  %275 = vst [vmem:[%s227 + $0xb8] sm:$0xff] %v274
                  %v276 = vld [vmem:[%s226 + $0x180] sm:$0xff]
                  %277 = vst [vmem:[%s227 + $0xc0] sm:$0xff] %v276
                  %v278 = vld [vmem:[%s226 + $0x190] sm:$0xff]
                  %279 = vst [vmem:[%s227 + $0xc8] sm:$0xff] %v278
                  %v280 = vld [vmem:[%s226 + $0x1a0] sm:$0xff]
                  %281 = vst [vmem:[%s227 + $0xd0] sm:$0xff] %v280
                  %v282 = vld [vmem:[%s226 + $0x1b0] sm:$0xff]
                  %283 = vst [vmem:[%s227 + $0xd8] sm:$0xff] %v282
                  %v284 = vld [vmem:[%s226 + $0x1c0] sm:$0xff]
                  %285 = vst [vmem:[%s227 + $0xe0] sm:$0xff] %v284
                  %v286 = vld [vmem:[%s226 + $0x1d0] sm:$0xff]
                  %287 = vst [vmem:[%s227 + $0xe8] sm:$0xff] %v286
                  %v288 = vld [vmem:[%s226 + $0x1e0] sm:$0xff]
                  %289 = vst [vmem:[%s227 + $0xf0] sm:$0xff] %v288
                  %v290 = vld [vmem:[%s226 + $0x1f0] sm:$0xff]
                  %291 = vst [vmem:[%s227 + $0xf8] sm:$0xff] %v290
                $region56: #{generator_forward.7} parent=50 // loop_footer
                  %s225 = sadd.s32 1, %s221
                $region57: #{generator_forward.7} parent=50 // loop_footer_branch
                  %220 = sbr.rel target = $region53
                $region58: #{generator_forward.7} parent=50 // loop_exit
                  _
              $region51: #{generator_forward.7} parent=35 // pred_fallthru
                _
              // Predicated region
              $region59: #{generator_forward.7} parent=35 // pred_check
                _
              $region60: #{generator_forward.7} parent=35 // pred_check_branch
                %293 = sbr.rel target = $region62
              $region61: #{generator_forward.7} parent=35 // pred_region
                _
              $region62: #{generator_forward.7} parent=35 // pred_fallthru
                _
            $region36: #{generator_forward.7} parent=31 // pred_fallthru
              _
            // Predicated region
            $region37: #{generator_forward.7} parent=31 // pred_check
              _
            $region38: #{generator_forward.7} parent=31 // pred_check_branch
              %143 = sbr.rel target = $region40
            $region39: #{generator_forward.7} parent=31 // pred_region
              %s145 = ssub.s32 256, 1
              loop: start=0, step=1, limit=1
              $region41: #{generator_forward.7} parent=39 // loop_pre_header
                _
              $region42: #{generator_forward.7} parent=39 // loop_header
                %s147 = sphi 0, %s151
                %p148 = scmp.ge.s32.totalorder %s147, 1
                %s152 = sphi %s137, %s137
                %s153 = sphi %s134, %s134
              $region43: #{generator_forward.7} parent=39 // loop_header_branch
                %150 = sbr.rel (%p148) target = $region47
              $region44: #{generator_forward.7} parent=39 // loop_body
                %v154 = vld [vmem:[%s152] sm:%s145]
                %155 = vst [vmem:[%s153] sm:%s145] %v154
                %v156 = vld [vmem:[%s152 + $0x10] sm:%s145]
                %157 = vst [vmem:[%s153 + $0x8] sm:%s145] %v156
                %v158 = vld [vmem:[%s152 + $0x20] sm:%s145]
                %159 = vst [vmem:[%s153 + $0x10] sm:%s145] %v158
                %v160 = vld [vmem:[%s152 + $0x30] sm:%s145]
                %161 = vst [vmem:[%s153 + $0x18] sm:%s145] %v160
                %v162 = vld [vmem:[%s152 + $0x40] sm:%s145]
                %163 = vst [vmem:[%s153 + $0x20] sm:%s145] %v162
                %v164 = vld [vmem:[%s152 + $0x50] sm:%s145]
                %165 = vst [vmem:[%s153 + $0x28] sm:%s145] %v164
                %v166 = vld [vmem:[%s152 + $0x60] sm:%s145]
                %167 = vst [vmem:[%s153 + $0x30] sm:%s145] %v166
                %v168 = vld [vmem:[%s152 + $0x70] sm:%s145]
                %169 = vst [vmem:[%s153 + $0x38] sm:%s145] %v168
                %v170 = vld [vmem:[%s152 + $0x80] sm:%s145]
                %171 = vst [vmem:[%s153 + $0x40] sm:%s145] %v170
                %v172 = vld [vmem:[%s152 + $0x90] sm:%s145]
                %173 = vst [vmem:[%s153 + $0x48] sm:%s145] %v172
                %v174 = vld [vmem:[%s152 + $0xa0] sm:%s145]
                %175 = vst [vmem:[%s153 + $0x50] sm:%s145] %v174
                %v176 = vld [vmem:[%s152 + $0xb0] sm:%s145]
                %177 = vst [vmem:[%s153 + $0x58] sm:%s145] %v176
                %v178 = vld [vmem:[%s152 + $0xc0] sm:%s145]
                %179 = vst [vmem:[%s153 + $0x60] sm:%s145] %v178
                %v180 = vld [vmem:[%s152 + $0xd0] sm:%s145]
                %181 = vst [vmem:[%s153 + $0x68] sm:%s145] %v180
                %v182 = vld [vmem:[%s152 + $0xe0] sm:%s145]
                %183 = vst [vmem:[%s153 + $0x70] sm:%s145] %v182
                %v184 = vld [vmem:[%s152 + $0xf0] sm:%s145]
                %185 = vst [vmem:[%s153 + $0x78] sm:%s145] %v184
                %v186 = vld [vmem:[%s152 + $0x100] sm:%s145]
                %187 = vst [vmem:[%s153 + $0x80] sm:%s145] %v186
                %v188 = vld [vmem:[%s152 + $0x110] sm:%s145]
                %189 = vst [vmem:[%s153 + $0x88] sm:%s145] %v188
                %v190 = vld [vmem:[%s152 + $0x120] sm:%s145]
                %191 = vst [vmem:[%s153 + $0x90] sm:%s145] %v190
                %v192 = vld [vmem:[%s152 + $0x130] sm:%s145]
                %193 = vst [vmem:[%s153 + $0x98] sm:%s145] %v192
                %v194 = vld [vmem:[%s152 + $0x140] sm:%s145]
                %195 = vst [vmem:[%s153 + $0xa0] sm:%s145] %v194
                %v196 = vld [vmem:[%s152 + $0x150] sm:%s145]
                %197 = vst [vmem:[%s153 + $0xa8] sm:%s145] %v196
                %v198 = vld [vmem:[%s152 + $0x160] sm:%s145]
                %199 = vst [vmem:[%s153 + $0xb0] sm:%s145] %v198
                %v200 = vld [vmem:[%s152 + $0x170] sm:%s145]
                %201 = vst [vmem:[%s153 + $0xb8] sm:%s145] %v200
                %v202 = vld [vmem:[%s152 + $0x180] sm:%s145]
                %203 = vst [vmem:[%s153 + $0xc0] sm:%s145] %v202
                %v204 = vld [vmem:[%s152 + $0x190] sm:%s145]
                %205 = vst [vmem:[%s153 + $0xc8] sm:%s145] %v204
                %v206 = vld [vmem:[%s152 + $0x1a0] sm:%s145]
                %207 = vst [vmem:[%s153 + $0xd0] sm:%s145] %v206
                %v208 = vld [vmem:[%s152 + $0x1b0] sm:%s145]
                %209 = vst [vmem:[%s153 + $0xd8] sm:%s145] %v208
                %v210 = vld [vmem:[%s152 + $0x1c0] sm:%s145]
                %211 = vst [vmem:[%s153 + $0xe0] sm:%s145] %v210
                %v212 = vld [vmem:[%s152 + $0x1d0] sm:%s145]
                %213 = vst [vmem:[%s153 + $0xe8] sm:%s145] %v212
                %v214 = vld [vmem:[%s152 + $0x1e0] sm:%s145]
                %215 = vst [vmem:[%s153 + $0xf0] sm:%s145] %v214
                %v216 = vld [vmem:[%s152 + $0x1f0] sm:%s145]
                %217 = vst [vmem:[%s153 + $0xf8] sm:%s145] %v216
              $region45: #{generator_forward.7} parent=39 // loop_footer
                %s151 = sadd.s32 1, %s147
              $region46: #{generator_forward.7} parent=39 // loop_footer_branch
                %146 = sbr.rel target = $region42
              $region47: #{generator_forward.7} parent=39 // loop_exit
                _
            $region40: #{generator_forward.7} parent=31 // pred_fallthru
              _
          $region32: #{generator_forward.7} parent=27 // pred_fallthru
            _
          %294 = vnop
        $region28: #{generator_forward.7} parent=23 // pred_fallthru
          _
      $region24: #{generator_forward.7} parent=5 // pred_fallthru
        _
      %p295 = scmp.le.s32.totalorder 1, %s9
      %p296 = scmp.lt.s32.totalorder %s9, 3
      %p297 = pnand %p295, %p296
      %p298 = pneg %p297
      // Predicated region
      $region63: #{generator_forward.7} parent=5 // pred_check
        _
      $region64: #{generator_forward.7} parent=5 // pred_check_branch
        %300 = sbr.rel (%p297) target = $region66
      $region65: #{generator_forward.7} parent=5 // pred_region
        %s301 = ssub.s32 %s9, 1
        %s302 = sand.u32 %s22, 1
        %s303 = sand.u32 %s22, 1
        %s304 = smul.addr %s303, 256
        %s305 = scalar_lea.vmem [#allocation2], %s304
        // Predicated region
        $region67: #{generator_forward.7} parent=65 // pred_check
          %p306 = pneg %p35
        $region68: #{generator_forward.7} parent=65 // pred_check_branch
          %308 = sbr.rel (%p306) target = $region70
        $region69: #{generator_forward.7} parent=65 // pred_region
          _
        $region70: #{generator_forward.7} parent=65 // pred_fallthru
          _
        %s309 = sand.u32 %s22, 1
        %s310 = sand.u32 %s22, 1
        %s311 = smul.addr %s310, 256
        %s312 = scalar_lea.vmem [#allocation2], %s311
        %p313 = pneg %p35
        %p314 = pneg %p32
        %p315 = pneg %p56
        %p316 = pneg %p53
        %p317 = pneg %p77
        %p318 = pneg %p74
        %p319 = pneg %p103
        %p320 = pneg %p100
        %s321 = smul.u32 2, %s14
        %p322 = scmp.lt.s32.totalorder %s321, 3
        %s323 = scalar_select %p322, %s321, 3
        %s324 = smul.addr %s323, 8
        %s325 = scalar_lea.vmem %s3, %s324
        %s326 = smul.u32 2, %s14
        %s327 = smul.u32 2, %s14
        %p328 = scmp.lt.s32.totalorder %s327, 3
        %s329 = scalar_select %p328, %s327, 3
        %s330 = smul.addr %s329, 8
        %s331 = scalar_lea.vmem %s3, %s330
        %s332 = smul.u32 2, %s14
        %v333 = vld [vmem:[%s1] sm:$0xff]
        %v334 = vld [vmem:[%s305] sm:$0xff]
        %v335 = vld [vmem:[%s305 + $0x8] sm:$0xff]
        %v336 = vld [vmem:[%s305 + $0x10] sm:$0xff]
        %v337 = vld [vmem:[%s305 + $0x18] sm:$0xff]
        %v338 = vld [vmem:[%s305 + $0x20] sm:$0xff]
        %v339 = vld [vmem:[%s305 + $0x28] sm:$0xff]
        %v340 = vld [vmem:[%s305 + $0x30] sm:$0xff]
        %v341 = vld [vmem:[%s305 + $0x38] sm:$0xff]
        %v342 = vld [vmem:[%s305 + $0x40] sm:$0xff]
        %v343 = vld [vmem:[%s305 + $0x48] sm:$0xff]
        %v344 = vld [vmem:[%s305 + $0x50] sm:$0xff]
        %v345 = vld [vmem:[%s305 + $0x58] sm:$0xff]
        %v346 = vld [vmem:[%s305 + $0x60] sm:$0xff]
        %v347 = vld [vmem:[%s305 + $0x68] sm:$0xff]
        %v348 = vld [vmem:[%s305 + $0x70] sm:$0xff]
        %v349 = vld [vmem:[%s305 + $0x78] sm:$0xff]
        %v350 = vld [vmem:[%s305 + $0x80] sm:$0xff]
        %v351 = vld [vmem:[%s305 + $0x88] sm:$0xff]
        %v352 = vld [vmem:[%s305 + $0x90] sm:$0xff]
        %v353 = vld [vmem:[%s305 + $0x98] sm:$0xff]
        %v354 = vld [vmem:[%s305 + $0xa0] sm:$0xff]
        %v355 = vld [vmem:[%s305 + $0xa8] sm:$0xff]
        %v356 = vld [vmem:[%s305 + $0xb0] sm:$0xff]
        %v357 = vld [vmem:[%s305 + $0xb8] sm:$0xff]
        %v358 = vld [vmem:[%s305 + $0xc0] sm:$0xff]
        %v359 = vld [vmem:[%s305 + $0xc8] sm:$0xff]
        %v360 = vld [vmem:[%s305 + $0xd0] sm:$0xff]
        %v361 = vld [vmem:[%s305 + $0xd8] sm:$0xff]
        %v362 = vld [vmem:[%s305 + $0xe0] sm:$0xff]
        %v363 = vld [vmem:[%s305 + $0xe8] sm:$0xff]
        %v364 = vld [vmem:[%s305 + $0xf0] sm:$0xff]
        %v365 = vld [vmem:[%s305 + $0xf8] sm:$0xff]
        %v366 = vld [vmem:[%s2] sm:$0xff]
        %368 = vset.pattern.permute.xlu0 0
        %369 = vperm.xlu0 %368, %v366
        %v370 = vpop.permute.xlu0 %369
        %v373 = vunpack.c.l.b16 %v333
        %v374 = vunpack.c.h.b16 %v333
        %v375 = vpack.c.b16 %v373, %v373
        %v376 = vpack.c.b16 %v374, %v374
        %v411 = vunpack.c.l.b16 %v334
        %v412 = vunpack.c.h.b16 %v334
        %v413 = vunpack.c.l.b16 %v335
        %v414 = vunpack.c.h.b16 %v335
        %v415 = vunpack.c.l.b16 %v336
        %v416 = vunpack.c.h.b16 %v336
        %v417 = vunpack.c.l.b16 %v337
        %v418 = vunpack.c.h.b16 %v337
        %v419 = vunpack.c.l.b16 %v338
        %v420 = vunpack.c.h.b16 %v338
        %v421 = vunpack.c.l.b16 %v339
        %v422 = vunpack.c.h.b16 %v339
        %v423 = vunpack.c.l.b16 %v340
        %v424 = vunpack.c.h.b16 %v340
        %v425 = vunpack.c.l.b16 %v341
        %v426 = vunpack.c.h.b16 %v341
        %v427 = vunpack.c.l.b16 %v342
        %v428 = vunpack.c.h.b16 %v342
        %v429 = vunpack.c.l.b16 %v343
        %v430 = vunpack.c.h.b16 %v343
        %v431 = vunpack.c.l.b16 %v344
        %v432 = vunpack.c.h.b16 %v344
        %v433 = vunpack.c.l.b16 %v345
        %v434 = vunpack.c.h.b16 %v345
        %v435 = vunpack.c.l.b16 %v346
        %v436 = vunpack.c.h.b16 %v346
        %v437 = vunpack.c.l.b16 %v347
        %v438 = vunpack.c.h.b16 %v347
        %v439 = vunpack.c.l.b16 %v348
        %v440 = vunpack.c.h.b16 %v348
        %v441 = vunpack.c.l.b16 %v349
        %v442 = vunpack.c.h.b16 %v349
        %v443 = vunpack.c.l.b16 %v350
        %v444 = vunpack.c.h.b16 %v350
        %v445 = vunpack.c.l.b16 %v351
        %v446 = vunpack.c.h.b16 %v351
        %v447 = vunpack.c.l.b16 %v352
        %v448 = vunpack.c.h.b16 %v352
        %v449 = vunpack.c.l.b16 %v353
        %v450 = vunpack.c.h.b16 %v353
        %v451 = vunpack.c.l.b16 %v354
        %v452 = vunpack.c.h.b16 %v354
        %v453 = vunpack.c.l.b16 %v355
        %v454 = vunpack.c.h.b16 %v355
        %v455 = vunpack.c.l.b16 %v356
        %v456 = vunpack.c.h.b16 %v356
        %v457 = vunpack.c.l.b16 %v357
        %v458 = vunpack.c.h.b16 %v357
        %v459 = vunpack.c.l.b16 %v358
        %v460 = vunpack.c.h.b16 %v358
        %v461 = vunpack.c.l.b16 %v359
        %v462 = vunpack.c.h.b16 %v359
        %v463 = vunpack.c.l.b16 %v360
        %v464 = vunpack.c.h.b16 %v360
        %v465 = vunpack.c.l.b16 %v361
        %v466 = vunpack.c.h.b16 %v361
        %v467 = vunpack.c.l.b16 %v362
        %v468 = vunpack.c.h.b16 %v362
        %v469 = vunpack.c.l.b16 %v363
        %v470 = vunpack.c.h.b16 %v363
        %v471 = vunpack.c.l.b16 %v364
        %v472 = vunpack.c.h.b16 %v364
        %v473 = vunpack.c.l.b16 %v365
        %v474 = vunpack.c.h.b16 %v365
        %v475 = vpack.c.b16 %v413, %v411
        %v476 = vpack.c.b16 %v414, %v412
        %v477 = vpack.c.b16 %v417, %v415
        %v478 = vpack.c.b16 %v418, %v416
        %v479 = vpack.c.b16 %v421, %v419
        %v480 = vpack.c.b16 %v422, %v420
        %v481 = vpack.c.b16 %v425, %v423
        %v482 = vpack.c.b16 %v426, %v424
        %v483 = vpack.c.b16 %v429, %v427
        %v484 = vpack.c.b16 %v430, %v428
        %v485 = vpack.c.b16 %v433, %v431
        %v486 = vpack.c.b16 %v434, %v432
        %v487 = vpack.c.b16 %v437, %v435
        %v488 = vpack.c.b16 %v438, %v436
        %v489 = vpack.c.b16 %v441, %v439
        %v490 = vpack.c.b16 %v442, %v440
        %v491 = vpack.c.b16 %v445, %v443
        %v492 = vpack.c.b16 %v446, %v444
        %v493 = vpack.c.b16 %v449, %v447
        %v494 = vpack.c.b16 %v450, %v448
        %v495 = vpack.c.b16 %v453, %v451
        %v496 = vpack.c.b16 %v454, %v452
        %v497 = vpack.c.b16 %v457, %v455
        %v498 = vpack.c.b16 %v458, %v456
        %v499 = vpack.c.b16 %v461, %v459
        %v500 = vpack.c.b16 %v462, %v460
        %v501 = vpack.c.b16 %v465, %v463
        %v502 = vpack.c.b16 %v466, %v464
        %v503 = vpack.c.b16 %v469, %v467
        %v504 = vpack.c.b16 %v470, %v468
        %v505 = vpack.c.b16 %v473, %v471
        %v506 = vpack.c.b16 %v474, %v472
        %539 = vmatpush.bf16.msra.mxu0 %v489
        %540 = vmatpush.bf16.msra.mxu0 %v487
        %541 = vmatpush.bf16.msra.mxu0 %v485
        %542 = vmatpush.bf16.msra.mxu0 %v483
        %543 = vmatpush.bf16.msra.mxu0 %v481
        %544 = vmatpush.bf16.msra.mxu0 %v479
        %545 = vmatpush.bf16.msra.mxu0 %v477
        %546 = vmatpush.bf16.msra.mxu0 %v475
        %547 = vmatmul.bf16.gmra.mxu0 %v375
        %v548 = vpop.f32.mrf.mxu0
        %v549 = vadd.f32 %v370, %v548
        %v550 = vpop.f32.mrf.mxu0
        %551 = vdwg.mxu0
        %552 = vmatpush.bf16.msra.mxu0 %v505
        %553 = vmatpush.bf16.msra.mxu0 %v503
        %554 = vmatpush.bf16.msra.mxu0 %v501
        %555 = vmatpush.bf16.msra.mxu0 %v499
        %556 = vmatpush.bf16.msra.mxu0 %v497
        %557 = vmatpush.bf16.msra.mxu0 %v495
        %558 = vmatpush.bf16.msra.mxu0 %v493
        %559 = vmatpush.bf16.msra.mxu0 %v491
        %560 = vmatmul.bf16.gmra.mxu0 %v376
        %v561 = vpop.f32.mrf.mxu0
        %v562 = vadd.f32 %v549, %v561
        %v563 = vpop.f32.mrf.mxu0
        %564 = vdwg.mxu0
        %565 = vmatpush.bf16.msra.mxu0 %v490
        %566 = vmatpush.bf16.msra.mxu0 %v488
        %567 = vmatpush.bf16.msra.mxu0 %v486
        %568 = vmatpush.bf16.msra.mxu0 %v484
        %569 = vmatpush.bf16.msra.mxu0 %v482
        %570 = vmatpush.bf16.msra.mxu0 %v480
        %571 = vmatpush.bf16.msra.mxu0 %v478
        %572 = vmatpush.bf16.msra.mxu0 %v476
        %573 = vmatmul.bf16.gmra.mxu0 %v375
        %v574 = vpop.f32.mrf.mxu0
        %v575 = vadd.f32 %v370, %v574
        %v576 = vpop.f32.mrf.mxu0
        %577 = vdwg.mxu0
        %578 = vmatpush.bf16.msra.mxu0 %v506
        %579 = vmatpush.bf16.msra.mxu0 %v504
        %580 = vmatpush.bf16.msra.mxu0 %v502
        %581 = vmatpush.bf16.msra.mxu0 %v500
        %582 = vmatpush.bf16.msra.mxu0 %v498
        %583 = vmatpush.bf16.msra.mxu0 %v496
        %584 = vmatpush.bf16.msra.mxu0 %v494
        %585 = vmatpush.bf16.msra.mxu0 %v492
        %586 = vmatmul.bf16.gmra.mxu0 %v376
        %v587 = vpop.f32.mrf.mxu0
        %v588 = vadd.f32 %v575, %v587
        %v589 = vpop.f32.mrf.mxu0
        %590 = vdwg.mxu0
        %v591 = vtanh.pop %v562
        %v592 = vtanh.pop %v588
        %593 = vst [vmem:[%s331] sm:$0xff] %v591
        %594 = vst [vmem:[%s331 + $0x8] sm:$0xff] %v592
        %s595 = smul.u32 2, %s14
        %p596 = scmp.lt.s32.totalorder %s595, 3
        %s597 = scalar_select %p596, %s595, 3
        %s598 = smul.addr %s597, 8
        %s599 = scalar_lea.vmem %s3, %s598
        // Predicated region
        $region71: #{generator_forward.7} parent=65 // pred_check
          %p600 = pneg %p100
        $region72: #{generator_forward.7} parent=65 // pred_check_branch
          %602 = sbr.rel (%p600) target = $region74
        $region73: #{generator_forward.7} parent=65 // pred_region
          %s603 = smul.u32 2, %s14
        $region74: #{generator_forward.7} parent=65 // pred_fallthru
          _
      $region66: #{generator_forward.7} parent=5 // pred_fallthru
        _
      %p604 = scmp.le.s32.totalorder 2, %s9
      // Predicated region
      $region75: #{generator_forward.7} parent=5 // pred_check
        %p605 = pneg %p604
      $region76: #{generator_forward.7} parent=5 // pred_check_branch
        %607 = sbr.rel (%p605) target = $region78
      $region77: #{generator_forward.7} parent=5 // pred_region
        %s608 = ssub.s32 %s9, 2
        // Predicated region
        $region79: #{generator_forward.7} parent=77 // pred_check
          %p609 = pneg %p106
        $region80: #{generator_forward.7} parent=77 // pred_check_branch
          %611 = sbr.rel (%p609) target = $region82
        $region81: #{generator_forward.7} parent=77 // pred_region
          %s612 = smul.u32 2, %s15
          %p613 = scmp.lt.s32.totalorder %s612, 3
          %s614 = scalar_select %p613, %s612, 3
          %s615 = smul.addr %s614, 8
          %s616 = scalar_lea.vmem %s3, %s615
        $region82: #{generator_forward.7} parent=77 // pred_fallthru
          _
      $region78: #{generator_forward.7} parent=5 // pred_fallthru
        _
    $region6: #{generator_forward.7} parent=1 // loop_footer
      %s13 = sadd.s32 1, %s9
    $region7: #{generator_forward.7} parent=1 // loop_footer_branch
      %8 = sbr.rel target = $region3
    $region8: #{generator_forward.7} parent=1 // loop_exit
      _

</llo_original>
